<compile_context>
chip_gen: v7x
topology: tpu7x:2x2x1
jax: 0.10.0
libtpu: 0.0.40
codegen_flags: <defaults>
</compile_context>

<pallas_src>
import functools

import jax
import jax.numpy as jnp
from jax.experimental import pallas as pl
from jax.experimental.pallas import tpu as pltpu


# ----------------------------------------------------------------------------
# Fused decoder kernel: one grid step == one image.
# ----------------------------------------------------------------------------
def _pose_decoder_kernel(x_ref, w_sq_ref, b_sq_ref,
                         w_p0_ref, b_p0_ref, w_p1_ref, b_p1_ref,
                         o_ref, cat_ref, p0_ref,
                         *, F, H, W, inv_hw):
    HW = H * W
    C_sq = w_sq_ref.shape[1]        # 256
    C_cat = cat_ref.shape[2]        # F * 256
    C_p = p0_ref.shape[2]           # 256

    # Zero the padded scratch tiles (gives the zero halo for padding=1 convs;
    # interiors are overwritten below).
    cat_ref[...] = jnp.zeros_like(cat_ref)
    p0_ref[...] = jnp.zeros_like(p0_ref)

    # --- squeeze: per-feature 1x1 conv + ReLU, channel-concatenated straight
    # --- into the zero-padded concat buffer (no separate concat pass).
    for f in range(F):
        s = jnp.dot(x_ref[f], w_sq_ref[...],
                    preferred_element_type=jnp.float32)            # (HW, 256)
        s = jnp.maximum(s + b_sq_ref[...], 0.0)
        cat_ref[1:1 + H, 1:1 + W, f * C_sq:(f + 1) * C_sq] = (
            s.astype(cat_ref.dtype).reshape(H, W, C_sq))

    # --- (pose, 0): 3x3 conv (F*256 -> 256) + ReLU via 9 shifted matmuls.
    acc = jnp.zeros((HW, C_p), jnp.float32)
    for kh in range(3):
        for kw in range(3):
            patch = cat_ref[kh:kh + H, kw:kw + W, :]                # (H, W, C_cat)
            acc = acc + jnp.dot(patch.reshape(HW, C_cat),
                                w_p0_ref[kh * 3 + kw],
                                preferred_element_type=jnp.float32)
    y0 = jnp.maximum(acc + b_p0_ref[...], 0.0)
    p0_ref[1:1 + H, 1:1 + W, :] = y0.astype(p0_ref.dtype).reshape(H, W, C_p)

    # --- (pose, 1): 3x3 conv (256 -> 256) + ReLU.
    acc = jnp.zeros((HW, C_p), jnp.float32)
    for kh in range(3):
        for kw in range(3):
            patch = p0_ref[kh:kh + H, kw:kw + W, :]                 # (H, W, 256)
            acc = acc + jnp.dot(patch.reshape(HW, C_p),
                                w_p1_ref[kh * 3 + kw],
                                preferred_element_type=jnp.float32)
    y1 = jnp.maximum(acc + b_p1_ref[...], 0.0)                      # (HW, 256) f32

    # --- spatial mean (the (pose, 2) 1x1 head conv is linear, so it is
    # --- applied to this mean outside the kernel).  Lane-dense output block.
    mean = jnp.sum(y1, axis=0, keepdims=True) * inv_hw              # (1, 256)
    o_ref[...] = jnp.broadcast_to(mean, o_ref.shape)


def pose_decoder_mean(x, w_sq, b_sq, w_p0, b_p0, w_p1, b_p1, *, H, W):
    """x: (N, F, H*W, C_enc) bf16 channels-last features.
    Returns (N, 256) f32: spatial mean of relu(conv_p1(relu(conv_p0(cat))))."""
    N, F, HW, Cenc = x.shape
    assert HW == H * W
    C_sq = w_sq.shape[1]
    C_cat = w_p0.shape[1]
    C_p = w_p1.shape[2]
    assert C_cat == F * C_sq

    kernel = functools.partial(_pose_decoder_kernel,
                               F=F, H=H, W=W, inv_hw=1.0 / float(HW))

    out = pl.pallas_call(
        kernel,
        out_shape=jax.ShapeDtypeStruct((N, 8, C_p), jnp.float32),
        grid=(N,),
        in_specs=[
            pl.BlockSpec((None, F, HW, Cenc), lambda n: (n, 0, 0, 0)),  # features
            pl.BlockSpec((Cenc, C_sq), lambda n: (0, 0)),               # w_sq
            pl.BlockSpec((1, C_sq), lambda n: (0, 0)),                  # b_sq
            pl.BlockSpec((9, C_cat, C_p), lambda n: (0, 0, 0)),         # w_p0
            pl.BlockSpec((1, C_p), lambda n: (0, 0)),                   # b_p0
            pl.BlockSpec((9, C_p, C_p), lambda n: (0, 0, 0)),           # w_p1
            pl.BlockSpec((1, C_p), lambda n: (0, 0)),                   # b_p1
        ],
        out_specs=pl.BlockSpec((None, 8, C_p), lambda n: (n, 0, 0)),
        scratch_shapes=[
            pltpu.VMEM((H + 2, W + 2, C_cat), jnp.bfloat16),  # padded concat
            pltpu.VMEM((H + 2, W + 2, C_p), jnp.bfloat16),    # padded conv0 out
        ],
        compiler_params=pltpu.CompilerParams(
            dimension_semantics=("parallel",)),
    )(x, w_sq, b_sq, w_p0, b_p0, w_p1, b_p1)
    return out[:, 0, :]   # (N, 256)


# ----------------------------------------------------------------------------
# PoseDecoder wrapper (parameters + minimal plain-JAX glue)
# ----------------------------------------------------------------------------
class PoseDecoderPallas:
    def __init__(self, num_ch_enc, num_input_features,
                 num_frames_to_predict_for=None, stride=1, key=None):
        assert stride == 1, "only stride=1 supported here"
        self.num_ch_enc = num_ch_enc
        self.num_input_features = num_input_features
        if num_frames_to_predict_for is None:
            num_frames_to_predict_for = num_input_features - 1
        self.num_frames_to_predict_for = num_frames_to_predict_for

        c_enc = int(num_ch_enc[-1])
        c_cat = num_input_features * 256
        c_out = 6 * num_frames_to_predict_for

        if key is None:
            key = jax.random.PRNGKey(0)
        ks = jax.random.split(key, 8)
        s = 0.05  # deterministic synthetic init scale

        # Kernel-friendly layouts; MXU weights bf16, biases / head weight f32.
        self.w_sq = (s * jax.random.normal(ks[0], (c_enc, 256))).astype(jnp.bfloat16)
        self.b_sq = s * jax.random.normal(ks[1], (1, 256), jnp.float32)

        w_p0 = s * jax.random.normal(ks[2], (3, 3, c_cat, 256), jnp.float32)
        self.w_p0 = w_p0.reshape(9, c_cat, 256).astype(jnp.bfloat16)   # [kh*3+kw]
        self.b_p0 = s * jax.random.normal(ks[3], (1, 256), jnp.float32)

        w_p1 = s * jax.random.normal(ks[4], (3, 3, 256, 256), jnp.float32)
        self.w_p1 = w_p1.reshape(9, 256, 256).astype(jnp.bfloat16)     # [kh*3+kw]
        self.b_p1 = s * jax.random.normal(ks[5], (1, 256), jnp.float32)

        self.w_p2 = s * jax.random.normal(ks[6], (256, c_out), jnp.float32)
        self.b_p2 = s * jax.random.normal(ks[7], (1, c_out), jnp.float32)

    def __call__(self, input_features):
        # input_features: list (len = num_input_features) of feature pyramids
        # (lists of NCHW arrays); only the last level of each is used.
        last_features = [f[-1] for f in input_features]

        x = jnp.stack(last_features, axis=1)                  # (N, F, C, H, W)
        N, F_, C, H, W = x.shape
        # One fused XLA pass: channels-last + bf16 cast for the MXU.
        # TODO(synk): fold this NCHW->NHWC transpose into the squeeze matmul
        # (dot_general contracting the leading C dim) to save one HBM pass.
        x = jnp.transpose(x, (0, 1, 3, 4, 2)).reshape(N, F_, H * W, C)
        x = x.astype(jnp.bfloat16)

        # One fused Pallas call: squeeze+concat, both 3x3 convs, spatial mean.
        mean = pose_decoder_mean(x, self.w_sq, self.b_sq,
                                 self.w_p0, self.b_p0,
                                 self.w_p1, self.b_p1, H=H, W=W)   # (N, 256) f32

        # Tiny head: 1x1 conv applied to the spatial mean (exact by linearity).
        pose = 0.01 * (mean @ self.w_p2 + self.b_p2)               # (N, 6*nf)
        pose = pose.reshape(-1, self.num_frames_to_predict_for, 1, 6)
        axisangle = pose[..., :3]
        translation = pose[..., 3:]
        return axisangle, translation


if __name__ == "__main__":
    # Small, module-consistent shapes.
    num_ch_enc = [16, 32, 64]
    num_input_features = 2          # -> num_frames_to_predict_for = 1
    N, H, W = 2, 8, 8
    c_enc = num_ch_enc[-1]

    key = jax.random.PRNGKey(0)
    k0, k1, kparams = jax.random.split(key, 3)
    # Two feature pyramids; only the last level ([-1]) of each is consumed.
    feats0 = [jax.random.normal(k0, (N, c_enc, H, W), jnp.float32)]
    feats1 = [jax.random.normal(k1, (N, c_enc, H, W), jnp.float32)]
    input_features = [feats0, feats1]

    decoder = PoseDecoderPallas(num_ch_enc, num_input_features, key=kparams)
    axisangle, translation = decoder(input_features)
    jax.block_until_ready((axisangle, translation))

    assert axisangle.shape == (N, 1, 1, 3), axisangle.shape
    assert translation.shape == (N, 1, 1, 3), translation.shape
    assert axisangle.dtype == jnp.float32
    assert bool(jnp.all(jnp.isfinite(axisangle))) and bool(jnp.all(jnp.isfinite(translation)))
    print("KERNEL_OK")
</pallas_src>

<mosaic_0001>
module attributes {stable_mosaic.version = 11 : i64} {
  func.func @_pose_decoder_kernel(%arg0: i32, %arg1: memref<1x2x64x64xbf16, #tpu.memory_space<vmem>>, %arg2: memref<64x256xbf16, #tpu.memory_space<vmem>>, %arg3: memref<1x256xf32, #tpu.memory_space<vmem>>, %arg4: memref<9x512x256xbf16, #tpu.memory_space<vmem>>, %arg5: memref<1x256xf32, #tpu.memory_space<vmem>>, %arg6: memref<9x256x256xbf16, #tpu.memory_space<vmem>>, %arg7: memref<1x256xf32, #tpu.memory_space<vmem>>, %arg8: memref<1x8x256xf32, #tpu.memory_space<vmem>>, %arg9: memref<10x10x512xbf16, #tpu.memory_space<vmem>>, %arg10: memref<10x10x256xbf16, #tpu.memory_space<vmem>>) attributes {dimension_semantics = [#tpu.dimension_semantics<parallel>], iteration_bounds = array<i64: 2>, scalar_prefetch = 0 : i64, scratch_operands = 2 : i64, tpu.core_type = #tpu.core_type<tc>, window_params = [{transform_indices = @transform_0, window_bounds = array<i64: 1, 2, 64, 64>}, {pipeline_mode = #tpu.pipeline_mode<synchronous>, transform_indices = @transform_1, window_bounds = array<i64: 64, 256>}, {pipeline_mode = #tpu.pipeline_mode<synchronous>, transform_indices = @transform_2, window_bounds = array<i64: 1, 256>}, {pipeline_mode = #tpu.pipeline_mode<synchronous>, transform_indices = @transform_3, window_bounds = array<i64: 9, 512, 256>}, {pipeline_mode = #tpu.pipeline_mode<synchronous>, transform_indices = @transform_4, window_bounds = array<i64: 1, 256>}, {pipeline_mode = #tpu.pipeline_mode<synchronous>, transform_indices = @transform_5, window_bounds = array<i64: 9, 256, 256>}, {pipeline_mode = #tpu.pipeline_mode<synchronous>, transform_indices = @transform_6, window_bounds = array<i64: 1, 256>}, {transform_indices = @transform_7, window_bounds = array<i64: 1, 8, 256>}]} {
    %cst = arith.constant 0.000000e+00 : bf16
    %0 = vector.broadcast %cst : bf16 to vector<10x10x512xbf16>
    %c0 = arith.constant 0 : index
    %c0_0 = arith.constant 0 : index
    %c0_1 = arith.constant 0 : index
    %1 = vector.load %arg9[%c0, %c0_0, %c0_1] : memref<10x10x512xbf16, #tpu.memory_space<vmem>>, vector<10x10x512xbf16>
    tpu.vector_store %arg9[%c0, %c0_0, %c0_1], %0 {strides = array<i32>} : memref<10x10x512xbf16, #tpu.memory_space<vmem>>, vector<10x10x512xbf16>,
    %cst_2 = arith.constant 0.000000e+00 : bf16
    %2 = vector.broadcast %cst_2 : bf16 to vector<10x10x256xbf16>
    %c0_3 = arith.constant 0 : index
    %c0_4 = arith.constant 0 : index
    %c0_5 = arith.constant 0 : index
    %3 = vector.load %arg10[%c0_3, %c0_4, %c0_5] : memref<10x10x256xbf16, #tpu.memory_space<vmem>>, vector<10x10x256xbf16>
    tpu.vector_store %arg10[%c0_3, %c0_4, %c0_5], %2 {strides = array<i32>} : memref<10x10x256xbf16, #tpu.memory_space<vmem>>, vector<10x10x256xbf16>,
    %c0_6 = arith.constant 0 : index
    %c0_7 = arith.constant 0 : index
    %c0_8 = arith.constant 0 : index
    %c0_9 = arith.constant 0 : index
    %4 = vector.load %arg1[%c0_6, %c0_7, %c0_8, %c0_9] : memref<1x2x64x64xbf16, #tpu.memory_space<vmem>>, vector<1x1x64x64xbf16>
    %5 = vector.shape_cast %4 : vector<1x1x64x64xbf16> to vector<64x64xbf16>
    %c0_10 = arith.constant 0 : index
    %c0_11 = arith.constant 0 : index
    %6 = vector.load %arg2[%c0_10, %c0_11] : memref<64x256xbf16, #tpu.memory_space<vmem>>, vector<64x256xbf16>
    %cst_12 = arith.constant dense<0.000000e+00> : vector<64x256xf32>
    %7 = tpu.matmul %5, %6, %cst_12 {dimension_numbers = #tpu.dot_dimension_numbers<[1], [0], [0], [1], [0, 0, 1, 1], [], []>} : vector<64x64xbf16>, vector<64x256xbf16>, vector<64x256xf32> -> vector<64x256xf32>
    %c0_13 = arith.constant 0 : index
    %c0_14 = arith.constant 0 : index
    %8 = vector.load %arg3[%c0_13, %c0_14] : memref<1x256xf32, #tpu.memory_space<vmem>>, vector<1x256xf32>
    %9 = vector.broadcast %8 : vector<1x256xf32> to vector<64x256xf32>
    %10 = arith.addf %7, %9 : vector<64x256xf32>
    %cst_15 = arith.constant 0.000000e+00 : f32
    %11 = vector.broadcast %cst_15 : f32 to vector<64x256xf32>
    %12 = arith.maximumf %10, %11 : vector<64x256xf32>
    %13 = arith.truncf %12 : vector<64x256xf32> to vector<64x256xbf16>
    %14 = vector.shape_cast %13 : vector<64x256xbf16> to vector<8x8x256xbf16>
    %c1 = arith.constant 1 : index
    %c1_16 = arith.constant 1 : index
    %c0_17 = arith.constant 0 : index
    %15 = vector.load %arg9[%c1, %c1_16, %c0_17] : memref<10x10x512xbf16, #tpu.memory_space<vmem>>, vector<8x8x256xbf16>
    tpu.vector_store %arg9[%c1, %c1_16, %c0_17], %14 {strides = array<i32>} : memref<10x10x512xbf16, #tpu.memory_space<vmem>>, vector<8x8x256xbf16>,
    %c0_18 = arith.constant 0 : index
    %c1_19 = arith.constant 1 : index
    %c0_20 = arith.constant 0 : index
    %c0_21 = arith.constant 0 : index
    %16 = vector.load %arg1[%c0_18, %c1_19, %c0_20, %c0_21] : memref<1x2x64x64xbf16, #tpu.memory_space<vmem>>, vector<1x1x64x64xbf16>
    %17 = vector.shape_cast %16 : vector<1x1x64x64xbf16> to vector<64x64xbf16>
    %c0_22 = arith.constant 0 : index
    %c0_23 = arith.constant 0 : index
    %18 = vector.load %arg2[%c0_22, %c0_23] : memref<64x256xbf16, #tpu.memory_space<vmem>>, vector<64x256xbf16>
    %cst_24 = arith.constant dense<0.000000e+00> : vector<64x256xf32>
    %19 = tpu.matmul %17, %18, %cst_24 {dimension_numbers = #tpu.dot_dimension_numbers<[1], [0], [0], [1], [0, 0, 1, 1], [], []>} : vector<64x64xbf16>, vector<64x256xbf16>, vector<64x256xf32> -> vector<64x256xf32>
    %c0_25 = arith.constant 0 : index
    %c0_26 = arith.constant 0 : index
    %20 = vector.load %arg3[%c0_25, %c0_26] : memref<1x256xf32, #tpu.memory_space<vmem>>, vector<1x256xf32>
    %21 = vector.broadcast %20 : vector<1x256xf32> to vector<64x256xf32>
    %22 = arith.addf %19, %21 : vector<64x256xf32>
    %cst_27 = arith.constant 0.000000e+00 : f32
    %23 = vector.broadcast %cst_27 : f32 to vector<64x256xf32>
    %24 = arith.maximumf %22, %23 : vector<64x256xf32>
    %25 = arith.truncf %24 : vector<64x256xf32> to vector<64x256xbf16>
    %26 = vector.shape_cast %25 : vector<64x256xbf16> to vector<8x8x256xbf16>
    %c1_28 = arith.constant 1 : index
    %c1_29 = arith.constant 1 : index
    %c256 = arith.constant 256 : index
    %27 = vector.load %arg9[%c1_28, %c1_29, %c256] : memref<10x10x512xbf16, #tpu.memory_space<vmem>>, vector<8x8x256xbf16>
    tpu.vector_store %arg9[%c1_28, %c1_29, %c256], %26 {strides = array<i32>} : memref<10x10x512xbf16, #tpu.memory_space<vmem>>, vector<8x8x256xbf16>,
    %cst_30 = arith.constant 0.000000e+00 : f32
    %28 = vector.broadcast %cst_30 : f32 to vector<64x256xf32>
    %c0_31 = arith.constant 0 : index
    %c0_32 = arith.constant 0 : index
    %c0_33 = arith.constant 0 : index
    %29 = vector.load %arg9[%c0_31, %c0_32, %c0_33] : memref<10x10x512xbf16, #tpu.memory_space<vmem>>, vector<8x8x512xbf16>
    %30 = vector.shape_cast %29 : vector<8x8x512xbf16> to vector<64x512xbf16>
    %c0_34 = arith.constant 0 : index
    %c0_35 = arith.constant 0 : index
    %c0_36 = arith.constant 0 : index
    %31 = vector.load %arg4[%c0_34, %c0_35, %c0_36] : memref<9x512x256xbf16, #tpu.memory_space<vmem>>, vector<1x512x256xbf16>
    %32 = vector.shape_cast %31 : vector<1x512x256xbf16> to vector<512x256xbf16>
    %cst_37 = arith.constant dense<0.000000e+00> : vector<64x256xf32>
    %33 = tpu.matmul %30, %32, %cst_37 {dimension_numbers = #tpu.dot_dimension_numbers<[1], [0], [0], [1], [0, 0, 1, 1], [], []>} : vector<64x512xbf16>, vector<512x256xbf16>, vector<64x256xf32> -> vector<64x256xf32>
    %34 = arith.addf %28, %33 : vector<64x256xf32>
    %c0_38 = arith.constant 0 : index
    %c1_39 = arith.constant 1 : index
    %c0_40 = arith.constant 0 : index
    %35 = vector.load %arg9[%c0_38, %c1_39, %c0_40] : memref<10x10x512xbf16, #tpu.memory_space<vmem>>, vector<8x8x512xbf16>
    %36 = vector.shape_cast %35 : vector<8x8x512xbf16> to vector<64x512xbf16>
    %c1_41 = arith.constant 1 : index
    %c0_42 = arith.constant 0 : index
    %c0_43 = arith.constant 0 : index
    %37 = vector.load %arg4[%c1_41, %c0_42, %c0_43] : memref<9x512x256xbf16, #tpu.memory_space<vmem>>, vector<1x512x256xbf16>
    %38 = vector.shape_cast %37 : vector<1x512x256xbf16> to vector<512x256xbf16>
    %cst_44 = arith.constant dense<0.000000e+00> : vector<64x256xf32>
    %39 = tpu.matmul %36, %38, %cst_44 {dimension_numbers = #tpu.dot_dimension_numbers<[1], [0], [0], [1], [0, 0, 1, 1], [], []>} : vector<64x512xbf16>, vector<512x256xbf16>, vector<64x256xf32> -> vector<64x256xf32>
    %40 = arith.addf %34, %39 : vector<64x256xf32>
    %c0_45 = arith.constant 0 : index
    %c2 = arith.constant 2 : index
    %c0_46 = arith.constant 0 : index
    %41 = vector.load %arg9[%c0_45, %c2, %c0_46] : memref<10x10x512xbf16, #tpu.memory_space<vmem>>, vector<8x8x512xbf16>
    %42 = vector.shape_cast %41 : vector<8x8x512xbf16> to vector<64x512xbf16>
    %c2_47 = arith.constant 2 : index
    %c0_48 = arith.constant 0 : index
    %c0_49 = arith.constant 0 : index
    %43 = vector.load %arg4[%c2_47, %c0_48, %c0_49] : memref<9x512x256xbf16, #tpu.memory_space<vmem>>, vector<1x512x256xbf16>
    %44 = vector.shape_cast %43 : vector<1x512x256xbf16> to vector<512x256xbf16>
    %cst_50 = arith.constant dense<0.000000e+00> : vector<64x256xf32>
    %45 = tpu.matmul %42, %44, %cst_50 {dimension_numbers = #tpu.dot_dimension_numbers<[1], [0], [0], [1], [0, 0, 1, 1], [], []>} : vector<64x512xbf16>, vector<512x256xbf16>, vector<64x256xf32> -> vector<64x256xf32>
    %46 = arith.addf %40, %45 : vector<64x256xf32>
    %c1_51 = arith.constant 1 : index
    %c0_52 = arith.constant 0 : index
    %c0_53 = arith.constant 0 : index
    %47 = vector.load %arg9[%c1_51, %c0_52, %c0_53] : memref<10x10x512xbf16, #tpu.memory_space<vmem>>, vector<8x8x512xbf16>
    %48 = vector.shape_cast %47 : vector<8x8x512xbf16> to vector<64x512xbf16>
    %c3 = arith.constant 3 : index
    %c0_54 = arith.constant 0 : index
    %c0_55 = arith.constant 0 : index
    %49 = vector.load %arg4[%c3, %c0_54, %c0_55] : memref<9x512x256xbf16, #tpu.memory_space<vmem>>, vector<1x512x256xbf16>
    %50 = vector.shape_cast %49 : vector<1x512x256xbf16> to vector<512x256xbf16>
    %cst_56 = arith.constant dense<0.000000e+00> : vector<64x256xf32>
    %51 = tpu.matmul %48, %50, %cst_56 {dimension_numbers = #tpu.dot_dimension_numbers<[1], [0], [0], [1], [0, 0, 1, 1], [], []>} : vector<64x512xbf16>, vector<512x256xbf16>, vector<64x256xf32> -> vector<64x256xf32>
    %52 = arith.addf %46, %51 : vector<64x256xf32>
    %c1_57 = arith.constant 1 : index
    %c1_58 = arith.constant 1 : index
    %c0_59 = arith.constant 0 : index
    %53 = vector.load %arg9[%c1_57, %c1_58, %c0_59] : memref<10x10x512xbf16, #tpu.memory_space<vmem>>, vector<8x8x512xbf16>
    %54 = vector.shape_cast %53 : vector<8x8x512xbf16> to vector<64x512xbf16>
    %c4 = arith.constant 4 : index
    %c0_60 = arith.constant 0 : index
    %c0_61 = arith.constant 0 : index
    %55 = vector.load %arg4[%c4, %c0_60, %c0_61] : memref<9x512x256xbf16, #tpu.memory_space<vmem>>, vector<1x512x256xbf16>
    %56 = vector.shape_cast %55 : vector<1x512x256xbf16> to vector<512x256xbf16>
    %cst_62 = arith.constant dense<0.000000e+00> : vector<64x256xf32>
    %57 = tpu.matmul %54, %56, %cst_62 {dimension_numbers = #tpu.dot_dimension_numbers<[1], [0], [0], [1], [0, 0, 1, 1], [], []>} : vector<64x512xbf16>, vector<512x256xbf16>, vector<64x256xf32> -> vector<64x256xf32>
    %58 = arith.addf %52, %57 : vector<64x256xf32>
    %c1_63 = arith.constant 1 : index
    %c2_64 = arith.constant 2 : index
    %c0_65 = arith.constant 0 : index
    %59 = vector.load %arg9[%c1_63, %c2_64, %c0_65] : memref<10x10x512xbf16, #tpu.memory_space<vmem>>, vector<8x8x512xbf16>
    %60 = vector.shape_cast %59 : vector<8x8x512xbf16> to vector<64x512xbf16>
    %c5 = arith.constant 5 : index
    %c0_66 = arith.constant 0 : index
    %c0_67 = arith.constant 0 : index
    %61 = vector.load %arg4[%c5, %c0_66, %c0_67] : memref<9x512x256xbf16, #tpu.memory_space<vmem>>, vector<1x512x256xbf16>
    %62 = vector.shape_cast %61 : vector<1x512x256xbf16> to vector<512x256xbf16>
    %cst_68 = arith.constant dense<0.000000e+00> : vector<64x256xf32>
    %63 = tpu.matmul %60, %62, %cst_68 {dimension_numbers = #tpu.dot_dimension_numbers<[1], [0], [0], [1], [0, 0, 1, 1], [], []>} : vector<64x512xbf16>, vector<512x256xbf16>, vector<64x256xf32> -> vector<64x256xf32>
    %64 = arith.addf %58, %63 : vector<64x256xf32>
    %c2_69 = arith.constant 2 : index
    %c0_70 = arith.constant 0 : index
    %c0_71 = arith.constant 0 : index
    %65 = vector.load %arg9[%c2_69, %c0_70, %c0_71] : memref<10x10x512xbf16, #tpu.memory_space<vmem>>, vector<8x8x512xbf16>
    %66 = vector.shape_cast %65 : vector<8x8x512xbf16> to vector<64x512xbf16>
    %c6 = arith.constant 6 : index
    %c0_72 = arith.constant 0 : index
    %c0_73 = arith.constant 0 : index
    %67 = vector.load %arg4[%c6, %c0_72, %c0_73] : memref<9x512x256xbf16, #tpu.memory_space<vmem>>, vector<1x512x256xbf16>
    %68 = vector.shape_cast %67 : vector<1x512x256xbf16> to vector<512x256xbf16>
    %cst_74 = arith.constant dense<0.000000e+00> : vector<64x256xf32>
    %69 = tpu.matmul %66, %68, %cst_74 {dimension_numbers = #tpu.dot_dimension_numbers<[1], [0], [0], [1], [0, 0, 1, 1], [], []>} : vector<64x512xbf16>, vector<512x256xbf16>, vector<64x256xf32> -> vector<64x256xf32>
    %70 = arith.addf %64, %69 : vector<64x256xf32>
    %c2_75 = arith.constant 2 : index
    %c1_76 = arith.constant 1 : index
    %c0_77 = arith.constant 0 : index
    %71 = vector.load %arg9[%c2_75, %c1_76, %c0_77] : memref<10x10x512xbf16, #tpu.memory_space<vmem>>, vector<8x8x512xbf16>
    %72 = vector.shape_cast %71 : vector<8x8x512xbf16> to vector<64x512xbf16>
    %c7 = arith.constant 7 : index
    %c0_78 = arith.constant 0 : index
    %c0_79 = arith.constant 0 : index
    %73 = vector.load %arg4[%c7, %c0_78, %c0_79] : memref<9x512x256xbf16, #tpu.memory_space<vmem>>, vector<1x512x256xbf16>
    %74 = vector.shape_cast %73 : vector<1x512x256xbf16> to vector<512x256xbf16>
    %cst_80 = arith.constant dense<0.000000e+00> : vector<64x256xf32>
    %75 = tpu.matmul %72, %74, %cst_80 {dimension_numbers = #tpu.dot_dimension_numbers<[1], [0], [0], [1], [0, 0, 1, 1], [], []>} : vector<64x512xbf16>, vector<512x256xbf16>, vector<64x256xf32> -> vector<64x256xf32>
    %76 = arith.addf %70, %75 : vector<64x256xf32>
    %c2_81 = arith.constant 2 : index
    %c2_82 = arith.constant 2 : index
    %c0_83 = arith.constant 0 : index
    %77 = vector.load %arg9[%c2_81, %c2_82, %c0_83] : memref<10x10x512xbf16, #tpu.memory_space<vmem>>, vector<8x8x512xbf16>
    %78 = vector.shape_cast %77 : vector<8x8x512xbf16> to vector<64x512xbf16>
    %c8 = arith.constant 8 : index
    %c0_84 = arith.constant 0 : index
    %c0_85 = arith.constant 0 : index
    %79 = vector.load %arg4[%c8, %c0_84, %c0_85] : memref<9x512x256xbf16, #tpu.memory_space<vmem>>, vector<1x512x256xbf16>
    %80 = vector.shape_cast %79 : vector<1x512x256xbf16> to vector<512x256xbf16>
    %cst_86 = arith.constant dense<0.000000e+00> : vector<64x256xf32>
    %81 = tpu.matmul %78, %80, %cst_86 {dimension_numbers = #tpu.dot_dimension_numbers<[1], [0], [0], [1], [0, 0, 1, 1], [], []>} : vector<64x512xbf16>, vector<512x256xbf16>, vector<64x256xf32> -> vector<64x256xf32>
    %82 = arith.addf %76, %81 : vector<64x256xf32>
    %c0_87 = arith.constant 0 : index
    %c0_88 = arith.constant 0 : index
    %83 = vector.load %arg5[%c0_87, %c0_88] : memref<1x256xf32, #tpu.memory_space<vmem>>, vector<1x256xf32>
    %84 = vector.broadcast %83 : vector<1x256xf32> to vector<64x256xf32>
    %85 = arith.addf %82, %84 : vector<64x256xf32>
    %cst_89 = arith.constant 0.000000e+00 : f32
    %86 = vector.broadcast %cst_89 : f32 to vector<64x256xf32>
    %87 = arith.maximumf %85, %86 : vector<64x256xf32>
    %88 = arith.truncf %87 : vector<64x256xf32> to vector<64x256xbf16>
    %89 = vector.shape_cast %88 : vector<64x256xbf16> to vector<8x8x256xbf16>
    %c1_90 = arith.constant 1 : index
    %c1_91 = arith.constant 1 : index
    %c0_92 = arith.constant 0 : index
    %90 = vector.load %arg10[%c1_90, %c1_91, %c0_92] : memref<10x10x256xbf16, #tpu.memory_space<vmem>>, vector<8x8x256xbf16>
    tpu.vector_store %arg10[%c1_90, %c1_91, %c0_92], %89 {strides = array<i32>} : memref<10x10x256xbf16, #tpu.memory_space<vmem>>, vector<8x8x256xbf16>,
    %cst_93 = arith.constant 0.000000e+00 : f32
    %91 = vector.broadcast %cst_93 : f32 to vector<64x256xf32>
    %c0_94 = arith.constant 0 : index
    %c0_95 = arith.constant 0 : index
    %c0_96 = arith.constant 0 : index
    %92 = vector.load %arg10[%c0_94, %c0_95, %c0_96] : memref<10x10x256xbf16, #tpu.memory_space<vmem>>, vector<8x8x256xbf16>
    %93 = vector.shape_cast %92 : vector<8x8x256xbf16> to vector<64x256xbf16>
    %c0_97 = arith.constant 0 : index
    %c0_98 = arith.constant 0 : index
    %c0_99 = arith.constant 0 : index
    %94 = vector.load %arg6[%c0_97, %c0_98, %c0_99] : memref<9x256x256xbf16, #tpu.memory_space<vmem>>, vector<1x256x256xbf16>
    %95 = vector.shape_cast %94 : vector<1x256x256xbf16> to vector<256x256xbf16>
    %cst_100 = arith.constant dense<0.000000e+00> : vector<64x256xf32>
    %96 = tpu.matmul %93, %95, %cst_100 {dimension_numbers = #tpu.dot_dimension_numbers<[1], [0], [0], [1], [0, 0, 1, 1], [], []>} : vector<64x256xbf16>, vector<256x256xbf16>, vector<64x256xf32> -> vector<64x256xf32>
    %97 = arith.addf %91, %96 : vector<64x256xf32>
    %c0_101 = arith.constant 0 : index
    %c1_102 = arith.constant 1 : index
    %c0_103 = arith.constant 0 : index
    %98 = vector.load %arg10[%c0_101, %c1_102, %c0_103] : memref<10x10x256xbf16, #tpu.memory_space<vmem>>, vector<8x8x256xbf16>
    %99 = vector.shape_cast %98 : vector<8x8x256xbf16> to vector<64x256xbf16>
    %c1_104 = arith.constant 1 : index
    %c0_105 = arith.constant 0 : index
    %c0_106 = arith.constant 0 : index
    %100 = vector.load %arg6[%c1_104, %c0_105, %c0_106] : memref<9x256x256xbf16, #tpu.memory_space<vmem>>, vector<1x256x256xbf16>
    %101 = vector.shape_cast %100 : vector<1x256x256xbf16> to vector<256x256xbf16>
    %cst_107 = arith.constant dense<0.000000e+00> : vector<64x256xf32>
    %102 = tpu.matmul %99, %101, %cst_107 {dimension_numbers = #tpu.dot_dimension_numbers<[1], [0], [0], [1], [0, 0, 1, 1], [], []>} : vector<64x256xbf16>, vector<256x256xbf16>, vector<64x256xf32> -> vector<64x256xf32>
    %103 = arith.addf %97, %102 : vector<64x256xf32>
    %c0_108 = arith.constant 0 : index
    %c2_109 = arith.constant 2 : index
    %c0_110 = arith.constant 0 : index
    %104 = vector.load %arg10[%c0_108, %c2_109, %c0_110] : memref<10x10x256xbf16, #tpu.memory_space<vmem>>, vector<8x8x256xbf16>
    %105 = vector.shape_cast %104 : vector<8x8x256xbf16> to vector<64x256xbf16>
    %c2_111 = arith.constant 2 : index
    %c0_112 = arith.constant 0 : index
    %c0_113 = arith.constant 0 : index
    %106 = vector.load %arg6[%c2_111, %c0_112, %c0_113] : memref<9x256x256xbf16, #tpu.memory_space<vmem>>, vector<1x256x256xbf16>
    %107 = vector.shape_cast %106 : vector<1x256x256xbf16> to vector<256x256xbf16>
    %cst_114 = arith.constant dense<0.000000e+00> : vector<64x256xf32>
    %108 = tpu.matmul %105, %107, %cst_114 {dimension_numbers = #tpu.dot_dimension_numbers<[1], [0], [0], [1], [0, 0, 1, 1], [], []>} : vector<64x256xbf16>, vector<256x256xbf16>, vector<64x256xf32> -> vector<64x256xf32>
    %109 = arith.addf %103, %108 : vector<64x256xf32>
    %c1_115 = arith.constant 1 : index
    %c0_116 = arith.constant 0 : index
    %c0_117 = arith.constant 0 : index
    %110 = vector.load %arg10[%c1_115, %c0_116, %c0_117] : memref<10x10x256xbf16, #tpu.memory_space<vmem>>, vector<8x8x256xbf16>
    %111 = vector.shape_cast %110 : vector<8x8x256xbf16> to vector<64x256xbf16>
    %c3_118 = arith.constant 3 : index
    %c0_119 = arith.constant 0 : index
    %c0_120 = arith.constant 0 : index
    %112 = vector.load %arg6[%c3_118, %c0_119, %c0_120] : memref<9x256x256xbf16, #tpu.memory_space<vmem>>, vector<1x256x256xbf16>
    %113 = vector.shape_cast %112 : vector<1x256x256xbf16> to vector<256x256xbf16>
    %cst_121 = arith.constant dense<0.000000e+00> : vector<64x256xf32>
    %114 = tpu.matmul %111, %113, %cst_121 {dimension_numbers = #tpu.dot_dimension_numbers<[1], [0], [0], [1], [0, 0, 1, 1], [], []>} : vector<64x256xbf16>, vector<256x256xbf16>, vector<64x256xf32> -> vector<64x256xf32>
    %115 = arith.addf %109, %114 : vector<64x256xf32>
    %c1_122 = arith.constant 1 : index
    %c1_123 = arith.constant 1 : index
    %c0_124 = arith.constant 0 : index
    %116 = vector.load %arg10[%c1_122, %c1_123, %c0_124] : memref<10x10x256xbf16, #tpu.memory_space<vmem>>, vector<8x8x256xbf16>
    %117 = vector.shape_cast %116 : vector<8x8x256xbf16> to vector<64x256xbf16>
    %c4_125 = arith.constant 4 : index
    %c0_126 = arith.constant 0 : index
    %c0_127 = arith.constant 0 : index
    %118 = vector.load %arg6[%c4_125, %c0_126, %c0_127] : memref<9x256x256xbf16, #tpu.memory_space<vmem>>, vector<1x256x256xbf16>
    %119 = vector.shape_cast %118 : vector<1x256x256xbf16> to vector<256x256xbf16>
    %cst_128 = arith.constant dense<0.000000e+00> : vector<64x256xf32>
    %120 = tpu.matmul %117, %119, %cst_128 {dimension_numbers = #tpu.dot_dimension_numbers<[1], [0], [0], [1], [0, 0, 1, 1], [], []>} : vector<64x256xbf16>, vector<256x256xbf16>, vector<64x256xf32> -> vector<64x256xf32>
    %121 = arith.addf %115, %120 : vector<64x256xf32>
    %c1_129 = arith.constant 1 : index
    %c2_130 = arith.constant 2 : index
    %c0_131 = arith.constant 0 : index
    %122 = vector.load %arg10[%c1_129, %c2_130, %c0_131] : memref<10x10x256xbf16, #tpu.memory_space<vmem>>, vector<8x8x256xbf16>
    %123 = vector.shape_cast %122 : vector<8x8x256xbf16> to vector<64x256xbf16>
    %c5_132 = arith.constant 5 : index
    %c0_133 = arith.constant 0 : index
    %c0_134 = arith.constant 0 : index
    %124 = vector.load %arg6[%c5_132, %c0_133, %c0_134] : memref<9x256x256xbf16, #tpu.memory_space<vmem>>, vector<1x256x256xbf16>
    %125 = vector.shape_cast %124 : vector<1x256x256xbf16> to vector<256x256xbf16>
    %cst_135 = arith.constant dense<0.000000e+00> : vector<64x256xf32>
    %126 = tpu.matmul %123, %125, %cst_135 {dimension_numbers = #tpu.dot_dimension_numbers<[1], [0], [0], [1], [0, 0, 1, 1], [], []>} : vector<64x256xbf16>, vector<256x256xbf16>, vector<64x256xf32> -> vector<64x256xf32>
    %127 = arith.addf %121, %126 : vector<64x256xf32>
    %c2_136 = arith.constant 2 : index
    %c0_137 = arith.constant 0 : index
    %c0_138 = arith.constant 0 : index
    %128 = vector.load %arg10[%c2_136, %c0_137, %c0_138] : memref<10x10x256xbf16, #tpu.memory_space<vmem>>, vector<8x8x256xbf16>
    %129 = vector.shape_cast %128 : vector<8x8x256xbf16> to vector<64x256xbf16>
    %c6_139 = arith.constant 6 : index
    %c0_140 = arith.constant 0 : index
    %c0_141 = arith.constant 0 : index
    %130 = vector.load %arg6[%c6_139, %c0_140, %c0_141] : memref<9x256x256xbf16, #tpu.memory_space<vmem>>, vector<1x256x256xbf16>
    %131 = vector.shape_cast %130 : vector<1x256x256xbf16> to vector<256x256xbf16>
    %cst_142 = arith.constant dense<0.000000e+00> : vector<64x256xf32>
    %132 = tpu.matmul %129, %131, %cst_142 {dimension_numbers = #tpu.dot_dimension_numbers<[1], [0], [0], [1], [0, 0, 1, 1], [], []>} : vector<64x256xbf16>, vector<256x256xbf16>, vector<64x256xf32> -> vector<64x256xf32>
    %133 = arith.addf %127, %132 : vector<64x256xf32>
    %c2_143 = arith.constant 2 : index
    %c1_144 = arith.constant 1 : index
    %c0_145 = arith.constant 0 : index
    %134 = vector.load %arg10[%c2_143, %c1_144, %c0_145] : memref<10x10x256xbf16, #tpu.memory_space<vmem>>, vector<8x8x256xbf16>
    %135 = vector.shape_cast %134 : vector<8x8x256xbf16> to vector<64x256xbf16>
    %c7_146 = arith.constant 7 : index
    %c0_147 = arith.constant 0 : index
    %c0_148 = arith.constant 0 : index
    %136 = vector.load %arg6[%c7_146, %c0_147, %c0_148] : memref<9x256x256xbf16, #tpu.memory_space<vmem>>, vector<1x256x256xbf16>
    %137 = vector.shape_cast %136 : vector<1x256x256xbf16> to vector<256x256xbf16>
    %cst_149 = arith.constant dense<0.000000e+00> : vector<64x256xf32>
    %138 = tpu.matmul %135, %137, %cst_149 {dimension_numbers = #tpu.dot_dimension_numbers<[1], [0], [0], [1], [0, 0, 1, 1], [], []>} : vector<64x256xbf16>, vector<256x256xbf16>, vector<64x256xf32> -> vector<64x256xf32>
    %139 = arith.addf %133, %138 : vector<64x256xf32>
    %c2_150 = arith.constant 2 : index
    %c2_151 = arith.constant 2 : index
    %c0_152 = arith.constant 0 : index
    %140 = vector.load %arg10[%c2_150, %c2_151, %c0_152] : memref<10x10x256xbf16, #tpu.memory_space<vmem>>, vector<8x8x256xbf16>
    %141 = vector.shape_cast %140 : vector<8x8x256xbf16> to vector<64x256xbf16>
    %c8_153 = arith.constant 8 : index
    %c0_154 = arith.constant 0 : index
    %c0_155 = arith.constant 0 : index
    %142 = vector.load %arg6[%c8_153, %c0_154, %c0_155] : memref<9x256x256xbf16, #tpu.memory_space<vmem>>, vector<1x256x256xbf16>
    %143 = vector.shape_cast %142 : vector<1x256x256xbf16> to vector<256x256xbf16>
    %cst_156 = arith.constant dense<0.000000e+00> : vector<64x256xf32>
    %144 = tpu.matmul %141, %143, %cst_156 {dimension_numbers = #tpu.dot_dimension_numbers<[1], [0], [0], [1], [0, 0, 1, 1], [], []>} : vector<64x256xbf16>, vector<256x256xbf16>, vector<64x256xf32> -> vector<64x256xf32>
    %145 = arith.addf %139, %144 : vector<64x256xf32>
    %c0_157 = arith.constant 0 : index
    %c0_158 = arith.constant 0 : index
    %146 = vector.load %arg7[%c0_157, %c0_158] : memref<1x256xf32, #tpu.memory_space<vmem>>, vector<1x256xf32>
    %147 = vector.broadcast %146 : vector<1x256xf32> to vector<64x256xf32>
    %148 = arith.addf %145, %147 : vector<64x256xf32>
    %cst_159 = arith.constant 0.000000e+00 : f32
    %149 = vector.broadcast %cst_159 : f32 to vector<64x256xf32>
    %150 = arith.maximumf %148, %149 : vector<64x256xf32>
    %cst_160 = arith.constant dense<0.000000e+00> : vector<256xf32>
    %151 = vector.multi_reduction <add>, %150, %cst_160 [0] : vector<64x256xf32> to vector<256xf32>
    %152 = vector.shape_cast %151 : vector<256xf32> to vector<1x256xf32>
    %cst_161 = arith.constant 1.562500e-02 : f32
    %153 = vector.broadcast %cst_161 : f32 to vector<1x256xf32>
    %154 = arith.mulf %152, %153 : vector<1x256xf32>
    %155 = vector.shape_cast %154 : vector<1x256xf32> to vector<1x256xf32>
    %156 = vector.broadcast %155 : vector<1x256xf32> to vector<8x256xf32>
    %c0_162 = arith.constant 0 : index
    %c0_163 = arith.constant 0 : index
    %c0_164 = arith.constant 0 : index
    %157 = vector.load %arg8[%c0_162, %c0_163, %c0_164] : memref<1x8x256xf32, #tpu.memory_space<vmem>>, vector<1x8x256xf32>
    %158 = vector.shape_cast %157 : vector<1x8x256xf32> to vector<8x256xf32>
    %159 = vector.shape_cast %156 : vector<8x256xf32> to vector<1x8x256xf32>
    tpu.vector_store %arg8[%c0_162, %c0_163, %c0_164], %159 {strides = array<i32>} : memref<1x8x256xf32, #tpu.memory_space<vmem>>, vector<1x8x256xf32>,
    return
  }
  func.func @transform_0(%arg0: i32) -> (i32, i32, i32, i32) {
    %c0_i32 = arith.constant 0 : i32
    %c0_i32_0 = arith.constant 0 : i32
    %c0_i32_1 = arith.constant 0 : i32
    %c0_i32_2 = arith.constant 0 : i32
    return %arg0, %c0_i32, %c0_i32_0, %c0_i32_1 : i32, i32, i32, i32
  }
  func.func @transform_1(%arg0: i32) -> (i32, i32) {
    %c0_i32 = arith.constant 0 : i32
    %c0_i32_0 = arith.constant 0 : i32
    %c0_i32_1 = arith.constant 0 : i32
    return %c0_i32, %c0_i32_0 : i32, i32
  }
  func.func @transform_2(%arg0: i32) -> (i32, i32) {
    %c0_i32 = arith.constant 0 : i32
    %c0_i32_0 = arith.constant 0 : i32
    %c0_i32_1 = arith.constant 0 : i32
    return %c0_i32, %c0_i32_0 : i32, i32
  }
  func.func @transform_3(%arg0: i32) -> (i32, i32, i32) {
    %c0_i32 = arith.constant 0 : i32
    %c0_i32_0 = arith.constant 0 : i32
    %c0_i32_1 = arith.constant 0 : i32
    %c0_i32_2 = arith.constant 0 : i32
    return %c0_i32, %c0_i32_0, %c0_i32_1 : i32, i32, i32
  }
  func.func @transform_4(%arg0: i32) -> (i32, i32) {
    %c0_i32 = arith.constant 0 : i32
    %c0_i32_0 = arith.constant 0 : i32
    %c0_i32_1 = arith.constant 0 : i32
    return %c0_i32, %c0_i32_0 : i32, i32
  }
  func.func @transform_5(%arg0: i32) -> (i32, i32, i32) {
    %c0_i32 = arith.constant 0 : i32
    %c0_i32_0 = arith.constant 0 : i32
    %c0_i32_1 = arith.constant 0 : i32
    %c0_i32_2 = arith.constant 0 : i32
    return %c0_i32, %c0_i32_0, %c0_i32_1 : i32, i32, i32
  }
  func.func @transform_6(%arg0: i32) -> (i32, i32) {
    %c0_i32 = arith.constant 0 : i32
    %c0_i32_0 = arith.constant 0 : i32
    %c0_i32_1 = arith.constant 0 : i32
    return %c0_i32, %c0_i32_0 : i32, i32
  }
  func.func @transform_7(%arg0: i32) -> (i32, i32, i32) {
    %c0_i32 = arith.constant 0 : i32
    %c0_i32_0 = arith.constant 0 : i32
    %c0_i32_1 = arith.constant 0 : i32
    return %arg0, %c0_i32, %c0_i32_0 : i32, i32, i32
  }
}

</mosaic_0001>

<llo_original>
// kernel: tpu_custom_call.1
$region0: #{tpu_custom_call.1}
  #allocation0 [shape = 'u32[]', space=smem, size = 0x4, offset = 0x4, fixed_abs, tag = 'smem constant byte address 0x4 - core index']
  #allocation1 [shape = 'u32[144,128]{1,0:T(1,128)}', space=vmem, size = 0x12000, scoped, tag = 'internal scratch']
  #allocation2 [shape = 'bf16[10,10,512]{2,1,0:T(8,128)(2,1)}', space=vmem, size = 0x28000, scoped, tag = 'scratch operand']
  #allocation3 [shape = 'bf16[10,10,256]{2,1,0:T(8,128)(2,1)}', space=vmem, size = 0x14000, scoped, tag = 'scratch operand']
  %s0 = inlined_call_operand.hbm [shape: bf16[2,2,64,64], index: 0, kind: input, shape index: {}]
  %s1 = inlined_call_operand.hbm [shape: bf16[64,256], index: 1, kind: input, shape index: {}]
  %s2 = inlined_call_operand.hbm [shape: f32[1,256], index: 2, kind: input, shape index: {}]
  %s3 = inlined_call_operand.hbm [shape: bf16[9,512,256], index: 3, kind: input, shape index: {}]
  %s4 = inlined_call_operand.hbm [shape: f32[1,256], index: 4, kind: input, shape index: {}]
  %s5 = inlined_call_operand.hbm [shape: bf16[9,256,256], index: 5, kind: input, shape index: {}]
  %s6 = inlined_call_operand.hbm [shape: f32[1,256], index: 6, kind: input, shape index: {}]
  %s7 = inlined_call_operand.hbm [shape: f32[2,8,256], index: 7, kind: output, shape index: {}]
  %s8 = sld [smem:[#allocation0]]
  $region89: #{tpu_custom_call.1} parent=0
    _
  %s10 = ssub.s32 1, %s8
  %s11 = scalar_select 0, %s10, %s8
  $region1: #{tpu_custom_call.1} parent=0
    #allocation4 [shape = 'u8[65536]{0}', space=vmem, size = 0x10000, scoped, tag = 'input window, operand 0']
    #allocation5 [shape = 's32[2]{0}', space=sflag, size = 0x8, scoped, tag = 'scoped memory for tpu_custom_call.1']
    #allocation6 [shape = 's32[2]{0}', space=sflag, size = 0x8, scoped, tag = 'scoped memory for tpu_custom_call.1']
    #allocation7 [shape = 'u8[32768]{0}', space=vmem, size = 0x8000, scoped, tag = 'input window, operand 1, single buffered']
    #allocation8 [shape = 's32[1]{0}', space=sflag, size = 0x4, scoped, tag = 'scoped memory for tpu_custom_call.1']
    #allocation9 [shape = 'u8[1024]{0}', space=vmem, size = 0x400, scoped, tag = 'input window, operand 2, single buffered']
    #allocation10 [shape = 'u8[2359296]{0}', space=vmem, size = 0x240000, scoped, tag = 'input window, operand 3, single buffered']
    #allocation11 [shape = 's32[1]{0}', space=sflag, size = 0x4, scoped, tag = 'scoped memory for tpu_custom_call.1']
    #allocation12 [shape = 'u8[1024]{0}', space=vmem, size = 0x400, scoped, tag = 'input window, operand 4, single buffered']
    #allocation13 [shape = 'u8[1179648]{0}', space=vmem, size = 0x120000, scoped, tag = 'input window, operand 5, single buffered']
    #allocation14 [shape = 's32[1]{0}', space=sflag, size = 0x4, scoped, tag = 'scoped memory for tpu_custom_call.1']
    #allocation15 [shape = 'u8[1024]{0}', space=vmem, size = 0x400, scoped, tag = 'input window, operand 6, single buffered']
    #allocation16 [shape = 'u8[16384]{0}', space=vmem, size = 0x4000, scoped, tag = 'output window, operand 0']
    %12 = vsyncpa [#allocation5], 0
    %s13 = scalar_lea.sflag [#allocation5], 1
    %14 = vsyncpa %s13, 0
    %15 = vsyncpa [#allocation8], 0
    %16 = vsyncpa [#allocation11], 0
    %17 = vsyncpa [#allocation14], 0
    %18 = vsyncpa [#allocation6], 0
    %s19 = scalar_lea.sflag [#allocation6], 1
    %20 = vsyncpa %s19, 0
    loop: start=0, step=1, limit=4
    $region2: #{tpu_custom_call.1} parent=1 // loop_pre_header
      _
    $region3: #{tpu_custom_call.1} parent=1 // loop_header
      %s22 = sphi 0, %s26
      %p23 = scmp.ge.s32.totalorder %s22, 4
      %s32 = sphi 0, %s34
      %s35 = sphi 0, %s32
      %s36 = sphi 0, %s35
      %s52 = sphi 0, %s36
      %s56 = sphi 0, %s56
      %s58 = sphi 0, %s56
      %s59 = sphi 0, %s58
      %s73 = sphi 0, %s59
      %s77 = sphi 0, %s77
      %s79 = sphi 0, %s77
      %s80 = sphi 0, %s79
      %s94 = sphi 0, %s80
      %s98 = sphi 0, %s98
      %s100 = sphi 0, %s98
      %s101 = sphi 0, %s100
      %s115 = sphi 0, %s101
      %s119 = sphi 0, %s119
      %s121 = sphi 0, %s119
      %s122 = sphi 0, %s121
      %s136 = sphi 0, %s122
      %s140 = sphi 0, %s140
      %s142 = sphi 0, %s140
      %s143 = sphi 0, %s142
      %s157 = sphi 0, %s143
      %s161 = sphi 0, %s161
      %s163 = sphi 0, %s161
      %s164 = sphi 0, %s163
      %s178 = sphi 0, %s164
      %s184 = sphi 0, %s186
      %s187 = sphi 0, %s184
      %s188 = sphi 0, %s187
      %s204 = sphi 0, %s188
    $region4: #{tpu_custom_call.1} parent=1 // loop_header_branch
      %25 = sbr.rel (%p23) target = $region8
    $region5: #{tpu_custom_call.1} parent=1 // loop_body
      %s27 = ssub.s32 %s22, 1
      %s28 = ssub.s32 %s22, 2
      %s29 = sadd.s32 %s22, 1
      %s30 = ssub.s32 %s22, %s29
      %p31 = scmp.eq.s32.totalorder %s30, 0
      %s33 = sadd.s32 %s32, 1
      %s34 = scalar_select %p31, %s32, %s33
      %p37 = pneg %p31
      %p38 = scmp.eq.s32.totalorder %s22, 1
      %p39 = por %p37, %p38
      %p40 = scmp.ne.s32.totalorder %s32, %s35
      %p41 = scmp.eq.s32.totalorder %s22, 0
      %p42 = por %p40, %p41
      %p43 = scmp.ne.s32.totalorder %s32, %s35
      %p44 = scmp.eq.s32.totalorder %s27, 1
      %p45 = por %p43, %p44
      %p46 = scmp.ne.s32.totalorder %s35, %s36
      %p47 = scmp.eq.s32.totalorder %s27, 0
      %p48 = por %p46, %p47
      %p49 = scmp.ne.s32.totalorder %s35, %s36
      %p50 = scmp.eq.s32.totalorder %s28, 1
      %p51 = por %p49, %p50
      %p53 = scmp.ne.s32.totalorder %s36, %s52
      %p54 = scmp.eq.s32.totalorder %s28, 0
      %p55 = por %p53, %p54
      %s57 = sadd.s32 %s56, 1
      %p60 = scmp.eq.s32.totalorder %s22, 1
      %p61 = scmp.ne.s32.totalorder %s56, %s58
      %p62 = scmp.eq.s32.totalorder %s22, 0
      %p63 = por %p61, %p62
      %p64 = scmp.ne.s32.totalorder %s56, %s58
      %p65 = scmp.eq.s32.totalorder %s27, 1
      %p66 = por %p64, %p65
      %p67 = scmp.ne.s32.totalorder %s58, %s59
      %p68 = scmp.eq.s32.totalorder %s27, 0
      %p69 = por %p67, %p68
      %p70 = scmp.ne.s32.totalorder %s58, %s59
      %p71 = scmp.eq.s32.totalorder %s28, 1
      %p72 = por %p70, %p71
      %p74 = scmp.ne.s32.totalorder %s59, %s73
      %p75 = scmp.eq.s32.totalorder %s28, 0
      %p76 = por %p74, %p75
      %s78 = sadd.s32 %s77, 1
      %p81 = scmp.eq.s32.totalorder %s22, 1
      %p82 = scmp.ne.s32.totalorder %s77, %s79
      %p83 = scmp.eq.s32.totalorder %s22, 0
      %p84 = por %p82, %p83
      %p85 = scmp.ne.s32.totalorder %s77, %s79
      %p86 = scmp.eq.s32.totalorder %s27, 1
      %p87 = por %p85, %p86
      %p88 = scmp.ne.s32.totalorder %s79, %s80
      %p89 = scmp.eq.s32.totalorder %s27, 0
      %p90 = por %p88, %p89
      %p91 = scmp.ne.s32.totalorder %s79, %s80
      %p92 = scmp.eq.s32.totalorder %s28, 1
      %p93 = por %p91, %p92
      %p95 = scmp.ne.s32.totalorder %s80, %s94
      %p96 = scmp.eq.s32.totalorder %s28, 0
      %p97 = por %p95, %p96
      %s99 = sadd.s32 %s98, 1
      %p102 = scmp.eq.s32.totalorder %s22, 1
      %p103 = scmp.ne.s32.totalorder %s98, %s100
      %p104 = scmp.eq.s32.totalorder %s22, 0
      %p105 = por %p103, %p104
      %p106 = scmp.ne.s32.totalorder %s98, %s100
      %p107 = scmp.eq.s32.totalorder %s27, 1
      %p108 = por %p106, %p107
      %p109 = scmp.ne.s32.totalorder %s100, %s101
      %p110 = scmp.eq.s32.totalorder %s27, 0
      %p111 = por %p109, %p110
      %p112 = scmp.ne.s32.totalorder %s100, %s101
      %p113 = scmp.eq.s32.totalorder %s28, 1
      %p114 = por %p112, %p113
      %p116 = scmp.ne.s32.totalorder %s101, %s115
      %p117 = scmp.eq.s32.totalorder %s28, 0
      %p118 = por %p116, %p117
      %s120 = sadd.s32 %s119, 1
      %p123 = scmp.eq.s32.totalorder %s22, 1
      %p124 = scmp.ne.s32.totalorder %s119, %s121
      %p125 = scmp.eq.s32.totalorder %s22, 0
      %p126 = por %p124, %p125
      %p127 = scmp.ne.s32.totalorder %s119, %s121
      %p128 = scmp.eq.s32.totalorder %s27, 1
      %p129 = por %p127, %p128
      %p130 = scmp.ne.s32.totalorder %s121, %s122
      %p131 = scmp.eq.s32.totalorder %s27, 0
      %p132 = por %p130, %p131
      %p133 = scmp.ne.s32.totalorder %s121, %s122
      %p134 = scmp.eq.s32.totalorder %s28, 1
      %p135 = por %p133, %p134
      %p137 = scmp.ne.s32.totalorder %s122, %s136
      %p138 = scmp.eq.s32.totalorder %s28, 0
      %p139 = por %p137, %p138
      %s141 = sadd.s32 %s140, 1
      %p144 = scmp.eq.s32.totalorder %s22, 1
      %p145 = scmp.ne.s32.totalorder %s140, %s142
      %p146 = scmp.eq.s32.totalorder %s22, 0
      %p147 = por %p145, %p146
      %p148 = scmp.ne.s32.totalorder %s140, %s142
      %p149 = scmp.eq.s32.totalorder %s27, 1
      %p150 = por %p148, %p149
      %p151 = scmp.ne.s32.totalorder %s142, %s143
      %p152 = scmp.eq.s32.totalorder %s27, 0
      %p153 = por %p151, %p152
      %p154 = scmp.ne.s32.totalorder %s142, %s143
      %p155 = scmp.eq.s32.totalorder %s28, 1
      %p156 = por %p154, %p155
      %p158 = scmp.ne.s32.totalorder %s143, %s157
      %p159 = scmp.eq.s32.totalorder %s28, 0
      %p160 = por %p158, %p159
      %s162 = sadd.s32 %s161, 1
      %p165 = scmp.eq.s32.totalorder %s22, 1
      %p166 = scmp.ne.s32.totalorder %s161, %s163
      %p167 = scmp.eq.s32.totalorder %s22, 0
      %p168 = por %p166, %p167
      %p169 = scmp.ne.s32.totalorder %s161, %s163
      %p170 = scmp.eq.s32.totalorder %s27, 1
      %p171 = por %p169, %p170
      %p172 = scmp.ne.s32.totalorder %s163, %s164
      %p173 = scmp.eq.s32.totalorder %s27, 0
      %p174 = por %p172, %p173
      %p175 = scmp.ne.s32.totalorder %s163, %s164
      %p176 = scmp.eq.s32.totalorder %s28, 1
      %p177 = por %p175, %p176
      %p179 = scmp.ne.s32.totalorder %s164, %s178
      %p180 = scmp.eq.s32.totalorder %s28, 0
      %p181 = por %p179, %p180
      %s182 = ssub.s32 %s22, %s29
      %p183 = scmp.eq.s32.totalorder %s182, 0
      %s185 = sadd.s32 %s184, 1
      %s186 = scalar_select %p183, %s184, %s185
      %p189 = pneg %p183
      %p190 = scmp.eq.s32.totalorder %s22, 1
      %p191 = por %p189, %p190
      %p192 = scmp.ne.s32.totalorder %s184, %s187
      %p193 = scmp.eq.s32.totalorder %s22, 0
      %p194 = por %p192, %p193
      %p195 = scmp.ne.s32.totalorder %s184, %s187
      %p196 = scmp.eq.s32.totalorder %s27, 1
      %p197 = por %p195, %p196
      %p198 = scmp.ne.s32.totalorder %s187, %s188
      %p199 = scmp.eq.s32.totalorder %s27, 0
      %p200 = por %p198, %p199
      %p201 = scmp.ne.s32.totalorder %s187, %s188
      %p202 = scmp.eq.s32.totalorder %s28, 1
      %p203 = por %p201, %p202
      %p205 = scmp.ne.s32.totalorder %s188, %s204
      %p206 = scmp.eq.s32.totalorder %s28, 0
      %p207 = por %p205, %p206
      %p208 = scmp.le.s32.totalorder 1, %s22
      %p209 = scmp.lt.s32.totalorder %s22, 3
      %p210 = pnand %p208, %p209
      %p211 = pneg %p210
      // Predicated region
      $region9: #{tpu_custom_call.1} parent=5 // pred_check
        _
      $region10: #{tpu_custom_call.1} parent=5 // pred_check_branch
        %213 = sbr.rel (%p210) target = $region12
      $region11: #{tpu_custom_call.1} parent=5 // pred_region
        %s214 = ssub.s32 %s22, 1
        // Predicated region
        $region13: #{tpu_custom_call.1} parent=11 // pred_check
          %p215 = pneg %p69
        $region14: #{tpu_custom_call.1} parent=11 // pred_check_branch
          %217 = sbr.rel (%p215) target = $region16
        $region15: #{tpu_custom_call.1} parent=11 // pred_region
          %s219 = ssub.s32 1024, 1024
          %220 = vsyncadd [#allocation8], %s219
          %s221 = sshll.u32 [#allocation7], 4
          %s222 = int_to_ptr.vmem [resolvable:$true] %s221
          %227 = dma.hbm_to_vmem [thread:$0]  %s1, 1024, %s222, [#allocation8], 128, 128, 8
        $region16: #{tpu_custom_call.1} parent=11 // pred_fallthru
          _
        // Predicated region
        $region17: #{tpu_custom_call.1} parent=11 // pred_check
          %p228 = pneg %p90
        $region18: #{tpu_custom_call.1} parent=11 // pred_check_branch
          %230 = sbr.rel (%p228) target = $region20
        $region19: #{tpu_custom_call.1} parent=11 // pred_region
          %s232 = ssub.s32 32, 32
          %233 = vsyncadd [#allocation8], %s232
          %s235 = sshll.u32 [#allocation9], 4
          %s236 = int_to_ptr.vmem [resolvable:$true] %s235
          %238 = dma.hbm_to_vmem [thread:$0]  %s2, 32, %s236, [#allocation8]
        $region20: #{tpu_custom_call.1} parent=11 // pred_fallthru
          _
        // Predicated region
        $region21: #{tpu_custom_call.1} parent=11 // pred_check
          %p239 = pneg %p111
        $region22: #{tpu_custom_call.1} parent=11 // pred_check_branch
          %241 = sbr.rel (%p239) target = $region24
        $region23: #{tpu_custom_call.1} parent=11 // pred_region
          %s243 = ssub.s32 73728, 73728
          %244 = vsyncadd [#allocation11], %s243
          %s245 = sshll.u32 [#allocation10], 4
          %s246 = int_to_ptr.vmem [resolvable:$true] %s245
          %251 = dma.hbm_to_vmem [thread:$0]  %s3, 73728, %s246, [#allocation11], 128, 128, 8
        $region24: #{tpu_custom_call.1} parent=11 // pred_fallthru
          _
        // Predicated region
        $region25: #{tpu_custom_call.1} parent=11 // pred_check
          %p252 = pneg %p132
        $region26: #{tpu_custom_call.1} parent=11 // pred_check_branch
          %254 = sbr.rel (%p252) target = $region28
        $region27: #{tpu_custom_call.1} parent=11 // pred_region
          %s256 = ssub.s32 32, 32
          %257 = vsyncadd [#allocation11], %s256
          %s259 = sshll.u32 [#allocation12], 4
          %s260 = int_to_ptr.vmem [resolvable:$true] %s259
          %262 = dma.hbm_to_vmem [thread:$0]  %s4, 32, %s260, [#allocation11]
        $region28: #{tpu_custom_call.1} parent=11 // pred_fallthru
          _
        // Predicated region
        $region29: #{tpu_custom_call.1} parent=11 // pred_check
          %p263 = pneg %p153
        $region30: #{tpu_custom_call.1} parent=11 // pred_check_branch
          %265 = sbr.rel (%p263) target = $region32
        $region31: #{tpu_custom_call.1} parent=11 // pred_region
          %s267 = ssub.s32 36864, 36864
          %268 = vsyncadd [#allocation14], %s267
          %s269 = sshll.u32 [#allocation13], 4
          %s270 = int_to_ptr.vmem [resolvable:$true] %s269
          %275 = dma.hbm_to_vmem [thread:$0]  %s5, 36864, %s270, [#allocation14], 128, 128, 8
        $region32: #{tpu_custom_call.1} parent=11 // pred_fallthru
          _
        // Predicated region
        $region33: #{tpu_custom_call.1} parent=11 // pred_check
          %p276 = pneg %p174
        $region34: #{tpu_custom_call.1} parent=11 // pred_check_branch
          %278 = sbr.rel (%p276) target = $region36
        $region35: #{tpu_custom_call.1} parent=11 // pred_region
          %s280 = ssub.s32 32, 32
          %281 = vsyncadd [#allocation14], %s280
          %s283 = sshll.u32 [#allocation15], 4
          %s284 = int_to_ptr.vmem [resolvable:$true] %s283
          %286 = dma.hbm_to_vmem [thread:$0]  %s6, 32, %s284, [#allocation14]
        $region36: #{tpu_custom_call.1} parent=11 // pred_fallthru
          _
      $region12: #{tpu_custom_call.1} parent=5 // pred_fallthru
        _
      %p287 = scmp.lt.s32.totalorder %s22, 2
      // Predicated region
      $region37: #{tpu_custom_call.1} parent=5 // pred_check
        %p288 = pneg %p287
      $region38: #{tpu_custom_call.1} parent=5 // pred_check_branch
        %290 = sbr.rel (%p288) target = $region40
      $region39: #{tpu_custom_call.1} parent=5 // pred_region
        // Predicated region
        $region41: #{tpu_custom_call.1} parent=39 // pred_check
          %p291 = pneg %p42
        $region42: #{tpu_custom_call.1} parent=39 // pred_check_branch
          %293 = sbr.rel (%p291) target = $region44
        $region43: #{tpu_custom_call.1} parent=39 // pred_region
          %s294 = sand.u32 %s32, 1
          %s295 = scalar_lea.sflag [#allocation5], %s294
          %s296 = sand.u32 %s32, 1
          %s297 = smul.addr %s296, 64
          %s298 = scalar_lea.vmem [#allocation4], %s297
          %s300 = ssub.s32 1024, 1024
          %301 = vsyncadd %s295, %s300
          %s302 = smul.addr %s22, 16
          %s303 = smul.addr %s302, 64
          %s304 = scalar_lea.hbm %s0, %s303
          %s305 = sshll.u32 %s298, 4
          %s306 = int_to_ptr.vmem [resolvable:$true] %s305
          %311 = dma.hbm_to_vmem [thread:$0]  %s304, 1024, %s306, %s295, 64, 64, 4
        $region44: #{tpu_custom_call.1} parent=39 // pred_fallthru
          _
      $region40: #{tpu_custom_call.1} parent=5 // pred_fallthru
        _
      %p312 = scmp.le.s32.totalorder 1, %s22
      %p313 = scmp.lt.s32.totalorder %s22, 3
      %p314 = pnand %p312, %p313
      %p315 = pneg %p314
      // Predicated region
      $region45: #{tpu_custom_call.1} parent=5 // pred_check
        _
      $region46: #{tpu_custom_call.1} parent=5 // pred_check_branch
        %317 = sbr.rel (%p314) target = $region48
      $region47: #{tpu_custom_call.1} parent=5 // pred_region
        %s318 = ssub.s32 %s22, 1
        %s319 = sand.u32 %s35, 1
        %s320 = scalar_lea.sflag [#allocation5], %s319
        %s321 = sand.u32 %s35, 1
        %s322 = smul.addr %s321, 64
        %s323 = scalar_lea.vmem [#allocation4], %s322
        // Predicated region
        $region49: #{tpu_custom_call.1} parent=47 // pred_check
          %p324 = pneg %p48
        $region50: #{tpu_custom_call.1} parent=47 // pred_check_branch
          %326 = sbr.rel (%p324) target = $region52
        $region51: #{tpu_custom_call.1} parent=47 // pred_region
          %327 = dma.done %s320, 1024
        $region52: #{tpu_custom_call.1} parent=47 // pred_fallthru
          _
        // Predicated region
        $region53: #{tpu_custom_call.1} parent=47 // pred_check
          %p328 = pneg %p69
        $region54: #{tpu_custom_call.1} parent=47 // pred_check_branch
          %330 = sbr.rel (%p328) target = $region56
        $region55: #{tpu_custom_call.1} parent=47 // pred_region
          %331 = dma.done [#allocation8], 1024
        $region56: #{tpu_custom_call.1} parent=47 // pred_fallthru
          _
        // Predicated region
        $region57: #{tpu_custom_call.1} parent=47 // pred_check
          %p332 = pneg %p90
        $region58: #{tpu_custom_call.1} parent=47 // pred_check_branch
          %334 = sbr.rel (%p332) target = $region60
        $region59: #{tpu_custom_call.1} parent=47 // pred_region
          %335 = dma.done [#allocation8], 32
        $region60: #{tpu_custom_call.1} parent=47 // pred_fallthru
          _
        // Predicated region
        $region61: #{tpu_custom_call.1} parent=47 // pred_check
          %p336 = pneg %p111
        $region62: #{tpu_custom_call.1} parent=47 // pred_check_branch
          %338 = sbr.rel (%p336) target = $region64
        $region63: #{tpu_custom_call.1} parent=47 // pred_region
          %339 = dma.done [#allocation11], 73728
        $region64: #{tpu_custom_call.1} parent=47 // pred_fallthru
          _
        // Predicated region
        $region65: #{tpu_custom_call.1} parent=47 // pred_check
          %p340 = pneg %p132
        $region66: #{tpu_custom_call.1} parent=47 // pred_check_branch
          %342 = sbr.rel (%p340) target = $region68
        $region67: #{tpu_custom_call.1} parent=47 // pred_region
          %343 = dma.done [#allocation11], 32
        $region68: #{tpu_custom_call.1} parent=47 // pred_fallthru
          _
        // Predicated region
        $region69: #{tpu_custom_call.1} parent=47 // pred_check
          %p344 = pneg %p153
        $region70: #{tpu_custom_call.1} parent=47 // pred_check_branch
          %346 = sbr.rel (%p344) target = $region72
        $region71: #{tpu_custom_call.1} parent=47 // pred_region
          %347 = dma.done [#allocation14], 36864
        $region72: #{tpu_custom_call.1} parent=47 // pred_fallthru
          _
        // Predicated region
        $region73: #{tpu_custom_call.1} parent=47 // pred_check
          %p348 = pneg %p174
        $region74: #{tpu_custom_call.1} parent=47 // pred_check_branch
          %350 = sbr.rel (%p348) target = $region76
        $region75: #{tpu_custom_call.1} parent=47 // pred_region
          %351 = dma.done [#allocation14], 32
        $region76: #{tpu_custom_call.1} parent=47 // pred_fallthru
          _
        %s352 = sand.u32 %s35, 1
        %s353 = scalar_lea.sflag [#allocation5], %s352
        %s354 = sand.u32 %s35, 1
        %s355 = smul.addr %s354, 64
        %s356 = scalar_lea.vmem [#allocation4], %s355
        %p357 = pneg %p48
        %p358 = pneg %p45
        %p359 = pneg %p69
        %p360 = pneg %p66
        %p361 = pneg %p90
        %p362 = pneg %p87
        %p363 = pneg %p111
        %p364 = pneg %p108
        %p365 = pneg %p132
        %p366 = pneg %p129
        %p367 = pneg %p153
        %p368 = pneg %p150
        %p369 = pneg %p174
        %p370 = pneg %p171
        %p371 = pneg %p200
        %p372 = pneg %p197
        %s373 = sand.u32 %s187, 1
        %s374 = scalar_lea.sflag [#allocation6], %s373
        %s375 = sand.u32 %s187, 1
        %s376 = smul.addr %s375, 16
        %s377 = scalar_lea.vmem [#allocation16], %s376
        %379 = vst [vmem:[#allocation2] sm:$0xff] 0
        %380 = vst [vmem:[#allocation2 + $0x8] sm:$0xff] 0
        %381 = vst [vmem:[#allocation2 + $0x10] sm:$0x11] 0
        %382 = vst [vmem:[#allocation2 + $0x18] sm:$0x11] 0
        %383 = vst [vmem:[#allocation2 + $0x20] sm:$0xff] 0
        %384 = vst [vmem:[#allocation2 + $0x28] sm:$0xff] 0
        %385 = vst [vmem:[#allocation2 + $0x30] sm:$0x11] 0
        %386 = vst [vmem:[#allocation2 + $0x38] sm:$0x11] 0
        %387 = vst [vmem:[#allocation2 + $0x40] sm:$0xff] 0
        %388 = vst [vmem:[#allocation2 + $0x48] sm:$0xff] 0
        %389 = vst [vmem:[#allocation2 + $0x50] sm:$0x11] 0
        %390 = vst [vmem:[#allocation2 + $0x58] sm:$0x11] 0
        %391 = vst [vmem:[#allocation2 + $0x60] sm:$0xff] 0
        %392 = vst [vmem:[#allocation2 + $0x68] sm:$0xff] 0
        %393 = vst [vmem:[#allocation2 + $0x70] sm:$0x11] 0
        %394 = vst [vmem:[#allocation2 + $0x78] sm:$0x11] 0
        %395 = vst [vmem:[#allocation2 + $0x80] sm:$0xff] 0
        %396 = vst [vmem:[#allocation2 + $0x88] sm:$0xff] 0
        %397 = vst [vmem:[#allocation2 + $0x90] sm:$0x11] 0
        %398 = vst [vmem:[#allocation2 + $0x98] sm:$0x11] 0
        %399 = vst [vmem:[#allocation2 + $0xa0] sm:$0xff] 0
        %400 = vst [vmem:[#allocation2 + $0xa8] sm:$0xff] 0
        %401 = vst [vmem:[#allocation2 + $0xb0] sm:$0x11] 0
        %402 = vst [vmem:[#allocation2 + $0xb8] sm:$0x11] 0
        %403 = vst [vmem:[#allocation2 + $0xc0] sm:$0xff] 0
        %404 = vst [vmem:[#allocation2 + $0xc8] sm:$0xff] 0
        %405 = vst [vmem:[#allocation2 + $0xd0] sm:$0x11] 0
        %406 = vst [vmem:[#allocation2 + $0xd8] sm:$0x11] 0
        %407 = vst [vmem:[#allocation2 + $0xe0] sm:$0xff] 0
        %408 = vst [vmem:[#allocation2 + $0xe8] sm:$0xff] 0
        %409 = vst [vmem:[#allocation2 + $0xf0] sm:$0x11] 0
        %410 = vst [vmem:[#allocation2 + $0xf8] sm:$0x11] 0
        %411 = vst [vmem:[#allocation2 + $0x100] sm:$0xff] 0
        %412 = vst [vmem:[#allocation2 + $0x108] sm:$0xff] 0
        %413 = vst [vmem:[#allocation2 + $0x110] sm:$0x11] 0
        %414 = vst [vmem:[#allocation2 + $0x118] sm:$0x11] 0
        %415 = vst [vmem:[#allocation2 + $0x120] sm:$0xff] 0
        %416 = vst [vmem:[#allocation2 + $0x128] sm:$0xff] 0
        %417 = vst [vmem:[#allocation2 + $0x130] sm:$0x11] 0
        %418 = vst [vmem:[#allocation2 + $0x138] sm:$0x11] 0
        %419 = vst [vmem:[#allocation3] sm:$0xff] 0
        %420 = vst [vmem:[#allocation3 + $0x8] sm:$0x11] 0
        %421 = vst [vmem:[#allocation3 + $0x10] sm:$0xff] 0
        %422 = vst [vmem:[#allocation3 + $0x18] sm:$0x11] 0
        %423 = vst [vmem:[#allocation3 + $0x20] sm:$0xff] 0
        %424 = vst [vmem:[#allocation3 + $0x28] sm:$0x11] 0
        %425 = vst [vmem:[#allocation3 + $0x30] sm:$0xff] 0
        %426 = vst [vmem:[#allocation3 + $0x38] sm:$0x11] 0
        %427 = vst [vmem:[#allocation3 + $0x40] sm:$0xff] 0
        %428 = vst [vmem:[#allocation3 + $0x48] sm:$0x11] 0
        %429 = vst [vmem:[#allocation3 + $0x50] sm:$0xff] 0
        %430 = vst [vmem:[#allocation3 + $0x58] sm:$0x11] 0
        %431 = vst [vmem:[#allocation3 + $0x60] sm:$0xff] 0
        %432 = vst [vmem:[#allocation3 + $0x68] sm:$0x11] 0
        %433 = vst [vmem:[#allocation3 + $0x70] sm:$0xff] 0
        %434 = vst [vmem:[#allocation3 + $0x78] sm:$0x11] 0
        %435 = vst [vmem:[#allocation3 + $0x80] sm:$0xff] 0
        %436 = vst [vmem:[#allocation3 + $0x88] sm:$0x11] 0
        %437 = vst [vmem:[#allocation3 + $0x90] sm:$0xff] 0
        %438 = vst [vmem:[#allocation3 + $0x98] sm:$0x11] 0
        %v439 = vld [vmem:[%s323] sm:$0xf]
        %v440 = vld [vmem:[%s323 + $0x4] sm:$0xf]
        %v441 = vld [vmem:[%s323 + $0x8] sm:$0xf]
        %v442 = vld [vmem:[%s323 + $0xc] sm:$0xf]
        %v443 = vld [vmem:[%s323 + $0x10] sm:$0xf]
        %v444 = vld [vmem:[%s323 + $0x14] sm:$0xf]
        %v445 = vld [vmem:[%s323 + $0x18] sm:$0xf]
        %v446 = vld [vmem:[%s323 + $0x1c] sm:$0xf]
        %v447 = vld [vmem:[#allocation7] sm:$0xff]
        %v448 = vld [vmem:[#allocation7 + $0x8] sm:$0xff]
        %v449 = vld [vmem:[#allocation7 + $0x10] sm:$0xff]
        %v450 = vld [vmem:[#allocation7 + $0x18] sm:$0xff]
        %v451 = vld [vmem:[#allocation7 + $0x20] sm:$0xff]
        %v452 = vld [vmem:[#allocation7 + $0x28] sm:$0xff]
        %v453 = vld [vmem:[#allocation7 + $0x30] sm:$0xff]
        %v454 = vld [vmem:[#allocation7 + $0x38] sm:$0xff]
        %v455 = vld [vmem:[#allocation9] sm:$0x3]
        %v457 = vlaneseq
        %v458 = vshrl.u32 %v457, 7
        %v459 = vsub.s32 0, %v458
        %v460 = vrot.slane %v455, %v459
        %v461 = vlaneseq
        %v462 = vshrl.u32 %v461, 7
        %v463 = vsub.s32 1, %v462
        %v464 = vrot.slane %v455, %v463
        %v475 = vunpack.c.l.b16 %v439
        %v476 = vunpack.c.l.b16 %v440
        %v477 = vunpack.c.l.b16 %v441
        %v478 = vunpack.c.l.b16 %v442
        %v479 = vunpack.c.l.b16 %v443
        %v480 = vunpack.c.l.b16 %v444
        %v481 = vunpack.c.l.b16 %v445
        %v482 = vunpack.c.l.b16 %v446
        %v483 = vpack.c.b16 %v476, %v475
        %v484 = vpack.c.b16 %v478, %v477
        %v485 = vpack.c.b16 %v480, %v479
        %v486 = vpack.c.b16 %v482, %v481
        %v495 = vunpack.c.l.b16 %v447
        %v496 = vunpack.c.h.b16 %v447
        %v497 = vunpack.c.l.b16 %v448
        %v498 = vunpack.c.h.b16 %v448
        %v499 = vunpack.c.l.b16 %v449
        %v500 = vunpack.c.h.b16 %v449
        %v501 = vunpack.c.l.b16 %v450
        %v502 = vunpack.c.h.b16 %v450
        %v503 = vunpack.c.l.b16 %v451
        %v504 = vunpack.c.h.b16 %v451
        %v505 = vunpack.c.l.b16 %v452
        %v506 = vunpack.c.h.b16 %v452
        %v507 = vunpack.c.l.b16 %v453
        %v508 = vunpack.c.h.b16 %v453
        %v509 = vunpack.c.l.b16 %v454
        %v510 = vunpack.c.h.b16 %v454
        %v511 = vpack.c.b16 %v497, %v495
        %v512 = vpack.c.b16 %v498, %v496
        %v513 = vpack.c.b16 %v501, %v499
        %v514 = vpack.c.b16 %v502, %v500
        %v515 = vpack.c.b16 %v505, %v503
        %v516 = vpack.c.b16 %v506, %v504
        %v517 = vpack.c.b16 %v509, %v507
        %v518 = vpack.c.b16 %v510, %v508
        %vm527 = vcmask 523264
        %v529 = vsel %vm527, %v483, 0
        %v532 = vsel %vm527, %v484, 0
        %v535 = vsel %vm527, %v485, 0
        %v538 = vsel %vm527, %v486, 0
        %540 = vmatprep.subr.bf16.mxu0 %v512
        %541 = vmatpush1.bf16.msra.mxu0 %v511
        %542 = vmatprep.subr.bf16.mxu0 %v514
        %543 = vmatpush1.bf16.msra.mxu0 %v513
        %544 = vmatprep.subr.bf16.mxu0 %v516
        %545 = vmatpush1.bf16.msra.mxu0 %v515
        %546 = vmatprep.subr.bf16.mxu0 %v518
        %547 = vmatpush1.bf16.msra.mxu0 %v517
        %548 = vmatprep.subr.bf16.mxu0 0
        %549 = vmatpush1.bf16.msra.mxu0 0
        %550 = vmatprep.subr.bf16.mxu0 0
        %551 = vmatpush1.bf16.msra.mxu0 0
        %552 = vmatprep.subr.bf16.mxu0 0
        %553 = vmatpush1.bf16.msra.mxu0 0
        %554 = vmatprep.subr.bf16.mxu0 0
        %555 = vmatpush1.bf16.msra.mxu0 0
        %556 = vmatprep.subr.bf16.mxu0 0
        %557 = vmatpush1.bf16.msra.mxu0 0
        %558 = vmatprep.subr.bf16.mxu0 0
        %559 = vmatpush1.bf16.msra.mxu0 0
        %560 = vmatprep.subr.bf16.mxu0 0
        %561 = vmatpush1.bf16.msra.mxu0 0
        %562 = vmatprep.subr.bf16.mxu0 0
        %563 = vmatpush1.bf16.msra.mxu0 0
        %564 = vmatprep.subr.bf16.mxu0 0
        %565 = vmatpush1.bf16.msra.mxu0 0
        %566 = vmatprep.subr.bf16.mxu0 0
        %567 = vmatpush1.bf16.msra.mxu0 0
        %568 = vmatprep.subr.bf16.mxu0 0
        %569 = vmatpush1.bf16.msra.mxu0 0
        %570 = vmatprep.subr.bf16.mxu0 0
        %571 = vmatpush1.bf16.msra.mxu0 0
        %572 = vmatprep.mubr.bf16.mxu0 0
        %573 = vmatmul.mubr.bf16.gmra.mrb[0].mxu0 %v529
        %v574 = vpop.f32.mrb[0].mxu0
        %v575 = vadd.f32 %v460, %v574
        %v576 = vpop.f32.mrb[0].mxu0
        %v577 = vadd.f32 %v464, %v576
        %v578 = vpop.f32.mrb[0].mxu0
        %v579 = vadd.f32 %v460, %v578
        %v580 = vpop.f32.mrb[0].mxu0
        %v581 = vadd.f32 %v464, %v580
        %582 = vmatprep.mubr.bf16.mxu0 0
        %583 = vmatmul.mubr.bf16.gmra.mrb[0].mxu0 %v532
        %v584 = vpop.f32.mrb[0].mxu0
        %v585 = vadd.f32 %v460, %v584
        %v586 = vpop.f32.mrb[0].mxu0
        %v587 = vadd.f32 %v464, %v586
        %v588 = vpop.f32.mrb[0].mxu0
        %v589 = vadd.f32 %v460, %v588
        %v590 = vpop.f32.mrb[0].mxu0
        %v591 = vadd.f32 %v464, %v590
        %592 = vmatprep.mubr.bf16.mxu0 0
        %593 = vmatmul.mubr.bf16.gmra.mrb[0].mxu0 %v535
        %v594 = vpop.f32.mrb[0].mxu0
        %v595 = vadd.f32 %v460, %v594
        %v596 = vpop.f32.mrb[0].mxu0
        %v597 = vadd.f32 %v464, %v596
        %v598 = vpop.f32.mrb[0].mxu0
        %v599 = vadd.f32 %v460, %v598
        %v600 = vpop.f32.mrb[0].mxu0
        %v601 = vadd.f32 %v464, %v600
        %602 = vmatprep.mubr.bf16.mxu0 0
        %603 = vmatmul.mubr.bf16.gmra.mrb[0].mxu0 %v538
        %v604 = vpop.f32.mrb[0].mxu0
        %v605 = vadd.f32 %v460, %v604
        %v606 = vpop.f32.mrb[0].mxu0
        %v607 = vadd.f32 %v464, %v606
        %v608 = vpop.f32.mrb[0].mxu0
        %v609 = vadd.f32 %v460, %v608
        %v610 = vpop.f32.mrb[0].mxu0
        %v611 = vadd.f32 %v464, %v610
        %612 = vdwg.mxu0
        %v613 = vmax.f32 %v575, 0.0
        %v614 = vmax.f32 %v577, 0.0
        %v615 = vmax.f32 %v579, 0.0
        %v616 = vmax.f32 %v581, 0.0
        %v617 = vmax.f32 %v585, 0.0
        %v618 = vmax.f32 %v587, 0.0
        %v619 = vmax.f32 %v589, 0.0
        %v620 = vmax.f32 %v591, 0.0
        %v621 = vmax.f32 %v595, 0.0
        %v622 = vmax.f32 %v597, 0.0
        %v623 = vmax.f32 %v599, 0.0
        %v624 = vmax.f32 %v601, 0.0
        %v625 = vmax.f32 %v605, 0.0
        %v626 = vmax.f32 %v607, 0.0
        %v627 = vmax.f32 %v609, 0.0
        %v628 = vmax.f32 %v611, 0.0
        %v629 = vpack.c.bf16 %v615, %v613
        %v630 = vpack.c.bf16 %v616, %v614
        %v631 = vpack.c.bf16 %v619, %v617
        %v632 = vpack.c.bf16 %v620, %v618
        %v633 = vpack.c.bf16 %v623, %v621
        %v634 = vpack.c.bf16 %v624, %v622
        %v635 = vpack.c.bf16 %v627, %v625
        %v636 = vpack.c.bf16 %v628, %v626
        %v645 = vunpack.c.l.b16 %v629
        %v646 = vunpack.c.l.b16 %v630
        %v647 = vunpack.c.h.b16 %v629
        %v648 = vunpack.c.h.b16 %v630
        %v649 = vunpack.c.l.b16 %v631
        %v650 = vunpack.c.l.b16 %v632
        %v651 = vunpack.c.h.b16 %v631
        %v652 = vunpack.c.h.b16 %v632
        %v653 = vunpack.c.l.b16 %v633
        %v654 = vunpack.c.l.b16 %v634
        %v655 = vunpack.c.h.b16 %v633
        %v656 = vunpack.c.h.b16 %v634
        %v657 = vunpack.c.l.b16 %v635
        %v658 = vunpack.c.l.b16 %v636
        %v659 = vunpack.c.h.b16 %v635
        %v660 = vunpack.c.h.b16 %v636
        %v661 = vpack.c.b16 %v646, %v645
        %v662 = vpack.c.b16 %v648, %v647
        %v663 = vpack.c.b16 %v650, %v649
        %v664 = vpack.c.b16 %v652, %v651
        %v665 = vpack.c.b16 %v654, %v653
        %v666 = vpack.c.b16 %v656, %v655
        %v667 = vpack.c.b16 %v658, %v657
        %v668 = vpack.c.b16 %v660, %v659
        %v670 = vshrl.u32 %v661, 16
        %v672 = vrot.slane %v670, 7
        %v673 = vshll.u32 %v661, 16
        %v675 = vor.u32 %v672, %v673
        %v676 = vrot.slane %v672, 4
        %v678 = vshrl.u32 %v662, 16
        %v680 = vrot.slane %v678, 7
        %v681 = vshll.u32 %v662, 16
        %v683 = vor.u32 %v680, %v681
        %v684 = vrot.slane %v680, 4
        %v686 = vshrl.u32 %v663, 16
        %v688 = vrot.slane %v686, 7
        %v689 = vshll.u32 %v663, 16
        %v691 = vor.u32 %v688, %v689
        %v692 = vrot.slane %v688, 4
        %v694 = vshrl.u32 %v664, 16
        %v696 = vrot.slane %v694, 7
        %v697 = vshll.u32 %v664, 16
        %v699 = vor.u32 %v696, %v697
        %v700 = vrot.slane %v696, 4
        %v702 = vshrl.u32 %v665, 16
        %v704 = vrot.slane %v702, 7
        %v705 = vshll.u32 %v665, 16
        %v707 = vor.u32 %v704, %v705
        %v708 = vrot.slane %v704, 4
        %v710 = vshrl.u32 %v666, 16
        %v712 = vrot.slane %v710, 7
        %v713 = vshll.u32 %v666, 16
        %v715 = vor.u32 %v712, %v713
        %v716 = vrot.slane %v712, 4
        %v718 = vshrl.u32 %v667, 16
        %v720 = vrot.slane %v718, 7
        %v721 = vshll.u32 %v667, 16
        %v723 = vor.u32 %v720, %v721
        %v724 = vrot.slane %v720, 4
        %v726 = vshrl.u32 %v668, 16
        %v728 = vrot.slane %v726, 7
        %v729 = vshll.u32 %v668, 16
        %v731 = vor.u32 %v728, %v729
        %v732 = vrot.slane %v728, 4
        %s749 = scalar_lea.vmem [#allocation2], 32
        %vm750 = vcmask 1043456
        %vm751 = vsmask.f32 7938
        %vm752 = vmand %vm750, %vm751
        %vm753 = vcmask 1047556
        %vm754 = vsmask.f32 7954
        %vm755 = vmand %vm753, %vm754
        %vm756 = vmor %vm755, %vm752
        %v757 = vld [vmem:[%s749] sm:$0xff]
        %v758 = vsel %vm756, %v675, %v757
        %759 = vst [vmem:[%s749] sm:$0xff] %v758
        %vm760 = vcmask 1040384
        %vm761 = vsmask.f32 256
        %vm762 = vmand %vm760, %vm761
        %vm763 = vcmask 1044484
        %vm764 = vsmask.f32 4352
        %vm765 = vmand %vm763, %vm764
        %vm766 = vmor %vm765, %vm762
        %v767 = vld [vmem:[%s749 + $0x10] sm:$0x11]
        %v768 = vsel %vm766, %v676, %v767
        %769 = vst [vmem:[%s749 + $0x10] sm:$0x11] %v768
        %v770 = vld [vmem:[%s749 + $0x20] sm:$0xff]
        %v771 = vsel %vm756, %v683, %v770
        %772 = vst [vmem:[%s749 + $0x20] sm:$0xff] %v771
        %v773 = vld [vmem:[%s749 + $0x30] sm:$0x11]
        %v774 = vsel %vm766, %v684, %v773
        %775 = vst [vmem:[%s749 + $0x30] sm:$0x11] %v774
        %v776 = vld [vmem:[%s749 + $0x40] sm:$0xff]
        %v777 = vsel %vm756, %v691, %v776
        %778 = vst [vmem:[%s749 + $0x40] sm:$0xff] %v777
        %v779 = vld [vmem:[%s749 + $0x50] sm:$0x11]
        %v780 = vsel %vm766, %v692, %v779
        %781 = vst [vmem:[%s749 + $0x50] sm:$0x11] %v780
        %v782 = vld [vmem:[%s749 + $0x60] sm:$0xff]
        %v783 = vsel %vm756, %v699, %v782
        %784 = vst [vmem:[%s749 + $0x60] sm:$0xff] %v783
        %v785 = vld [vmem:[%s749 + $0x70] sm:$0x11]
        %v786 = vsel %vm766, %v700, %v785
        %787 = vst [vmem:[%s749 + $0x70] sm:$0x11] %v786
        %v788 = vld [vmem:[%s749 + $0x80] sm:$0xff]
        %v789 = vsel %vm756, %v707, %v788
        %790 = vst [vmem:[%s749 + $0x80] sm:$0xff] %v789
        %v791 = vld [vmem:[%s749 + $0x90] sm:$0x11]
        %v792 = vsel %vm766, %v708, %v791
        %793 = vst [vmem:[%s749 + $0x90] sm:$0x11] %v792
        %v794 = vld [vmem:[%s749 + $0xa0] sm:$0xff]
        %v795 = vsel %vm756, %v715, %v794
        %796 = vst [vmem:[%s749 + $0xa0] sm:$0xff] %v795
        %v797 = vld [vmem:[%s749 + $0xb0] sm:$0x11]
        %v798 = vsel %vm766, %v716, %v797
        %799 = vst [vmem:[%s749 + $0xb0] sm:$0x11] %v798
        %v800 = vld [vmem:[%s749 + $0xc0] sm:$0xff]
        %v801 = vsel %vm756, %v723, %v800
        %802 = vst [vmem:[%s749 + $0xc0] sm:$0xff] %v801
        %v803 = vld [vmem:[%s749 + $0xd0] sm:$0x11]
        %v804 = vsel %vm766, %v724, %v803
        %805 = vst [vmem:[%s749 + $0xd0] sm:$0x11] %v804
        %v806 = vld [vmem:[%s749 + $0xe0] sm:$0xff]
        %v807 = vsel %vm756, %v731, %v806
        %808 = vst [vmem:[%s749 + $0xe0] sm:$0xff] %v807
        %v809 = vld [vmem:[%s749 + $0xf0] sm:$0x11]
        %v810 = vsel %vm766, %v732, %v809
        %811 = vst [vmem:[%s749 + $0xf0] sm:$0x11] %v810
        %s812 = scalar_lea.vmem %s323, 32 [#allocation4]
        %v813 = vld [vmem:[%s812] sm:$0xf]
        %v814 = vld [vmem:[%s812 + $0x4] sm:$0xf]
        %v815 = vld [vmem:[%s812 + $0x8] sm:$0xf]
        %v816 = vld [vmem:[%s812 + $0xc] sm:$0xf]
        %v817 = vld [vmem:[%s812 + $0x10] sm:$0xf]
        %v818 = vld [vmem:[%s812 + $0x14] sm:$0xf]
        %v819 = vld [vmem:[%s812 + $0x18] sm:$0xf]
        %v820 = vld [vmem:[%s812 + $0x1c] sm:$0xf]
        %v821 = vld [vmem:[#allocation7] sm:$0xff]
        %v822 = vld [vmem:[#allocation7 + $0x8] sm:$0xff]
        %v823 = vld [vmem:[#allocation7 + $0x10] sm:$0xff]
        %v824 = vld [vmem:[#allocation7 + $0x18] sm:$0xff]
        %v825 = vld [vmem:[#allocation7 + $0x20] sm:$0xff]
        %v826 = vld [vmem:[#allocation7 + $0x28] sm:$0xff]
        %v827 = vld [vmem:[#allocation7 + $0x30] sm:$0xff]
        %v828 = vld [vmem:[#allocation7 + $0x38] sm:$0xff]
        %v829 = vld [vmem:[#allocation9] sm:$0x3]
        %v831 = vlaneseq
        %v832 = vshrl.u32 %v831, 7
        %v833 = vsub.s32 0, %v832
        %v834 = vrot.slane %v829, %v833
        %v835 = vlaneseq
        %v836 = vshrl.u32 %v835, 7
        %v837 = vsub.s32 1, %v836
        %v838 = vrot.slane %v829, %v837
        %v849 = vunpack.c.l.b16 %v813
        %v850 = vunpack.c.l.b16 %v814
        %v851 = vunpack.c.l.b16 %v815
        %v852 = vunpack.c.l.b16 %v816
        %v853 = vunpack.c.l.b16 %v817
        %v854 = vunpack.c.l.b16 %v818
        %v855 = vunpack.c.l.b16 %v819
        %v856 = vunpack.c.l.b16 %v820
        %v857 = vpack.c.b16 %v850, %v849
        %v858 = vpack.c.b16 %v852, %v851
        %v859 = vpack.c.b16 %v854, %v853
        %v860 = vpack.c.b16 %v856, %v855
        %v869 = vunpack.c.l.b16 %v821
        %v870 = vunpack.c.h.b16 %v821
        %v871 = vunpack.c.l.b16 %v822
        %v872 = vunpack.c.h.b16 %v822
        %v873 = vunpack.c.l.b16 %v823
        %v874 = vunpack.c.h.b16 %v823
        %v875 = vunpack.c.l.b16 %v824
        %v876 = vunpack.c.h.b16 %v824
        %v877 = vunpack.c.l.b16 %v825
        %v878 = vunpack.c.h.b16 %v825
        %v879 = vunpack.c.l.b16 %v826
        %v880 = vunpack.c.h.b16 %v826
        %v881 = vunpack.c.l.b16 %v827
        %v882 = vunpack.c.h.b16 %v827
        %v883 = vunpack.c.l.b16 %v828
        %v884 = vunpack.c.h.b16 %v828
        %v885 = vpack.c.b16 %v871, %v869
        %v886 = vpack.c.b16 %v872, %v870
        %v887 = vpack.c.b16 %v875, %v873
        %v888 = vpack.c.b16 %v876, %v874
        %v889 = vpack.c.b16 %v879, %v877
        %v890 = vpack.c.b16 %v880, %v878
        %v891 = vpack.c.b16 %v883, %v881
        %v892 = vpack.c.b16 %v884, %v882
        %v902 = vsel %vm527, %v857, 0
        %v905 = vsel %vm527, %v858, 0
        %v908 = vsel %vm527, %v859, 0
        %v911 = vsel %vm527, %v860, 0
        %913 = vmatprep.subr.bf16.mxu0 %v886
        %914 = vmatpush1.bf16.msra.mxu0 %v885
        %915 = vmatprep.subr.bf16.mxu0 %v888
        %916 = vmatpush1.bf16.msra.mxu0 %v887
        %917 = vmatprep.subr.bf16.mxu0 %v890
        %918 = vmatpush1.bf16.msra.mxu0 %v889
        %919 = vmatprep.subr.bf16.mxu0 %v892
        %920 = vmatpush1.bf16.msra.mxu0 %v891
        %921 = vmatprep.subr.bf16.mxu0 0
        %922 = vmatpush1.bf16.msra.mxu0 0
        %923 = vmatprep.subr.bf16.mxu0 0
        %924 = vmatpush1.bf16.msra.mxu0 0
        %925 = vmatprep.subr.bf16.mxu0 0
        %926 = vmatpush1.bf16.msra.mxu0 0
        %927 = vmatprep.subr.bf16.mxu0 0
        %928 = vmatpush1.bf16.msra.mxu0 0
        %929 = vmatprep.subr.bf16.mxu0 0
        %930 = vmatpush1.bf16.msra.mxu0 0
        %931 = vmatprep.subr.bf16.mxu0 0
        %932 = vmatpush1.bf16.msra.mxu0 0
        %933 = vmatprep.subr.bf16.mxu0 0
        %934 = vmatpush1.bf16.msra.mxu0 0
        %935 = vmatprep.subr.bf16.mxu0 0
        %936 = vmatpush1.bf16.msra.mxu0 0
        %937 = vmatprep.subr.bf16.mxu0 0
        %938 = vmatpush1.bf16.msra.mxu0 0
        %939 = vmatprep.subr.bf16.mxu0 0
        %940 = vmatpush1.bf16.msra.mxu0 0
        %941 = vmatprep.subr.bf16.mxu0 0
        %942 = vmatpush1.bf16.msra.mxu0 0
        %943 = vmatprep.subr.bf16.mxu0 0
        %944 = vmatpush1.bf16.msra.mxu0 0
        %945 = vmatprep.mubr.bf16.mxu0 0
        %946 = vmatmul.mubr.bf16.gmra.mrb[0].mxu0 %v902
        %v947 = vpop.f32.mrb[0].mxu0
        %v948 = vadd.f32 %v834, %v947
        %v949 = vpop.f32.mrb[0].mxu0
        %v950 = vadd.f32 %v838, %v949
        %v951 = vpop.f32.mrb[0].mxu0
        %v952 = vadd.f32 %v834, %v951
        %v953 = vpop.f32.mrb[0].mxu0
        %v954 = vadd.f32 %v838, %v953
        %955 = vmatprep.mubr.bf16.mxu0 0
        %956 = vmatmul.mubr.bf16.gmra.mrb[0].mxu0 %v905
        %v957 = vpop.f32.mrb[0].mxu0
        %v958 = vadd.f32 %v834, %v957
        %v959 = vpop.f32.mrb[0].mxu0
        %v960 = vadd.f32 %v838, %v959
        %v961 = vpop.f32.mrb[0].mxu0
        %v962 = vadd.f32 %v834, %v961
        %v963 = vpop.f32.mrb[0].mxu0
        %v964 = vadd.f32 %v838, %v963
        %965 = vmatprep.mubr.bf16.mxu0 0
        %966 = vmatmul.mubr.bf16.gmra.mrb[0].mxu0 %v908
        %v967 = vpop.f32.mrb[0].mxu0
        %v968 = vadd.f32 %v834, %v967
        %v969 = vpop.f32.mrb[0].mxu0
        %v970 = vadd.f32 %v838, %v969
        %v971 = vpop.f32.mrb[0].mxu0
        %v972 = vadd.f32 %v834, %v971
        %v973 = vpop.f32.mrb[0].mxu0
        %v974 = vadd.f32 %v838, %v973
        %975 = vmatprep.mubr.bf16.mxu0 0
        %976 = vmatmul.mubr.bf16.gmra.mrb[0].mxu0 %v911
        %v977 = vpop.f32.mrb[0].mxu0
        %v978 = vadd.f32 %v834, %v977
        %v979 = vpop.f32.mrb[0].mxu0
        %v980 = vadd.f32 %v838, %v979
        %v981 = vpop.f32.mrb[0].mxu0
        %v982 = vadd.f32 %v834, %v981
        %v983 = vpop.f32.mrb[0].mxu0
        %v984 = vadd.f32 %v838, %v983
        %985 = vdwg.mxu0
        %v986 = vmax.f32 %v948, 0.0
        %v987 = vmax.f32 %v950, 0.0
        %v988 = vmax.f32 %v952, 0.0
        %v989 = vmax.f32 %v954, 0.0
        %v990 = vmax.f32 %v958, 0.0
        %v991 = vmax.f32 %v960, 0.0
        %v992 = vmax.f32 %v962, 0.0
        %v993 = vmax.f32 %v964, 0.0
        %v994 = vmax.f32 %v968, 0.0
        %v995 = vmax.f32 %v970, 0.0
        %v996 = vmax.f32 %v972, 0.0
        %v997 = vmax.f32 %v974, 0.0
        %v998 = vmax.f32 %v978, 0.0
        %v999 = vmax.f32 %v980, 0.0
        %v1000 = vmax.f32 %v982, 0.0
        %v1001 = vmax.f32 %v984, 0.0
        %v1002 = vpack.c.bf16 %v988, %v986
        %v1003 = vpack.c.bf16 %v989, %v987
        %v1004 = vpack.c.bf16 %v992, %v990
        %v1005 = vpack.c.bf16 %v993, %v991
        %v1006 = vpack.c.bf16 %v996, %v994
        %v1007 = vpack.c.bf16 %v997, %v995
        %v1008 = vpack.c.bf16 %v1000, %v998
        %v1009 = vpack.c.bf16 %v1001, %v999
        %v1018 = vunpack.c.l.b16 %v1002
        %v1019 = vunpack.c.l.b16 %v1003
        %v1020 = vunpack.c.h.b16 %v1002
        %v1021 = vunpack.c.h.b16 %v1003
        %v1022 = vunpack.c.l.b16 %v1004
        %v1023 = vunpack.c.l.b16 %v1005
        %v1024 = vunpack.c.h.b16 %v1004
        %v1025 = vunpack.c.h.b16 %v1005
        %v1026 = vunpack.c.l.b16 %v1006
        %v1027 = vunpack.c.l.b16 %v1007
        %v1028 = vunpack.c.h.b16 %v1006
        %v1029 = vunpack.c.h.b16 %v1007
        %v1030 = vunpack.c.l.b16 %v1008
        %v1031 = vunpack.c.l.b16 %v1009
        %v1032 = vunpack.c.h.b16 %v1008
        %v1033 = vunpack.c.h.b16 %v1009
        %v1034 = vpack.c.b16 %v1019, %v1018
        %v1035 = vpack.c.b16 %v1021, %v1020
        %v1036 = vpack.c.b16 %v1023, %v1022
        %v1037 = vpack.c.b16 %v1025, %v1024
        %v1038 = vpack.c.b16 %v1027, %v1026
        %v1039 = vpack.c.b16 %v1029, %v1028
        %v1040 = vpack.c.b16 %v1031, %v1030
        %v1041 = vpack.c.b16 %v1033, %v1032
        %v1043 = vshrl.u32 %v1034, 16
        %v1045 = vrot.slane %v1043, 7
        %v1046 = vshll.u32 %v1034, 16
        %v1048 = vor.u32 %v1045, %v1046
        %v1049 = vrot.slane %v1045, 4
        %v1051 = vshrl.u32 %v1035, 16
        %v1053 = vrot.slane %v1051, 7
        %v1054 = vshll.u32 %v1035, 16
        %v1056 = vor.u32 %v1053, %v1054
        %v1057 = vrot.slane %v1053, 4
        %v1059 = vshrl.u32 %v1036, 16
        %v1061 = vrot.slane %v1059, 7
        %v1062 = vshll.u32 %v1036, 16
        %v1064 = vor.u32 %v1061, %v1062
        %v1065 = vrot.slane %v1061, 4
        %v1067 = vshrl.u32 %v1037, 16
        %v1069 = vrot.slane %v1067, 7
        %v1070 = vshll.u32 %v1037, 16
        %v1072 = vor.u32 %v1069, %v1070
        %v1073 = vrot.slane %v1069, 4
        %v1075 = vshrl.u32 %v1038, 16
        %v1077 = vrot.slane %v1075, 7
        %v1078 = vshll.u32 %v1038, 16
        %v1080 = vor.u32 %v1077, %v1078
        %v1081 = vrot.slane %v1077, 4
        %v1083 = vshrl.u32 %v1039, 16
        %v1085 = vrot.slane %v1083, 7
        %v1086 = vshll.u32 %v1039, 16
        %v1088 = vor.u32 %v1085, %v1086
        %v1089 = vrot.slane %v1085, 4
        %v1091 = vshrl.u32 %v1040, 16
        %v1093 = vrot.slane %v1091, 7
        %v1094 = vshll.u32 %v1040, 16
        %v1096 = vor.u32 %v1093, %v1094
        %v1097 = vrot.slane %v1093, 4
        %v1099 = vshrl.u32 %v1041, 16
        %v1101 = vrot.slane %v1099, 7
        %v1102 = vshll.u32 %v1041, 16
        %v1104 = vor.u32 %v1101, %v1102
        %v1105 = vrot.slane %v1101, 4
        %v1122 = vld [vmem:[%s749 + $0x8] sm:$0xff]
        %v1123 = vsel %vm756, %v1048, %v1122
        %1124 = vst [vmem:[%s749 + $0x8] sm:$0xff] %v1123
        %v1125 = vld [vmem:[%s749 + $0x18] sm:$0x11]
        %v1126 = vsel %vm766, %v1049, %v1125
        %1127 = vst [vmem:[%s749 + $0x18] sm:$0x11] %v1126
        %v1128 = vld [vmem:[%s749 + $0x28] sm:$0xff]
        %v1129 = vsel %vm756, %v1056, %v1128
        %1130 = vst [vmem:[%s749 + $0x28] sm:$0xff] %v1129
        %v1131 = vld [vmem:[%s749 + $0x38] sm:$0x11]
        %v1132 = vsel %vm766, %v1057, %v1131
        %1133 = vst [vmem:[%s749 + $0x38] sm:$0x11] %v1132
        %v1134 = vld [vmem:[%s749 + $0x48] sm:$0xff]
        %v1135 = vsel %vm756, %v1064, %v1134
        %1136 = vst [vmem:[%s749 + $0x48] sm:$0xff] %v1135
        %v1137 = vld [vmem:[%s749 + $0x58] sm:$0x11]
        %v1138 = vsel %vm766, %v1065, %v1137
        %1139 = vst [vmem:[%s749 + $0x58] sm:$0x11] %v1138
        %v1140 = vld [vmem:[%s749 + $0x68] sm:$0xff]
        %v1141 = vsel %vm756, %v1072, %v1140
        %1142 = vst [vmem:[%s749 + $0x68] sm:$0xff] %v1141
        %v1143 = vld [vmem:[%s749 + $0x78] sm:$0x11]
        %v1144 = vsel %vm766, %v1073, %v1143
        %1145 = vst [vmem:[%s749 + $0x78] sm:$0x11] %v1144
        %v1146 = vld [vmem:[%s749 + $0x88] sm:$0xff]
        %v1147 = vsel %vm756, %v1080, %v1146
        %1148 = vst [vmem:[%s749 + $0x88] sm:$0xff] %v1147
        %v1149 = vld [vmem:[%s749 + $0x98] sm:$0x11]
        %v1150 = vsel %vm766, %v1081, %v1149
        %1151 = vst [vmem:[%s749 + $0x98] sm:$0x11] %v1150
        %v1152 = vld [vmem:[%s749 + $0xa8] sm:$0xff]
        %v1153 = vsel %vm756, %v1088, %v1152
        %1154 = vst [vmem:[%s749 + $0xa8] sm:$0xff] %v1153
        %v1155 = vld [vmem:[%s749 + $0xb8] sm:$0x11]
        %v1156 = vsel %vm766, %v1089, %v1155
        %1157 = vst [vmem:[%s749 + $0xb8] sm:$0x11] %v1156
        %v1158 = vld [vmem:[%s749 + $0xc8] sm:$0xff]
        %v1159 = vsel %vm756, %v1096, %v1158
        %1160 = vst [vmem:[%s749 + $0xc8] sm:$0xff] %v1159
        %v1161 = vld [vmem:[%s749 + $0xd8] sm:$0x11]
        %v1162 = vsel %vm766, %v1097, %v1161
        %1163 = vst [vmem:[%s749 + $0xd8] sm:$0x11] %v1162
        %v1164 = vld [vmem:[%s749 + $0xe8] sm:$0xff]
        %v1165 = vsel %vm756, %v1104, %v1164
        %1166 = vst [vmem:[%s749 + $0xe8] sm:$0xff] %v1165
        %v1167 = vld [vmem:[%s749 + $0xf8] sm:$0x11]
        %v1168 = vsel %vm766, %v1105, %v1167
        %1169 = vst [vmem:[%s749 + $0xf8] sm:$0x11] %v1168
        %v1170 = vld [vmem:[#allocation2] sm:$0xff]
        %v1171 = vld [vmem:[#allocation2 + $0x8] sm:$0xff]
        %v1172 = vld [vmem:[#allocation2 + $0x20] sm:$0xff]
        %v1173 = vld [vmem:[#allocation2 + $0x28] sm:$0xff]
        %v1174 = vld [vmem:[#allocation2 + $0x40] sm:$0xff]
        %v1175 = vld [vmem:[#allocation2 + $0x48] sm:$0xff]
        %v1176 = vld [vmem:[#allocation2 + $0x60] sm:$0xff]
        %v1177 = vld [vmem:[#allocation2 + $0x68] sm:$0xff]
        %v1178 = vld [vmem:[#allocation2 + $0x80] sm:$0xff]
        %v1179 = vld [vmem:[#allocation2 + $0x88] sm:$0xff]
        %v1180 = vld [vmem:[#allocation2 + $0xa0] sm:$0xff]
        %v1181 = vld [vmem:[#allocation2 + $0xa8] sm:$0xff]
        %v1182 = vld [vmem:[#allocation2 + $0xc0] sm:$0xff]
        %v1183 = vld [vmem:[#allocation2 + $0xc8] sm:$0xff]
        %v1184 = vld [vmem:[#allocation2 + $0xe0] sm:$0xff]
        %v1185 = vld [vmem:[#allocation2 + $0xe8] sm:$0xff]
        %v1186 = vld [vmem:[#allocation10] sm:$0xff]
        %v1187 = vld [vmem:[#allocation10 + $0x8] sm:$0xff]
        %v1188 = vld [vmem:[#allocation10 + $0x10] sm:$0xff]
        %v1189 = vld [vmem:[#allocation10 + $0x18] sm:$0xff]
        %v1190 = vld [vmem:[#allocation10 + $0x20] sm:$0xff]
        %v1191 = vld [vmem:[#allocation10 + $0x28] sm:$0xff]
        %v1192 = vld [vmem:[#allocation10 + $0x30] sm:$0xff]
        %v1193 = vld [vmem:[#allocation10 + $0x38] sm:$0xff]
        %v1194 = vld [vmem:[#allocation10 + $0x40] sm:$0xff]
        %v1195 = vld [vmem:[#allocation10 + $0x48] sm:$0xff]
        %v1196 = vld [vmem:[#allocation10 + $0x50] sm:$0xff]
        %v1197 = vld [vmem:[#allocation10 + $0x58] sm:$0xff]
        %v1198 = vld [vmem:[#allocation10 + $0x60] sm:$0xff]
        %v1199 = vld [vmem:[#allocation10 + $0x68] sm:$0xff]
        %v1200 = vld [vmem:[#allocation10 + $0x70] sm:$0xff]
        %v1201 = vld [vmem:[#allocation10 + $0x78] sm:$0xff]
        %v1202 = vld [vmem:[#allocation10 + $0x80] sm:$0xff]
        %v1203 = vld [vmem:[#allocation10 + $0x88] sm:$0xff]
        %v1204 = vld [vmem:[#allocation10 + $0x90] sm:$0xff]
        %v1205 = vld [vmem:[#allocation10 + $0x98] sm:$0xff]
        %v1206 = vld [vmem:[#allocation10 + $0xa0] sm:$0xff]
        %v1207 = vld [vmem:[#allocation10 + $0xa8] sm:$0xff]
        %v1208 = vld [vmem:[#allocation10 + $0xb0] sm:$0xff]
        %v1209 = vld [vmem:[#allocation10 + $0xb8] sm:$0xff]
        %v1210 = vld [vmem:[#allocation10 + $0xc0] sm:$0xff]
        %v1211 = vld [vmem:[#allocation10 + $0xc8] sm:$0xff]
        %v1212 = vld [vmem:[#allocation10 + $0xd0] sm:$0xff]
        %v1213 = vld [vmem:[#allocation10 + $0xd8] sm:$0xff]
        %v1214 = vld [vmem:[#allocation10 + $0xe0] sm:$0xff]
        %v1215 = vld [vmem:[#allocation10 + $0xe8] sm:$0xff]
        %v1216 = vld [vmem:[#allocation10 + $0xf0] sm:$0xff]
        %v1217 = vld [vmem:[#allocation10 + $0xf8] sm:$0xff]
        %v1218 = vld [vmem:[#allocation10 + $0x100] sm:$0xff]
        %v1219 = vld [vmem:[#allocation10 + $0x108] sm:$0xff]
        %v1220 = vld [vmem:[#allocation10 + $0x110] sm:$0xff]
        %v1221 = vld [vmem:[#allocation10 + $0x118] sm:$0xff]
        %v1222 = vld [vmem:[#allocation10 + $0x120] sm:$0xff]
        %v1223 = vld [vmem:[#allocation10 + $0x128] sm:$0xff]
        %v1224 = vld [vmem:[#allocation10 + $0x130] sm:$0xff]
        %v1225 = vld [vmem:[#allocation10 + $0x138] sm:$0xff]
        %v1226 = vld [vmem:[#allocation10 + $0x140] sm:$0xff]
        %v1227 = vld [vmem:[#allocation10 + $0x148] sm:$0xff]
        %v1228 = vld [vmem:[#allocation10 + $0x150] sm:$0xff]
        %v1229 = vld [vmem:[#allocation10 + $0x158] sm:$0xff]
        %v1230 = vld [vmem:[#allocation10 + $0x160] sm:$0xff]
        %v1231 = vld [vmem:[#allocation10 + $0x168] sm:$0xff]
        %v1232 = vld [vmem:[#allocation10 + $0x170] sm:$0xff]
        %v1233 = vld [vmem:[#allocation10 + $0x178] sm:$0xff]
        %v1234 = vld [vmem:[#allocation10 + $0x180] sm:$0xff]
        %v1235 = vld [vmem:[#allocation10 + $0x188] sm:$0xff]
        %v1236 = vld [vmem:[#allocation10 + $0x190] sm:$0xff]
        %v1237 = vld [vmem:[#allocation10 + $0x198] sm:$0xff]
        %v1238 = vld [vmem:[#allocation10 + $0x1a0] sm:$0xff]
        %v1239 = vld [vmem:[#allocation10 + $0x1a8] sm:$0xff]
        %v1240 = vld [vmem:[#allocation10 + $0x1b0] sm:$0xff]
        %v1241 = vld [vmem:[#allocation10 + $0x1b8] sm:$0xff]
        %v1242 = vld [vmem:[#allocation10 + $0x1c0] sm:$0xff]
        %v1243 = vld [vmem:[#allocation10 + $0x1c8] sm:$0xff]
        %v1244 = vld [vmem:[#allocation10 + $0x1d0] sm:$0xff]
        %v1245 = vld [vmem:[#allocation10 + $0x1d8] sm:$0xff]
        %v1246 = vld [vmem:[#allocation10 + $0x1e0] sm:$0xff]
        %v1247 = vld [vmem:[#allocation10 + $0x1e8] sm:$0xff]
        %v1248 = vld [vmem:[#allocation10 + $0x1f0] sm:$0xff]
        %v1249 = vld [vmem:[#allocation10 + $0x1f8] sm:$0xff]
        %v1250 = vld [vmem:[#allocation2 + $0x10] sm:$0x11]
        %v1251 = vld [vmem:[#allocation2 + $0x18] sm:$0x11]
        %v1252 = vld [vmem:[#allocation2 + $0x30] sm:$0x11]
        %v1253 = vld [vmem:[#allocation2 + $0x38] sm:$0x11]
        %v1254 = vld [vmem:[#allocation2 + $0x50] sm:$0x11]
        %v1255 = vld [vmem:[#allocation2 + $0x58] sm:$0x11]
        %v1256 = vld [vmem:[#allocation2 + $0x70] sm:$0x11]
        %v1257 = vld [vmem:[#allocation2 + $0x78] sm:$0x11]
        %v1258 = vld [vmem:[#allocation2 + $0x90] sm:$0x11]
        %v1259 = vld [vmem:[#allocation2 + $0x98] sm:$0x11]
        %v1260 = vld [vmem:[#allocation2 + $0xb0] sm:$0x11]
        %v1261 = vld [vmem:[#allocation2 + $0xb8] sm:$0x11]
        %v1262 = vld [vmem:[#allocation2 + $0xd0] sm:$0x11]
        %v1263 = vld [vmem:[#allocation2 + $0xd8] sm:$0x11]
        %v1264 = vld [vmem:[#allocation2 + $0xf0] sm:$0x11]
        %v1265 = vld [vmem:[#allocation2 + $0xf8] sm:$0x11]
        %vm1266 = vsmask.f32 3328
        %vm1267 = vsmask.f32 7440
        %vm1268 = vmor %vm1266, %vm1267
        %v1270 = vshrl.u32 %v1170, 16
        %v1272 = vrot.slane %v1270, 4
        %v1273 = vshll.u32 %v1170, 16
        %v1275 = vrot.slane %v1273, 5
        %v1276 = vor.u32 %v1272, %v1275
        %v1277 = vrot.slane %v1276, 4
        %v1279 = vshll.u32 %v1250, 16
        %v1281 = vrot.slane %v1279, 5
        %v1282 = vsel %vm1268, %v1277, %v1281
        %v1284 = vshrl.u32 %v1171, 16
        %v1286 = vrot.slane %v1284, 4
        %v1287 = vshll.u32 %v1171, 16
        %v1289 = vrot.slane %v1287, 5
        %v1290 = vor.u32 %v1286, %v1289
        %v1291 = vrot.slane %v1290, 4
        %v1293 = vshll.u32 %v1251, 16
        %v1295 = vrot.slane %v1293, 5
        %v1296 = vsel %vm1268, %v1291, %v1295
        %v1298 = vshrl.u32 %v1172, 16
        %v1300 = vrot.slane %v1298, 4
        %v1301 = vshll.u32 %v1172, 16
        %v1303 = vrot.slane %v1301, 5
        %v1304 = vor.u32 %v1300, %v1303
        %v1305 = vrot.slane %v1304, 4
        %v1307 = vshll.u32 %v1252, 16
        %v1309 = vrot.slane %v1307, 5
        %v1310 = vsel %vm1268, %v1305, %v1309
        %v1312 = vshrl.u32 %v1173, 16
        %v1314 = vrot.slane %v1312, 4
        %v1315 = vshll.u32 %v1173, 16
        %v1317 = vrot.slane %v1315, 5
        %v1318 = vor.u32 %v1314, %v1317
        %v1319 = vrot.slane %v1318, 4
        %v1321 = vshll.u32 %v1253, 16
        %v1323 = vrot.slane %v1321, 5
        %v1324 = vsel %vm1268, %v1319, %v1323
        %v1326 = vshrl.u32 %v1174, 16
        %v1328 = vrot.slane %v1326, 4
        %v1329 = vshll.u32 %v1174, 16
        %v1331 = vrot.slane %v1329, 5
        %v1332 = vor.u32 %v1328, %v1331
        %v1333 = vrot.slane %v1332, 4
        %v1335 = vshll.u32 %v1254, 16
        %v1337 = vrot.slane %v1335, 5
        %v1338 = vsel %vm1268, %v1333, %v1337
        %v1340 = vshrl.u32 %v1175, 16
        %v1342 = vrot.slane %v1340, 4
        %v1343 = vshll.u32 %v1175, 16
        %v1345 = vrot.slane %v1343, 5
        %v1346 = vor.u32 %v1342, %v1345
        %v1347 = vrot.slane %v1346, 4
        %v1349 = vshll.u32 %v1255, 16
        %v1351 = vrot.slane %v1349, 5
        %v1352 = vsel %vm1268, %v1347, %v1351
        %v1354 = vshrl.u32 %v1176, 16
        %v1356 = vrot.slane %v1354, 4
        %v1357 = vshll.u32 %v1176, 16
        %v1359 = vrot.slane %v1357, 5
        %v1360 = vor.u32 %v1356, %v1359
        %v1361 = vrot.slane %v1360, 4
        %v1363 = vshll.u32 %v1256, 16
        %v1365 = vrot.slane %v1363, 5
        %v1366 = vsel %vm1268, %v1361, %v1365
        %v1368 = vshrl.u32 %v1177, 16
        %v1370 = vrot.slane %v1368, 4
        %v1371 = vshll.u32 %v1177, 16
        %v1373 = vrot.slane %v1371, 5
        %v1374 = vor.u32 %v1370, %v1373
        %v1375 = vrot.slane %v1374, 4
        %v1377 = vshll.u32 %v1257, 16
        %v1379 = vrot.slane %v1377, 5
        %v1380 = vsel %vm1268, %v1375, %v1379
        %v1382 = vshrl.u32 %v1178, 16
        %v1384 = vrot.slane %v1382, 4
        %v1385 = vshll.u32 %v1178, 16
        %v1387 = vrot.slane %v1385, 5
        %v1388 = vor.u32 %v1384, %v1387
        %v1389 = vrot.slane %v1388, 4
        %v1391 = vshll.u32 %v1258, 16
        %v1393 = vrot.slane %v1391, 5
        %v1394 = vsel %vm1268, %v1389, %v1393
        %v1396 = vshrl.u32 %v1179, 16
        %v1398 = vrot.slane %v1396, 4
        %v1399 = vshll.u32 %v1179, 16
        %v1401 = vrot.slane %v1399, 5
        %v1402 = vor.u32 %v1398, %v1401
        %v1403 = vrot.slane %v1402, 4
        %v1405 = vshll.u32 %v1259, 16
        %v1407 = vrot.slane %v1405, 5
        %v1408 = vsel %vm1268, %v1403, %v1407
        %v1410 = vshrl.u32 %v1180, 16
        %v1412 = vrot.slane %v1410, 4
        %v1413 = vshll.u32 %v1180, 16
        %v1415 = vrot.slane %v1413, 5
        %v1416 = vor.u32 %v1412, %v1415
        %v1417 = vrot.slane %v1416, 4
        %v1419 = vshll.u32 %v1260, 16
        %v1421 = vrot.slane %v1419, 5
        %v1422 = vsel %vm1268, %v1417, %v1421
        %v1424 = vshrl.u32 %v1181, 16
        %v1426 = vrot.slane %v1424, 4
        %v1427 = vshll.u32 %v1181, 16
        %v1429 = vrot.slane %v1427, 5
        %v1430 = vor.u32 %v1426, %v1429
        %v1431 = vrot.slane %v1430, 4
        %v1433 = vshll.u32 %v1261, 16
        %v1435 = vrot.slane %v1433, 5
        %v1436 = vsel %vm1268, %v1431, %v1435
        %v1438 = vshrl.u32 %v1182, 16
        %v1440 = vrot.slane %v1438, 4
        %v1441 = vshll.u32 %v1182, 16
        %v1443 = vrot.slane %v1441, 5
        %v1444 = vor.u32 %v1440, %v1443
        %v1445 = vrot.slane %v1444, 4
        %v1447 = vshll.u32 %v1262, 16
        %v1449 = vrot.slane %v1447, 5
        %v1450 = vsel %vm1268, %v1445, %v1449
        %v1452 = vshrl.u32 %v1183, 16
        %v1454 = vrot.slane %v1452, 4
        %v1455 = vshll.u32 %v1183, 16
        %v1457 = vrot.slane %v1455, 5
        %v1458 = vor.u32 %v1454, %v1457
        %v1459 = vrot.slane %v1458, 4
        %v1461 = vshll.u32 %v1263, 16
        %v1463 = vrot.slane %v1461, 5
        %v1464 = vsel %vm1268, %v1459, %v1463
        %v1466 = vshrl.u32 %v1184, 16
        %v1468 = vrot.slane %v1466, 4
        %v1469 = vshll.u32 %v1184, 16
        %v1471 = vrot.slane %v1469, 5
        %v1472 = vor.u32 %v1468, %v1471
        %v1473 = vrot.slane %v1472, 4
        %v1475 = vshll.u32 %v1264, 16
        %v1477 = vrot.slane %v1475, 5
        %v1478 = vsel %vm1268, %v1473, %v1477
        %v1480 = vshrl.u32 %v1185, 16
        %v1482 = vrot.slane %v1480, 4
        %v1483 = vshll.u32 %v1185, 16
        %v1485 = vrot.slane %v1483, 5
        %v1486 = vor.u32 %v1482, %v1485
        %v1487 = vrot.slane %v1486, 4
        %v1489 = vshll.u32 %v1265, 16
        %v1491 = vrot.slane %v1489, 5
        %v1492 = vsel %vm1268, %v1487, %v1491
        %s1493 = scalar_lea.vmem [#allocation10], 512
        %v1494 = vld [vmem:[%s1493] sm:$0xff]
        %v1495 = vld [vmem:[%s1493 + $0x8] sm:$0xff]
        %v1496 = vld [vmem:[%s1493 + $0x10] sm:$0xff]
        %v1497 = vld [vmem:[%s1493 + $0x18] sm:$0xff]
        %v1498 = vld [vmem:[%s1493 + $0x20] sm:$0xff]
        %v1499 = vld [vmem:[%s1493 + $0x28] sm:$0xff]
        %v1500 = vld [vmem:[%s1493 + $0x30] sm:$0xff]
        %v1501 = vld [vmem:[%s1493 + $0x38] sm:$0xff]
        %v1502 = vld [vmem:[%s1493 + $0x40] sm:$0xff]
        %v1503 = vld [vmem:[%s1493 + $0x48] sm:$0xff]
        %v1504 = vld [vmem:[%s1493 + $0x50] sm:$0xff]
        %v1505 = vld [vmem:[%s1493 + $0x58] sm:$0xff]
        %v1506 = vld [vmem:[%s1493 + $0x60] sm:$0xff]
        %v1507 = vld [vmem:[%s1493 + $0x68] sm:$0xff]
        %v1508 = vld [vmem:[%s1493 + $0x70] sm:$0xff]
        %v1509 = vld [vmem:[%s1493 + $0x78] sm:$0xff]
        %v1510 = vld [vmem:[%s1493 + $0x80] sm:$0xff]
        %v1511 = vld [vmem:[%s1493 + $0x88] sm:$0xff]
        %v1512 = vld [vmem:[%s1493 + $0x90] sm:$0xff]
        %v1513 = vld [vmem:[%s1493 + $0x98] sm:$0xff]
        %v1514 = vld [vmem:[%s1493 + $0xa0] sm:$0xff]
        %v1515 = vld [vmem:[%s1493 + $0xa8] sm:$0xff]
        %v1516 = vld [vmem:[%s1493 + $0xb0] sm:$0xff]
        %v1517 = vld [vmem:[%s1493 + $0xb8] sm:$0xff]
        %v1518 = vld [vmem:[%s1493 + $0xc0] sm:$0xff]
        %v1519 = vld [vmem:[%s1493 + $0xc8] sm:$0xff]
        %v1520 = vld [vmem:[%s1493 + $0xd0] sm:$0xff]
        %v1521 = vld [vmem:[%s1493 + $0xd8] sm:$0xff]
        %v1522 = vld [vmem:[%s1493 + $0xe0] sm:$0xff]
        %v1523 = vld [vmem:[%s1493 + $0xe8] sm:$0xff]
        %v1524 = vld [vmem:[%s1493 + $0xf0] sm:$0xff]
        %v1525 = vld [vmem:[%s1493 + $0xf8] sm:$0xff]
        %v1526 = vld [vmem:[%s1493 + $0x100] sm:$0xff]
        %v1527 = vld [vmem:[%s1493 + $0x108] sm:$0xff]
        %v1528 = vld [vmem:[%s1493 + $0x110] sm:$0xff]
        %v1529 = vld [vmem:[%s1493 + $0x118] sm:$0xff]
        %v1530 = vld [vmem:[%s1493 + $0x120] sm:$0xff]
        %v1531 = vld [vmem:[%s1493 + $0x128] sm:$0xff]
        %v1532 = vld [vmem:[%s1493 + $0x130] sm:$0xff]
        %v1533 = vld [vmem:[%s1493 + $0x138] sm:$0xff]
        %v1534 = vld [vmem:[%s1493 + $0x140] sm:$0xff]
        %v1535 = vld [vmem:[%s1493 + $0x148] sm:$0xff]
        %v1536 = vld [vmem:[%s1493 + $0x150] sm:$0xff]
        %v1537 = vld [vmem:[%s1493 + $0x158] sm:$0xff]
        %v1538 = vld [vmem:[%s1493 + $0x160] sm:$0xff]
        %v1539 = vld [vmem:[%s1493 + $0x168] sm:$0xff]
        %v1540 = vld [vmem:[%s1493 + $0x170] sm:$0xff]
        %v1541 = vld [vmem:[%s1493 + $0x178] sm:$0xff]
        %v1542 = vld [vmem:[%s1493 + $0x180] sm:$0xff]
        %v1543 = vld [vmem:[%s1493 + $0x188] sm:$0xff]
        %v1544 = vld [vmem:[%s1493 + $0x190] sm:$0xff]
        %v1545 = vld [vmem:[%s1493 + $0x198] sm:$0xff]
        %v1546 = vld [vmem:[%s1493 + $0x1a0] sm:$0xff]
        %v1547 = vld [vmem:[%s1493 + $0x1a8] sm:$0xff]
        %v1548 = vld [vmem:[%s1493 + $0x1b0] sm:$0xff]
        %v1549 = vld [vmem:[%s1493 + $0x1b8] sm:$0xff]
        %v1550 = vld [vmem:[%s1493 + $0x1c0] sm:$0xff]
        %v1551 = vld [vmem:[%s1493 + $0x1c8] sm:$0xff]
        %v1552 = vld [vmem:[%s1493 + $0x1d0] sm:$0xff]
        %v1553 = vld [vmem:[%s1493 + $0x1d8] sm:$0xff]
        %v1554 = vld [vmem:[%s1493 + $0x1e0] sm:$0xff]
        %v1555 = vld [vmem:[%s1493 + $0x1e8] sm:$0xff]
        %v1556 = vld [vmem:[%s1493 + $0x1f0] sm:$0xff]
        %v1557 = vld [vmem:[%s1493 + $0x1f8] sm:$0xff]
        %v1558 = vunpack.c.l.b16 %v1282
        %v1559 = vunpack.c.h.b16 %v1282
        %v1560 = vunpack.c.l.b16 %v1296
        %v1561 = vunpack.c.h.b16 %v1296
        %v1562 = vunpack.c.l.b16 %v1310
        %v1563 = vunpack.c.h.b16 %v1310
        %v1564 = vunpack.c.l.b16 %v1324
        %v1565 = vunpack.c.h.b16 %v1324
        %v1566 = vunpack.c.l.b16 %v1338
        %v1567 = vunpack.c.h.b16 %v1338
        %v1568 = vunpack.c.l.b16 %v1352
        %v1569 = vunpack.c.h.b16 %v1352
        %v1570 = vunpack.c.l.b16 %v1366
        %v1571 = vunpack.c.h.b16 %v1366
        %v1572 = vunpack.c.l.b16 %v1380
        %v1573 = vunpack.c.h.b16 %v1380
        %v1574 = vunpack.c.l.b16 %v1394
        %v1575 = vunpack.c.h.b16 %v1394
        %v1576 = vunpack.c.l.b16 %v1408
        %v1577 = vunpack.c.h.b16 %v1408
        %v1578 = vunpack.c.l.b16 %v1422
        %v1579 = vunpack.c.h.b16 %v1422
        %v1580 = vunpack.c.l.b16 %v1436
        %v1581 = vunpack.c.h.b16 %v1436
        %v1582 = vunpack.c.l.b16 %v1450
        %v1583 = vunpack.c.h.b16 %v1450
        %v1584 = vunpack.c.l.b16 %v1464
        %v1585 = vunpack.c.h.b16 %v1464
        %v1586 = vunpack.c.l.b16 %v1478
        %v1587 = vunpack.c.h.b16 %v1478
        %v1588 = vunpack.c.l.b16 %v1492
        %v1589 = vunpack.c.h.b16 %v1492
        %v1590 = vpack.c.b16 %v1562, %v1558
        %v1591 = vpack.c.b16 %v1563, %v1559
        %v1592 = vpack.c.b16 %v1564, %v1560
        %v1593 = vpack.c.b16 %v1565, %v1561
        %v1594 = vpack.c.b16 %v1570, %v1566
        %v1595 = vpack.c.b16 %v1571, %v1567
        %v1596 = vpack.c.b16 %v1572, %v1568
        %v1597 = vpack.c.b16 %v1573, %v1569
        %v1598 = vpack.c.b16 %v1578, %v1574
        %v1599 = vpack.c.b16 %v1579, %v1575
        %v1600 = vpack.c.b16 %v1580, %v1576
        %v1601 = vpack.c.b16 %v1581, %v1577
        %v1602 = vpack.c.b16 %v1586, %v1582
        %v1603 = vpack.c.b16 %v1587, %v1583
        %v1604 = vpack.c.b16 %v1588, %v1584
        %v1605 = vpack.c.b16 %v1589, %v1585
        %v1686 = vunpack.c.l.b16 %v1494
        %v1687 = vunpack.c.h.b16 %v1494
        %v1688 = vunpack.c.l.b16 %v1495
        %v1689 = vunpack.c.h.b16 %v1495
        %v1690 = vunpack.c.l.b16 %v1496
        %v1691 = vunpack.c.h.b16 %v1496
        %v1692 = vunpack.c.l.b16 %v1497
        %v1693 = vunpack.c.h.b16 %v1497
        %v1694 = vunpack.c.l.b16 %v1498
        %v1695 = vunpack.c.h.b16 %v1498
        %v1696 = vunpack.c.l.b16 %v1499
        %v1697 = vunpack.c.h.b16 %v1499
        %v1698 = vunpack.c.l.b16 %v1500
        %v1699 = vunpack.c.h.b16 %v1500
        %v1700 = vunpack.c.l.b16 %v1501
        %v1701 = vunpack.c.h.b16 %v1501
        %v1702 = vunpack.c.l.b16 %v1502
        %v1703 = vunpack.c.h.b16 %v1502
        %v1704 = vunpack.c.l.b16 %v1503
        %v1705 = vunpack.c.h.b16 %v1503
        %v1706 = vunpack.c.l.b16 %v1504
        %v1707 = vunpack.c.h.b16 %v1504
        %v1708 = vunpack.c.l.b16 %v1505
        %v1709 = vunpack.c.h.b16 %v1505
        %v1710 = vunpack.c.l.b16 %v1506
        %v1711 = vunpack.c.h.b16 %v1506
        %v1712 = vunpack.c.l.b16 %v1507
        %v1713 = vunpack.c.h.b16 %v1507
        %v1714 = vunpack.c.l.b16 %v1508
        %v1715 = vunpack.c.h.b16 %v1508
        %v1716 = vunpack.c.l.b16 %v1509
        %v1717 = vunpack.c.h.b16 %v1509
        %v1718 = vunpack.c.l.b16 %v1510
        %v1719 = vunpack.c.h.b16 %v1510
        %v1720 = vunpack.c.l.b16 %v1511
        %v1721 = vunpack.c.h.b16 %v1511
        %v1722 = vunpack.c.l.b16 %v1512
        %v1723 = vunpack.c.h.b16 %v1512
        %v1724 = vunpack.c.l.b16 %v1513
        %v1725 = vunpack.c.h.b16 %v1513
        %v1726 = vunpack.c.l.b16 %v1514
        %v1727 = vunpack.c.h.b16 %v1514
        %v1728 = vunpack.c.l.b16 %v1515
        %v1729 = vunpack.c.h.b16 %v1515
        %v1730 = vunpack.c.l.b16 %v1516
        %v1731 = vunpack.c.h.b16 %v1516
        %v1732 = vunpack.c.l.b16 %v1517
        %v1733 = vunpack.c.h.b16 %v1517
        %v1734 = vunpack.c.l.b16 %v1518
        %v1735 = vunpack.c.h.b16 %v1518
        %v1736 = vunpack.c.l.b16 %v1519
        %v1737 = vunpack.c.h.b16 %v1519
        %v1738 = vunpack.c.l.b16 %v1520
        %v1739 = vunpack.c.h.b16 %v1520
        %v1740 = vunpack.c.l.b16 %v1521
        %v1741 = vunpack.c.h.b16 %v1521
        %v1742 = vunpack.c.l.b16 %v1522
        %v1743 = vunpack.c.h.b16 %v1522
        %v1744 = vunpack.c.l.b16 %v1523
        %v1745 = vunpack.c.h.b16 %v1523
        %v1746 = vunpack.c.l.b16 %v1524
        %v1747 = vunpack.c.h.b16 %v1524
        %v1748 = vunpack.c.l.b16 %v1525
        %v1749 = vunpack.c.h.b16 %v1525
        %v1750 = vunpack.c.l.b16 %v1526
        %v1751 = vunpack.c.h.b16 %v1526
        %v1752 = vunpack.c.l.b16 %v1527
        %v1753 = vunpack.c.h.b16 %v1527
        %v1754 = vunpack.c.l.b16 %v1528
        %v1755 = vunpack.c.h.b16 %v1528
        %v1756 = vunpack.c.l.b16 %v1529
        %v1757 = vunpack.c.h.b16 %v1529
        %v1758 = vunpack.c.l.b16 %v1530
        %v1759 = vunpack.c.h.b16 %v1530
        %v1760 = vunpack.c.l.b16 %v1531
        %v1761 = vunpack.c.h.b16 %v1531
        %v1762 = vunpack.c.l.b16 %v1532
        %v1763 = vunpack.c.h.b16 %v1532
        %v1764 = vunpack.c.l.b16 %v1533
        %v1765 = vunpack.c.h.b16 %v1533
        %v1766 = vunpack.c.l.b16 %v1534
        %v1767 = vunpack.c.h.b16 %v1534
        %v1768 = vunpack.c.l.b16 %v1535
        %v1769 = vunpack.c.h.b16 %v1535
        %v1770 = vunpack.c.l.b16 %v1536
        %v1771 = vunpack.c.h.b16 %v1536
        %v1772 = vunpack.c.l.b16 %v1537
        %v1773 = vunpack.c.h.b16 %v1537
        %v1774 = vunpack.c.l.b16 %v1538
        %v1775 = vunpack.c.h.b16 %v1538
        %v1776 = vunpack.c.l.b16 %v1539
        %v1777 = vunpack.c.h.b16 %v1539
        %v1778 = vunpack.c.l.b16 %v1540
        %v1779 = vunpack.c.h.b16 %v1540
        %v1780 = vunpack.c.l.b16 %v1541
        %v1781 = vunpack.c.h.b16 %v1541
        %v1782 = vunpack.c.l.b16 %v1542
        %v1783 = vunpack.c.h.b16 %v1542
        %v1784 = vunpack.c.l.b16 %v1543
        %v1785 = vunpack.c.h.b16 %v1543
        %v1786 = vunpack.c.l.b16 %v1544
        %v1787 = vunpack.c.h.b16 %v1544
        %v1788 = vunpack.c.l.b16 %v1545
        %v1789 = vunpack.c.h.b16 %v1545
        %v1790 = vunpack.c.l.b16 %v1546
        %v1791 = vunpack.c.h.b16 %v1546
        %v1792 = vunpack.c.l.b16 %v1547
        %v1793 = vunpack.c.h.b16 %v1547
        %v1794 = vunpack.c.l.b16 %v1548
        %v1795 = vunpack.c.h.b16 %v1548
        %v1796 = vunpack.c.l.b16 %v1549
        %v1797 = vunpack.c.h.b16 %v1549
        %v1798 = vunpack.c.l.b16 %v1550
        %v1799 = vunpack.c.h.b16 %v1550
        %v1800 = vunpack.c.l.b16 %v1551
        %v1801 = vunpack.c.h.b16 %v1551
        %v1802 = vunpack.c.l.b16 %v1552
        %v1803 = vunpack.c.h.b16 %v1552
        %v1804 = vunpack.c.l.b16 %v1553
        %v1805 = vunpack.c.h.b16 %v1553
        %v1806 = vunpack.c.l.b16 %v1554
        %v1807 = vunpack.c.h.b16 %v1554
        %v1808 = vunpack.c.l.b16 %v1555
        %v1809 = vunpack.c.h.b16 %v1555
        %v1810 = vunpack.c.l.b16 %v1556
        %v1811 = vunpack.c.h.b16 %v1556
        %v1812 = vunpack.c.l.b16 %v1557
        %v1813 = vunpack.c.h.b16 %v1557
        %v1814 = vpack.c.b16 %v1688, %v1686
        %v1815 = vpack.c.b16 %v1689, %v1687
        %v1816 = vpack.c.b16 %v1692, %v1690
        %v1817 = vpack.c.b16 %v1693, %v1691
        %v1818 = vpack.c.b16 %v1696, %v1694
        %v1819 = vpack.c.b16 %v1697, %v1695
        %v1820 = vpack.c.b16 %v1700, %v1698
        %v1821 = vpack.c.b16 %v1701, %v1699
        %v1822 = vpack.c.b16 %v1704, %v1702
        %v1823 = vpack.c.b16 %v1705, %v1703
        %v1824 = vpack.c.b16 %v1708, %v1706
        %v1825 = vpack.c.b16 %v1709, %v1707
        %v1826 = vpack.c.b16 %v1712, %v1710
        %v1827 = vpack.c.b16 %v1713, %v1711
        %v1828 = vpack.c.b16 %v1716, %v1714
        %v1829 = vpack.c.b16 %v1717, %v1715
        %v1830 = vpack.c.b16 %v1720, %v1718
        %v1831 = vpack.c.b16 %v1721, %v1719
        %v1832 = vpack.c.b16 %v1724, %v1722
        %v1833 = vpack.c.b16 %v1725, %v1723
        %v1834 = vpack.c.b16 %v1728, %v1726
        %v1835 = vpack.c.b16 %v1729, %v1727
        %v1836 = vpack.c.b16 %v1732, %v1730
        %v1837 = vpack.c.b16 %v1733, %v1731
        %v1838 = vpack.c.b16 %v1736, %v1734
        %v1839 = vpack.c.b16 %v1737, %v1735
        %v1840 = vpack.c.b16 %v1740, %v1738
        %v1841 = vpack.c.b16 %v1741, %v1739
        %v1842 = vpack.c.b16 %v1744, %v1742
        %v1843 = vpack.c.b16 %v1745, %v1743
        %v1844 = vpack.c.b16 %v1748, %v1746
        %v1845 = vpack.c.b16 %v1749, %v1747
        %v1846 = vpack.c.b16 %v1752, %v1750
        %v1847 = vpack.c.b16 %v1753, %v1751
        %v1848 = vpack.c.b16 %v1756, %v1754
        %v1849 = vpack.c.b16 %v1757, %v1755
        %v1850 = vpack.c.b16 %v1760, %v1758
        %v1851 = vpack.c.b16 %v1761, %v1759
        %v1852 = vpack.c.b16 %v1764, %v1762
        %v1853 = vpack.c.b16 %v1765, %v1763
        %v1854 = vpack.c.b16 %v1768, %v1766
        %v1855 = vpack.c.b16 %v1769, %v1767
        %v1856 = vpack.c.b16 %v1772, %v1770
        %v1857 = vpack.c.b16 %v1773, %v1771
        %v1858 = vpack.c.b16 %v1776, %v1774
        %v1859 = vpack.c.b16 %v1777, %v1775
        %v1860 = vpack.c.b16 %v1780, %v1778
        %v1861 = vpack.c.b16 %v1781, %v1779
        %v1862 = vpack.c.b16 %v1784, %v1782
        %v1863 = vpack.c.b16 %v1785, %v1783
        %v1864 = vpack.c.b16 %v1788, %v1786
        %v1865 = vpack.c.b16 %v1789, %v1787
        %v1866 = vpack.c.b16 %v1792, %v1790
        %v1867 = vpack.c.b16 %v1793, %v1791
        %v1868 = vpack.c.b16 %v1796, %v1794
        %v1869 = vpack.c.b16 %v1797, %v1795
        %v1870 = vpack.c.b16 %v1800, %v1798
        %v1871 = vpack.c.b16 %v1801, %v1799
        %v1872 = vpack.c.b16 %v1804, %v1802
        %v1873 = vpack.c.b16 %v1805, %v1803
        %v1874 = vpack.c.b16 %v1808, %v1806
        %v1875 = vpack.c.b16 %v1809, %v1807
        %v1876 = vpack.c.b16 %v1812, %v1810
        %v1877 = vpack.c.b16 %v1813, %v1811
        %1942 = vmatprep.subr.bf16.mxu0 %v1815
        %1943 = vmatpush1.bf16.msra.mxu0 %v1814
        %1944 = vmatprep.subr.bf16.mxu0 %v1817
        %1945 = vmatpush1.bf16.msra.mxu0 %v1816
        %1946 = vmatprep.subr.bf16.mxu0 %v1819
        %1947 = vmatpush1.bf16.msra.mxu0 %v1818
        %1948 = vmatprep.subr.bf16.mxu0 %v1821
        %1949 = vmatpush1.bf16.msra.mxu0 %v1820
        %1950 = vmatprep.subr.bf16.mxu0 %v1823
        %1951 = vmatpush1.bf16.msra.mxu0 %v1822
        %1952 = vmatprep.subr.bf16.mxu0 %v1825
        %1953 = vmatpush1.bf16.msra.mxu0 %v1824
        %1954 = vmatprep.subr.bf16.mxu0 %v1827
        %1955 = vmatpush1.bf16.msra.mxu0 %v1826
        %1956 = vmatprep.subr.bf16.mxu0 %v1829
        %1957 = vmatpush1.bf16.msra.mxu0 %v1828
        %1958 = vmatprep.subr.bf16.mxu0 %v1831
        %1959 = vmatpush1.bf16.msra.mxu0 %v1830
        %1960 = vmatprep.subr.bf16.mxu0 %v1833
        %1961 = vmatpush1.bf16.msra.mxu0 %v1832
        %1962 = vmatprep.subr.bf16.mxu0 %v1835
        %1963 = vmatpush1.bf16.msra.mxu0 %v1834
        %1964 = vmatprep.subr.bf16.mxu0 %v1837
        %1965 = vmatpush1.bf16.msra.mxu0 %v1836
        %1966 = vmatprep.subr.bf16.mxu0 %v1839
        %1967 = vmatpush1.bf16.msra.mxu0 %v1838
        %1968 = vmatprep.subr.bf16.mxu0 %v1841
        %1969 = vmatpush1.bf16.msra.mxu0 %v1840
        %1970 = vmatprep.subr.bf16.mxu0 %v1843
        %1971 = vmatpush1.bf16.msra.mxu0 %v1842
        %1972 = vmatprep.subr.bf16.mxu0 %v1845
        %1973 = vmatpush1.bf16.msra.mxu0 %v1844
        %1974 = vmatprep.mubr.bf16.mxu0 %v1591
        %1975 = vmatmul.mubr.bf16.gmra.mrb[0].mxu0 %v1590
        %v1976 = vpop.f32.mrb[0].mxu0
        %v1977 = vadd.f32 0.0, %v1976
        %v1978 = vpop.f32.mrb[0].mxu0
        %v1979 = vadd.f32 0.0, %v1978
        %v1980 = vpop.f32.mrb[0].mxu0
        %v1981 = vadd.f32 0.0, %v1980
        %v1982 = vpop.f32.mrb[0].mxu0
        %v1983 = vadd.f32 0.0, %v1982
        %1984 = vmatprep.mubr.bf16.mxu0 %v1595
        %1985 = vmatmul.mubr.bf16.gmra.mrb[0].mxu0 %v1594
        %v1986 = vpop.f32.mrb[0].mxu0
        %v1987 = vadd.f32 0.0, %v1986
        %v1988 = vpop.f32.mrb[0].mxu0
        %v1989 = vadd.f32 0.0, %v1988
        %v1990 = vpop.f32.mrb[0].mxu0
        %v1991 = vadd.f32 0.0, %v1990
        %v1992 = vpop.f32.mrb[0].mxu0
        %v1993 = vadd.f32 0.0, %v1992
        %1994 = vmatprep.mubr.bf16.mxu0 %v1599
        %1995 = vmatmul.mubr.bf16.gmra.mrb[0].mxu0 %v1598
        %v1996 = vpop.f32.mrb[0].mxu0
        %v1997 = vadd.f32 0.0, %v1996
        %v1998 = vpop.f32.mrb[0].mxu0
        %v1999 = vadd.f32 0.0, %v1998
        %v2000 = vpop.f32.mrb[0].mxu0
        %v2001 = vadd.f32 0.0, %v2000
        %v2002 = vpop.f32.mrb[0].mxu0
        %v2003 = vadd.f32 0.0, %v2002
        %2004 = vmatprep.mubr.bf16.mxu0 %v1603
        %2005 = vmatmul.mubr.bf16.gmra.mrb[0].mxu0 %v1602
        %v2006 = vpop.f32.mrb[0].mxu0
        %v2007 = vadd.f32 0.0, %v2006
        %v2008 = vpop.f32.mrb[0].mxu0
        %v2009 = vadd.f32 0.0, %v2008
        %v2010 = vpop.f32.mrb[0].mxu0
        %v2011 = vadd.f32 0.0, %v2010
        %v2012 = vpop.f32.mrb[0].mxu0
        %v2013 = vadd.f32 0.0, %v2012
        %2014 = vdwg.mxu0
        %2015 = vmatprep.subr.bf16.mxu0 %v1847
        %2016 = vmatpush1.bf16.msra.mxu0 %v1846
        %2017 = vmatprep.subr.bf16.mxu0 %v1849
        %2018 = vmatpush1.bf16.msra.mxu0 %v1848
        %2019 = vmatprep.subr.bf16.mxu0 %v1851
        %2020 = vmatpush1.bf16.msra.mxu0 %v1850
        %2021 = vmatprep.subr.bf16.mxu0 %v1853
        %2022 = vmatpush1.bf16.msra.mxu0 %v1852
        %2023 = vmatprep.subr.bf16.mxu0 %v1855
        %2024 = vmatpush1.bf16.msra.mxu0 %v1854
        %2025 = vmatprep.subr.bf16.mxu0 %v1857
        %2026 = vmatpush1.bf16.msra.mxu0 %v1856
        %2027 = vmatprep.subr.bf16.mxu0 %v1859
        %2028 = vmatpush1.bf16.msra.mxu0 %v1858
        %2029 = vmatprep.subr.bf16.mxu0 %v1861
        %2030 = vmatpush1.bf16.msra.mxu0 %v1860
        %2031 = vmatprep.subr.bf16.mxu0 %v1863
        %2032 = vmatpush1.bf16.msra.mxu0 %v1862
        %2033 = vmatprep.subr.bf16.mxu0 %v1865
        %2034 = vmatpush1.bf16.msra.mxu0 %v1864
        %2035 = vmatprep.subr.bf16.mxu0 %v1867
        %2036 = vmatpush1.bf16.msra.mxu0 %v1866
        %2037 = vmatprep.subr.bf16.mxu0 %v1869
        %2038 = vmatpush1.bf16.msra.mxu0 %v1868
        %2039 = vmatprep.subr.bf16.mxu0 %v1871
        %2040 = vmatpush1.bf16.msra.mxu0 %v1870
        %2041 = vmatprep.subr.bf16.mxu0 %v1873
        %2042 = vmatpush1.bf16.msra.mxu0 %v1872
        %2043 = vmatprep.subr.bf16.mxu0 %v1875
        %2044 = vmatpush1.bf16.msra.mxu0 %v1874
        %2045 = vmatprep.subr.bf16.mxu0 %v1877
        %2046 = vmatpush1.bf16.msra.mxu0 %v1876
        %2047 = vmatprep.mubr.bf16.mxu0 %v1593
        %2048 = vmatmul.mubr.bf16.gmra.mrb[0].mxu0 %v1592
        %v2049 = vpop.f32.mrb[0].mxu0
        %v2050 = vadd.f32 %v1977, %v2049
        %v2051 = vpop.f32.mrb[0].mxu0
        %v2052 = vadd.f32 %v1979, %v2051
        %v2053 = vpop.f32.mrb[0].mxu0
        %v2054 = vadd.f32 %v1981, %v2053
        %v2055 = vpop.f32.mrb[0].mxu0
        %v2056 = vadd.f32 %v1983, %v2055
        %2057 = vmatprep.mubr.bf16.mxu0 %v1597
        %2058 = vmatmul.mubr.bf16.gmra.mrb[0].mxu0 %v1596
        %v2059 = vpop.f32.mrb[0].mxu0
        %v2060 = vadd.f32 %v1987, %v2059
        %v2061 = vpop.f32.mrb[0].mxu0
        %v2062 = vadd.f32 %v1989, %v2061
        %v2063 = vpop.f32.mrb[0].mxu0
        %v2064 = vadd.f32 %v1991, %v2063
        %v2065 = vpop.f32.mrb[0].mxu0
        %v2066 = vadd.f32 %v1993, %v2065
        %2067 = vmatprep.mubr.bf16.mxu0 %v1601
        %2068 = vmatmul.mubr.bf16.gmra.mrb[0].mxu0 %v1600
        %v2069 = vpop.f32.mrb[0].mxu0
        %v2070 = vadd.f32 %v1997, %v2069
        %v2071 = vpop.f32.mrb[0].mxu0
        %v2072 = vadd.f32 %v1999, %v2071
        %v2073 = vpop.f32.mrb[0].mxu0
        %v2074 = vadd.f32 %v2001, %v2073
        %v2075 = vpop.f32.mrb[0].mxu0
        %v2076 = vadd.f32 %v2003, %v2075
        %2077 = vmatprep.mubr.bf16.mxu0 %v1605
        %2078 = vmatmul.mubr.bf16.gmra.mrb[0].mxu0 %v1604
        %v2079 = vpop.f32.mrb[0].mxu0
        %v2080 = vadd.f32 %v2007, %v2079
        %v2081 = vpop.f32.mrb[0].mxu0
        %v2082 = vadd.f32 %v2009, %v2081
        %v2083 = vpop.f32.mrb[0].mxu0
        %v2084 = vadd.f32 %v2011, %v2083
        %v2085 = vpop.f32.mrb[0].mxu0
        %v2086 = vadd.f32 %v2013, %v2085
        %2087 = vdwg.mxu0
        %v2104 = vunpack.c.l.b16 %v1170
        %v2105 = vunpack.c.h.b16 %v1170
        %v2106 = vunpack.c.l.b16 %v1171
        %v2107 = vunpack.c.h.b16 %v1171
        %v2108 = vunpack.c.l.b16 %v1172
        %v2109 = vunpack.c.h.b16 %v1172
        %v2110 = vunpack.c.l.b16 %v1173
        %v2111 = vunpack.c.h.b16 %v1173
        %v2112 = vunpack.c.l.b16 %v1174
        %v2113 = vunpack.c.h.b16 %v1174
        %v2114 = vunpack.c.l.b16 %v1175
        %v2115 = vunpack.c.h.b16 %v1175
        %v2116 = vunpack.c.l.b16 %v1176
        %v2117 = vunpack.c.h.b16 %v1176
        %v2118 = vunpack.c.l.b16 %v1177
        %v2119 = vunpack.c.h.b16 %v1177
        %v2120 = vunpack.c.l.b16 %v1178
        %v2121 = vunpack.c.h.b16 %v1178
        %v2122 = vunpack.c.l.b16 %v1179
        %v2123 = vunpack.c.h.b16 %v1179
        %v2124 = vunpack.c.l.b16 %v1180
        %v2125 = vunpack.c.h.b16 %v1180
        %v2126 = vunpack.c.l.b16 %v1181
        %v2127 = vunpack.c.h.b16 %v1181
        %v2128 = vunpack.c.l.b16 %v1182
        %v2129 = vunpack.c.h.b16 %v1182
        %v2130 = vunpack.c.l.b16 %v1183
        %v2131 = vunpack.c.h.b16 %v1183
        %v2132 = vunpack.c.l.b16 %v1184
        %v2133 = vunpack.c.h.b16 %v1184
        %v2134 = vunpack.c.l.b16 %v1185
        %v2135 = vunpack.c.h.b16 %v1185
        %v2136 = vpack.c.b16 %v2108, %v2104
        %v2137 = vpack.c.b16 %v2109, %v2105
        %v2138 = vpack.c.b16 %v2110, %v2106
        %v2139 = vpack.c.b16 %v2111, %v2107
        %v2140 = vpack.c.b16 %v2116, %v2112
        %v2141 = vpack.c.b16 %v2117, %v2113
        %v2142 = vpack.c.b16 %v2118, %v2114
        %v2143 = vpack.c.b16 %v2119, %v2115
        %v2144 = vpack.c.b16 %v2124, %v2120
        %v2145 = vpack.c.b16 %v2125, %v2121
        %v2146 = vpack.c.b16 %v2126, %v2122
        %v2147 = vpack.c.b16 %v2127, %v2123
        %v2148 = vpack.c.b16 %v2132, %v2128
        %v2149 = vpack.c.b16 %v2133, %v2129
        %v2150 = vpack.c.b16 %v2134, %v2130
        %v2151 = vpack.c.b16 %v2135, %v2131
        %v2232 = vunpack.c.l.b16 %v1186
        %v2233 = vunpack.c.h.b16 %v1186
        %v2234 = vunpack.c.l.b16 %v1187
        %v2235 = vunpack.c.h.b16 %v1187
        %v2236 = vunpack.c.l.b16 %v1188
        %v2237 = vunpack.c.h.b16 %v1188
        %v2238 = vunpack.c.l.b16 %v1189
        %v2239 = vunpack.c.h.b16 %v1189
        %v2240 = vunpack.c.l.b16 %v1190
        %v2241 = vunpack.c.h.b16 %v1190
        %v2242 = vunpack.c.l.b16 %v1191
        %v2243 = vunpack.c.h.b16 %v1191
        %v2244 = vunpack.c.l.b16 %v1192
        %v2245 = vunpack.c.h.b16 %v1192
        %v2246 = vunpack.c.l.b16 %v1193
        %v2247 = vunpack.c.h.b16 %v1193
        %v2248 = vunpack.c.l.b16 %v1194
        %v2249 = vunpack.c.h.b16 %v1194
        %v2250 = vunpack.c.l.b16 %v1195
        %v2251 = vunpack.c.h.b16 %v1195
        %v2252 = vunpack.c.l.b16 %v1196
        %v2253 = vunpack.c.h.b16 %v1196
        %v2254 = vunpack.c.l.b16 %v1197
        %v2255 = vunpack.c.h.b16 %v1197
        %v2256 = vunpack.c.l.b16 %v1198
        %v2257 = vunpack.c.h.b16 %v1198
        %v2258 = vunpack.c.l.b16 %v1199
        %v2259 = vunpack.c.h.b16 %v1199
        %v2260 = vunpack.c.l.b16 %v1200
        %v2261 = vunpack.c.h.b16 %v1200
        %v2262 = vunpack.c.l.b16 %v1201
        %v2263 = vunpack.c.h.b16 %v1201
        %v2264 = vunpack.c.l.b16 %v1202
        %v2265 = vunpack.c.h.b16 %v1202
        %v2266 = vunpack.c.l.b16 %v1203
        %v2267 = vunpack.c.h.b16 %v1203
        %v2268 = vunpack.c.l.b16 %v1204
        %v2269 = vunpack.c.h.b16 %v1204
        %v2270 = vunpack.c.l.b16 %v1205
        %v2271 = vunpack.c.h.b16 %v1205
        %v2272 = vunpack.c.l.b16 %v1206
        %v2273 = vunpack.c.h.b16 %v1206
        %v2274 = vunpack.c.l.b16 %v1207
        %v2275 = vunpack.c.h.b16 %v1207
        %v2276 = vunpack.c.l.b16 %v1208
        %v2277 = vunpack.c.h.b16 %v1208
        %v2278 = vunpack.c.l.b16 %v1209
        %v2279 = vunpack.c.h.b16 %v1209
        %v2280 = vunpack.c.l.b16 %v1210
        %v2281 = vunpack.c.h.b16 %v1210
        %v2282 = vunpack.c.l.b16 %v1211
        %v2283 = vunpack.c.h.b16 %v1211
        %v2284 = vunpack.c.l.b16 %v1212
        %v2285 = vunpack.c.h.b16 %v1212
        %v2286 = vunpack.c.l.b16 %v1213
        %v2287 = vunpack.c.h.b16 %v1213
        %v2288 = vunpack.c.l.b16 %v1214
        %v2289 = vunpack.c.h.b16 %v1214
        %v2290 = vunpack.c.l.b16 %v1215
        %v2291 = vunpack.c.h.b16 %v1215
        %v2292 = vunpack.c.l.b16 %v1216
        %v2293 = vunpack.c.h.b16 %v1216
        %v2294 = vunpack.c.l.b16 %v1217
        %v2295 = vunpack.c.h.b16 %v1217
        %v2296 = vunpack.c.l.b16 %v1218
        %v2297 = vunpack.c.h.b16 %v1218
        %v2298 = vunpack.c.l.b16 %v1219
        %v2299 = vunpack.c.h.b16 %v1219
        %v2300 = vunpack.c.l.b16 %v1220
        %v2301 = vunpack.c.h.b16 %v1220
        %v2302 = vunpack.c.l.b16 %v1221
        %v2303 = vunpack.c.h.b16 %v1221
        %v2304 = vunpack.c.l.b16 %v1222
        %v2305 = vunpack.c.h.b16 %v1222
        %v2306 = vunpack.c.l.b16 %v1223
        %v2307 = vunpack.c.h.b16 %v1223
        %v2308 = vunpack.c.l.b16 %v1224
        %v2309 = vunpack.c.h.b16 %v1224
        %v2310 = vunpack.c.l.b16 %v1225
        %v2311 = vunpack.c.h.b16 %v1225
        %v2312 = vunpack.c.l.b16 %v1226
        %v2313 = vunpack.c.h.b16 %v1226
        %v2314 = vunpack.c.l.b16 %v1227
        %v2315 = vunpack.c.h.b16 %v1227
        %v2316 = vunpack.c.l.b16 %v1228
        %v2317 = vunpack.c.h.b16 %v1228
        %v2318 = vunpack.c.l.b16 %v1229
        %v2319 = vunpack.c.h.b16 %v1229
        %v2320 = vunpack.c.l.b16 %v1230
        %v2321 = vunpack.c.h.b16 %v1230
        %v2322 = vunpack.c.l.b16 %v1231
        %v2323 = vunpack.c.h.b16 %v1231
        %v2324 = vunpack.c.l.b16 %v1232
        %v2325 = vunpack.c.h.b16 %v1232
        %v2326 = vunpack.c.l.b16 %v1233
        %v2327 = vunpack.c.h.b16 %v1233
        %v2328 = vunpack.c.l.b16 %v1234
        %v2329 = vunpack.c.h.b16 %v1234
        %v2330 = vunpack.c.l.b16 %v1235
        %v2331 = vunpack.c.h.b16 %v1235
        %v2332 = vunpack.c.l.b16 %v1236
        %v2333 = vunpack.c.h.b16 %v1236
        %v2334 = vunpack.c.l.b16 %v1237
        %v2335 = vunpack.c.h.b16 %v1237
        %v2336 = vunpack.c.l.b16 %v1238
        %v2337 = vunpack.c.h.b16 %v1238
        %v2338 = vunpack.c.l.b16 %v1239
        %v2339 = vunpack.c.h.b16 %v1239
        %v2340 = vunpack.c.l.b16 %v1240
        %v2341 = vunpack.c.h.b16 %v1240
        %v2342 = vunpack.c.l.b16 %v1241
        %v2343 = vunpack.c.h.b16 %v1241
        %v2344 = vunpack.c.l.b16 %v1242
        %v2345 = vunpack.c.h.b16 %v1242
        %v2346 = vunpack.c.l.b16 %v1243
        %v2347 = vunpack.c.h.b16 %v1243
        %v2348 = vunpack.c.l.b16 %v1244
        %v2349 = vunpack.c.h.b16 %v1244
        %v2350 = vunpack.c.l.b16 %v1245
        %v2351 = vunpack.c.h.b16 %v1245
        %v2352 = vunpack.c.l.b16 %v1246
        %v2353 = vunpack.c.h.b16 %v1246
        %v2354 = vunpack.c.l.b16 %v1247
        %v2355 = vunpack.c.h.b16 %v1247
        %v2356 = vunpack.c.l.b16 %v1248
        %v2357 = vunpack.c.h.b16 %v1248
        %v2358 = vunpack.c.l.b16 %v1249
        %v2359 = vunpack.c.h.b16 %v1249
        %v2360 = vpack.c.b16 %v2234, %v2232
        %v2361 = vpack.c.b16 %v2235, %v2233
        %v2362 = vpack.c.b16 %v2238, %v2236
        %v2363 = vpack.c.b16 %v2239, %v2237
        %v2364 = vpack.c.b16 %v2242, %v2240
        %v2365 = vpack.c.b16 %v2243, %v2241
        %v2366 = vpack.c.b16 %v2246, %v2244
        %v2367 = vpack.c.b16 %v2247, %v2245
        %v2368 = vpack.c.b16 %v2250, %v2248
        %v2369 = vpack.c.b16 %v2251, %v2249
        %v2370 = vpack.c.b16 %v2254, %v2252
        %v2371 = vpack.c.b16 %v2255, %v2253
        %v2372 = vpack.c.b16 %v2258, %v2256
        %v2373 = vpack.c.b16 %v2259, %v2257
        %v2374 = vpack.c.b16 %v2262, %v2260
        %v2375 = vpack.c.b16 %v2263, %v2261
        %v2376 = vpack.c.b16 %v2266, %v2264
        %v2377 = vpack.c.b16 %v2267, %v2265
        %v2378 = vpack.c.b16 %v2270, %v2268
        %v2379 = vpack.c.b16 %v2271, %v2269
        %v2380 = vpack.c.b16 %v2274, %v2272
        %v2381 = vpack.c.b16 %v2275, %v2273
        %v2382 = vpack.c.b16 %v2278, %v2276
        %v2383 = vpack.c.b16 %v2279, %v2277
        %v2384 = vpack.c.b16 %v2282, %v2280
        %v2385 = vpack.c.b16 %v2283, %v2281
        %v2386 = vpack.c.b16 %v2286, %v2284
        %v2387 = vpack.c.b16 %v2287, %v2285
        %v2388 = vpack.c.b16 %v2290, %v2288
        %v2389 = vpack.c.b16 %v2291, %v2289
        %v2390 = vpack.c.b16 %v2294, %v2292
        %v2391 = vpack.c.b16 %v2295, %v2293
        %v2392 = vpack.c.b16 %v2298, %v2296
        %v2393 = vpack.c.b16 %v2299, %v2297
        %v2394 = vpack.c.b16 %v2302, %v2300
        %v2395 = vpack.c.b16 %v2303, %v2301
        %v2396 = vpack.c.b16 %v2306, %v2304
        %v2397 = vpack.c.b16 %v2307, %v2305
        %v2398 = vpack.c.b16 %v2310, %v2308
        %v2399 = vpack.c.b16 %v2311, %v2309
        %v2400 = vpack.c.b16 %v2314, %v2312
        %v2401 = vpack.c.b16 %v2315, %v2313
        %v2402 = vpack.c.b16 %v2318, %v2316
        %v2403 = vpack.c.b16 %v2319, %v2317
        %v2404 = vpack.c.b16 %v2322, %v2320
        %v2405 = vpack.c.b16 %v2323, %v2321
        %v2406 = vpack.c.b16 %v2326, %v2324
        %v2407 = vpack.c.b16 %v2327, %v2325
        %v2408 = vpack.c.b16 %v2330, %v2328
        %v2409 = vpack.c.b16 %v2331, %v2329
        %v2410 = vpack.c.b16 %v2334, %v2332
        %v2411 = vpack.c.b16 %v2335, %v2333
        %v2412 = vpack.c.b16 %v2338, %v2336
        %v2413 = vpack.c.b16 %v2339, %v2337
        %v2414 = vpack.c.b16 %v2342, %v2340
        %v2415 = vpack.c.b16 %v2343, %v2341
        %v2416 = vpack.c.b16 %v2346, %v2344
        %v2417 = vpack.c.b16 %v2347, %v2345
        %v2418 = vpack.c.b16 %v2350, %v2348
        %v2419 = vpack.c.b16 %v2351, %v2349
        %v2420 = vpack.c.b16 %v2354, %v2352
        %v2421 = vpack.c.b16 %v2355, %v2353
        %v2422 = vpack.c.b16 %v2358, %v2356
        %v2423 = vpack.c.b16 %v2359, %v2357
        %2488 = vmatprep.subr.bf16.mxu0 %v2361
        %2489 = vmatpush1.bf16.msra.mxu0 %v2360
        %2490 = vmatprep.subr.bf16.mxu0 %v2363
        %2491 = vmatpush1.bf16.msra.mxu0 %v2362
        %2492 = vmatprep.subr.bf16.mxu0 %v2365
        %2493 = vmatpush1.bf16.msra.mxu0 %v2364
        %2494 = vmatprep.subr.bf16.mxu0 %v2367
        %2495 = vmatpush1.bf16.msra.mxu0 %v2366
        %2496 = vmatprep.subr.bf16.mxu0 %v2369
        %2497 = vmatpush1.bf16.msra.mxu0 %v2368
        %2498 = vmatprep.subr.bf16.mxu0 %v2371
        %2499 = vmatpush1.bf16.msra.mxu0 %v2370
        %2500 = vmatprep.subr.bf16.mxu0 %v2373
        %2501 = vmatpush1.bf16.msra.mxu0 %v2372
        %2502 = vmatprep.subr.bf16.mxu0 %v2375
        %2503 = vmatpush1.bf16.msra.mxu0 %v2374
        %2504 = vmatprep.subr.bf16.mxu0 %v2377
        %2505 = vmatpush1.bf16.msra.mxu0 %v2376
        %2506 = vmatprep.subr.bf16.mxu0 %v2379
        %2507 = vmatpush1.bf16.msra.mxu0 %v2378
        %2508 = vmatprep.subr.bf16.mxu0 %v2381
        %2509 = vmatpush1.bf16.msra.mxu0 %v2380
        %2510 = vmatprep.subr.bf16.mxu0 %v2383
        %2511 = vmatpush1.bf16.msra.mxu0 %v2382
        %2512 = vmatprep.subr.bf16.mxu0 %v2385
        %2513 = vmatpush1.bf16.msra.mxu0 %v2384
        %2514 = vmatprep.subr.bf16.mxu0 %v2387
        %2515 = vmatpush1.bf16.msra.mxu0 %v2386
        %2516 = vmatprep.subr.bf16.mxu0 %v2389
        %2517 = vmatpush1.bf16.msra.mxu0 %v2388
        %2518 = vmatprep.subr.bf16.mxu0 %v2391
        %2519 = vmatpush1.bf16.msra.mxu0 %v2390
        %2520 = vmatprep.mubr.bf16.mxu0 %v2137
        %2521 = vmatmul.mubr.bf16.gmra.mrb[0].mxu0 %v2136
        %v2522 = vpop.f32.mrb[0].mxu0
        %v2523 = vadd.f32 %v2050, %v2522
        %v2524 = vpop.f32.mrb[0].mxu0
        %v2525 = vadd.f32 %v2052, %v2524
        %v2526 = vpop.f32.mrb[0].mxu0
        %v2527 = vadd.f32 %v2054, %v2526
        %v2528 = vpop.f32.mrb[0].mxu0
        %v2529 = vadd.f32 %v2056, %v2528
        %2530 = vmatprep.mubr.bf16.mxu0 %v2141
        %2531 = vmatmul.mubr.bf16.gmra.mrb[0].mxu0 %v2140
        %v2532 = vpop.f32.mrb[0].mxu0
        %v2533 = vadd.f32 %v2060, %v2532
        %v2534 = vpop.f32.mrb[0].mxu0
        %v2535 = vadd.f32 %v2062, %v2534
        %v2536 = vpop.f32.mrb[0].mxu0
        %v2537 = vadd.f32 %v2064, %v2536
        %v2538 = vpop.f32.mrb[0].mxu0
        %v2539 = vadd.f32 %v2066, %v2538
        %2540 = vmatprep.mubr.bf16.mxu0 %v2145
        %2541 = vmatmul.mubr.bf16.gmra.mrb[0].mxu0 %v2144
        %v2542 = vpop.f32.mrb[0].mxu0
        %v2543 = vadd.f32 %v2070, %v2542
        %v2544 = vpop.f32.mrb[0].mxu0
        %v2545 = vadd.f32 %v2072, %v2544
        %v2546 = vpop.f32.mrb[0].mxu0
        %v2547 = vadd.f32 %v2074, %v2546
        %v2548 = vpop.f32.mrb[0].mxu0
        %v2549 = vadd.f32 %v2076, %v2548
        %2550 = vmatprep.mubr.bf16.mxu0 %v2149
        %2551 = vmatmul.mubr.bf16.gmra.mrb[0].mxu0 %v2148
        %v2552 = vpop.f32.mrb[0].mxu0
        %v2553 = vadd.f32 %v2080, %v2552
        %v2554 = vpop.f32.mrb[0].mxu0
        %v2555 = vadd.f32 %v2082, %v2554
        %v2556 = vpop.f32.mrb[0].mxu0
        %v2557 = vadd.f32 %v2084, %v2556
        %v2558 = vpop.f32.mrb[0].mxu0
        %v2559 = vadd.f32 %v2086, %v2558
        %2560 = vdwg.mxu0
        %2561 = vmatprep.subr.bf16.mxu0 %v2393
        %2562 = vmatpush1.bf16.msra.mxu0 %v2392
        %2563 = vmatprep.subr.bf16.mxu0 %v2395
        %2564 = vmatpush1.bf16.msra.mxu0 %v2394
        %2565 = vmatprep.subr.bf16.mxu0 %v2397
        %2566 = vmatpush1.bf16.msra.mxu0 %v2396
        %2567 = vmatprep.subr.bf16.mxu0 %v2399
        %2568 = vmatpush1.bf16.msra.mxu0 %v2398
        %2569 = vmatprep.subr.bf16.mxu0 %v2401
        %2570 = vmatpush1.bf16.msra.mxu0 %v2400
        %2571 = vmatprep.subr.bf16.mxu0 %v2403
        %2572 = vmatpush1.bf16.msra.mxu0 %v2402
        %2573 = vmatprep.subr.bf16.mxu0 %v2405
        %2574 = vmatpush1.bf16.msra.mxu0 %v2404
        %2575 = vmatprep.subr.bf16.mxu0 %v2407
        %2576 = vmatpush1.bf16.msra.mxu0 %v2406
        %2577 = vmatprep.subr.bf16.mxu0 %v2409
        %2578 = vmatpush1.bf16.msra.mxu0 %v2408
        %2579 = vmatprep.subr.bf16.mxu0 %v2411
        %2580 = vmatpush1.bf16.msra.mxu0 %v2410
        %2581 = vmatprep.subr.bf16.mxu0 %v2413
        %2582 = vmatpush1.bf16.msra.mxu0 %v2412
        %2583 = vmatprep.subr.bf16.mxu0 %v2415
        %2584 = vmatpush1.bf16.msra.mxu0 %v2414
        %2585 = vmatprep.subr.bf16.mxu0 %v2417
        %2586 = vmatpush1.bf16.msra.mxu0 %v2416
        %2587 = vmatprep.subr.bf16.mxu0 %v2419
        %2588 = vmatpush1.bf16.msra.mxu0 %v2418
        %2589 = vmatprep.subr.bf16.mxu0 %v2421
        %2590 = vmatpush1.bf16.msra.mxu0 %v2420
        %2591 = vmatprep.subr.bf16.mxu0 %v2423
        %2592 = vmatpush1.bf16.msra.mxu0 %v2422
        %2593 = vmatprep.mubr.bf16.mxu0 %v2139
        %2594 = vmatmul.mubr.bf16.gmra.mrb[0].mxu0 %v2138
        %v2595 = vpop.f32.mrb[0].mxu0
        %v2596 = vadd.f32 %v2523, %v2595
        %v2597 = vpop.f32.mrb[0].mxu0
        %v2598 = vadd.f32 %v2525, %v2597
        %v2599 = vpop.f32.mrb[0].mxu0
        %v2600 = vadd.f32 %v2527, %v2599
        %v2601 = vpop.f32.mrb[0].mxu0
        %v2602 = vadd.f32 %v2529, %v2601
        %2603 = vmatprep.mubr.bf16.mxu0 %v2143
        %2604 = vmatmul.mubr.bf16.gmra.mrb[0].mxu0 %v2142
        %v2605 = vpop.f32.mrb[0].mxu0
        %v2606 = vadd.f32 %v2533, %v2605
        %v2607 = vpop.f32.mrb[0].mxu0
        %v2608 = vadd.f32 %v2535, %v2607
        %v2609 = vpop.f32.mrb[0].mxu0
        %v2610 = vadd.f32 %v2537, %v2609
        %v2611 = vpop.f32.mrb[0].mxu0
        %v2612 = vadd.f32 %v2539, %v2611
        %2613 = vmatprep.mubr.bf16.mxu0 %v2147
        %2614 = vmatmul.mubr.bf16.gmra.mrb[0].mxu0 %v2146
        %v2615 = vpop.f32.mrb[0].mxu0
        %v2616 = vadd.f32 %v2543, %v2615
        %v2617 = vpop.f32.mrb[0].mxu0
        %v2618 = vadd.f32 %v2545, %v2617
        %v2619 = vpop.f32.mrb[0].mxu0
        %v2620 = vadd.f32 %v2547, %v2619
        %v2621 = vpop.f32.mrb[0].mxu0
        %v2622 = vadd.f32 %v2549, %v2621
        %2623 = vmatprep.mubr.bf16.mxu0 %v2151
        %2624 = vmatmul.mubr.bf16.gmra.mrb[0].mxu0 %v2150
        %v2625 = vpop.f32.mrb[0].mxu0
        %v2626 = vadd.f32 %v2553, %v2625
        %v2627 = vpop.f32.mrb[0].mxu0
        %v2628 = vadd.f32 %v2555, %v2627
        %v2629 = vpop.f32.mrb[0].mxu0
        %v2630 = vadd.f32 %v2557, %v2629
        %v2631 = vpop.f32.mrb[0].mxu0
        %v2632 = vadd.f32 %v2559, %v2631
        %2633 = vdwg.mxu0
        %v2634 = vld [vmem:[#allocation2] sm:$0xee]
        %v2635 = vld [vmem:[#allocation2 + $0x8] sm:$0xee]
        %v2636 = vld [vmem:[#allocation2 + $0x20] sm:$0xee]
        %v2637 = vld [vmem:[#allocation2 + $0x28] sm:$0xee]
        %v2638 = vld [vmem:[#allocation2 + $0x40] sm:$0xee]
        %v2639 = vld [vmem:[#allocation2 + $0x48] sm:$0xee]
        %v2640 = vld [vmem:[#allocation2 + $0x60] sm:$0xee]
        %v2641 = vld [vmem:[#allocation2 + $0x68] sm:$0xee]
        %v2642 = vld [vmem:[#allocation2 + $0x80] sm:$0xee]
        %v2643 = vld [vmem:[#allocation2 + $0x88] sm:$0xee]
        %v2644 = vld [vmem:[#allocation2 + $0xa0] sm:$0xee]
        %v2645 = vld [vmem:[#allocation2 + $0xa8] sm:$0xee]
        %v2646 = vld [vmem:[#allocation2 + $0xc0] sm:$0xee]
        %v2647 = vld [vmem:[#allocation2 + $0xc8] sm:$0xee]
        %v2648 = vld [vmem:[#allocation2 + $0xe0] sm:$0xee]
        %v2649 = vld [vmem:[#allocation2 + $0xe8] sm:$0xee]
        %vm2682 = vcmask 1042432
        %vm2683 = vcmask 1046532
        %vm2684 = vmor %vm2682, %vm2683
        %v2685 = vrot.slane %v2634, 5
        %v2686 = vrot.slane %v2685, 4
        %v2687 = vrot.slane %v1250, 5
        %v2688 = vsel %vm2684, %v2686, %v2687
        %v2689 = vrot.slane %v2635, 5
        %v2690 = vrot.slane %v2689, 4
        %v2691 = vrot.slane %v1251, 5
        %v2692 = vsel %vm2684, %v2690, %v2691
        %v2693 = vrot.slane %v2636, 5
        %v2694 = vrot.slane %v2693, 4
        %v2695 = vrot.slane %v1252, 5
        %v2696 = vsel %vm2684, %v2694, %v2695
        %v2697 = vrot.slane %v2637, 5
        %v2698 = vrot.slane %v2697, 4
        %v2699 = vrot.slane %v1253, 5
        %v2700 = vsel %vm2684, %v2698, %v2699
        %v2701 = vrot.slane %v2638, 5
        %v2702 = vrot.slane %v2701, 4
        %v2703 = vrot.slane %v1254, 5
        %v2704 = vsel %vm2684, %v2702, %v2703
        %v2705 = vrot.slane %v2639, 5
        %v2706 = vrot.slane %v2705, 4
        %v2707 = vrot.slane %v1255, 5
        %v2708 = vsel %vm2684, %v2706, %v2707
        %v2709 = vrot.slane %v2640, 5
        %v2710 = vrot.slane %v2709, 4
        %v2711 = vrot.slane %v1256, 5
        %v2712 = vsel %vm2684, %v2710, %v2711
        %v2713 = vrot.slane %v2641, 5
        %v2714 = vrot.slane %v2713, 4
        %v2715 = vrot.slane %v1257, 5
        %v2716 = vsel %vm2684, %v2714, %v2715
        %v2717 = vrot.slane %v2642, 5
        %v2718 = vrot.slane %v2717, 4
        %v2719 = vrot.slane %v1258, 5
        %v2720 = vsel %vm2684, %v2718, %v2719
        %v2721 = vrot.slane %v2643, 5
        %v2722 = vrot.slane %v2721, 4
        %v2723 = vrot.slane %v1259, 5
        %v2724 = vsel %vm2684, %v2722, %v2723
        %v2725 = vrot.slane %v2644, 5
        %v2726 = vrot.slane %v2725, 4
        %v2727 = vrot.slane %v1260, 5
        %v2728 = vsel %vm2684, %v2726, %v2727
        %v2729 = vrot.slane %v2645, 5
        %v2730 = vrot.slane %v2729, 4
        %v2731 = vrot.slane %v1261, 5
        %v2732 = vsel %vm2684, %v2730, %v2731
        %v2733 = vrot.slane %v2646, 5
        %v2734 = vrot.slane %v2733, 4
        %v2735 = vrot.slane %v1262, 5
        %v2736 = vsel %vm2684, %v2734, %v2735
        %v2737 = vrot.slane %v2647, 5
        %v2738 = vrot.slane %v2737, 4
        %v2739 = vrot.slane %v1263, 5
        %v2740 = vsel %vm2684, %v2738, %v2739
        %v2741 = vrot.slane %v2648, 5
        %v2742 = vrot.slane %v2741, 4
        %v2743 = vrot.slane %v1264, 5
        %v2744 = vsel %vm2684, %v2742, %v2743
        %v2745 = vrot.slane %v2649, 5
        %v2746 = vrot.slane %v2745, 4
        %v2747 = vrot.slane %v1265, 5
        %v2748 = vsel %vm2684, %v2746, %v2747
        %s2749 = scalar_lea.vmem [#allocation10], 1024
        %v2750 = vld [vmem:[%s2749] sm:$0xff]
        %v2751 = vld [vmem:[%s2749 + $0x8] sm:$0xff]
        %v2752 = vld [vmem:[%s2749 + $0x10] sm:$0xff]
        %v2753 = vld [vmem:[%s2749 + $0x18] sm:$0xff]
        %v2754 = vld [vmem:[%s2749 + $0x20] sm:$0xff]
        %v2755 = vld [vmem:[%s2749 + $0x28] sm:$0xff]
        %v2756 = vld [vmem:[%s2749 + $0x30] sm:$0xff]
        %v2757 = vld [vmem:[%s2749 + $0x38] sm:$0xff]
        %v2758 = vld [vmem:[%s2749 + $0x40] sm:$0xff]
        %v2759 = vld [vmem:[%s2749 + $0x48] sm:$0xff]
        %v2760 = vld [vmem:[%s2749 + $0x50] sm:$0xff]
        %v2761 = vld [vmem:[%s2749 + $0x58] sm:$0xff]
        %v2762 = vld [vmem:[%s2749 + $0x60] sm:$0xff]
        %v2763 = vld [vmem:[%s2749 + $0x68] sm:$0xff]
        %v2764 = vld [vmem:[%s2749 + $0x70] sm:$0xff]
        %v2765 = vld [vmem:[%s2749 + $0x78] sm:$0xff]
        %v2766 = vld [vmem:[%s2749 + $0x80] sm:$0xff]
        %v2767 = vld [vmem:[%s2749 + $0x88] sm:$0xff]
        %v2768 = vld [vmem:[%s2749 + $0x90] sm:$0xff]
        %v2769 = vld [vmem:[%s2749 + $0x98] sm:$0xff]
        %v2770 = vld [vmem:[%s2749 + $0xa0] sm:$0xff]
        %v2771 = vld [vmem:[%s2749 + $0xa8] sm:$0xff]
        %v2772 = vld [vmem:[%s2749 + $0xb0] sm:$0xff]
        %v2773 = vld [vmem:[%s2749 + $0xb8] sm:$0xff]
        %v2774 = vld [vmem:[%s2749 + $0xc0] sm:$0xff]
        %v2775 = vld [vmem:[%s2749 + $0xc8] sm:$0xff]
        %v2776 = vld [vmem:[%s2749 + $0xd0] sm:$0xff]
        %v2777 = vld [vmem:[%s2749 + $0xd8] sm:$0xff]
        %v2778 = vld [vmem:[%s2749 + $0xe0] sm:$0xff]
        %v2779 = vld [vmem:[%s2749 + $0xe8] sm:$0xff]
        %v2780 = vld [vmem:[%s2749 + $0xf0] sm:$0xff]
        %v2781 = vld [vmem:[%s2749 + $0xf8] sm:$0xff]
        %v2782 = vld [vmem:[%s2749 + $0x100] sm:$0xff]
        %v2783 = vld [vmem:[%s2749 + $0x108] sm:$0xff]
        %v2784 = vld [vmem:[%s2749 + $0x110] sm:$0xff]
        %v2785 = vld [vmem:[%s2749 + $0x118] sm:$0xff]
        %v2786 = vld [vmem:[%s2749 + $0x120] sm:$0xff]
        %v2787 = vld [vmem:[%s2749 + $0x128] sm:$0xff]
        %v2788 = vld [vmem:[%s2749 + $0x130] sm:$0xff]
        %v2789 = vld [vmem:[%s2749 + $0x138] sm:$0xff]
        %v2790 = vld [vmem:[%s2749 + $0x140] sm:$0xff]
        %v2791 = vld [vmem:[%s2749 + $0x148] sm:$0xff]
        %v2792 = vld [vmem:[%s2749 + $0x150] sm:$0xff]
        %v2793 = vld [vmem:[%s2749 + $0x158] sm:$0xff]
        %v2794 = vld [vmem:[%s2749 + $0x160] sm:$0xff]
        %v2795 = vld [vmem:[%s2749 + $0x168] sm:$0xff]
        %v2796 = vld [vmem:[%s2749 + $0x170] sm:$0xff]
        %v2797 = vld [vmem:[%s2749 + $0x178] sm:$0xff]
        %v2798 = vld [vmem:[%s2749 + $0x180] sm:$0xff]
        %v2799 = vld [vmem:[%s2749 + $0x188] sm:$0xff]
        %v2800 = vld [vmem:[%s2749 + $0x190] sm:$0xff]
        %v2801 = vld [vmem:[%s2749 + $0x198] sm:$0xff]
        %v2802 = vld [vmem:[%s2749 + $0x1a0] sm:$0xff]
        %v2803 = vld [vmem:[%s2749 + $0x1a8] sm:$0xff]
        %v2804 = vld [vmem:[%s2749 + $0x1b0] sm:$0xff]
        %v2805 = vld [vmem:[%s2749 + $0x1b8] sm:$0xff]
        %v2806 = vld [vmem:[%s2749 + $0x1c0] sm:$0xff]
        %v2807 = vld [vmem:[%s2749 + $0x1c8] sm:$0xff]
        %v2808 = vld [vmem:[%s2749 + $0x1d0] sm:$0xff]
        %v2809 = vld [vmem:[%s2749 + $0x1d8] sm:$0xff]
        %v2810 = vld [vmem:[%s2749 + $0x1e0] sm:$0xff]
        %v2811 = vld [vmem:[%s2749 + $0x1e8] sm:$0xff]
        %v2812 = vld [vmem:[%s2749 + $0x1f0] sm:$0xff]
        %v2813 = vld [vmem:[%s2749 + $0x1f8] sm:$0xff]
        %v2814 = vunpack.c.l.b16 %v2688
        %v2815 = vunpack.c.h.b16 %v2688
        %v2816 = vunpack.c.l.b16 %v2692
        %v2817 = vunpack.c.h.b16 %v2692
        %v2818 = vunpack.c.l.b16 %v2696
        %v2819 = vunpack.c.h.b16 %v2696
        %v2820 = vunpack.c.l.b16 %v2700
        %v2821 = vunpack.c.h.b16 %v2700
        %v2822 = vunpack.c.l.b16 %v2704
        %v2823 = vunpack.c.h.b16 %v2704
        %v2824 = vunpack.c.l.b16 %v2708
        %v2825 = vunpack.c.h.b16 %v2708
        %v2826 = vunpack.c.l.b16 %v2712
        %v2827 = vunpack.c.h.b16 %v2712
        %v2828 = vunpack.c.l.b16 %v2716
        %v2829 = vunpack.c.h.b16 %v2716
        %v2830 = vunpack.c.l.b16 %v2720
        %v2831 = vunpack.c.h.b16 %v2720
        %v2832 = vunpack.c.l.b16 %v2724
        %v2833 = vunpack.c.h.b16 %v2724
        %v2834 = vunpack.c.l.b16 %v2728
        %v2835 = vunpack.c.h.b16 %v2728
        %v2836 = vunpack.c.l.b16 %v2732
        %v2837 = vunpack.c.h.b16 %v2732
        %v2838 = vunpack.c.l.b16 %v2736
        %v2839 = vunpack.c.h.b16 %v2736
        %v2840 = vunpack.c.l.b16 %v2740
        %v2841 = vunpack.c.h.b16 %v2740
        %v2842 = vunpack.c.l.b16 %v2744
        %v2843 = vunpack.c.h.b16 %v2744
        %v2844 = vunpack.c.l.b16 %v2748
        %v2845 = vunpack.c.h.b16 %v2748
        %v2846 = vpack.c.b16 %v2818, %v2814
        %v2847 = vpack.c.b16 %v2819, %v2815
        %v2848 = vpack.c.b16 %v2820, %v2816
        %v2849 = vpack.c.b16 %v2821, %v2817
        %v2850 = vpack.c.b16 %v2826, %v2822
        %v2851 = vpack.c.b16 %v2827, %v2823
        %v2852 = vpack.c.b16 %v2828, %v2824
        %v2853 = vpack.c.b16 %v2829, %v2825
        %v2854 = vpack.c.b16 %v2834, %v2830
        %v2855 = vpack.c.b16 %v2835, %v2831
        %v2856 = vpack.c.b16 %v2836, %v2832
        %v2857 = vpack.c.b16 %v2837, %v2833
        %v2858 = vpack.c.b16 %v2842, %v2838
        %v2859 = vpack.c.b16 %v2843, %v2839
        %v2860 = vpack.c.b16 %v2844, %v2840
        %v2861 = vpack.c.b16 %v2845, %v2841
        %v2942 = vunpack.c.l.b16 %v2750
        %v2943 = vunpack.c.h.b16 %v2750
        %v2944 = vunpack.c.l.b16 %v2751
        %v2945 = vunpack.c.h.b16 %v2751
        %v2946 = vunpack.c.l.b16 %v2752
        %v2947 = vunpack.c.h.b16 %v2752
        %v2948 = vunpack.c.l.b16 %v2753
        %v2949 = vunpack.c.h.b16 %v2753
        %v2950 = vunpack.c.l.b16 %v2754
        %v2951 = vunpack.c.h.b16 %v2754
        %v2952 = vunpack.c.l.b16 %v2755
        %v2953 = vunpack.c.h.b16 %v2755
        %v2954 = vunpack.c.l.b16 %v2756
        %v2955 = vunpack.c.h.b16 %v2756
        %v2956 = vunpack.c.l.b16 %v2757
        %v2957 = vunpack.c.h.b16 %v2757
        %v2958 = vunpack.c.l.b16 %v2758
        %v2959 = vunpack.c.h.b16 %v2758
        %v2960 = vunpack.c.l.b16 %v2759
        %v2961 = vunpack.c.h.b16 %v2759
        %v2962 = vunpack.c.l.b16 %v2760
        %v2963 = vunpack.c.h.b16 %v2760
        %v2964 = vunpack.c.l.b16 %v2761
        %v2965 = vunpack.c.h.b16 %v2761
        %v2966 = vunpack.c.l.b16 %v2762
        %v2967 = vunpack.c.h.b16 %v2762
        %v2968 = vunpack.c.l.b16 %v2763
        %v2969 = vunpack.c.h.b16 %v2763
        %v2970 = vunpack.c.l.b16 %v2764
        %v2971 = vunpack.c.h.b16 %v2764
        %v2972 = vunpack.c.l.b16 %v2765
        %v2973 = vunpack.c.h.b16 %v2765
        %v2974 = vunpack.c.l.b16 %v2766
        %v2975 = vunpack.c.h.b16 %v2766
        %v2976 = vunpack.c.l.b16 %v2767
        %v2977 = vunpack.c.h.b16 %v2767
        %v2978 = vunpack.c.l.b16 %v2768
        %v2979 = vunpack.c.h.b16 %v2768
        %v2980 = vunpack.c.l.b16 %v2769
        %v2981 = vunpack.c.h.b16 %v2769
        %v2982 = vunpack.c.l.b16 %v2770
        %v2983 = vunpack.c.h.b16 %v2770
        %v2984 = vunpack.c.l.b16 %v2771
        %v2985 = vunpack.c.h.b16 %v2771
        %v2986 = vunpack.c.l.b16 %v2772
        %v2987 = vunpack.c.h.b16 %v2772
        %v2988 = vunpack.c.l.b16 %v2773
        %v2989 = vunpack.c.h.b16 %v2773
        %v2990 = vunpack.c.l.b16 %v2774
        %v2991 = vunpack.c.h.b16 %v2774
        %v2992 = vunpack.c.l.b16 %v2775
        %v2993 = vunpack.c.h.b16 %v2775
        %v2994 = vunpack.c.l.b16 %v2776
        %v2995 = vunpack.c.h.b16 %v2776
        %v2996 = vunpack.c.l.b16 %v2777
        %v2997 = vunpack.c.h.b16 %v2777
        %v2998 = vunpack.c.l.b16 %v2778
        %v2999 = vunpack.c.h.b16 %v2778
        %v3000 = vunpack.c.l.b16 %v2779
        %v3001 = vunpack.c.h.b16 %v2779
        %v3002 = vunpack.c.l.b16 %v2780
        %v3003 = vunpack.c.h.b16 %v2780
        %v3004 = vunpack.c.l.b16 %v2781
        %v3005 = vunpack.c.h.b16 %v2781
        %v3006 = vunpack.c.l.b16 %v2782
        %v3007 = vunpack.c.h.b16 %v2782
        %v3008 = vunpack.c.l.b16 %v2783
        %v3009 = vunpack.c.h.b16 %v2783
        %v3010 = vunpack.c.l.b16 %v2784
        %v3011 = vunpack.c.h.b16 %v2784
        %v3012 = vunpack.c.l.b16 %v2785
        %v3013 = vunpack.c.h.b16 %v2785
        %v3014 = vunpack.c.l.b16 %v2786
        %v3015 = vunpack.c.h.b16 %v2786
        %v3016 = vunpack.c.l.b16 %v2787
        %v3017 = vunpack.c.h.b16 %v2787
        %v3018 = vunpack.c.l.b16 %v2788
        %v3019 = vunpack.c.h.b16 %v2788
        %v3020 = vunpack.c.l.b16 %v2789
        %v3021 = vunpack.c.h.b16 %v2789
        %v3022 = vunpack.c.l.b16 %v2790
        %v3023 = vunpack.c.h.b16 %v2790
        %v3024 = vunpack.c.l.b16 %v2791
        %v3025 = vunpack.c.h.b16 %v2791
        %v3026 = vunpack.c.l.b16 %v2792
        %v3027 = vunpack.c.h.b16 %v2792
        %v3028 = vunpack.c.l.b16 %v2793
        %v3029 = vunpack.c.h.b16 %v2793
        %v3030 = vunpack.c.l.b16 %v2794
        %v3031 = vunpack.c.h.b16 %v2794
        %v3032 = vunpack.c.l.b16 %v2795
        %v3033 = vunpack.c.h.b16 %v2795
        %v3034 = vunpack.c.l.b16 %v2796
        %v3035 = vunpack.c.h.b16 %v2796
        %v3036 = vunpack.c.l.b16 %v2797
        %v3037 = vunpack.c.h.b16 %v2797
        %v3038 = vunpack.c.l.b16 %v2798
        %v3039 = vunpack.c.h.b16 %v2798
        %v3040 = vunpack.c.l.b16 %v2799
        %v3041 = vunpack.c.h.b16 %v2799
        %v3042 = vunpack.c.l.b16 %v2800
        %v3043 = vunpack.c.h.b16 %v2800
        %v3044 = vunpack.c.l.b16 %v2801
        %v3045 = vunpack.c.h.b16 %v2801
        %v3046 = vunpack.c.l.b16 %v2802
        %v3047 = vunpack.c.h.b16 %v2802
        %v3048 = vunpack.c.l.b16 %v2803
        %v3049 = vunpack.c.h.b16 %v2803
        %v3050 = vunpack.c.l.b16 %v2804
        %v3051 = vunpack.c.h.b16 %v2804
        %v3052 = vunpack.c.l.b16 %v2805
        %v3053 = vunpack.c.h.b16 %v2805
        %v3054 = vunpack.c.l.b16 %v2806
        %v3055 = vunpack.c.h.b16 %v2806
        %v3056 = vunpack.c.l.b16 %v2807
        %v3057 = vunpack.c.h.b16 %v2807
        %v3058 = vunpack.c.l.b16 %v2808
        %v3059 = vunpack.c.h.b16 %v2808
        %v3060 = vunpack.c.l.b16 %v2809
        %v3061 = vunpack.c.h.b16 %v2809
        %v3062 = vunpack.c.l.b16 %v2810
        %v3063 = vunpack.c.h.b16 %v2810
        %v3064 = vunpack.c.l.b16 %v2811
        %v3065 = vunpack.c.h.b16 %v2811
        %v3066 = vunpack.c.l.b16 %v2812
        %v3067 = vunpack.c.h.b16 %v2812
        %v3068 = vunpack.c.l.b16 %v2813
        %v3069 = vunpack.c.h.b16 %v2813
        %v3070 = vpack.c.b16 %v2944, %v2942
        %v3071 = vpack.c.b16 %v2945, %v2943
        %v3072 = vpack.c.b16 %v2948, %v2946
        %v3073 = vpack.c.b16 %v2949, %v2947
        %v3074 = vpack.c.b16 %v2952, %v2950
        %v3075 = vpack.c.b16 %v2953, %v2951
        %v3076 = vpack.c.b16 %v2956, %v2954
        %v3077 = vpack.c.b16 %v2957, %v2955
        %v3078 = vpack.c.b16 %v2960, %v2958
        %v3079 = vpack.c.b16 %v2961, %v2959
        %v3080 = vpack.c.b16 %v2964, %v2962
        %v3081 = vpack.c.b16 %v2965, %v2963
        %v3082 = vpack.c.b16 %v2968, %v2966
        %v3083 = vpack.c.b16 %v2969, %v2967
        %v3084 = vpack.c.b16 %v2972, %v2970
        %v3085 = vpack.c.b16 %v2973, %v2971
        %v3086 = vpack.c.b16 %v2976, %v2974
        %v3087 = vpack.c.b16 %v2977, %v2975
        %v3088 = vpack.c.b16 %v2980, %v2978
        %v3089 = vpack.c.b16 %v2981, %v2979
        %v3090 = vpack.c.b16 %v2984, %v2982
        %v3091 = vpack.c.b16 %v2985, %v2983
        %v3092 = vpack.c.b16 %v2988, %v2986
        %v3093 = vpack.c.b16 %v2989, %v2987
        %v3094 = vpack.c.b16 %v2992, %v2990
        %v3095 = vpack.c.b16 %v2993, %v2991
        %v3096 = vpack.c.b16 %v2996, %v2994
        %v3097 = vpack.c.b16 %v2997, %v2995
        %v3098 = vpack.c.b16 %v3000, %v2998
        %v3099 = vpack.c.b16 %v3001, %v2999
        %v3100 = vpack.c.b16 %v3004, %v3002
        %v3101 = vpack.c.b16 %v3005, %v3003
        %v3102 = vpack.c.b16 %v3008, %v3006
        %v3103 = vpack.c.b16 %v3009, %v3007
        %v3104 = vpack.c.b16 %v3012, %v3010
        %v3105 = vpack.c.b16 %v3013, %v3011
        %v3106 = vpack.c.b16 %v3016, %v3014
        %v3107 = vpack.c.b16 %v3017, %v3015
        %v3108 = vpack.c.b16 %v3020, %v3018
        %v3109 = vpack.c.b16 %v3021, %v3019
        %v3110 = vpack.c.b16 %v3024, %v3022
        %v3111 = vpack.c.b16 %v3025, %v3023
        %v3112 = vpack.c.b16 %v3028, %v3026
        %v3113 = vpack.c.b16 %v3029, %v3027
        %v3114 = vpack.c.b16 %v3032, %v3030
        %v3115 = vpack.c.b16 %v3033, %v3031
        %v3116 = vpack.c.b16 %v3036, %v3034
        %v3117 = vpack.c.b16 %v3037, %v3035
        %v3118 = vpack.c.b16 %v3040, %v3038
        %v3119 = vpack.c.b16 %v3041, %v3039
        %v3120 = vpack.c.b16 %v3044, %v3042
        %v3121 = vpack.c.b16 %v3045, %v3043
        %v3122 = vpack.c.b16 %v3048, %v3046
        %v3123 = vpack.c.b16 %v3049, %v3047
        %v3124 = vpack.c.b16 %v3052, %v3050
        %v3125 = vpack.c.b16 %v3053, %v3051
        %v3126 = vpack.c.b16 %v3056, %v3054
        %v3127 = vpack.c.b16 %v3057, %v3055
        %v3128 = vpack.c.b16 %v3060, %v3058
        %v3129 = vpack.c.b16 %v3061, %v3059
        %v3130 = vpack.c.b16 %v3064, %v3062
        %v3131 = vpack.c.b16 %v3065, %v3063
        %v3132 = vpack.c.b16 %v3068, %v3066
        %v3133 = vpack.c.b16 %v3069, %v3067
        %3198 = vmatprep.subr.bf16.mxu0 %v3071
        %3199 = vmatpush1.bf16.msra.mxu0 %v3070
        %3200 = vmatprep.subr.bf16.mxu0 %v3073
        %3201 = vmatpush1.bf16.msra.mxu0 %v3072
        %3202 = vmatprep.subr.bf16.mxu0 %v3075
        %3203 = vmatpush1.bf16.msra.mxu0 %v3074
        %3204 = vmatprep.subr.bf16.mxu0 %v3077
        %3205 = vmatpush1.bf16.msra.mxu0 %v3076
        %3206 = vmatprep.subr.bf16.mxu0 %v3079
        %3207 = vmatpush1.bf16.msra.mxu0 %v3078
        %3208 = vmatprep.subr.bf16.mxu0 %v3081
        %3209 = vmatpush1.bf16.msra.mxu0 %v3080
        %3210 = vmatprep.subr.bf16.mxu0 %v3083
        %3211 = vmatpush1.bf16.msra.mxu0 %v3082
        %3212 = vmatprep.subr.bf16.mxu0 %v3085
        %3213 = vmatpush1.bf16.msra.mxu0 %v3084
        %3214 = vmatprep.subr.bf16.mxu0 %v3087
        %3215 = vmatpush1.bf16.msra.mxu0 %v3086
        %3216 = vmatprep.subr.bf16.mxu0 %v3089
        %3217 = vmatpush1.bf16.msra.mxu0 %v3088
        %3218 = vmatprep.subr.bf16.mxu0 %v3091
        %3219 = vmatpush1.bf16.msra.mxu0 %v3090
        %3220 = vmatprep.subr.bf16.mxu0 %v3093
        %3221 = vmatpush1.bf16.msra.mxu0 %v3092
        %3222 = vmatprep.subr.bf16.mxu0 %v3095
        %3223 = vmatpush1.bf16.msra.mxu0 %v3094
        %3224 = vmatprep.subr.bf16.mxu0 %v3097
        %3225 = vmatpush1.bf16.msra.mxu0 %v3096
        %3226 = vmatprep.subr.bf16.mxu0 %v3099
        %3227 = vmatpush1.bf16.msra.mxu0 %v3098
        %3228 = vmatprep.subr.bf16.mxu0 %v3101
        %3229 = vmatpush1.bf16.msra.mxu0 %v3100
        %3230 = vmatprep.mubr.bf16.mxu0 %v2847
        %3231 = vmatmul.mubr.bf16.gmra.mrb[0].mxu0 %v2846
        %v3232 = vpop.f32.mrb[0].mxu0
        %v3233 = vadd.f32 0.0, %v3232
        %v3234 = vpop.f32.mrb[0].mxu0
        %v3235 = vadd.f32 0.0, %v3234
        %v3236 = vpop.f32.mrb[0].mxu0
        %v3237 = vadd.f32 0.0, %v3236
        %v3238 = vpop.f32.mrb[0].mxu0
        %v3239 = vadd.f32 0.0, %v3238
        %3240 = vmatprep.mubr.bf16.mxu0 %v2851
        %3241 = vmatmul.mubr.bf16.gmra.mrb[0].mxu0 %v2850
        %v3242 = vpop.f32.mrb[0].mxu0
        %v3243 = vadd.f32 0.0, %v3242
        %v3244 = vpop.f32.mrb[0].mxu0
        %v3245 = vadd.f32 0.0, %v3244
        %v3246 = vpop.f32.mrb[0].mxu0
        %v3247 = vadd.f32 0.0, %v3246
        %v3248 = vpop.f32.mrb[0].mxu0
        %v3249 = vadd.f32 0.0, %v3248
        %3250 = vmatprep.mubr.bf16.mxu0 %v2855
        %3251 = vmatmul.mubr.bf16.gmra.mrb[0].mxu0 %v2854
        %v3252 = vpop.f32.mrb[0].mxu0
        %v3253 = vadd.f32 0.0, %v3252
        %v3254 = vpop.f32.mrb[0].mxu0
        %v3255 = vadd.f32 0.0, %v3254
        %v3256 = vpop.f32.mrb[0].mxu0
        %v3257 = vadd.f32 0.0, %v3256
        %v3258 = vpop.f32.mrb[0].mxu0
        %v3259 = vadd.f32 0.0, %v3258
        %3260 = vmatprep.mubr.bf16.mxu0 %v2859
        %3261 = vmatmul.mubr.bf16.gmra.mrb[0].mxu0 %v2858
        %v3262 = vpop.f32.mrb[0].mxu0
        %v3263 = vadd.f32 0.0, %v3262
        %v3264 = vpop.f32.mrb[0].mxu0
        %v3265 = vadd.f32 0.0, %v3264
        %v3266 = vpop.f32.mrb[0].mxu0
        %v3267 = vadd.f32 0.0, %v3266
        %v3268 = vpop.f32.mrb[0].mxu0
        %v3269 = vadd.f32 0.0, %v3268
        %3270 = vdwg.mxu0
        %3271 = vmatprep.subr.bf16.mxu0 %v3103
        %3272 = vmatpush1.bf16.msra.mxu0 %v3102
        %3273 = vmatprep.subr.bf16.mxu0 %v3105
        %3274 = vmatpush1.bf16.msra.mxu0 %v3104
        %3275 = vmatprep.subr.bf16.mxu0 %v3107
        %3276 = vmatpush1.bf16.msra.mxu0 %v3106
        %3277 = vmatprep.subr.bf16.mxu0 %v3109
        %3278 = vmatpush1.bf16.msra.mxu0 %v3108
        %3279 = vmatprep.subr.bf16.mxu0 %v3111
        %3280 = vmatpush1.bf16.msra.mxu0 %v3110
        %3281 = vmatprep.subr.bf16.mxu0 %v3113
        %3282 = vmatpush1.bf16.msra.mxu0 %v3112
        %3283 = vmatprep.subr.bf16.mxu0 %v3115
        %3284 = vmatpush1.bf16.msra.mxu0 %v3114
        %3285 = vmatprep.subr.bf16.mxu0 %v3117
        %3286 = vmatpush1.bf16.msra.mxu0 %v3116
        %3287 = vmatprep.subr.bf16.mxu0 %v3119
        %3288 = vmatpush1.bf16.msra.mxu0 %v3118
        %3289 = vmatprep.subr.bf16.mxu0 %v3121
        %3290 = vmatpush1.bf16.msra.mxu0 %v3120
        %3291 = vmatprep.subr.bf16.mxu0 %v3123
        %3292 = vmatpush1.bf16.msra.mxu0 %v3122
        %3293 = vmatprep.subr.bf16.mxu0 %v3125
        %3294 = vmatpush1.bf16.msra.mxu0 %v3124
        %3295 = vmatprep.subr.bf16.mxu0 %v3127
        %3296 = vmatpush1.bf16.msra.mxu0 %v3126
        %3297 = vmatprep.subr.bf16.mxu0 %v3129
        %3298 = vmatpush1.bf16.msra.mxu0 %v3128
        %3299 = vmatprep.subr.bf16.mxu0 %v3131
        %3300 = vmatpush1.bf16.msra.mxu0 %v3130
        %3301 = vmatprep.subr.bf16.mxu0 %v3133
        %3302 = vmatpush1.bf16.msra.mxu0 %v3132
        %3303 = vmatprep.mubr.bf16.mxu0 %v2849
        %3304 = vmatmul.mubr.bf16.gmra.mrb[0].mxu0 %v2848
        %v3305 = vpop.f32.mrb[0].mxu0
        %v3306 = vadd.f32 %v3233, %v3305
        %v3307 = vpop.f32.mrb[0].mxu0
        %v3308 = vadd.f32 %v3235, %v3307
        %v3309 = vpop.f32.mrb[0].mxu0
        %v3310 = vadd.f32 %v3237, %v3309
        %v3311 = vpop.f32.mrb[0].mxu0
        %v3312 = vadd.f32 %v3239, %v3311
        %3313 = vmatprep.mubr.bf16.mxu0 %v2853
        %3314 = vmatmul.mubr.bf16.gmra.mrb[0].mxu0 %v2852
        %v3315 = vpop.f32.mrb[0].mxu0
        %v3316 = vadd.f32 %v3243, %v3315
        %v3317 = vpop.f32.mrb[0].mxu0
        %v3318 = vadd.f32 %v3245, %v3317
        %v3319 = vpop.f32.mrb[0].mxu0
        %v3320 = vadd.f32 %v3247, %v3319
        %v3321 = vpop.f32.mrb[0].mxu0
        %v3322 = vadd.f32 %v3249, %v3321
        %3323 = vmatprep.mubr.bf16.mxu0 %v2857
        %3324 = vmatmul.mubr.bf16.gmra.mrb[0].mxu0 %v2856
        %v3325 = vpop.f32.mrb[0].mxu0
        %v3326 = vadd.f32 %v3253, %v3325
        %v3327 = vpop.f32.mrb[0].mxu0
        %v3328 = vadd.f32 %v3255, %v3327
        %v3329 = vpop.f32.mrb[0].mxu0
        %v3330 = vadd.f32 %v3257, %v3329
        %v3331 = vpop.f32.mrb[0].mxu0
        %v3332 = vadd.f32 %v3259, %v3331
        %3333 = vmatprep.mubr.bf16.mxu0 %v2861
        %3334 = vmatmul.mubr.bf16.gmra.mrb[0].mxu0 %v2860
        %v3335 = vpop.f32.mrb[0].mxu0
        %v3336 = vadd.f32 %v3263, %v3335
        %v3337 = vpop.f32.mrb[0].mxu0
        %v3338 = vadd.f32 %v3265, %v3337
        %v3339 = vpop.f32.mrb[0].mxu0
        %v3340 = vadd.f32 %v3267, %v3339
        %v3341 = vpop.f32.mrb[0].mxu0
        %v3342 = vadd.f32 %v3269, %v3341
        %3343 = vdwg.mxu0
        %v3344 = vadd.f32 %v2596, %v3306
        %v3345 = vadd.f32 %v2598, %v3308
        %v3346 = vadd.f32 %v2600, %v3310
        %v3347 = vadd.f32 %v2602, %v3312
        %v3348 = vadd.f32 %v2606, %v3316
        %v3349 = vadd.f32 %v2608, %v3318
        %v3350 = vadd.f32 %v2610, %v3320
        %v3351 = vadd.f32 %v2612, %v3322
        %v3352 = vadd.f32 %v2616, %v3326
        %v3353 = vadd.f32 %v2618, %v3328
        %v3354 = vadd.f32 %v2620, %v3330
        %v3355 = vadd.f32 %v2622, %v3332
        %v3356 = vadd.f32 %v2626, %v3336
        %v3357 = vadd.f32 %v2628, %v3338
        %v3358 = vadd.f32 %v2630, %v3340
        %v3359 = vadd.f32 %v2632, %v3342
        %v3360 = vld [vmem:[%s749] sm:$0xff]
        %v3361 = vld [vmem:[%s749 + $0x8] sm:$0xff]
        %v3362 = vld [vmem:[%s749 + $0x20] sm:$0xff]
        %v3363 = vld [vmem:[%s749 + $0x28] sm:$0xff]
        %v3364 = vld [vmem:[%s749 + $0x40] sm:$0xff]
        %v3365 = vld [vmem:[%s749 + $0x48] sm:$0xff]
        %v3366 = vld [vmem:[%s749 + $0x60] sm:$0xff]
        %v3367 = vld [vmem:[%s749 + $0x68] sm:$0xff]
        %v3368 = vld [vmem:[%s749 + $0x80] sm:$0xff]
        %v3369 = vld [vmem:[%s749 + $0x88] sm:$0xff]
        %v3370 = vld [vmem:[%s749 + $0xa0] sm:$0xff]
        %v3371 = vld [vmem:[%s749 + $0xa8] sm:$0xff]
        %v3372 = vld [vmem:[%s749 + $0xc0] sm:$0xff]
        %v3373 = vld [vmem:[%s749 + $0xc8] sm:$0xff]
        %v3374 = vld [vmem:[%s749 + $0xe0] sm:$0xff]
        %v3375 = vld [vmem:[%s749 + $0xe8] sm:$0xff]
        %s3376 = scalar_lea.vmem [#allocation10], 1536
        %v3377 = vld [vmem:[%s3376] sm:$0xff]
        %v3378 = vld [vmem:[%s3376 + $0x8] sm:$0xff]
        %v3379 = vld [vmem:[%s3376 + $0x10] sm:$0xff]
        %v3380 = vld [vmem:[%s3376 + $0x18] sm:$0xff]
        %v3381 = vld [vmem:[%s3376 + $0x20] sm:$0xff]
        %v3382 = vld [vmem:[%s3376 + $0x28] sm:$0xff]
        %v3383 = vld [vmem:[%s3376 + $0x30] sm:$0xff]
        %v3384 = vld [vmem:[%s3376 + $0x38] sm:$0xff]
        %v3385 = vld [vmem:[%s3376 + $0x40] sm:$0xff]
        %v3386 = vld [vmem:[%s3376 + $0x48] sm:$0xff]
        %v3387 = vld [vmem:[%s3376 + $0x50] sm:$0xff]
        %v3388 = vld [vmem:[%s3376 + $0x58] sm:$0xff]
        %v3389 = vld [vmem:[%s3376 + $0x60] sm:$0xff]
        %v3390 = vld [vmem:[%s3376 + $0x68] sm:$0xff]
        %v3391 = vld [vmem:[%s3376 + $0x70] sm:$0xff]
        %v3392 = vld [vmem:[%s3376 + $0x78] sm:$0xff]
        %v3393 = vld [vmem:[%s3376 + $0x80] sm:$0xff]
        %v3394 = vld [vmem:[%s3376 + $0x88] sm:$0xff]
        %v3395 = vld [vmem:[%s3376 + $0x90] sm:$0xff]
        %v3396 = vld [vmem:[%s3376 + $0x98] sm:$0xff]
        %v3397 = vld [vmem:[%s3376 + $0xa0] sm:$0xff]
        %v3398 = vld [vmem:[%s3376 + $0xa8] sm:$0xff]
        %v3399 = vld [vmem:[%s3376 + $0xb0] sm:$0xff]
        %v3400 = vld [vmem:[%s3376 + $0xb8] sm:$0xff]
        %v3401 = vld [vmem:[%s3376 + $0xc0] sm:$0xff]
        %v3402 = vld [vmem:[%s3376 + $0xc8] sm:$0xff]
        %v3403 = vld [vmem:[%s3376 + $0xd0] sm:$0xff]
        %v3404 = vld [vmem:[%s3376 + $0xd8] sm:$0xff]
        %v3405 = vld [vmem:[%s3376 + $0xe0] sm:$0xff]
        %v3406 = vld [vmem:[%s3376 + $0xe8] sm:$0xff]
        %v3407 = vld [vmem:[%s3376 + $0xf0] sm:$0xff]
        %v3408 = vld [vmem:[%s3376 + $0xf8] sm:$0xff]
        %v3409 = vld [vmem:[%s3376 + $0x100] sm:$0xff]
        %v3410 = vld [vmem:[%s3376 + $0x108] sm:$0xff]
        %v3411 = vld [vmem:[%s3376 + $0x110] sm:$0xff]
        %v3412 = vld [vmem:[%s3376 + $0x118] sm:$0xff]
        %v3413 = vld [vmem:[%s3376 + $0x120] sm:$0xff]
        %v3414 = vld [vmem:[%s3376 + $0x128] sm:$0xff]
        %v3415 = vld [vmem:[%s3376 + $0x130] sm:$0xff]
        %v3416 = vld [vmem:[%s3376 + $0x138] sm:$0xff]
        %v3417 = vld [vmem:[%s3376 + $0x140] sm:$0xff]
        %v3418 = vld [vmem:[%s3376 + $0x148] sm:$0xff]
        %v3419 = vld [vmem:[%s3376 + $0x150] sm:$0xff]
        %v3420 = vld [vmem:[%s3376 + $0x158] sm:$0xff]
        %v3421 = vld [vmem:[%s3376 + $0x160] sm:$0xff]
        %v3422 = vld [vmem:[%s3376 + $0x168] sm:$0xff]
        %v3423 = vld [vmem:[%s3376 + $0x170] sm:$0xff]
        %v3424 = vld [vmem:[%s3376 + $0x178] sm:$0xff]
        %v3425 = vld [vmem:[%s3376 + $0x180] sm:$0xff]
        %v3426 = vld [vmem:[%s3376 + $0x188] sm:$0xff]
        %v3427 = vld [vmem:[%s3376 + $0x190] sm:$0xff]
        %v3428 = vld [vmem:[%s3376 + $0x198] sm:$0xff]
        %v3429 = vld [vmem:[%s3376 + $0x1a0] sm:$0xff]
        %v3430 = vld [vmem:[%s3376 + $0x1a8] sm:$0xff]
        %v3431 = vld [vmem:[%s3376 + $0x1b0] sm:$0xff]
        %v3432 = vld [vmem:[%s3376 + $0x1b8] sm:$0xff]
        %v3433 = vld [vmem:[%s3376 + $0x1c0] sm:$0xff]
        %v3434 = vld [vmem:[%s3376 + $0x1c8] sm:$0xff]
        %v3435 = vld [vmem:[%s3376 + $0x1d0] sm:$0xff]
        %v3436 = vld [vmem:[%s3376 + $0x1d8] sm:$0xff]
        %v3437 = vld [vmem:[%s3376 + $0x1e0] sm:$0xff]
        %v3438 = vld [vmem:[%s3376 + $0x1e8] sm:$0xff]
        %v3439 = vld [vmem:[%s3376 + $0x1f0] sm:$0xff]
        %v3440 = vld [vmem:[%s3376 + $0x1f8] sm:$0xff]
        %v3457 = vunpack.c.l.b16 %v3360
        %v3458 = vunpack.c.h.b16 %v3360
        %v3459 = vunpack.c.l.b16 %v3361
        %v3460 = vunpack.c.h.b16 %v3361
        %v3461 = vunpack.c.l.b16 %v3362
        %v3462 = vunpack.c.h.b16 %v3362
        %v3463 = vunpack.c.l.b16 %v3363
        %v3464 = vunpack.c.h.b16 %v3363
        %v3465 = vunpack.c.l.b16 %v3364
        %v3466 = vunpack.c.h.b16 %v3364
        %v3467 = vunpack.c.l.b16 %v3365
        %v3468 = vunpack.c.h.b16 %v3365
        %v3469 = vunpack.c.l.b16 %v3366
        %v3470 = vunpack.c.h.b16 %v3366
        %v3471 = vunpack.c.l.b16 %v3367
        %v3472 = vunpack.c.h.b16 %v3367
        %v3473 = vunpack.c.l.b16 %v3368
        %v3474 = vunpack.c.h.b16 %v3368
        %v3475 = vunpack.c.l.b16 %v3369
        %v3476 = vunpack.c.h.b16 %v3369
        %v3477 = vunpack.c.l.b16 %v3370
        %v3478 = vunpack.c.h.b16 %v3370
        %v3479 = vunpack.c.l.b16 %v3371
        %v3480 = vunpack.c.h.b16 %v3371
        %v3481 = vunpack.c.l.b16 %v3372
        %v3482 = vunpack.c.h.b16 %v3372
        %v3483 = vunpack.c.l.b16 %v3373
        %v3484 = vunpack.c.h.b16 %v3373
        %v3485 = vunpack.c.l.b16 %v3374
        %v3486 = vunpack.c.h.b16 %v3374
        %v3487 = vunpack.c.l.b16 %v3375
        %v3488 = vunpack.c.h.b16 %v3375
        %v3489 = vpack.c.b16 %v3461, %v3457
        %v3490 = vpack.c.b16 %v3462, %v3458
        %v3491 = vpack.c.b16 %v3463, %v3459
        %v3492 = vpack.c.b16 %v3464, %v3460
        %v3493 = vpack.c.b16 %v3469, %v3465
        %v3494 = vpack.c.b16 %v3470, %v3466
        %v3495 = vpack.c.b16 %v3471, %v3467
        %v3496 = vpack.c.b16 %v3472, %v3468
        %v3497 = vpack.c.b16 %v3477, %v3473
        %v3498 = vpack.c.b16 %v3478, %v3474
        %v3499 = vpack.c.b16 %v3479, %v3475
        %v3500 = vpack.c.b16 %v3480, %v3476
        %v3501 = vpack.c.b16 %v3485, %v3481
        %v3502 = vpack.c.b16 %v3486, %v3482
        %v3503 = vpack.c.b16 %v3487, %v3483
        %v3504 = vpack.c.b16 %v3488, %v3484
        %v3585 = vunpack.c.l.b16 %v3377
        %v3586 = vunpack.c.h.b16 %v3377
        %v3587 = vunpack.c.l.b16 %v3378
        %v3588 = vunpack.c.h.b16 %v3378
        %v3589 = vunpack.c.l.b16 %v3379
        %v3590 = vunpack.c.h.b16 %v3379
        %v3591 = vunpack.c.l.b16 %v3380
        %v3592 = vunpack.c.h.b16 %v3380
        %v3593 = vunpack.c.l.b16 %v3381
        %v3594 = vunpack.c.h.b16 %v3381
        %v3595 = vunpack.c.l.b16 %v3382
        %v3596 = vunpack.c.h.b16 %v3382
        %v3597 = vunpack.c.l.b16 %v3383
        %v3598 = vunpack.c.h.b16 %v3383
        %v3599 = vunpack.c.l.b16 %v3384
        %v3600 = vunpack.c.h.b16 %v3384
        %v3601 = vunpack.c.l.b16 %v3385
        %v3602 = vunpack.c.h.b16 %v3385
        %v3603 = vunpack.c.l.b16 %v3386
        %v3604 = vunpack.c.h.b16 %v3386
        %v3605 = vunpack.c.l.b16 %v3387
        %v3606 = vunpack.c.h.b16 %v3387
        %v3607 = vunpack.c.l.b16 %v3388
        %v3608 = vunpack.c.h.b16 %v3388
        %v3609 = vunpack.c.l.b16 %v3389
        %v3610 = vunpack.c.h.b16 %v3389
        %v3611 = vunpack.c.l.b16 %v3390
        %v3612 = vunpack.c.h.b16 %v3390
        %v3613 = vunpack.c.l.b16 %v3391
        %v3614 = vunpack.c.h.b16 %v3391
        %v3615 = vunpack.c.l.b16 %v3392
        %v3616 = vunpack.c.h.b16 %v3392
        %v3617 = vunpack.c.l.b16 %v3393
        %v3618 = vunpack.c.h.b16 %v3393
        %v3619 = vunpack.c.l.b16 %v3394
        %v3620 = vunpack.c.h.b16 %v3394
        %v3621 = vunpack.c.l.b16 %v3395
        %v3622 = vunpack.c.h.b16 %v3395
        %v3623 = vunpack.c.l.b16 %v3396
        %v3624 = vunpack.c.h.b16 %v3396
        %v3625 = vunpack.c.l.b16 %v3397
        %v3626 = vunpack.c.h.b16 %v3397
        %v3627 = vunpack.c.l.b16 %v3398
        %v3628 = vunpack.c.h.b16 %v3398
        %v3629 = vunpack.c.l.b16 %v3399
        %v3630 = vunpack.c.h.b16 %v3399
        %v3631 = vunpack.c.l.b16 %v3400
        %v3632 = vunpack.c.h.b16 %v3400
        %v3633 = vunpack.c.l.b16 %v3401
        %v3634 = vunpack.c.h.b16 %v3401
        %v3635 = vunpack.c.l.b16 %v3402
        %v3636 = vunpack.c.h.b16 %v3402
        %v3637 = vunpack.c.l.b16 %v3403
        %v3638 = vunpack.c.h.b16 %v3403
        %v3639 = vunpack.c.l.b16 %v3404
        %v3640 = vunpack.c.h.b16 %v3404
        %v3641 = vunpack.c.l.b16 %v3405
        %v3642 = vunpack.c.h.b16 %v3405
        %v3643 = vunpack.c.l.b16 %v3406
        %v3644 = vunpack.c.h.b16 %v3406
        %v3645 = vunpack.c.l.b16 %v3407
        %v3646 = vunpack.c.h.b16 %v3407
        %v3647 = vunpack.c.l.b16 %v3408
        %v3648 = vunpack.c.h.b16 %v3408
        %v3649 = vunpack.c.l.b16 %v3409
        %v3650 = vunpack.c.h.b16 %v3409
        %v3651 = vunpack.c.l.b16 %v3410
        %v3652 = vunpack.c.h.b16 %v3410
        %v3653 = vunpack.c.l.b16 %v3411
        %v3654 = vunpack.c.h.b16 %v3411
        %v3655 = vunpack.c.l.b16 %v3412
        %v3656 = vunpack.c.h.b16 %v3412
        %v3657 = vunpack.c.l.b16 %v3413
        %v3658 = vunpack.c.h.b16 %v3413
        %v3659 = vunpack.c.l.b16 %v3414
        %v3660 = vunpack.c.h.b16 %v3414
        %v3661 = vunpack.c.l.b16 %v3415
        %v3662 = vunpack.c.h.b16 %v3415
        %v3663 = vunpack.c.l.b16 %v3416
        %v3664 = vunpack.c.h.b16 %v3416
        %v3665 = vunpack.c.l.b16 %v3417
        %v3666 = vunpack.c.h.b16 %v3417
        %v3667 = vunpack.c.l.b16 %v3418
        %v3668 = vunpack.c.h.b16 %v3418
        %v3669 = vunpack.c.l.b16 %v3419
        %v3670 = vunpack.c.h.b16 %v3419
        %v3671 = vunpack.c.l.b16 %v3420
        %v3672 = vunpack.c.h.b16 %v3420
        %v3673 = vunpack.c.l.b16 %v3421
        %v3674 = vunpack.c.h.b16 %v3421
        %v3675 = vunpack.c.l.b16 %v3422
        %v3676 = vunpack.c.h.b16 %v3422
        %v3677 = vunpack.c.l.b16 %v3423
        %v3678 = vunpack.c.h.b16 %v3423
        %v3679 = vunpack.c.l.b16 %v3424
        %v3680 = vunpack.c.h.b16 %v3424
        %v3681 = vunpack.c.l.b16 %v3425
        %v3682 = vunpack.c.h.b16 %v3425
        %v3683 = vunpack.c.l.b16 %v3426
        %v3684 = vunpack.c.h.b16 %v3426
        %v3685 = vunpack.c.l.b16 %v3427
        %v3686 = vunpack.c.h.b16 %v3427
        %v3687 = vunpack.c.l.b16 %v3428
        %v3688 = vunpack.c.h.b16 %v3428
        %v3689 = vunpack.c.l.b16 %v3429
        %v3690 = vunpack.c.h.b16 %v3429
        %v3691 = vunpack.c.l.b16 %v3430
        %v3692 = vunpack.c.h.b16 %v3430
        %v3693 = vunpack.c.l.b16 %v3431
        %v3694 = vunpack.c.h.b16 %v3431
        %v3695 = vunpack.c.l.b16 %v3432
        %v3696 = vunpack.c.h.b16 %v3432
        %v3697 = vunpack.c.l.b16 %v3433
        %v3698 = vunpack.c.h.b16 %v3433
        %v3699 = vunpack.c.l.b16 %v3434
        %v3700 = vunpack.c.h.b16 %v3434
        %v3701 = vunpack.c.l.b16 %v3435
        %v3702 = vunpack.c.h.b16 %v3435
        %v3703 = vunpack.c.l.b16 %v3436
        %v3704 = vunpack.c.h.b16 %v3436
        %v3705 = vunpack.c.l.b16 %v3437
        %v3706 = vunpack.c.h.b16 %v3437
        %v3707 = vunpack.c.l.b16 %v3438
        %v3708 = vunpack.c.h.b16 %v3438
        %v3709 = vunpack.c.l.b16 %v3439
        %v3710 = vunpack.c.h.b16 %v3439
        %v3711 = vunpack.c.l.b16 %v3440
        %v3712 = vunpack.c.h.b16 %v3440
        %v3713 = vpack.c.b16 %v3587, %v3585
        %v3714 = vpack.c.b16 %v3588, %v3586
        %v3715 = vpack.c.b16 %v3591, %v3589
        %v3716 = vpack.c.b16 %v3592, %v3590
        %v3717 = vpack.c.b16 %v3595, %v3593
        %v3718 = vpack.c.b16 %v3596, %v3594
        %v3719 = vpack.c.b16 %v3599, %v3597
        %v3720 = vpack.c.b16 %v3600, %v3598
        %v3721 = vpack.c.b16 %v3603, %v3601
        %v3722 = vpack.c.b16 %v3604, %v3602
        %v3723 = vpack.c.b16 %v3607, %v3605
        %v3724 = vpack.c.b16 %v3608, %v3606
        %v3725 = vpack.c.b16 %v3611, %v3609
        %v3726 = vpack.c.b16 %v3612, %v3610
        %v3727 = vpack.c.b16 %v3615, %v3613
        %v3728 = vpack.c.b16 %v3616, %v3614
        %v3729 = vpack.c.b16 %v3619, %v3617
        %v3730 = vpack.c.b16 %v3620, %v3618
        %v3731 = vpack.c.b16 %v3623, %v3621
        %v3732 = vpack.c.b16 %v3624, %v3622
        %v3733 = vpack.c.b16 %v3627, %v3625
        %v3734 = vpack.c.b16 %v3628, %v3626
        %v3735 = vpack.c.b16 %v3631, %v3629
        %v3736 = vpack.c.b16 %v3632, %v3630
        %v3737 = vpack.c.b16 %v3635, %v3633
        %v3738 = vpack.c.b16 %v3636, %v3634
        %v3739 = vpack.c.b16 %v3639, %v3637
        %v3740 = vpack.c.b16 %v3640, %v3638
        %v3741 = vpack.c.b16 %v3643, %v3641
        %v3742 = vpack.c.b16 %v3644, %v3642
        %v3743 = vpack.c.b16 %v3647, %v3645
        %v3744 = vpack.c.b16 %v3648, %v3646
        %v3745 = vpack.c.b16 %v3651, %v3649
        %v3746 = vpack.c.b16 %v3652, %v3650
        %v3747 = vpack.c.b16 %v3655, %v3653
        %v3748 = vpack.c.b16 %v3656, %v3654
        %v3749 = vpack.c.b16 %v3659, %v3657
        %v3750 = vpack.c.b16 %v3660, %v3658
        %v3751 = vpack.c.b16 %v3663, %v3661
        %v3752 = vpack.c.b16 %v3664, %v3662
        %v3753 = vpack.c.b16 %v3667, %v3665
        %v3754 = vpack.c.b16 %v3668, %v3666
        %v3755 = vpack.c.b16 %v3671, %v3669
        %v3756 = vpack.c.b16 %v3672, %v3670
        %v3757 = vpack.c.b16 %v3675, %v3673
        %v3758 = vpack.c.b16 %v3676, %v3674
        %v3759 = vpack.c.b16 %v3679, %v3677
        %v3760 = vpack.c.b16 %v3680, %v3678
        %v3761 = vpack.c.b16 %v3683, %v3681
        %v3762 = vpack.c.b16 %v3684, %v3682
        %v3763 = vpack.c.b16 %v3687, %v3685
        %v3764 = vpack.c.b16 %v3688, %v3686
        %v3765 = vpack.c.b16 %v3691, %v3689
        %v3766 = vpack.c.b16 %v3692, %v3690
        %v3767 = vpack.c.b16 %v3695, %v3693
        %v3768 = vpack.c.b16 %v3696, %v3694
        %v3769 = vpack.c.b16 %v3699, %v3697
        %v3770 = vpack.c.b16 %v3700, %v3698
        %v3771 = vpack.c.b16 %v3703, %v3701
        %v3772 = vpack.c.b16 %v3704, %v3702
        %v3773 = vpack.c.b16 %v3707, %v3705
        %v3774 = vpack.c.b16 %v3708, %v3706
        %v3775 = vpack.c.b16 %v3711, %v3709
        %v3776 = vpack.c.b16 %v3712, %v3710
        %3841 = vmatprep.subr.bf16.mxu0 %v3714
        %3842 = vmatpush1.bf16.msra.mxu0 %v3713
        %3843 = vmatprep.subr.bf16.mxu0 %v3716
        %3844 = vmatpush1.bf16.msra.mxu0 %v3715
        %3845 = vmatprep.subr.bf16.mxu0 %v3718
        %3846 = vmatpush1.bf16.msra.mxu0 %v3717
        %3847 = vmatprep.subr.bf16.mxu0 %v3720
        %3848 = vmatpush1.bf16.msra.mxu0 %v3719
        %3849 = vmatprep.subr.bf16.mxu0 %v3722
        %3850 = vmatpush1.bf16.msra.mxu0 %v3721
        %3851 = vmatprep.subr.bf16.mxu0 %v3724
        %3852 = vmatpush1.bf16.msra.mxu0 %v3723
        %3853 = vmatprep.subr.bf16.mxu0 %v3726
        %3854 = vmatpush1.bf16.msra.mxu0 %v3725
        %3855 = vmatprep.subr.bf16.mxu0 %v3728
        %3856 = vmatpush1.bf16.msra.mxu0 %v3727
        %3857 = vmatprep.subr.bf16.mxu0 %v3730
        %3858 = vmatpush1.bf16.msra.mxu0 %v3729
        %3859 = vmatprep.subr.bf16.mxu0 %v3732
        %3860 = vmatpush1.bf16.msra.mxu0 %v3731
        %3861 = vmatprep.subr.bf16.mxu0 %v3734
        %3862 = vmatpush1.bf16.msra.mxu0 %v3733
        %3863 = vmatprep.subr.bf16.mxu0 %v3736
        %3864 = vmatpush1.bf16.msra.mxu0 %v3735
        %3865 = vmatprep.subr.bf16.mxu0 %v3738
        %3866 = vmatpush1.bf16.msra.mxu0 %v3737
        %3867 = vmatprep.subr.bf16.mxu0 %v3740
        %3868 = vmatpush1.bf16.msra.mxu0 %v3739
        %3869 = vmatprep.subr.bf16.mxu0 %v3742
        %3870 = vmatpush1.bf16.msra.mxu0 %v3741
        %3871 = vmatprep.subr.bf16.mxu0 %v3744
        %3872 = vmatpush1.bf16.msra.mxu0 %v3743
        %3873 = vmatprep.mubr.bf16.mxu0 %v3490
        %3874 = vmatmul.mubr.bf16.gmra.mrb[0].mxu0 %v3489
        %v3875 = vpop.f32.mrb[0].mxu0
        %v3876 = vadd.f32 0.0, %v3875
        %v3877 = vpop.f32.mrb[0].mxu0
        %v3878 = vadd.f32 0.0, %v3877
        %v3879 = vpop.f32.mrb[0].mxu0
        %v3880 = vadd.f32 0.0, %v3879
        %v3881 = vpop.f32.mrb[0].mxu0
        %v3882 = vadd.f32 0.0, %v3881
        %3883 = vmatprep.mubr.bf16.mxu0 %v3494
        %3884 = vmatmul.mubr.bf16.gmra.mrb[0].mxu0 %v3493
        %v3885 = vpop.f32.mrb[0].mxu0
        %v3886 = vadd.f32 0.0, %v3885
        %v3887 = vpop.f32.mrb[0].mxu0
        %v3888 = vadd.f32 0.0, %v3887
        %v3889 = vpop.f32.mrb[0].mxu0
        %v3890 = vadd.f32 0.0, %v3889
        %v3891 = vpop.f32.mrb[0].mxu0
        %v3892 = vadd.f32 0.0, %v3891
        %3893 = vmatprep.mubr.bf16.mxu0 %v3498
        %3894 = vmatmul.mubr.bf16.gmra.mrb[0].mxu0 %v3497
        %v3895 = vpop.f32.mrb[0].mxu0
        %v3896 = vadd.f32 0.0, %v3895
        %v3897 = vpop.f32.mrb[0].mxu0
        %v3898 = vadd.f32 0.0, %v3897
        %v3899 = vpop.f32.mrb[0].mxu0
        %v3900 = vadd.f32 0.0, %v3899
        %v3901 = vpop.f32.mrb[0].mxu0
        %v3902 = vadd.f32 0.0, %v3901
        %3903 = vmatprep.mubr.bf16.mxu0 %v3502
        %3904 = vmatmul.mubr.bf16.gmra.mrb[0].mxu0 %v3501
        %v3905 = vpop.f32.mrb[0].mxu0
        %v3906 = vadd.f32 0.0, %v3905
        %v3907 = vpop.f32.mrb[0].mxu0
        %v3908 = vadd.f32 0.0, %v3907
        %v3909 = vpop.f32.mrb[0].mxu0
        %v3910 = vadd.f32 0.0, %v3909
        %v3911 = vpop.f32.mrb[0].mxu0
        %v3912 = vadd.f32 0.0, %v3911
        %3913 = vdwg.mxu0
        %3914 = vmatprep.subr.bf16.mxu0 %v3746
        %3915 = vmatpush1.bf16.msra.mxu0 %v3745
        %3916 = vmatprep.subr.bf16.mxu0 %v3748
        %3917 = vmatpush1.bf16.msra.mxu0 %v3747
        %3918 = vmatprep.subr.bf16.mxu0 %v3750
        %3919 = vmatpush1.bf16.msra.mxu0 %v3749
        %3920 = vmatprep.subr.bf16.mxu0 %v3752
        %3921 = vmatpush1.bf16.msra.mxu0 %v3751
        %3922 = vmatprep.subr.bf16.mxu0 %v3754
        %3923 = vmatpush1.bf16.msra.mxu0 %v3753
        %3924 = vmatprep.subr.bf16.mxu0 %v3756
        %3925 = vmatpush1.bf16.msra.mxu0 %v3755
        %3926 = vmatprep.subr.bf16.mxu0 %v3758
        %3927 = vmatpush1.bf16.msra.mxu0 %v3757
        %3928 = vmatprep.subr.bf16.mxu0 %v3760
        %3929 = vmatpush1.bf16.msra.mxu0 %v3759
        %3930 = vmatprep.subr.bf16.mxu0 %v3762
        %3931 = vmatpush1.bf16.msra.mxu0 %v3761
        %3932 = vmatprep.subr.bf16.mxu0 %v3764
        %3933 = vmatpush1.bf16.msra.mxu0 %v3763
        %3934 = vmatprep.subr.bf16.mxu0 %v3766
        %3935 = vmatpush1.bf16.msra.mxu0 %v3765
        %3936 = vmatprep.subr.bf16.mxu0 %v3768
        %3937 = vmatpush1.bf16.msra.mxu0 %v3767
        %3938 = vmatprep.subr.bf16.mxu0 %v3770
        %3939 = vmatpush1.bf16.msra.mxu0 %v3769
        %3940 = vmatprep.subr.bf16.mxu0 %v3772
        %3941 = vmatpush1.bf16.msra.mxu0 %v3771
        %3942 = vmatprep.subr.bf16.mxu0 %v3774
        %3943 = vmatpush1.bf16.msra.mxu0 %v3773
        %3944 = vmatprep.subr.bf16.mxu0 %v3776
        %3945 = vmatpush1.bf16.msra.mxu0 %v3775
        %3946 = vmatprep.mubr.bf16.mxu0 %v3492
        %3947 = vmatmul.mubr.bf16.gmra.mrb[0].mxu0 %v3491
        %v3948 = vpop.f32.mrb[0].mxu0
        %v3949 = vadd.f32 %v3876, %v3948
        %v3950 = vpop.f32.mrb[0].mxu0
        %v3951 = vadd.f32 %v3878, %v3950
        %v3952 = vpop.f32.mrb[0].mxu0
        %v3953 = vadd.f32 %v3880, %v3952
        %v3954 = vpop.f32.mrb[0].mxu0
        %v3955 = vadd.f32 %v3882, %v3954
        %3956 = vmatprep.mubr.bf16.mxu0 %v3496
        %3957 = vmatmul.mubr.bf16.gmra.mrb[0].mxu0 %v3495
        %v3958 = vpop.f32.mrb[0].mxu0
        %v3959 = vadd.f32 %v3886, %v3958
        %v3960 = vpop.f32.mrb[0].mxu0
        %v3961 = vadd.f32 %v3888, %v3960
        %v3962 = vpop.f32.mrb[0].mxu0
        %v3963 = vadd.f32 %v3890, %v3962
        %v3964 = vpop.f32.mrb[0].mxu0
        %v3965 = vadd.f32 %v3892, %v3964
        %3966 = vmatprep.mubr.bf16.mxu0 %v3500
        %3967 = vmatmul.mubr.bf16.gmra.mrb[0].mxu0 %v3499
        %v3968 = vpop.f32.mrb[0].mxu0
        %v3969 = vadd.f32 %v3896, %v3968
        %v3970 = vpop.f32.mrb[0].mxu0
        %v3971 = vadd.f32 %v3898, %v3970
        %v3972 = vpop.f32.mrb[0].mxu0
        %v3973 = vadd.f32 %v3900, %v3972
        %v3974 = vpop.f32.mrb[0].mxu0
        %v3975 = vadd.f32 %v3902, %v3974
        %3976 = vmatprep.mubr.bf16.mxu0 %v3504
        %3977 = vmatmul.mubr.bf16.gmra.mrb[0].mxu0 %v3503
        %v3978 = vpop.f32.mrb[0].mxu0
        %v3979 = vadd.f32 %v3906, %v3978
        %v3980 = vpop.f32.mrb[0].mxu0
        %v3981 = vadd.f32 %v3908, %v3980
        %v3982 = vpop.f32.mrb[0].mxu0
        %v3983 = vadd.f32 %v3910, %v3982
        %v3984 = vpop.f32.mrb[0].mxu0
        %v3985 = vadd.f32 %v3912, %v3984
        %3986 = vdwg.mxu0
        %v3987 = vadd.f32 %v3344, %v3949
        %v3988 = vadd.f32 %v3345, %v3951
        %v3989 = vadd.f32 %v3346, %v3953
        %v3990 = vadd.f32 %v3347, %v3955
        %v3991 = vadd.f32 %v3348, %v3959
        %v3992 = vadd.f32 %v3349, %v3961
        %v3993 = vadd.f32 %v3350, %v3963
        %v3994 = vadd.f32 %v3351, %v3965
        %v3995 = vadd.f32 %v3352, %v3969
        %v3996 = vadd.f32 %v3353, %v3971
        %v3997 = vadd.f32 %v3354, %v3973
        %v3998 = vadd.f32 %v3355, %v3975
        %v3999 = vadd.f32 %v3356, %v3979
        %v4000 = vadd.f32 %v3357, %v3981
        %v4001 = vadd.f32 %v3358, %v3983
        %v4002 = vadd.f32 %v3359, %v3985
        %v4003 = vld [vmem:[%s749] sm:$0xff]
        %v4004 = vld [vmem:[%s749 + $0x8] sm:$0xff]
        %v4005 = vld [vmem:[%s749 + $0x10] sm:$0x11]
        %v4006 = vld [vmem:[%s749 + $0x18] sm:$0x11]
        %v4007 = vld [vmem:[%s749 + $0x20] sm:$0xff]
        %v4008 = vld [vmem:[%s749 + $0x28] sm:$0xff]
        %v4009 = vld [vmem:[%s749 + $0x30] sm:$0x11]
        %v4010 = vld [vmem:[%s749 + $0x38] sm:$0x11]
        %v4011 = vld [vmem:[%s749 + $0x40] sm:$0xff]
        %v4012 = vld [vmem:[%s749 + $0x48] sm:$0xff]
        %v4013 = vld [vmem:[%s749 + $0x50] sm:$0x11]
        %v4014 = vld [vmem:[%s749 + $0x58] sm:$0x11]
        %v4015 = vld [vmem:[%s749 + $0x60] sm:$0xff]
        %v4016 = vld [vmem:[%s749 + $0x68] sm:$0xff]
        %v4017 = vld [vmem:[%s749 + $0x70] sm:$0x11]
        %v4018 = vld [vmem:[%s749 + $0x78] sm:$0x11]
        %v4019 = vld [vmem:[%s749 + $0x80] sm:$0xff]
        %v4020 = vld [vmem:[%s749 + $0x88] sm:$0xff]
        %v4021 = vld [vmem:[%s749 + $0x90] sm:$0x11]
        %v4022 = vld [vmem:[%s749 + $0x98] sm:$0x11]
        %v4023 = vld [vmem:[%s749 + $0xa0] sm:$0xff]
        %v4024 = vld [vmem:[%s749 + $0xa8] sm:$0xff]
        %v4025 = vld [vmem:[%s749 + $0xb0] sm:$0x11]
        %v4026 = vld [vmem:[%s749 + $0xb8] sm:$0x11]
        %v4027 = vld [vmem:[%s749 + $0xc0] sm:$0xff]
        %v4028 = vld [vmem:[%s749 + $0xc8] sm:$0xff]
        %v4029 = vld [vmem:[%s749 + $0xd0] sm:$0x11]
        %v4030 = vld [vmem:[%s749 + $0xd8] sm:$0x11]
        %v4031 = vld [vmem:[%s749 + $0xe0] sm:$0xff]
        %v4032 = vld [vmem:[%s749 + $0xe8] sm:$0xff]
        %v4033 = vld [vmem:[%s749 + $0xf0] sm:$0x11]
        %v4034 = vld [vmem:[%s749 + $0xf8] sm:$0x11]
        %v4036 = vshrl.u32 %v4003, 16
        %v4038 = vrot.slane %v4036, 4
        %v4039 = vshll.u32 %v4003, 16
        %v4041 = vrot.slane %v4039, 5
        %v4042 = vor.u32 %v4038, %v4041
        %v4043 = vrot.slane %v4042, 4
        %v4045 = vshll.u32 %v4005, 16
        %v4047 = vrot.slane %v4045, 5
        %v4048 = vsel %vm1268, %v4043, %v4047
        %v4050 = vshrl.u32 %v4004, 16
        %v4052 = vrot.slane %v4050, 4
        %v4053 = vshll.u32 %v4004, 16
        %v4055 = vrot.slane %v4053, 5
        %v4056 = vor.u32 %v4052, %v4055
        %v4057 = vrot.slane %v4056, 4
        %v4059 = vshll.u32 %v4006, 16
        %v4061 = vrot.slane %v4059, 5
        %v4062 = vsel %vm1268, %v4057, %v4061
        %v4064 = vshrl.u32 %v4007, 16
        %v4066 = vrot.slane %v4064, 4
        %v4067 = vshll.u32 %v4007, 16
        %v4069 = vrot.slane %v4067, 5
        %v4070 = vor.u32 %v4066, %v4069
        %v4071 = vrot.slane %v4070, 4
        %v4073 = vshll.u32 %v4009, 16
        %v4075 = vrot.slane %v4073, 5
        %v4076 = vsel %vm1268, %v4071, %v4075
        %v4078 = vshrl.u32 %v4008, 16
        %v4080 = vrot.slane %v4078, 4
        %v4081 = vshll.u32 %v4008, 16
        %v4083 = vrot.slane %v4081, 5
        %v4084 = vor.u32 %v4080, %v4083
        %v4085 = vrot.slane %v4084, 4
        %v4087 = vshll.u32 %v4010, 16
        %v4089 = vrot.slane %v4087, 5
        %v4090 = vsel %vm1268, %v4085, %v4089
        %v4092 = vshrl.u32 %v4011, 16
        %v4094 = vrot.slane %v4092, 4
        %v4095 = vshll.u32 %v4011, 16
        %v4097 = vrot.slane %v4095, 5
        %v4098 = vor.u32 %v4094, %v4097
        %v4099 = vrot.slane %v4098, 4
        %v4101 = vshll.u32 %v4013, 16
        %v4103 = vrot.slane %v4101, 5
        %v4104 = vsel %vm1268, %v4099, %v4103
        %v4106 = vshrl.u32 %v4012, 16
        %v4108 = vrot.slane %v4106, 4
        %v4109 = vshll.u32 %v4012, 16
        %v4111 = vrot.slane %v4109, 5
        %v4112 = vor.u32 %v4108, %v4111
        %v4113 = vrot.slane %v4112, 4
        %v4115 = vshll.u32 %v4014, 16
        %v4117 = vrot.slane %v4115, 5
        %v4118 = vsel %vm1268, %v4113, %v4117
        %v4120 = vshrl.u32 %v4015, 16
        %v4122 = vrot.slane %v4120, 4
        %v4123 = vshll.u32 %v4015, 16
        %v4125 = vrot.slane %v4123, 5
        %v4126 = vor.u32 %v4122, %v4125
        %v4127 = vrot.slane %v4126, 4
        %v4129 = vshll.u32 %v4017, 16
        %v4131 = vrot.slane %v4129, 5
        %v4132 = vsel %vm1268, %v4127, %v4131
        %v4134 = vshrl.u32 %v4016, 16
        %v4136 = vrot.slane %v4134, 4
        %v4137 = vshll.u32 %v4016, 16
        %v4139 = vrot.slane %v4137, 5
        %v4140 = vor.u32 %v4136, %v4139
        %v4141 = vrot.slane %v4140, 4
        %v4143 = vshll.u32 %v4018, 16
        %v4145 = vrot.slane %v4143, 5
        %v4146 = vsel %vm1268, %v4141, %v4145
        %v4148 = vshrl.u32 %v4019, 16
        %v4150 = vrot.slane %v4148, 4
        %v4151 = vshll.u32 %v4019, 16
        %v4153 = vrot.slane %v4151, 5
        %v4154 = vor.u32 %v4150, %v4153
        %v4155 = vrot.slane %v4154, 4
        %v4157 = vshll.u32 %v4021, 16
        %v4159 = vrot.slane %v4157, 5
        %v4160 = vsel %vm1268, %v4155, %v4159
        %v4162 = vshrl.u32 %v4020, 16
        %v4164 = vrot.slane %v4162, 4
        %v4165 = vshll.u32 %v4020, 16
        %v4167 = vrot.slane %v4165, 5
        %v4168 = vor.u32 %v4164, %v4167
        %v4169 = vrot.slane %v4168, 4
        %v4171 = vshll.u32 %v4022, 16
        %v4173 = vrot.slane %v4171, 5
        %v4174 = vsel %vm1268, %v4169, %v4173
        %v4176 = vshrl.u32 %v4023, 16
        %v4178 = vrot.slane %v4176, 4
        %v4179 = vshll.u32 %v4023, 16
        %v4181 = vrot.slane %v4179, 5
        %v4182 = vor.u32 %v4178, %v4181
        %v4183 = vrot.slane %v4182, 4
        %v4185 = vshll.u32 %v4025, 16
        %v4187 = vrot.slane %v4185, 5
        %v4188 = vsel %vm1268, %v4183, %v4187
        %v4190 = vshrl.u32 %v4024, 16
        %v4192 = vrot.slane %v4190, 4
        %v4193 = vshll.u32 %v4024, 16
        %v4195 = vrot.slane %v4193, 5
        %v4196 = vor.u32 %v4192, %v4195
        %v4197 = vrot.slane %v4196, 4
        %v4199 = vshll.u32 %v4026, 16
        %v4201 = vrot.slane %v4199, 5
        %v4202 = vsel %vm1268, %v4197, %v4201
        %v4204 = vshrl.u32 %v4027, 16
        %v4206 = vrot.slane %v4204, 4
        %v4207 = vshll.u32 %v4027, 16
        %v4209 = vrot.slane %v4207, 5
        %v4210 = vor.u32 %v4206, %v4209
        %v4211 = vrot.slane %v4210, 4
        %v4213 = vshll.u32 %v4029, 16
        %v4215 = vrot.slane %v4213, 5
        %v4216 = vsel %vm1268, %v4211, %v4215
        %v4218 = vshrl.u32 %v4028, 16
        %v4220 = vrot.slane %v4218, 4
        %v4221 = vshll.u32 %v4028, 16
        %v4223 = vrot.slane %v4221, 5
        %v4224 = vor.u32 %v4220, %v4223
        %v4225 = vrot.slane %v4224, 4
        %v4227 = vshll.u32 %v4030, 16
        %v4229 = vrot.slane %v4227, 5
        %v4230 = vsel %vm1268, %v4225, %v4229
        %v4232 = vshrl.u32 %v4031, 16
        %v4234 = vrot.slane %v4232, 4
        %v4235 = vshll.u32 %v4031, 16
        %v4237 = vrot.slane %v4235, 5
        %v4238 = vor.u32 %v4234, %v4237
        %v4239 = vrot.slane %v4238, 4
        %v4241 = vshll.u32 %v4033, 16
        %v4243 = vrot.slane %v4241, 5
        %v4244 = vsel %vm1268, %v4239, %v4243
        %v4246 = vshrl.u32 %v4032, 16
        %v4248 = vrot.slane %v4246, 4
        %v4249 = vshll.u32 %v4032, 16
        %v4251 = vrot.slane %v4249, 5
        %v4252 = vor.u32 %v4248, %v4251
        %v4253 = vrot.slane %v4252, 4
        %v4255 = vshll.u32 %v4034, 16
        %v4257 = vrot.slane %v4255, 5
        %v4258 = vsel %vm1268, %v4253, %v4257
        %s4259 = scalar_lea.vmem [#allocation10], 2048
        %v4260 = vld [vmem:[%s4259] sm:$0xff]
        %v4261 = vld [vmem:[%s4259 + $0x8] sm:$0xff]
        %v4262 = vld [vmem:[%s4259 + $0x10] sm:$0xff]
        %v4263 = vld [vmem:[%s4259 + $0x18] sm:$0xff]
        %v4264 = vld [vmem:[%s4259 + $0x20] sm:$0xff]
        %v4265 = vld [vmem:[%s4259 + $0x28] sm:$0xff]
        %v4266 = vld [vmem:[%s4259 + $0x30] sm:$0xff]
        %v4267 = vld [vmem:[%s4259 + $0x38] sm:$0xff]
        %v4268 = vld [vmem:[%s4259 + $0x40] sm:$0xff]
        %v4269 = vld [vmem:[%s4259 + $0x48] sm:$0xff]
        %v4270 = vld [vmem:[%s4259 + $0x50] sm:$0xff]
        %v4271 = vld [vmem:[%s4259 + $0x58] sm:$0xff]
        %v4272 = vld [vmem:[%s4259 + $0x60] sm:$0xff]
        %v4273 = vld [vmem:[%s4259 + $0x68] sm:$0xff]
        %v4274 = vld [vmem:[%s4259 + $0x70] sm:$0xff]
        %v4275 = vld [vmem:[%s4259 + $0x78] sm:$0xff]
        %v4276 = vld [vmem:[%s4259 + $0x80] sm:$0xff]
        %v4277 = vld [vmem:[%s4259 + $0x88] sm:$0xff]
        %v4278 = vld [vmem:[%s4259 + $0x90] sm:$0xff]
        %v4279 = vld [vmem:[%s4259 + $0x98] sm:$0xff]
        %v4280 = vld [vmem:[%s4259 + $0xa0] sm:$0xff]
        %v4281 = vld [vmem:[%s4259 + $0xa8] sm:$0xff]
        %v4282 = vld [vmem:[%s4259 + $0xb0] sm:$0xff]
        %v4283 = vld [vmem:[%s4259 + $0xb8] sm:$0xff]
        %v4284 = vld [vmem:[%s4259 + $0xc0] sm:$0xff]
        %v4285 = vld [vmem:[%s4259 + $0xc8] sm:$0xff]
        %v4286 = vld [vmem:[%s4259 + $0xd0] sm:$0xff]
        %v4287 = vld [vmem:[%s4259 + $0xd8] sm:$0xff]
        %v4288 = vld [vmem:[%s4259 + $0xe0] sm:$0xff]
        %v4289 = vld [vmem:[%s4259 + $0xe8] sm:$0xff]
        %v4290 = vld [vmem:[%s4259 + $0xf0] sm:$0xff]
        %v4291 = vld [vmem:[%s4259 + $0xf8] sm:$0xff]
        %v4292 = vld [vmem:[%s4259 + $0x100] sm:$0xff]
        %v4293 = vld [vmem:[%s4259 + $0x108] sm:$0xff]
        %v4294 = vld [vmem:[%s4259 + $0x110] sm:$0xff]
        %v4295 = vld [vmem:[%s4259 + $0x118] sm:$0xff]
        %v4296 = vld [vmem:[%s4259 + $0x120] sm:$0xff]
        %v4297 = vld [vmem:[%s4259 + $0x128] sm:$0xff]
        %v4298 = vld [vmem:[%s4259 + $0x130] sm:$0xff]
        %v4299 = vld [vmem:[%s4259 + $0x138] sm:$0xff]
        %v4300 = vld [vmem:[%s4259 + $0x140] sm:$0xff]
        %v4301 = vld [vmem:[%s4259 + $0x148] sm:$0xff]
        %v4302 = vld [vmem:[%s4259 + $0x150] sm:$0xff]
        %v4303 = vld [vmem:[%s4259 + $0x158] sm:$0xff]
        %v4304 = vld [vmem:[%s4259 + $0x160] sm:$0xff]
        %v4305 = vld [vmem:[%s4259 + $0x168] sm:$0xff]
        %v4306 = vld [vmem:[%s4259 + $0x170] sm:$0xff]
        %v4307 = vld [vmem:[%s4259 + $0x178] sm:$0xff]
        %v4308 = vld [vmem:[%s4259 + $0x180] sm:$0xff]
        %v4309 = vld [vmem:[%s4259 + $0x188] sm:$0xff]
        %v4310 = vld [vmem:[%s4259 + $0x190] sm:$0xff]
        %v4311 = vld [vmem:[%s4259 + $0x198] sm:$0xff]
        %v4312 = vld [vmem:[%s4259 + $0x1a0] sm:$0xff]
        %v4313 = vld [vmem:[%s4259 + $0x1a8] sm:$0xff]
        %v4314 = vld [vmem:[%s4259 + $0x1b0] sm:$0xff]
        %v4315 = vld [vmem:[%s4259 + $0x1b8] sm:$0xff]
        %v4316 = vld [vmem:[%s4259 + $0x1c0] sm:$0xff]
        %v4317 = vld [vmem:[%s4259 + $0x1c8] sm:$0xff]
        %v4318 = vld [vmem:[%s4259 + $0x1d0] sm:$0xff]
        %v4319 = vld [vmem:[%s4259 + $0x1d8] sm:$0xff]
        %v4320 = vld [vmem:[%s4259 + $0x1e0] sm:$0xff]
        %v4321 = vld [vmem:[%s4259 + $0x1e8] sm:$0xff]
        %v4322 = vld [vmem:[%s4259 + $0x1f0] sm:$0xff]
        %v4323 = vld [vmem:[%s4259 + $0x1f8] sm:$0xff]
        %v4324 = vunpack.c.l.b16 %v4048
        %v4325 = vunpack.c.h.b16 %v4048
        %v4326 = vunpack.c.l.b16 %v4062
        %v4327 = vunpack.c.h.b16 %v4062
        %v4328 = vunpack.c.l.b16 %v4076
        %v4329 = vunpack.c.h.b16 %v4076
        %v4330 = vunpack.c.l.b16 %v4090
        %v4331 = vunpack.c.h.b16 %v4090
        %v4332 = vunpack.c.l.b16 %v4104
        %v4333 = vunpack.c.h.b16 %v4104
        %v4334 = vunpack.c.l.b16 %v4118
        %v4335 = vunpack.c.h.b16 %v4118
        %v4336 = vunpack.c.l.b16 %v4132
        %v4337 = vunpack.c.h.b16 %v4132
        %v4338 = vunpack.c.l.b16 %v4146
        %v4339 = vunpack.c.h.b16 %v4146
        %v4340 = vunpack.c.l.b16 %v4160
        %v4341 = vunpack.c.h.b16 %v4160
        %v4342 = vunpack.c.l.b16 %v4174
        %v4343 = vunpack.c.h.b16 %v4174
        %v4344 = vunpack.c.l.b16 %v4188
        %v4345 = vunpack.c.h.b16 %v4188
        %v4346 = vunpack.c.l.b16 %v4202
        %v4347 = vunpack.c.h.b16 %v4202
        %v4348 = vunpack.c.l.b16 %v4216
        %v4349 = vunpack.c.h.b16 %v4216
        %v4350 = vunpack.c.l.b16 %v4230
        %v4351 = vunpack.c.h.b16 %v4230
        %v4352 = vunpack.c.l.b16 %v4244
        %v4353 = vunpack.c.h.b16 %v4244
        %v4354 = vunpack.c.l.b16 %v4258
        %v4355 = vunpack.c.h.b16 %v4258
        %v4356 = vpack.c.b16 %v4328, %v4324
        %v4357 = vpack.c.b16 %v4329, %v4325
        %v4358 = vpack.c.b16 %v4330, %v4326
        %v4359 = vpack.c.b16 %v4331, %v4327
        %v4360 = vpack.c.b16 %v4336, %v4332
        %v4361 = vpack.c.b16 %v4337, %v4333
        %v4362 = vpack.c.b16 %v4338, %v4334
        %v4363 = vpack.c.b16 %v4339, %v4335
        %v4364 = vpack.c.b16 %v4344, %v4340
        %v4365 = vpack.c.b16 %v4345, %v4341
        %v4366 = vpack.c.b16 %v4346, %v4342
        %v4367 = vpack.c.b16 %v4347, %v4343
        %v4368 = vpack.c.b16 %v4352, %v4348
        %v4369 = vpack.c.b16 %v4353, %v4349
        %v4370 = vpack.c.b16 %v4354, %v4350
        %v4371 = vpack.c.b16 %v4355, %v4351
        %v4452 = vunpack.c.l.b16 %v4260
        %v4453 = vunpack.c.h.b16 %v4260
        %v4454 = vunpack.c.l.b16 %v4261
        %v4455 = vunpack.c.h.b16 %v4261
        %v4456 = vunpack.c.l.b16 %v4262
        %v4457 = vunpack.c.h.b16 %v4262
        %v4458 = vunpack.c.l.b16 %v4263
        %v4459 = vunpack.c.h.b16 %v4263
        %v4460 = vunpack.c.l.b16 %v4264
        %v4461 = vunpack.c.h.b16 %v4264
        %v4462 = vunpack.c.l.b16 %v4265
        %v4463 = vunpack.c.h.b16 %v4265
        %v4464 = vunpack.c.l.b16 %v4266
        %v4465 = vunpack.c.h.b16 %v4266
        %v4466 = vunpack.c.l.b16 %v4267
        %v4467 = vunpack.c.h.b16 %v4267
        %v4468 = vunpack.c.l.b16 %v4268
        %v4469 = vunpack.c.h.b16 %v4268
        %v4470 = vunpack.c.l.b16 %v4269
        %v4471 = vunpack.c.h.b16 %v4269
        %v4472 = vunpack.c.l.b16 %v4270
        %v4473 = vunpack.c.h.b16 %v4270
        %v4474 = vunpack.c.l.b16 %v4271
        %v4475 = vunpack.c.h.b16 %v4271
        %v4476 = vunpack.c.l.b16 %v4272
        %v4477 = vunpack.c.h.b16 %v4272
        %v4478 = vunpack.c.l.b16 %v4273
        %v4479 = vunpack.c.h.b16 %v4273
        %v4480 = vunpack.c.l.b16 %v4274
        %v4481 = vunpack.c.h.b16 %v4274
        %v4482 = vunpack.c.l.b16 %v4275
        %v4483 = vunpack.c.h.b16 %v4275
        %v4484 = vunpack.c.l.b16 %v4276
        %v4485 = vunpack.c.h.b16 %v4276
        %v4486 = vunpack.c.l.b16 %v4277
        %v4487 = vunpack.c.h.b16 %v4277
        %v4488 = vunpack.c.l.b16 %v4278
        %v4489 = vunpack.c.h.b16 %v4278
        %v4490 = vunpack.c.l.b16 %v4279
        %v4491 = vunpack.c.h.b16 %v4279
        %v4492 = vunpack.c.l.b16 %v4280
        %v4493 = vunpack.c.h.b16 %v4280
        %v4494 = vunpack.c.l.b16 %v4281
        %v4495 = vunpack.c.h.b16 %v4281
        %v4496 = vunpack.c.l.b16 %v4282
        %v4497 = vunpack.c.h.b16 %v4282
        %v4498 = vunpack.c.l.b16 %v4283
        %v4499 = vunpack.c.h.b16 %v4283
        %v4500 = vunpack.c.l.b16 %v4284
        %v4501 = vunpack.c.h.b16 %v4284
        %v4502 = vunpack.c.l.b16 %v4285
        %v4503 = vunpack.c.h.b16 %v4285
        %v4504 = vunpack.c.l.b16 %v4286
        %v4505 = vunpack.c.h.b16 %v4286
        %v4506 = vunpack.c.l.b16 %v4287
        %v4507 = vunpack.c.h.b16 %v4287
        %v4508 = vunpack.c.l.b16 %v4288
        %v4509 = vunpack.c.h.b16 %v4288
        %v4510 = vunpack.c.l.b16 %v4289
        %v4511 = vunpack.c.h.b16 %v4289
        %v4512 = vunpack.c.l.b16 %v4290
        %v4513 = vunpack.c.h.b16 %v4290
        %v4514 = vunpack.c.l.b16 %v4291
        %v4515 = vunpack.c.h.b16 %v4291
        %v4516 = vunpack.c.l.b16 %v4292
        %v4517 = vunpack.c.h.b16 %v4292
        %v4518 = vunpack.c.l.b16 %v4293
        %v4519 = vunpack.c.h.b16 %v4293
        %v4520 = vunpack.c.l.b16 %v4294
        %v4521 = vunpack.c.h.b16 %v4294
        %v4522 = vunpack.c.l.b16 %v4295
        %v4523 = vunpack.c.h.b16 %v4295
        %v4524 = vunpack.c.l.b16 %v4296
        %v4525 = vunpack.c.h.b16 %v4296
        %v4526 = vunpack.c.l.b16 %v4297
        %v4527 = vunpack.c.h.b16 %v4297
        %v4528 = vunpack.c.l.b16 %v4298
        %v4529 = vunpack.c.h.b16 %v4298
        %v4530 = vunpack.c.l.b16 %v4299
        %v4531 = vunpack.c.h.b16 %v4299
        %v4532 = vunpack.c.l.b16 %v4300
        %v4533 = vunpack.c.h.b16 %v4300
        %v4534 = vunpack.c.l.b16 %v4301
        %v4535 = vunpack.c.h.b16 %v4301
        %v4536 = vunpack.c.l.b16 %v4302
        %v4537 = vunpack.c.h.b16 %v4302
        %v4538 = vunpack.c.l.b16 %v4303
        %v4539 = vunpack.c.h.b16 %v4303
        %v4540 = vunpack.c.l.b16 %v4304
        %v4541 = vunpack.c.h.b16 %v4304
        %v4542 = vunpack.c.l.b16 %v4305
        %v4543 = vunpack.c.h.b16 %v4305
        %v4544 = vunpack.c.l.b16 %v4306
        %v4545 = vunpack.c.h.b16 %v4306
        %v4546 = vunpack.c.l.b16 %v4307
        %v4547 = vunpack.c.h.b16 %v4307
        %v4548 = vunpack.c.l.b16 %v4308
        %v4549 = vunpack.c.h.b16 %v4308
        %v4550 = vunpack.c.l.b16 %v4309
        %v4551 = vunpack.c.h.b16 %v4309
        %v4552 = vunpack.c.l.b16 %v4310
        %v4553 = vunpack.c.h.b16 %v4310
        %v4554 = vunpack.c.l.b16 %v4311
        %v4555 = vunpack.c.h.b16 %v4311
        %v4556 = vunpack.c.l.b16 %v4312
        %v4557 = vunpack.c.h.b16 %v4312
        %v4558 = vunpack.c.l.b16 %v4313
        %v4559 = vunpack.c.h.b16 %v4313
        %v4560 = vunpack.c.l.b16 %v4314
        %v4561 = vunpack.c.h.b16 %v4314
        %v4562 = vunpack.c.l.b16 %v4315
        %v4563 = vunpack.c.h.b16 %v4315
        %v4564 = vunpack.c.l.b16 %v4316
        %v4565 = vunpack.c.h.b16 %v4316
        %v4566 = vunpack.c.l.b16 %v4317
        %v4567 = vunpack.c.h.b16 %v4317
        %v4568 = vunpack.c.l.b16 %v4318
        %v4569 = vunpack.c.h.b16 %v4318
        %v4570 = vunpack.c.l.b16 %v4319
        %v4571 = vunpack.c.h.b16 %v4319
        %v4572 = vunpack.c.l.b16 %v4320
        %v4573 = vunpack.c.h.b16 %v4320
        %v4574 = vunpack.c.l.b16 %v4321
        %v4575 = vunpack.c.h.b16 %v4321
        %v4576 = vunpack.c.l.b16 %v4322
        %v4577 = vunpack.c.h.b16 %v4322
        %v4578 = vunpack.c.l.b16 %v4323
        %v4579 = vunpack.c.h.b16 %v4323
        %v4580 = vpack.c.b16 %v4454, %v4452
        %v4581 = vpack.c.b16 %v4455, %v4453
        %v4582 = vpack.c.b16 %v4458, %v4456
        %v4583 = vpack.c.b16 %v4459, %v4457
        %v4584 = vpack.c.b16 %v4462, %v4460
        %v4585 = vpack.c.b16 %v4463, %v4461
        %v4586 = vpack.c.b16 %v4466, %v4464
        %v4587 = vpack.c.b16 %v4467, %v4465
        %v4588 = vpack.c.b16 %v4470, %v4468
        %v4589 = vpack.c.b16 %v4471, %v4469
        %v4590 = vpack.c.b16 %v4474, %v4472
        %v4591 = vpack.c.b16 %v4475, %v4473
        %v4592 = vpack.c.b16 %v4478, %v4476
        %v4593 = vpack.c.b16 %v4479, %v4477
        %v4594 = vpack.c.b16 %v4482, %v4480
        %v4595 = vpack.c.b16 %v4483, %v4481
        %v4596 = vpack.c.b16 %v4486, %v4484
        %v4597 = vpack.c.b16 %v4487, %v4485
        %v4598 = vpack.c.b16 %v4490, %v4488
        %v4599 = vpack.c.b16 %v4491, %v4489
        %v4600 = vpack.c.b16 %v4494, %v4492
        %v4601 = vpack.c.b16 %v4495, %v4493
        %v4602 = vpack.c.b16 %v4498, %v4496
        %v4603 = vpack.c.b16 %v4499, %v4497
        %v4604 = vpack.c.b16 %v4502, %v4500
        %v4605 = vpack.c.b16 %v4503, %v4501
        %v4606 = vpack.c.b16 %v4506, %v4504
        %v4607 = vpack.c.b16 %v4507, %v4505
        %v4608 = vpack.c.b16 %v4510, %v4508
        %v4609 = vpack.c.b16 %v4511, %v4509
        %v4610 = vpack.c.b16 %v4514, %v4512
        %v4611 = vpack.c.b16 %v4515, %v4513
        %v4612 = vpack.c.b16 %v4518, %v4516
        %v4613 = vpack.c.b16 %v4519, %v4517
        %v4614 = vpack.c.b16 %v4522, %v4520
        %v4615 = vpack.c.b16 %v4523, %v4521
        %v4616 = vpack.c.b16 %v4526, %v4524
        %v4617 = vpack.c.b16 %v4527, %v4525
        %v4618 = vpack.c.b16 %v4530, %v4528
        %v4619 = vpack.c.b16 %v4531, %v4529
        %v4620 = vpack.c.b16 %v4534, %v4532
        %v4621 = vpack.c.b16 %v4535, %v4533
        %v4622 = vpack.c.b16 %v4538, %v4536
        %v4623 = vpack.c.b16 %v4539, %v4537
        %v4624 = vpack.c.b16 %v4542, %v4540
        %v4625 = vpack.c.b16 %v4543, %v4541
        %v4626 = vpack.c.b16 %v4546, %v4544
        %v4627 = vpack.c.b16 %v4547, %v4545
        %v4628 = vpack.c.b16 %v4550, %v4548
        %v4629 = vpack.c.b16 %v4551, %v4549
        %v4630 = vpack.c.b16 %v4554, %v4552
        %v4631 = vpack.c.b16 %v4555, %v4553
        %v4632 = vpack.c.b16 %v4558, %v4556
        %v4633 = vpack.c.b16 %v4559, %v4557
        %v4634 = vpack.c.b16 %v4562, %v4560
        %v4635 = vpack.c.b16 %v4563, %v4561
        %v4636 = vpack.c.b16 %v4566, %v4564
        %v4637 = vpack.c.b16 %v4567, %v4565
        %v4638 = vpack.c.b16 %v4570, %v4568
        %v4639 = vpack.c.b16 %v4571, %v4569
        %v4640 = vpack.c.b16 %v4574, %v4572
        %v4641 = vpack.c.b16 %v4575, %v4573
        %v4642 = vpack.c.b16 %v4578, %v4576
        %v4643 = vpack.c.b16 %v4579, %v4577
        %4708 = vmatprep.subr.bf16.mxu0 %v4581
        %4709 = vmatpush1.bf16.msra.mxu0 %v4580
        %4710 = vmatprep.subr.bf16.mxu0 %v4583
        %4711 = vmatpush1.bf16.msra.mxu0 %v4582
        %4712 = vmatprep.subr.bf16.mxu0 %v4585
        %4713 = vmatpush1.bf16.msra.mxu0 %v4584
        %4714 = vmatprep.subr.bf16.mxu0 %v4587
        %4715 = vmatpush1.bf16.msra.mxu0 %v4586
        %4716 = vmatprep.subr.bf16.mxu0 %v4589
        %4717 = vmatpush1.bf16.msra.mxu0 %v4588
        %4718 = vmatprep.subr.bf16.mxu0 %v4591
        %4719 = vmatpush1.bf16.msra.mxu0 %v4590
        %4720 = vmatprep.subr.bf16.mxu0 %v4593
        %4721 = vmatpush1.bf16.msra.mxu0 %v4592
        %4722 = vmatprep.subr.bf16.mxu0 %v4595
        %4723 = vmatpush1.bf16.msra.mxu0 %v4594
        %4724 = vmatprep.subr.bf16.mxu0 %v4597
        %4725 = vmatpush1.bf16.msra.mxu0 %v4596
        %4726 = vmatprep.subr.bf16.mxu0 %v4599
        %4727 = vmatpush1.bf16.msra.mxu0 %v4598
        %4728 = vmatprep.subr.bf16.mxu0 %v4601
        %4729 = vmatpush1.bf16.msra.mxu0 %v4600
        %4730 = vmatprep.subr.bf16.mxu0 %v4603
        %4731 = vmatpush1.bf16.msra.mxu0 %v4602
        %4732 = vmatprep.subr.bf16.mxu0 %v4605
        %4733 = vmatpush1.bf16.msra.mxu0 %v4604
        %4734 = vmatprep.subr.bf16.mxu0 %v4607
        %4735 = vmatpush1.bf16.msra.mxu0 %v4606
        %4736 = vmatprep.subr.bf16.mxu0 %v4609
        %4737 = vmatpush1.bf16.msra.mxu0 %v4608
        %4738 = vmatprep.subr.bf16.mxu0 %v4611
        %4739 = vmatpush1.bf16.msra.mxu0 %v4610
        %4740 = vmatprep.mubr.bf16.mxu0 %v4357
        %4741 = vmatmul.mubr.bf16.gmra.mrb[0].mxu0 %v4356
        %v4742 = vpop.f32.mrb[0].mxu0
        %v4743 = vadd.f32 0.0, %v4742
        %v4744 = vpop.f32.mrb[0].mxu0
        %v4745 = vadd.f32 0.0, %v4744
        %v4746 = vpop.f32.mrb[0].mxu0
        %v4747 = vadd.f32 0.0, %v4746
        %v4748 = vpop.f32.mrb[0].mxu0
        %v4749 = vadd.f32 0.0, %v4748
        %4750 = vmatprep.mubr.bf16.mxu0 %v4361
        %4751 = vmatmul.mubr.bf16.gmra.mrb[0].mxu0 %v4360
        %v4752 = vpop.f32.mrb[0].mxu0
        %v4753 = vadd.f32 0.0, %v4752
        %v4754 = vpop.f32.mrb[0].mxu0
        %v4755 = vadd.f32 0.0, %v4754
        %v4756 = vpop.f32.mrb[0].mxu0
        %v4757 = vadd.f32 0.0, %v4756
        %v4758 = vpop.f32.mrb[0].mxu0
        %v4759 = vadd.f32 0.0, %v4758
        %4760 = vmatprep.mubr.bf16.mxu0 %v4365
        %4761 = vmatmul.mubr.bf16.gmra.mrb[0].mxu0 %v4364
        %v4762 = vpop.f32.mrb[0].mxu0
        %v4763 = vadd.f32 0.0, %v4762
        %v4764 = vpop.f32.mrb[0].mxu0
        %v4765 = vadd.f32 0.0, %v4764
        %v4766 = vpop.f32.mrb[0].mxu0
        %v4767 = vadd.f32 0.0, %v4766
        %v4768 = vpop.f32.mrb[0].mxu0
        %v4769 = vadd.f32 0.0, %v4768
        %4770 = vmatprep.mubr.bf16.mxu0 %v4369
        %4771 = vmatmul.mubr.bf16.gmra.mrb[0].mxu0 %v4368
        %v4772 = vpop.f32.mrb[0].mxu0
        %v4773 = vadd.f32 0.0, %v4772
        %v4774 = vpop.f32.mrb[0].mxu0
        %v4775 = vadd.f32 0.0, %v4774
        %v4776 = vpop.f32.mrb[0].mxu0
        %v4777 = vadd.f32 0.0, %v4776
        %v4778 = vpop.f32.mrb[0].mxu0
        %v4779 = vadd.f32 0.0, %v4778
        %4780 = vdwg.mxu0
        %4781 = vmatprep.subr.bf16.mxu0 %v4613
        %4782 = vmatpush1.bf16.msra.mxu0 %v4612
        %4783 = vmatprep.subr.bf16.mxu0 %v4615
        %4784 = vmatpush1.bf16.msra.mxu0 %v4614
        %4785 = vmatprep.subr.bf16.mxu0 %v4617
        %4786 = vmatpush1.bf16.msra.mxu0 %v4616
        %4787 = vmatprep.subr.bf16.mxu0 %v4619
        %4788 = vmatpush1.bf16.msra.mxu0 %v4618
        %4789 = vmatprep.subr.bf16.mxu0 %v4621
        %4790 = vmatpush1.bf16.msra.mxu0 %v4620
        %4791 = vmatprep.subr.bf16.mxu0 %v4623
        %4792 = vmatpush1.bf16.msra.mxu0 %v4622
        %4793 = vmatprep.subr.bf16.mxu0 %v4625
        %4794 = vmatpush1.bf16.msra.mxu0 %v4624
        %4795 = vmatprep.subr.bf16.mxu0 %v4627
        %4796 = vmatpush1.bf16.msra.mxu0 %v4626
        %4797 = vmatprep.subr.bf16.mxu0 %v4629
        %4798 = vmatpush1.bf16.msra.mxu0 %v4628
        %4799 = vmatprep.subr.bf16.mxu0 %v4631
        %4800 = vmatpush1.bf16.msra.mxu0 %v4630
        %4801 = vmatprep.subr.bf16.mxu0 %v4633
        %4802 = vmatpush1.bf16.msra.mxu0 %v4632
        %4803 = vmatprep.subr.bf16.mxu0 %v4635
        %4804 = vmatpush1.bf16.msra.mxu0 %v4634
        %4805 = vmatprep.subr.bf16.mxu0 %v4637
        %4806 = vmatpush1.bf16.msra.mxu0 %v4636
        %4807 = vmatprep.subr.bf16.mxu0 %v4639
        %4808 = vmatpush1.bf16.msra.mxu0 %v4638
        %4809 = vmatprep.subr.bf16.mxu0 %v4641
        %4810 = vmatpush1.bf16.msra.mxu0 %v4640
        %4811 = vmatprep.subr.bf16.mxu0 %v4643
        %4812 = vmatpush1.bf16.msra.mxu0 %v4642
        %4813 = vmatprep.mubr.bf16.mxu0 %v4359
        %4814 = vmatmul.mubr.bf16.gmra.mrb[0].mxu0 %v4358
        %v4815 = vpop.f32.mrb[0].mxu0
        %v4816 = vadd.f32 %v4743, %v4815
        %v4817 = vpop.f32.mrb[0].mxu0
        %v4818 = vadd.f32 %v4745, %v4817
        %v4819 = vpop.f32.mrb[0].mxu0
        %v4820 = vadd.f32 %v4747, %v4819
        %v4821 = vpop.f32.mrb[0].mxu0
        %v4822 = vadd.f32 %v4749, %v4821
        %4823 = vmatprep.mubr.bf16.mxu0 %v4363
        %4824 = vmatmul.mubr.bf16.gmra.mrb[0].mxu0 %v4362
        %v4825 = vpop.f32.mrb[0].mxu0
        %v4826 = vadd.f32 %v4753, %v4825
        %v4827 = vpop.f32.mrb[0].mxu0
        %v4828 = vadd.f32 %v4755, %v4827
        %v4829 = vpop.f32.mrb[0].mxu0
        %v4830 = vadd.f32 %v4757, %v4829
        %v4831 = vpop.f32.mrb[0].mxu0
        %v4832 = vadd.f32 %v4759, %v4831
        %4833 = vmatprep.mubr.bf16.mxu0 %v4367
        %4834 = vmatmul.mubr.bf16.gmra.mrb[0].mxu0 %v4366
        %v4835 = vpop.f32.mrb[0].mxu0
        %v4836 = vadd.f32 %v4763, %v4835
        %v4837 = vpop.f32.mrb[0].mxu0
        %v4838 = vadd.f32 %v4765, %v4837
        %v4839 = vpop.f32.mrb[0].mxu0
        %v4840 = vadd.f32 %v4767, %v4839
        %v4841 = vpop.f32.mrb[0].mxu0
        %v4842 = vadd.f32 %v4769, %v4841
        %4843 = vmatprep.mubr.bf16.mxu0 %v4371
        %4844 = vmatmul.mubr.bf16.gmra.mrb[0].mxu0 %v4370
        %v4845 = vpop.f32.mrb[0].mxu0
        %v4846 = vadd.f32 %v4773, %v4845
        %v4847 = vpop.f32.mrb[0].mxu0
        %v4848 = vadd.f32 %v4775, %v4847
        %v4849 = vpop.f32.mrb[0].mxu0
        %v4850 = vadd.f32 %v4777, %v4849
        %v4851 = vpop.f32.mrb[0].mxu0
        %v4852 = vadd.f32 %v4779, %v4851
        %4853 = vdwg.mxu0
        %v4854 = vadd.f32 %v3987, %v4816
        %v4855 = vadd.f32 %v3988, %v4818
        %v4856 = vadd.f32 %v3989, %v4820
        %v4857 = vadd.f32 %v3990, %v4822
        %v4858 = vadd.f32 %v3991, %v4826
        %v4859 = vadd.f32 %v3992, %v4828
        %v4860 = vadd.f32 %v3993, %v4830
        %v4861 = vadd.f32 %v3994, %v4832
        %v4862 = vadd.f32 %v3995, %v4836
        %v4863 = vadd.f32 %v3996, %v4838
        %v4864 = vadd.f32 %v3997, %v4840
        %v4865 = vadd.f32 %v3998, %v4842
        %v4866 = vadd.f32 %v3999, %v4846
        %v4867 = vadd.f32 %v4000, %v4848
        %v4868 = vadd.f32 %v4001, %v4850
        %v4869 = vadd.f32 %v4002, %v4852
        %v4870 = vld [vmem:[%s749] sm:$0xee]
        %v4871 = vld [vmem:[%s749 + $0x8] sm:$0xee]
        %v4872 = vld [vmem:[%s749 + $0x20] sm:$0xee]
        %v4873 = vld [vmem:[%s749 + $0x28] sm:$0xee]
        %v4874 = vld [vmem:[%s749 + $0x40] sm:$0xee]
        %v4875 = vld [vmem:[%s749 + $0x48] sm:$0xee]
        %v4876 = vld [vmem:[%s749 + $0x60] sm:$0xee]
        %v4877 = vld [vmem:[%s749 + $0x68] sm:$0xee]
        %v4878 = vld [vmem:[%s749 + $0x80] sm:$0xee]
        %v4879 = vld [vmem:[%s749 + $0x88] sm:$0xee]
        %v4880 = vld [vmem:[%s749 + $0xa0] sm:$0xee]
        %v4881 = vld [vmem:[%s749 + $0xa8] sm:$0xee]
        %v4882 = vld [vmem:[%s749 + $0xc0] sm:$0xee]
        %v4883 = vld [vmem:[%s749 + $0xc8] sm:$0xee]
        %v4884 = vld [vmem:[%s749 + $0xe0] sm:$0xee]
        %v4885 = vld [vmem:[%s749 + $0xe8] sm:$0xee]
        %v4918 = vrot.slane %v4870, 5
        %v4919 = vrot.slane %v4918, 4
        %v4920 = vrot.slane %v4005, 5
        %v4921 = vsel %vm2684, %v4919, %v4920
        %v4922 = vrot.slane %v4871, 5
        %v4923 = vrot.slane %v4922, 4
        %v4924 = vrot.slane %v4006, 5
        %v4925 = vsel %vm2684, %v4923, %v4924
        %v4926 = vrot.slane %v4872, 5
        %v4927 = vrot.slane %v4926, 4
        %v4928 = vrot.slane %v4009, 5
        %v4929 = vsel %vm2684, %v4927, %v4928
        %v4930 = vrot.slane %v4873, 5
        %v4931 = vrot.slane %v4930, 4
        %v4932 = vrot.slane %v4010, 5
        %v4933 = vsel %vm2684, %v4931, %v4932
        %v4934 = vrot.slane %v4874, 5
        %v4935 = vrot.slane %v4934, 4
        %v4936 = vrot.slane %v4013, 5
        %v4937 = vsel %vm2684, %v4935, %v4936
        %v4938 = vrot.slane %v4875, 5
        %v4939 = vrot.slane %v4938, 4
        %v4940 = vrot.slane %v4014, 5
        %v4941 = vsel %vm2684, %v4939, %v4940
        %v4942 = vrot.slane %v4876, 5
        %v4943 = vrot.slane %v4942, 4
        %v4944 = vrot.slane %v4017, 5
        %v4945 = vsel %vm2684, %v4943, %v4944
        %v4946 = vrot.slane %v4877, 5
        %v4947 = vrot.slane %v4946, 4
        %v4948 = vrot.slane %v4018, 5
        %v4949 = vsel %vm2684, %v4947, %v4948
        %v4950 = vrot.slane %v4878, 5
        %v4951 = vrot.slane %v4950, 4
        %v4952 = vrot.slane %v4021, 5
        %v4953 = vsel %vm2684, %v4951, %v4952
        %v4954 = vrot.slane %v4879, 5
        %v4955 = vrot.slane %v4954, 4
        %v4956 = vrot.slane %v4022, 5
        %v4957 = vsel %vm2684, %v4955, %v4956
        %v4958 = vrot.slane %v4880, 5
        %v4959 = vrot.slane %v4958, 4
        %v4960 = vrot.slane %v4025, 5
        %v4961 = vsel %vm2684, %v4959, %v4960
        %v4962 = vrot.slane %v4881, 5
        %v4963 = vrot.slane %v4962, 4
        %v4964 = vrot.slane %v4026, 5
        %v4965 = vsel %vm2684, %v4963, %v4964
        %v4966 = vrot.slane %v4882, 5
        %v4967 = vrot.slane %v4966, 4
        %v4968 = vrot.slane %v4029, 5
        %v4969 = vsel %vm2684, %v4967, %v4968
        %v4970 = vrot.slane %v4883, 5
        %v4971 = vrot.slane %v4970, 4
        %v4972 = vrot.slane %v4030, 5
        %v4973 = vsel %vm2684, %v4971, %v4972
        %v4974 = vrot.slane %v4884, 5
        %v4975 = vrot.slane %v4974, 4
        %v4976 = vrot.slane %v4033, 5
        %v4977 = vsel %vm2684, %v4975, %v4976
        %v4978 = vrot.slane %v4885, 5
        %v4979 = vrot.slane %v4978, 4
        %v4980 = vrot.slane %v4034, 5
        %v4981 = vsel %vm2684, %v4979, %v4980
        %s4982 = scalar_lea.vmem [#allocation10], 2560
        %v4983 = vld [vmem:[%s4982] sm:$0xff]
        %v4984 = vld [vmem:[%s4982 + $0x8] sm:$0xff]
        %v4985 = vld [vmem:[%s4982 + $0x10] sm:$0xff]
        %v4986 = vld [vmem:[%s4982 + $0x18] sm:$0xff]
        %v4987 = vld [vmem:[%s4982 + $0x20] sm:$0xff]
        %v4988 = vld [vmem:[%s4982 + $0x28] sm:$0xff]
        %v4989 = vld [vmem:[%s4982 + $0x30] sm:$0xff]
        %v4990 = vld [vmem:[%s4982 + $0x38] sm:$0xff]
        %v4991 = vld [vmem:[%s4982 + $0x40] sm:$0xff]
        %v4992 = vld [vmem:[%s4982 + $0x48] sm:$0xff]
        %v4993 = vld [vmem:[%s4982 + $0x50] sm:$0xff]
        %v4994 = vld [vmem:[%s4982 + $0x58] sm:$0xff]
        %v4995 = vld [vmem:[%s4982 + $0x60] sm:$0xff]
        %v4996 = vld [vmem:[%s4982 + $0x68] sm:$0xff]
        %v4997 = vld [vmem:[%s4982 + $0x70] sm:$0xff]
        %v4998 = vld [vmem:[%s4982 + $0x78] sm:$0xff]
        %v4999 = vld [vmem:[%s4982 + $0x80] sm:$0xff]
        %v5000 = vld [vmem:[%s4982 + $0x88] sm:$0xff]
        %v5001 = vld [vmem:[%s4982 + $0x90] sm:$0xff]
        %v5002 = vld [vmem:[%s4982 + $0x98] sm:$0xff]
        %v5003 = vld [vmem:[%s4982 + $0xa0] sm:$0xff]
        %v5004 = vld [vmem:[%s4982 + $0xa8] sm:$0xff]
        %v5005 = vld [vmem:[%s4982 + $0xb0] sm:$0xff]
        %v5006 = vld [vmem:[%s4982 + $0xb8] sm:$0xff]
        %v5007 = vld [vmem:[%s4982 + $0xc0] sm:$0xff]
        %v5008 = vld [vmem:[%s4982 + $0xc8] sm:$0xff]
        %v5009 = vld [vmem:[%s4982 + $0xd0] sm:$0xff]
        %v5010 = vld [vmem:[%s4982 + $0xd8] sm:$0xff]
        %v5011 = vld [vmem:[%s4982 + $0xe0] sm:$0xff]
        %v5012 = vld [vmem:[%s4982 + $0xe8] sm:$0xff]
        %v5013 = vld [vmem:[%s4982 + $0xf0] sm:$0xff]
        %v5014 = vld [vmem:[%s4982 + $0xf8] sm:$0xff]
        %v5015 = vld [vmem:[%s4982 + $0x100] sm:$0xff]
        %v5016 = vld [vmem:[%s4982 + $0x108] sm:$0xff]
        %v5017 = vld [vmem:[%s4982 + $0x110] sm:$0xff]
        %v5018 = vld [vmem:[%s4982 + $0x118] sm:$0xff]
        %v5019 = vld [vmem:[%s4982 + $0x120] sm:$0xff]
        %v5020 = vld [vmem:[%s4982 + $0x128] sm:$0xff]
        %v5021 = vld [vmem:[%s4982 + $0x130] sm:$0xff]
        %v5022 = vld [vmem:[%s4982 + $0x138] sm:$0xff]
        %v5023 = vld [vmem:[%s4982 + $0x140] sm:$0xff]
        %v5024 = vld [vmem:[%s4982 + $0x148] sm:$0xff]
        %v5025 = vld [vmem:[%s4982 + $0x150] sm:$0xff]
        %v5026 = vld [vmem:[%s4982 + $0x158] sm:$0xff]
        %v5027 = vld [vmem:[%s4982 + $0x160] sm:$0xff]
        %v5028 = vld [vmem:[%s4982 + $0x168] sm:$0xff]
        %v5029 = vld [vmem:[%s4982 + $0x170] sm:$0xff]
        %v5030 = vld [vmem:[%s4982 + $0x178] sm:$0xff]
        %v5031 = vld [vmem:[%s4982 + $0x180] sm:$0xff]
        %v5032 = vld [vmem:[%s4982 + $0x188] sm:$0xff]
        %v5033 = vld [vmem:[%s4982 + $0x190] sm:$0xff]
        %v5034 = vld [vmem:[%s4982 + $0x198] sm:$0xff]
        %v5035 = vld [vmem:[%s4982 + $0x1a0] sm:$0xff]
        %v5036 = vld [vmem:[%s4982 + $0x1a8] sm:$0xff]
        %v5037 = vld [vmem:[%s4982 + $0x1b0] sm:$0xff]
        %v5038 = vld [vmem:[%s4982 + $0x1b8] sm:$0xff]
        %v5039 = vld [vmem:[%s4982 + $0x1c0] sm:$0xff]
        %v5040 = vld [vmem:[%s4982 + $0x1c8] sm:$0xff]
        %v5041 = vld [vmem:[%s4982 + $0x1d0] sm:$0xff]
        %v5042 = vld [vmem:[%s4982 + $0x1d8] sm:$0xff]
        %v5043 = vld [vmem:[%s4982 + $0x1e0] sm:$0xff]
        %v5044 = vld [vmem:[%s4982 + $0x1e8] sm:$0xff]
        %v5045 = vld [vmem:[%s4982 + $0x1f0] sm:$0xff]
        %v5046 = vld [vmem:[%s4982 + $0x1f8] sm:$0xff]
        %v5047 = vunpack.c.l.b16 %v4921
        %v5048 = vunpack.c.h.b16 %v4921
        %v5049 = vunpack.c.l.b16 %v4925
        %v5050 = vunpack.c.h.b16 %v4925
        %v5051 = vunpack.c.l.b16 %v4929
        %v5052 = vunpack.c.h.b16 %v4929
        %v5053 = vunpack.c.l.b16 %v4933
        %v5054 = vunpack.c.h.b16 %v4933
        %v5055 = vunpack.c.l.b16 %v4937
        %v5056 = vunpack.c.h.b16 %v4937
        %v5057 = vunpack.c.l.b16 %v4941
        %v5058 = vunpack.c.h.b16 %v4941
        %v5059 = vunpack.c.l.b16 %v4945
        %v5060 = vunpack.c.h.b16 %v4945
        %v5061 = vunpack.c.l.b16 %v4949
        %v5062 = vunpack.c.h.b16 %v4949
        %v5063 = vunpack.c.l.b16 %v4953
        %v5064 = vunpack.c.h.b16 %v4953
        %v5065 = vunpack.c.l.b16 %v4957
        %v5066 = vunpack.c.h.b16 %v4957
        %v5067 = vunpack.c.l.b16 %v4961
        %v5068 = vunpack.c.h.b16 %v4961
        %v5069 = vunpack.c.l.b16 %v4965
        %v5070 = vunpack.c.h.b16 %v4965
        %v5071 = vunpack.c.l.b16 %v4969
        %v5072 = vunpack.c.h.b16 %v4969
        %v5073 = vunpack.c.l.b16 %v4973
        %v5074 = vunpack.c.h.b16 %v4973
        %v5075 = vunpack.c.l.b16 %v4977
        %v5076 = vunpack.c.h.b16 %v4977
        %v5077 = vunpack.c.l.b16 %v4981
        %v5078 = vunpack.c.h.b16 %v4981
        %v5079 = vpack.c.b16 %v5051, %v5047
        %v5080 = vpack.c.b16 %v5052, %v5048
        %v5081 = vpack.c.b16 %v5053, %v5049
        %v5082 = vpack.c.b16 %v5054, %v5050
        %v5083 = vpack.c.b16 %v5059, %v5055
        %v5084 = vpack.c.b16 %v5060, %v5056
        %v5085 = vpack.c.b16 %v5061, %v5057
        %v5086 = vpack.c.b16 %v5062, %v5058
        %v5087 = vpack.c.b16 %v5067, %v5063
        %v5088 = vpack.c.b16 %v5068, %v5064
        %v5089 = vpack.c.b16 %v5069, %v5065
        %v5090 = vpack.c.b16 %v5070, %v5066
        %v5091 = vpack.c.b16 %v5075, %v5071
        %v5092 = vpack.c.b16 %v5076, %v5072
        %v5093 = vpack.c.b16 %v5077, %v5073
        %v5094 = vpack.c.b16 %v5078, %v5074
        %v5175 = vunpack.c.l.b16 %v4983
        %v5176 = vunpack.c.h.b16 %v4983
        %v5177 = vunpack.c.l.b16 %v4984
        %v5178 = vunpack.c.h.b16 %v4984
        %v5179 = vunpack.c.l.b16 %v4985
        %v5180 = vunpack.c.h.b16 %v4985
        %v5181 = vunpack.c.l.b16 %v4986
        %v5182 = vunpack.c.h.b16 %v4986
        %v5183 = vunpack.c.l.b16 %v4987
        %v5184 = vunpack.c.h.b16 %v4987
        %v5185 = vunpack.c.l.b16 %v4988
        %v5186 = vunpack.c.h.b16 %v4988
        %v5187 = vunpack.c.l.b16 %v4989
        %v5188 = vunpack.c.h.b16 %v4989
        %v5189 = vunpack.c.l.b16 %v4990
        %v5190 = vunpack.c.h.b16 %v4990
        %v5191 = vunpack.c.l.b16 %v4991
        %v5192 = vunpack.c.h.b16 %v4991
        %v5193 = vunpack.c.l.b16 %v4992
        %v5194 = vunpack.c.h.b16 %v4992
        %v5195 = vunpack.c.l.b16 %v4993
        %v5196 = vunpack.c.h.b16 %v4993
        %v5197 = vunpack.c.l.b16 %v4994
        %v5198 = vunpack.c.h.b16 %v4994
        %v5199 = vunpack.c.l.b16 %v4995
        %v5200 = vunpack.c.h.b16 %v4995
        %v5201 = vunpack.c.l.b16 %v4996
        %v5202 = vunpack.c.h.b16 %v4996
        %v5203 = vunpack.c.l.b16 %v4997
        %v5204 = vunpack.c.h.b16 %v4997
        %v5205 = vunpack.c.l.b16 %v4998
        %v5206 = vunpack.c.h.b16 %v4998
        %v5207 = vunpack.c.l.b16 %v4999
        %v5208 = vunpack.c.h.b16 %v4999
        %v5209 = vunpack.c.l.b16 %v5000
        %v5210 = vunpack.c.h.b16 %v5000
        %v5211 = vunpack.c.l.b16 %v5001
        %v5212 = vunpack.c.h.b16 %v5001
        %v5213 = vunpack.c.l.b16 %v5002
        %v5214 = vunpack.c.h.b16 %v5002
        %v5215 = vunpack.c.l.b16 %v5003
        %v5216 = vunpack.c.h.b16 %v5003
        %v5217 = vunpack.c.l.b16 %v5004
        %v5218 = vunpack.c.h.b16 %v5004
        %v5219 = vunpack.c.l.b16 %v5005
        %v5220 = vunpack.c.h.b16 %v5005
        %v5221 = vunpack.c.l.b16 %v5006
        %v5222 = vunpack.c.h.b16 %v5006
        %v5223 = vunpack.c.l.b16 %v5007
        %v5224 = vunpack.c.h.b16 %v5007
        %v5225 = vunpack.c.l.b16 %v5008
        %v5226 = vunpack.c.h.b16 %v5008
        %v5227 = vunpack.c.l.b16 %v5009
        %v5228 = vunpack.c.h.b16 %v5009
        %v5229 = vunpack.c.l.b16 %v5010
        %v5230 = vunpack.c.h.b16 %v5010
        %v5231 = vunpack.c.l.b16 %v5011
        %v5232 = vunpack.c.h.b16 %v5011
        %v5233 = vunpack.c.l.b16 %v5012
        %v5234 = vunpack.c.h.b16 %v5012
        %v5235 = vunpack.c.l.b16 %v5013
        %v5236 = vunpack.c.h.b16 %v5013
        %v5237 = vunpack.c.l.b16 %v5014
        %v5238 = vunpack.c.h.b16 %v5014
        %v5239 = vunpack.c.l.b16 %v5015
        %v5240 = vunpack.c.h.b16 %v5015
        %v5241 = vunpack.c.l.b16 %v5016
        %v5242 = vunpack.c.h.b16 %v5016
        %v5243 = vunpack.c.l.b16 %v5017
        %v5244 = vunpack.c.h.b16 %v5017
        %v5245 = vunpack.c.l.b16 %v5018
        %v5246 = vunpack.c.h.b16 %v5018
        %v5247 = vunpack.c.l.b16 %v5019
        %v5248 = vunpack.c.h.b16 %v5019
        %v5249 = vunpack.c.l.b16 %v5020
        %v5250 = vunpack.c.h.b16 %v5020
        %v5251 = vunpack.c.l.b16 %v5021
        %v5252 = vunpack.c.h.b16 %v5021
        %v5253 = vunpack.c.l.b16 %v5022
        %v5254 = vunpack.c.h.b16 %v5022
        %v5255 = vunpack.c.l.b16 %v5023
        %v5256 = vunpack.c.h.b16 %v5023
        %v5257 = vunpack.c.l.b16 %v5024
        %v5258 = vunpack.c.h.b16 %v5024
        %v5259 = vunpack.c.l.b16 %v5025
        %v5260 = vunpack.c.h.b16 %v5025
        %v5261 = vunpack.c.l.b16 %v5026
        %v5262 = vunpack.c.h.b16 %v5026
        %v5263 = vunpack.c.l.b16 %v5027
        %v5264 = vunpack.c.h.b16 %v5027
        %v5265 = vunpack.c.l.b16 %v5028
        %v5266 = vunpack.c.h.b16 %v5028
        %v5267 = vunpack.c.l.b16 %v5029
        %v5268 = vunpack.c.h.b16 %v5029
        %v5269 = vunpack.c.l.b16 %v5030
        %v5270 = vunpack.c.h.b16 %v5030
        %v5271 = vunpack.c.l.b16 %v5031
        %v5272 = vunpack.c.h.b16 %v5031
        %v5273 = vunpack.c.l.b16 %v5032
        %v5274 = vunpack.c.h.b16 %v5032
        %v5275 = vunpack.c.l.b16 %v5033
        %v5276 = vunpack.c.h.b16 %v5033
        %v5277 = vunpack.c.l.b16 %v5034
        %v5278 = vunpack.c.h.b16 %v5034
        %v5279 = vunpack.c.l.b16 %v5035
        %v5280 = vunpack.c.h.b16 %v5035
        %v5281 = vunpack.c.l.b16 %v5036
        %v5282 = vunpack.c.h.b16 %v5036
        %v5283 = vunpack.c.l.b16 %v5037
        %v5284 = vunpack.c.h.b16 %v5037
        %v5285 = vunpack.c.l.b16 %v5038
        %v5286 = vunpack.c.h.b16 %v5038
        %v5287 = vunpack.c.l.b16 %v5039
        %v5288 = vunpack.c.h.b16 %v5039
        %v5289 = vunpack.c.l.b16 %v5040
        %v5290 = vunpack.c.h.b16 %v5040
        %v5291 = vunpack.c.l.b16 %v5041
        %v5292 = vunpack.c.h.b16 %v5041
        %v5293 = vunpack.c.l.b16 %v5042
        %v5294 = vunpack.c.h.b16 %v5042
        %v5295 = vunpack.c.l.b16 %v5043
        %v5296 = vunpack.c.h.b16 %v5043
        %v5297 = vunpack.c.l.b16 %v5044
        %v5298 = vunpack.c.h.b16 %v5044
        %v5299 = vunpack.c.l.b16 %v5045
        %v5300 = vunpack.c.h.b16 %v5045
        %v5301 = vunpack.c.l.b16 %v5046
        %v5302 = vunpack.c.h.b16 %v5046
        %v5303 = vpack.c.b16 %v5177, %v5175
        %v5304 = vpack.c.b16 %v5178, %v5176
        %v5305 = vpack.c.b16 %v5181, %v5179
        %v5306 = vpack.c.b16 %v5182, %v5180
        %v5307 = vpack.c.b16 %v5185, %v5183
        %v5308 = vpack.c.b16 %v5186, %v5184
        %v5309 = vpack.c.b16 %v5189, %v5187
        %v5310 = vpack.c.b16 %v5190, %v5188
        %v5311 = vpack.c.b16 %v5193, %v5191
        %v5312 = vpack.c.b16 %v5194, %v5192
        %v5313 = vpack.c.b16 %v5197, %v5195
        %v5314 = vpack.c.b16 %v5198, %v5196
        %v5315 = vpack.c.b16 %v5201, %v5199
        %v5316 = vpack.c.b16 %v5202, %v5200
        %v5317 = vpack.c.b16 %v5205, %v5203
        %v5318 = vpack.c.b16 %v5206, %v5204
        %v5319 = vpack.c.b16 %v5209, %v5207
        %v5320 = vpack.c.b16 %v5210, %v5208
        %v5321 = vpack.c.b16 %v5213, %v5211
        %v5322 = vpack.c.b16 %v5214, %v5212
        %v5323 = vpack.c.b16 %v5217, %v5215
        %v5324 = vpack.c.b16 %v5218, %v5216
        %v5325 = vpack.c.b16 %v5221, %v5219
        %v5326 = vpack.c.b16 %v5222, %v5220
        %v5327 = vpack.c.b16 %v5225, %v5223
        %v5328 = vpack.c.b16 %v5226, %v5224
        %v5329 = vpack.c.b16 %v5229, %v5227
        %v5330 = vpack.c.b16 %v5230, %v5228
        %v5331 = vpack.c.b16 %v5233, %v5231
        %v5332 = vpack.c.b16 %v5234, %v5232
        %v5333 = vpack.c.b16 %v5237, %v5235
        %v5334 = vpack.c.b16 %v5238, %v5236
        %v5335 = vpack.c.b16 %v5241, %v5239
        %v5336 = vpack.c.b16 %v5242, %v5240
        %v5337 = vpack.c.b16 %v5245, %v5243
        %v5338 = vpack.c.b16 %v5246, %v5244
        %v5339 = vpack.c.b16 %v5249, %v5247
        %v5340 = vpack.c.b16 %v5250, %v5248
        %v5341 = vpack.c.b16 %v5253, %v5251
        %v5342 = vpack.c.b16 %v5254, %v5252
        %v5343 = vpack.c.b16 %v5257, %v5255
        %v5344 = vpack.c.b16 %v5258, %v5256
        %v5345 = vpack.c.b16 %v5261, %v5259
        %v5346 = vpack.c.b16 %v5262, %v5260
        %v5347 = vpack.c.b16 %v5265, %v5263
        %v5348 = vpack.c.b16 %v5266, %v5264
        %v5349 = vpack.c.b16 %v5269, %v5267
        %v5350 = vpack.c.b16 %v5270, %v5268
        %v5351 = vpack.c.b16 %v5273, %v5271
        %v5352 = vpack.c.b16 %v5274, %v5272
        %v5353 = vpack.c.b16 %v5277, %v5275
        %v5354 = vpack.c.b16 %v5278, %v5276
        %v5355 = vpack.c.b16 %v5281, %v5279
        %v5356 = vpack.c.b16 %v5282, %v5280
        %v5357 = vpack.c.b16 %v5285, %v5283
        %v5358 = vpack.c.b16 %v5286, %v5284
        %v5359 = vpack.c.b16 %v5289, %v5287
        %v5360 = vpack.c.b16 %v5290, %v5288
        %v5361 = vpack.c.b16 %v5293, %v5291
        %v5362 = vpack.c.b16 %v5294, %v5292
        %v5363 = vpack.c.b16 %v5297, %v5295
        %v5364 = vpack.c.b16 %v5298, %v5296
        %v5365 = vpack.c.b16 %v5301, %v5299
        %v5366 = vpack.c.b16 %v5302, %v5300
        %5431 = vmatprep.subr.bf16.mxu0 %v5304
        %5432 = vmatpush1.bf16.msra.mxu0 %v5303
        %5433 = vmatprep.subr.bf16.mxu0 %v5306
        %5434 = vmatpush1.bf16.msra.mxu0 %v5305
        %5435 = vmatprep.subr.bf16.mxu0 %v5308
        %5436 = vmatpush1.bf16.msra.mxu0 %v5307
        %5437 = vmatprep.subr.bf16.mxu0 %v5310
        %5438 = vmatpush1.bf16.msra.mxu0 %v5309
        %5439 = vmatprep.subr.bf16.mxu0 %v5312
        %5440 = vmatpush1.bf16.msra.mxu0 %v5311
        %5441 = vmatprep.subr.bf16.mxu0 %v5314
        %5442 = vmatpush1.bf16.msra.mxu0 %v5313
        %5443 = vmatprep.subr.bf16.mxu0 %v5316
        %5444 = vmatpush1.bf16.msra.mxu0 %v5315
        %5445 = vmatprep.subr.bf16.mxu0 %v5318
        %5446 = vmatpush1.bf16.msra.mxu0 %v5317
        %5447 = vmatprep.subr.bf16.mxu0 %v5320
        %5448 = vmatpush1.bf16.msra.mxu0 %v5319
        %5449 = vmatprep.subr.bf16.mxu0 %v5322
        %5450 = vmatpush1.bf16.msra.mxu0 %v5321
        %5451 = vmatprep.subr.bf16.mxu0 %v5324
        %5452 = vmatpush1.bf16.msra.mxu0 %v5323
        %5453 = vmatprep.subr.bf16.mxu0 %v5326
        %5454 = vmatpush1.bf16.msra.mxu0 %v5325
        %5455 = vmatprep.subr.bf16.mxu0 %v5328
        %5456 = vmatpush1.bf16.msra.mxu0 %v5327
        %5457 = vmatprep.subr.bf16.mxu0 %v5330
        %5458 = vmatpush1.bf16.msra.mxu0 %v5329
        %5459 = vmatprep.subr.bf16.mxu0 %v5332
        %5460 = vmatpush1.bf16.msra.mxu0 %v5331
        %5461 = vmatprep.subr.bf16.mxu0 %v5334
        %5462 = vmatpush1.bf16.msra.mxu0 %v5333
        %5463 = vmatprep.mubr.bf16.mxu0 %v5080
        %5464 = vmatmul.mubr.bf16.gmra.mrb[0].mxu0 %v5079
        %v5465 = vpop.f32.mrb[0].mxu0
        %v5466 = vadd.f32 0.0, %v5465
        %v5467 = vpop.f32.mrb[0].mxu0
        %v5468 = vadd.f32 0.0, %v5467
        %v5469 = vpop.f32.mrb[0].mxu0
        %v5470 = vadd.f32 0.0, %v5469
        %v5471 = vpop.f32.mrb[0].mxu0
        %v5472 = vadd.f32 0.0, %v5471
        %5473 = vmatprep.mubr.bf16.mxu0 %v5084
        %5474 = vmatmul.mubr.bf16.gmra.mrb[0].mxu0 %v5083
        %v5475 = vpop.f32.mrb[0].mxu0
        %v5476 = vadd.f32 0.0, %v5475
        %v5477 = vpop.f32.mrb[0].mxu0
        %v5478 = vadd.f32 0.0, %v5477
        %v5479 = vpop.f32.mrb[0].mxu0
        %v5480 = vadd.f32 0.0, %v5479
        %v5481 = vpop.f32.mrb[0].mxu0
        %v5482 = vadd.f32 0.0, %v5481
        %5483 = vmatprep.mubr.bf16.mxu0 %v5088
        %5484 = vmatmul.mubr.bf16.gmra.mrb[0].mxu0 %v5087
        %v5485 = vpop.f32.mrb[0].mxu0
        %v5486 = vadd.f32 0.0, %v5485
        %v5487 = vpop.f32.mrb[0].mxu0
        %v5488 = vadd.f32 0.0, %v5487
        %v5489 = vpop.f32.mrb[0].mxu0
        %v5490 = vadd.f32 0.0, %v5489
        %v5491 = vpop.f32.mrb[0].mxu0
        %v5492 = vadd.f32 0.0, %v5491
        %5493 = vmatprep.mubr.bf16.mxu0 %v5092
        %5494 = vmatmul.mubr.bf16.gmra.mrb[0].mxu0 %v5091
        %v5495 = vpop.f32.mrb[0].mxu0
        %v5496 = vadd.f32 0.0, %v5495
        %v5497 = vpop.f32.mrb[0].mxu0
        %v5498 = vadd.f32 0.0, %v5497
        %v5499 = vpop.f32.mrb[0].mxu0
        %v5500 = vadd.f32 0.0, %v5499
        %v5501 = vpop.f32.mrb[0].mxu0
        %v5502 = vadd.f32 0.0, %v5501
        %5503 = vdwg.mxu0
        %5504 = vmatprep.subr.bf16.mxu0 %v5336
        %5505 = vmatpush1.bf16.msra.mxu0 %v5335
        %5506 = vmatprep.subr.bf16.mxu0 %v5338
        %5507 = vmatpush1.bf16.msra.mxu0 %v5337
        %5508 = vmatprep.subr.bf16.mxu0 %v5340
        %5509 = vmatpush1.bf16.msra.mxu0 %v5339
        %5510 = vmatprep.subr.bf16.mxu0 %v5342
        %5511 = vmatpush1.bf16.msra.mxu0 %v5341
        %5512 = vmatprep.subr.bf16.mxu0 %v5344
        %5513 = vmatpush1.bf16.msra.mxu0 %v5343
        %5514 = vmatprep.subr.bf16.mxu0 %v5346
        %5515 = vmatpush1.bf16.msra.mxu0 %v5345
        %5516 = vmatprep.subr.bf16.mxu0 %v5348
        %5517 = vmatpush1.bf16.msra.mxu0 %v5347
        %5518 = vmatprep.subr.bf16.mxu0 %v5350
        %5519 = vmatpush1.bf16.msra.mxu0 %v5349
        %5520 = vmatprep.subr.bf16.mxu0 %v5352
        %5521 = vmatpush1.bf16.msra.mxu0 %v5351
        %5522 = vmatprep.subr.bf16.mxu0 %v5354
        %5523 = vmatpush1.bf16.msra.mxu0 %v5353
        %5524 = vmatprep.subr.bf16.mxu0 %v5356
        %5525 = vmatpush1.bf16.msra.mxu0 %v5355
        %5526 = vmatprep.subr.bf16.mxu0 %v5358
        %5527 = vmatpush1.bf16.msra.mxu0 %v5357
        %5528 = vmatprep.subr.bf16.mxu0 %v5360
        %5529 = vmatpush1.bf16.msra.mxu0 %v5359
        %5530 = vmatprep.subr.bf16.mxu0 %v5362
        %5531 = vmatpush1.bf16.msra.mxu0 %v5361
        %5532 = vmatprep.subr.bf16.mxu0 %v5364
        %5533 = vmatpush1.bf16.msra.mxu0 %v5363
        %5534 = vmatprep.subr.bf16.mxu0 %v5366
        %5535 = vmatpush1.bf16.msra.mxu0 %v5365
        %5536 = vmatprep.mubr.bf16.mxu0 %v5082
        %5537 = vmatmul.mubr.bf16.gmra.mrb[0].mxu0 %v5081
        %v5538 = vpop.f32.mrb[0].mxu0
        %v5539 = vadd.f32 %v5466, %v5538
        %v5540 = vpop.f32.mrb[0].mxu0
        %v5541 = vadd.f32 %v5468, %v5540
        %v5542 = vpop.f32.mrb[0].mxu0
        %v5543 = vadd.f32 %v5470, %v5542
        %v5544 = vpop.f32.mrb[0].mxu0
        %v5545 = vadd.f32 %v5472, %v5544
        %5546 = vmatprep.mubr.bf16.mxu0 %v5086
        %5547 = vmatmul.mubr.bf16.gmra.mrb[0].mxu0 %v5085
        %v5548 = vpop.f32.mrb[0].mxu0
        %v5549 = vadd.f32 %v5476, %v5548
        %v5550 = vpop.f32.mrb[0].mxu0
        %v5551 = vadd.f32 %v5478, %v5550
        %v5552 = vpop.f32.mrb[0].mxu0
        %v5553 = vadd.f32 %v5480, %v5552
        %v5554 = vpop.f32.mrb[0].mxu0
        %v5555 = vadd.f32 %v5482, %v5554
        %5556 = vmatprep.mubr.bf16.mxu0 %v5090
        %5557 = vmatmul.mubr.bf16.gmra.mrb[0].mxu0 %v5089
        %v5558 = vpop.f32.mrb[0].mxu0
        %v5559 = vadd.f32 %v5486, %v5558
        %v5560 = vpop.f32.mrb[0].mxu0
        %v5561 = vadd.f32 %v5488, %v5560
        %v5562 = vpop.f32.mrb[0].mxu0
        %v5563 = vadd.f32 %v5490, %v5562
        %v5564 = vpop.f32.mrb[0].mxu0
        %v5565 = vadd.f32 %v5492, %v5564
        %5566 = vmatprep.mubr.bf16.mxu0 %v5094
        %5567 = vmatmul.mubr.bf16.gmra.mrb[0].mxu0 %v5093
        %v5568 = vpop.f32.mrb[0].mxu0
        %v5569 = vadd.f32 %v5496, %v5568
        %v5570 = vpop.f32.mrb[0].mxu0
        %v5571 = vadd.f32 %v5498, %v5570
        %v5572 = vpop.f32.mrb[0].mxu0
        %v5573 = vadd.f32 %v5500, %v5572
        %v5574 = vpop.f32.mrb[0].mxu0
        %v5575 = vadd.f32 %v5502, %v5574
        %5576 = vdwg.mxu0
        %v5577 = vadd.f32 %v4854, %v5539
        %v5578 = vadd.f32 %v4855, %v5541
        %v5579 = vadd.f32 %v4856, %v5543
        %v5580 = vadd.f32 %v4857, %v5545
        %v5581 = vadd.f32 %v4858, %v5549
        %v5582 = vadd.f32 %v4859, %v5551
        %v5583 = vadd.f32 %v4860, %v5553
        %v5584 = vadd.f32 %v4861, %v5555
        %v5585 = vadd.f32 %v4862, %v5559
        %v5586 = vadd.f32 %v4863, %v5561
        %v5587 = vadd.f32 %v4864, %v5563
        %v5588 = vadd.f32 %v4865, %v5565
        %v5589 = vadd.f32 %v4866, %v5569
        %v5590 = vadd.f32 %v4867, %v5571
        %v5591 = vadd.f32 %v4868, %v5573
        %v5592 = vadd.f32 %v4869, %v5575
        %s5593 = scalar_lea.vmem [#allocation2], 64
        %v5594 = vld [vmem:[%s5593] sm:$0xff]
        %v5595 = vld [vmem:[%s5593 + $0x8] sm:$0xff]
        %v5596 = vld [vmem:[%s5593 + $0x20] sm:$0xff]
        %v5597 = vld [vmem:[%s5593 + $0x28] sm:$0xff]
        %v5598 = vld [vmem:[%s5593 + $0x40] sm:$0xff]
        %v5599 = vld [vmem:[%s5593 + $0x48] sm:$0xff]
        %v5600 = vld [vmem:[%s5593 + $0x60] sm:$0xff]
        %v5601 = vld [vmem:[%s5593 + $0x68] sm:$0xff]
        %v5602 = vld [vmem:[%s5593 + $0x80] sm:$0xff]
        %v5603 = vld [vmem:[%s5593 + $0x88] sm:$0xff]
        %v5604 = vld [vmem:[%s5593 + $0xa0] sm:$0xff]
        %v5605 = vld [vmem:[%s5593 + $0xa8] sm:$0xff]
        %v5606 = vld [vmem:[%s5593 + $0xc0] sm:$0xff]
        %v5607 = vld [vmem:[%s5593 + $0xc8] sm:$0xff]
        %v5608 = vld [vmem:[%s5593 + $0xe0] sm:$0xff]
        %v5609 = vld [vmem:[%s5593 + $0xe8] sm:$0xff]
        %s5610 = scalar_lea.vmem [#allocation10], 3072
        %v5611 = vld [vmem:[%s5610] sm:$0xff]
        %v5612 = vld [vmem:[%s5610 + $0x8] sm:$0xff]
        %v5613 = vld [vmem:[%s5610 + $0x10] sm:$0xff]
        %v5614 = vld [vmem:[%s5610 + $0x18] sm:$0xff]
        %v5615 = vld [vmem:[%s5610 + $0x20] sm:$0xff]
        %v5616 = vld [vmem:[%s5610 + $0x28] sm:$0xff]
        %v5617 = vld [vmem:[%s5610 + $0x30] sm:$0xff]
        %v5618 = vld [vmem:[%s5610 + $0x38] sm:$0xff]
        %v5619 = vld [vmem:[%s5610 + $0x40] sm:$0xff]
        %v5620 = vld [vmem:[%s5610 + $0x48] sm:$0xff]
        %v5621 = vld [vmem:[%s5610 + $0x50] sm:$0xff]
        %v5622 = vld [vmem:[%s5610 + $0x58] sm:$0xff]
        %v5623 = vld [vmem:[%s5610 + $0x60] sm:$0xff]
        %v5624 = vld [vmem:[%s5610 + $0x68] sm:$0xff]
        %v5625 = vld [vmem:[%s5610 + $0x70] sm:$0xff]
        %v5626 = vld [vmem:[%s5610 + $0x78] sm:$0xff]
        %v5627 = vld [vmem:[%s5610 + $0x80] sm:$0xff]
        %v5628 = vld [vmem:[%s5610 + $0x88] sm:$0xff]
        %v5629 = vld [vmem:[%s5610 + $0x90] sm:$0xff]
        %v5630 = vld [vmem:[%s5610 + $0x98] sm:$0xff]
        %v5631 = vld [vmem:[%s5610 + $0xa0] sm:$0xff]
        %v5632 = vld [vmem:[%s5610 + $0xa8] sm:$0xff]
        %v5633 = vld [vmem:[%s5610 + $0xb0] sm:$0xff]
        %v5634 = vld [vmem:[%s5610 + $0xb8] sm:$0xff]
        %v5635 = vld [vmem:[%s5610 + $0xc0] sm:$0xff]
        %v5636 = vld [vmem:[%s5610 + $0xc8] sm:$0xff]
        %v5637 = vld [vmem:[%s5610 + $0xd0] sm:$0xff]
        %v5638 = vld [vmem:[%s5610 + $0xd8] sm:$0xff]
        %v5639 = vld [vmem:[%s5610 + $0xe0] sm:$0xff]
        %v5640 = vld [vmem:[%s5610 + $0xe8] sm:$0xff]
        %v5641 = vld [vmem:[%s5610 + $0xf0] sm:$0xff]
        %v5642 = vld [vmem:[%s5610 + $0xf8] sm:$0xff]
        %v5643 = vld [vmem:[%s5610 + $0x100] sm:$0xff]
        %v5644 = vld [vmem:[%s5610 + $0x108] sm:$0xff]
        %v5645 = vld [vmem:[%s5610 + $0x110] sm:$0xff]
        %v5646 = vld [vmem:[%s5610 + $0x118] sm:$0xff]
        %v5647 = vld [vmem:[%s5610 + $0x120] sm:$0xff]
        %v5648 = vld [vmem:[%s5610 + $0x128] sm:$0xff]
        %v5649 = vld [vmem:[%s5610 + $0x130] sm:$0xff]
        %v5650 = vld [vmem:[%s5610 + $0x138] sm:$0xff]
        %v5651 = vld [vmem:[%s5610 + $0x140] sm:$0xff]
        %v5652 = vld [vmem:[%s5610 + $0x148] sm:$0xff]
        %v5653 = vld [vmem:[%s5610 + $0x150] sm:$0xff]
        %v5654 = vld [vmem:[%s5610 + $0x158] sm:$0xff]
        %v5655 = vld [vmem:[%s5610 + $0x160] sm:$0xff]
        %v5656 = vld [vmem:[%s5610 + $0x168] sm:$0xff]
        %v5657 = vld [vmem:[%s5610 + $0x170] sm:$0xff]
        %v5658 = vld [vmem:[%s5610 + $0x178] sm:$0xff]
        %v5659 = vld [vmem:[%s5610 + $0x180] sm:$0xff]
        %v5660 = vld [vmem:[%s5610 + $0x188] sm:$0xff]
        %v5661 = vld [vmem:[%s5610 + $0x190] sm:$0xff]
        %v5662 = vld [vmem:[%s5610 + $0x198] sm:$0xff]
        %v5663 = vld [vmem:[%s5610 + $0x1a0] sm:$0xff]
        %v5664 = vld [vmem:[%s5610 + $0x1a8] sm:$0xff]
        %v5665 = vld [vmem:[%s5610 + $0x1b0] sm:$0xff]
        %v5666 = vld [vmem:[%s5610 + $0x1b8] sm:$0xff]
        %v5667 = vld [vmem:[%s5610 + $0x1c0] sm:$0xff]
        %v5668 = vld [vmem:[%s5610 + $0x1c8] sm:$0xff]
        %v5669 = vld [vmem:[%s5610 + $0x1d0] sm:$0xff]
        %v5670 = vld [vmem:[%s5610 + $0x1d8] sm:$0xff]
        %v5671 = vld [vmem:[%s5610 + $0x1e0] sm:$0xff]
        %v5672 = vld [vmem:[%s5610 + $0x1e8] sm:$0xff]
        %v5673 = vld [vmem:[%s5610 + $0x1f0] sm:$0xff]
        %v5674 = vld [vmem:[%s5610 + $0x1f8] sm:$0xff]
        %v5691 = vunpack.c.l.b16 %v5594
        %v5692 = vunpack.c.h.b16 %v5594
        %v5693 = vunpack.c.l.b16 %v5595
        %v5694 = vunpack.c.h.b16 %v5595
        %v5695 = vunpack.c.l.b16 %v5596
        %v5696 = vunpack.c.h.b16 %v5596
        %v5697 = vunpack.c.l.b16 %v5597
        %v5698 = vunpack.c.h.b16 %v5597
        %v5699 = vunpack.c.l.b16 %v5598
        %v5700 = vunpack.c.h.b16 %v5598
        %v5701 = vunpack.c.l.b16 %v5599
        %v5702 = vunpack.c.h.b16 %v5599
        %v5703 = vunpack.c.l.b16 %v5600
        %v5704 = vunpack.c.h.b16 %v5600
        %v5705 = vunpack.c.l.b16 %v5601
        %v5706 = vunpack.c.h.b16 %v5601
        %v5707 = vunpack.c.l.b16 %v5602
        %v5708 = vunpack.c.h.b16 %v5602
        %v5709 = vunpack.c.l.b16 %v5603
        %v5710 = vunpack.c.h.b16 %v5603
        %v5711 = vunpack.c.l.b16 %v5604
        %v5712 = vunpack.c.h.b16 %v5604
        %v5713 = vunpack.c.l.b16 %v5605
        %v5714 = vunpack.c.h.b16 %v5605
        %v5715 = vunpack.c.l.b16 %v5606
        %v5716 = vunpack.c.h.b16 %v5606
        %v5717 = vunpack.c.l.b16 %v5607
        %v5718 = vunpack.c.h.b16 %v5607
        %v5719 = vunpack.c.l.b16 %v5608
        %v5720 = vunpack.c.h.b16 %v5608
        %v5721 = vunpack.c.l.b16 %v5609
        %v5722 = vunpack.c.h.b16 %v5609
        %v5723 = vpack.c.b16 %v5695, %v5691
        %v5724 = vpack.c.b16 %v5696, %v5692
        %v5725 = vpack.c.b16 %v5697, %v5693
        %v5726 = vpack.c.b16 %v5698, %v5694
        %v5727 = vpack.c.b16 %v5703, %v5699
        %v5728 = vpack.c.b16 %v5704, %v5700
        %v5729 = vpack.c.b16 %v5705, %v5701
        %v5730 = vpack.c.b16 %v5706, %v5702
        %v5731 = vpack.c.b16 %v5711, %v5707
        %v5732 = vpack.c.b16 %v5712, %v5708
        %v5733 = vpack.c.b16 %v5713, %v5709
        %v5734 = vpack.c.b16 %v5714, %v5710
        %v5735 = vpack.c.b16 %v5719, %v5715
        %v5736 = vpack.c.b16 %v5720, %v5716
        %v5737 = vpack.c.b16 %v5721, %v5717
        %v5738 = vpack.c.b16 %v5722, %v5718
        %v5819 = vunpack.c.l.b16 %v5611
        %v5820 = vunpack.c.h.b16 %v5611
        %v5821 = vunpack.c.l.b16 %v5612
        %v5822 = vunpack.c.h.b16 %v5612
        %v5823 = vunpack.c.l.b16 %v5613
        %v5824 = vunpack.c.h.b16 %v5613
        %v5825 = vunpack.c.l.b16 %v5614
        %v5826 = vunpack.c.h.b16 %v5614
        %v5827 = vunpack.c.l.b16 %v5615
        %v5828 = vunpack.c.h.b16 %v5615
        %v5829 = vunpack.c.l.b16 %v5616
        %v5830 = vunpack.c.h.b16 %v5616
        %v5831 = vunpack.c.l.b16 %v5617
        %v5832 = vunpack.c.h.b16 %v5617
        %v5833 = vunpack.c.l.b16 %v5618
        %v5834 = vunpack.c.h.b16 %v5618
        %v5835 = vunpack.c.l.b16 %v5619
        %v5836 = vunpack.c.h.b16 %v5619
        %v5837 = vunpack.c.l.b16 %v5620
        %v5838 = vunpack.c.h.b16 %v5620
        %v5839 = vunpack.c.l.b16 %v5621
        %v5840 = vunpack.c.h.b16 %v5621
        %v5841 = vunpack.c.l.b16 %v5622
        %v5842 = vunpack.c.h.b16 %v5622
        %v5843 = vunpack.c.l.b16 %v5623
        %v5844 = vunpack.c.h.b16 %v5623
        %v5845 = vunpack.c.l.b16 %v5624
        %v5846 = vunpack.c.h.b16 %v5624
        %v5847 = vunpack.c.l.b16 %v5625
        %v5848 = vunpack.c.h.b16 %v5625
        %v5849 = vunpack.c.l.b16 %v5626
        %v5850 = vunpack.c.h.b16 %v5626
        %v5851 = vunpack.c.l.b16 %v5627
        %v5852 = vunpack.c.h.b16 %v5627
        %v5853 = vunpack.c.l.b16 %v5628
        %v5854 = vunpack.c.h.b16 %v5628
        %v5855 = vunpack.c.l.b16 %v5629
        %v5856 = vunpack.c.h.b16 %v5629
        %v5857 = vunpack.c.l.b16 %v5630
        %v5858 = vunpack.c.h.b16 %v5630
        %v5859 = vunpack.c.l.b16 %v5631
        %v5860 = vunpack.c.h.b16 %v5631
        %v5861 = vunpack.c.l.b16 %v5632
        %v5862 = vunpack.c.h.b16 %v5632
        %v5863 = vunpack.c.l.b16 %v5633
        %v5864 = vunpack.c.h.b16 %v5633
        %v5865 = vunpack.c.l.b16 %v5634
        %v5866 = vunpack.c.h.b16 %v5634
        %v5867 = vunpack.c.l.b16 %v5635
        %v5868 = vunpack.c.h.b16 %v5635
        %v5869 = vunpack.c.l.b16 %v5636
        %v5870 = vunpack.c.h.b16 %v5636
        %v5871 = vunpack.c.l.b16 %v5637
        %v5872 = vunpack.c.h.b16 %v5637
        %v5873 = vunpack.c.l.b16 %v5638
        %v5874 = vunpack.c.h.b16 %v5638
        %v5875 = vunpack.c.l.b16 %v5639
        %v5876 = vunpack.c.h.b16 %v5639
        %v5877 = vunpack.c.l.b16 %v5640
        %v5878 = vunpack.c.h.b16 %v5640
        %v5879 = vunpack.c.l.b16 %v5641
        %v5880 = vunpack.c.h.b16 %v5641
        %v5881 = vunpack.c.l.b16 %v5642
        %v5882 = vunpack.c.h.b16 %v5642
        %v5883 = vunpack.c.l.b16 %v5643
        %v5884 = vunpack.c.h.b16 %v5643
        %v5885 = vunpack.c.l.b16 %v5644
        %v5886 = vunpack.c.h.b16 %v5644
        %v5887 = vunpack.c.l.b16 %v5645
        %v5888 = vunpack.c.h.b16 %v5645
        %v5889 = vunpack.c.l.b16 %v5646
        %v5890 = vunpack.c.h.b16 %v5646
        %v5891 = vunpack.c.l.b16 %v5647
        %v5892 = vunpack.c.h.b16 %v5647
        %v5893 = vunpack.c.l.b16 %v5648
        %v5894 = vunpack.c.h.b16 %v5648
        %v5895 = vunpack.c.l.b16 %v5649
        %v5896 = vunpack.c.h.b16 %v5649
        %v5897 = vunpack.c.l.b16 %v5650
        %v5898 = vunpack.c.h.b16 %v5650
        %v5899 = vunpack.c.l.b16 %v5651
        %v5900 = vunpack.c.h.b16 %v5651
        %v5901 = vunpack.c.l.b16 %v5652
        %v5902 = vunpack.c.h.b16 %v5652
        %v5903 = vunpack.c.l.b16 %v5653
        %v5904 = vunpack.c.h.b16 %v5653
        %v5905 = vunpack.c.l.b16 %v5654
        %v5906 = vunpack.c.h.b16 %v5654
        %v5907 = vunpack.c.l.b16 %v5655
        %v5908 = vunpack.c.h.b16 %v5655
        %v5909 = vunpack.c.l.b16 %v5656
        %v5910 = vunpack.c.h.b16 %v5656
        %v5911 = vunpack.c.l.b16 %v5657
        %v5912 = vunpack.c.h.b16 %v5657
        %v5913 = vunpack.c.l.b16 %v5658
        %v5914 = vunpack.c.h.b16 %v5658
        %v5915 = vunpack.c.l.b16 %v5659
        %v5916 = vunpack.c.h.b16 %v5659
        %v5917 = vunpack.c.l.b16 %v5660
        %v5918 = vunpack.c.h.b16 %v5660
        %v5919 = vunpack.c.l.b16 %v5661
        %v5920 = vunpack.c.h.b16 %v5661
        %v5921 = vunpack.c.l.b16 %v5662
        %v5922 = vunpack.c.h.b16 %v5662
        %v5923 = vunpack.c.l.b16 %v5663
        %v5924 = vunpack.c.h.b16 %v5663
        %v5925 = vunpack.c.l.b16 %v5664
        %v5926 = vunpack.c.h.b16 %v5664
        %v5927 = vunpack.c.l.b16 %v5665
        %v5928 = vunpack.c.h.b16 %v5665
        %v5929 = vunpack.c.l.b16 %v5666
        %v5930 = vunpack.c.h.b16 %v5666
        %v5931 = vunpack.c.l.b16 %v5667
        %v5932 = vunpack.c.h.b16 %v5667
        %v5933 = vunpack.c.l.b16 %v5668
        %v5934 = vunpack.c.h.b16 %v5668
        %v5935 = vunpack.c.l.b16 %v5669
        %v5936 = vunpack.c.h.b16 %v5669
        %v5937 = vunpack.c.l.b16 %v5670
        %v5938 = vunpack.c.h.b16 %v5670
        %v5939 = vunpack.c.l.b16 %v5671
        %v5940 = vunpack.c.h.b16 %v5671
        %v5941 = vunpack.c.l.b16 %v5672
        %v5942 = vunpack.c.h.b16 %v5672
        %v5943 = vunpack.c.l.b16 %v5673
        %v5944 = vunpack.c.h.b16 %v5673
        %v5945 = vunpack.c.l.b16 %v5674
        %v5946 = vunpack.c.h.b16 %v5674
        %v5947 = vpack.c.b16 %v5821, %v5819
        %v5948 = vpack.c.b16 %v5822, %v5820
        %v5949 = vpack.c.b16 %v5825, %v5823
        %v5950 = vpack.c.b16 %v5826, %v5824
        %v5951 = vpack.c.b16 %v5829, %v5827
        %v5952 = vpack.c.b16 %v5830, %v5828
        %v5953 = vpack.c.b16 %v5833, %v5831
        %v5954 = vpack.c.b16 %v5834, %v5832
        %v5955 = vpack.c.b16 %v5837, %v5835
        %v5956 = vpack.c.b16 %v5838, %v5836
        %v5957 = vpack.c.b16 %v5841, %v5839
        %v5958 = vpack.c.b16 %v5842, %v5840
        %v5959 = vpack.c.b16 %v5845, %v5843
        %v5960 = vpack.c.b16 %v5846, %v5844
        %v5961 = vpack.c.b16 %v5849, %v5847
        %v5962 = vpack.c.b16 %v5850, %v5848
        %v5963 = vpack.c.b16 %v5853, %v5851
        %v5964 = vpack.c.b16 %v5854, %v5852
        %v5965 = vpack.c.b16 %v5857, %v5855
        %v5966 = vpack.c.b16 %v5858, %v5856
        %v5967 = vpack.c.b16 %v5861, %v5859
        %v5968 = vpack.c.b16 %v5862, %v5860
        %v5969 = vpack.c.b16 %v5865, %v5863
        %v5970 = vpack.c.b16 %v5866, %v5864
        %v5971 = vpack.c.b16 %v5869, %v5867
        %v5972 = vpack.c.b16 %v5870, %v5868
        %v5973 = vpack.c.b16 %v5873, %v5871
        %v5974 = vpack.c.b16 %v5874, %v5872
        %v5975 = vpack.c.b16 %v5877, %v5875
        %v5976 = vpack.c.b16 %v5878, %v5876
        %v5977 = vpack.c.b16 %v5881, %v5879
        %v5978 = vpack.c.b16 %v5882, %v5880
        %v5979 = vpack.c.b16 %v5885, %v5883
        %v5980 = vpack.c.b16 %v5886, %v5884
        %v5981 = vpack.c.b16 %v5889, %v5887
        %v5982 = vpack.c.b16 %v5890, %v5888
        %v5983 = vpack.c.b16 %v5893, %v5891
        %v5984 = vpack.c.b16 %v5894, %v5892
        %v5985 = vpack.c.b16 %v5897, %v5895
        %v5986 = vpack.c.b16 %v5898, %v5896
        %v5987 = vpack.c.b16 %v5901, %v5899
        %v5988 = vpack.c.b16 %v5902, %v5900
        %v5989 = vpack.c.b16 %v5905, %v5903
        %v5990 = vpack.c.b16 %v5906, %v5904
        %v5991 = vpack.c.b16 %v5909, %v5907
        %v5992 = vpack.c.b16 %v5910, %v5908
        %v5993 = vpack.c.b16 %v5913, %v5911
        %v5994 = vpack.c.b16 %v5914, %v5912
        %v5995 = vpack.c.b16 %v5917, %v5915
        %v5996 = vpack.c.b16 %v5918, %v5916
        %v5997 = vpack.c.b16 %v5921, %v5919
        %v5998 = vpack.c.b16 %v5922, %v5920
        %v5999 = vpack.c.b16 %v5925, %v5923
        %v6000 = vpack.c.b16 %v5926, %v5924
        %v6001 = vpack.c.b16 %v5929, %v5927
        %v6002 = vpack.c.b16 %v5930, %v5928
        %v6003 = vpack.c.b16 %v5933, %v5931
        %v6004 = vpack.c.b16 %v5934, %v5932
        %v6005 = vpack.c.b16 %v5937, %v5935
        %v6006 = vpack.c.b16 %v5938, %v5936
        %v6007 = vpack.c.b16 %v5941, %v5939
        %v6008 = vpack.c.b16 %v5942, %v5940
        %v6009 = vpack.c.b16 %v5945, %v5943
        %v6010 = vpack.c.b16 %v5946, %v5944
        %6075 = vmatprep.subr.bf16.mxu0 %v5948
        %6076 = vmatpush1.bf16.msra.mxu0 %v5947
        %6077 = vmatprep.subr.bf16.mxu0 %v5950
        %6078 = vmatpush1.bf16.msra.mxu0 %v5949
        %6079 = vmatprep.subr.bf16.mxu0 %v5952
        %6080 = vmatpush1.bf16.msra.mxu0 %v5951
        %6081 = vmatprep.subr.bf16.mxu0 %v5954
        %6082 = vmatpush1.bf16.msra.mxu0 %v5953
        %6083 = vmatprep.subr.bf16.mxu0 %v5956
        %6084 = vmatpush1.bf16.msra.mxu0 %v5955
        %6085 = vmatprep.subr.bf16.mxu0 %v5958
        %6086 = vmatpush1.bf16.msra.mxu0 %v5957
        %6087 = vmatprep.subr.bf16.mxu0 %v5960
        %6088 = vmatpush1.bf16.msra.mxu0 %v5959
        %6089 = vmatprep.subr.bf16.mxu0 %v5962
        %6090 = vmatpush1.bf16.msra.mxu0 %v5961
        %6091 = vmatprep.subr.bf16.mxu0 %v5964
        %6092 = vmatpush1.bf16.msra.mxu0 %v5963
        %6093 = vmatprep.subr.bf16.mxu0 %v5966
        %6094 = vmatpush1.bf16.msra.mxu0 %v5965
        %6095 = vmatprep.subr.bf16.mxu0 %v5968
        %6096 = vmatpush1.bf16.msra.mxu0 %v5967
        %6097 = vmatprep.subr.bf16.mxu0 %v5970
        %6098 = vmatpush1.bf16.msra.mxu0 %v5969
        %6099 = vmatprep.subr.bf16.mxu0 %v5972
        %6100 = vmatpush1.bf16.msra.mxu0 %v5971
        %6101 = vmatprep.subr.bf16.mxu0 %v5974
        %6102 = vmatpush1.bf16.msra.mxu0 %v5973
        %6103 = vmatprep.subr.bf16.mxu0 %v5976
        %6104 = vmatpush1.bf16.msra.mxu0 %v5975
        %6105 = vmatprep.subr.bf16.mxu0 %v5978
        %6106 = vmatpush1.bf16.msra.mxu0 %v5977
        %6107 = vmatprep.mubr.bf16.mxu0 %v5724
        %6108 = vmatmul.mubr.bf16.gmra.mrb[0].mxu0 %v5723
        %v6109 = vpop.f32.mrb[0].mxu0
        %v6110 = vadd.f32 0.0, %v6109
        %v6111 = vpop.f32.mrb[0].mxu0
        %v6112 = vadd.f32 0.0, %v6111
        %v6113 = vpop.f32.mrb[0].mxu0
        %v6114 = vadd.f32 0.0, %v6113
        %v6115 = vpop.f32.mrb[0].mxu0
        %v6116 = vadd.f32 0.0, %v6115
        %6117 = vmatprep.mubr.bf16.mxu0 %v5728
        %6118 = vmatmul.mubr.bf16.gmra.mrb[0].mxu0 %v5727
        %v6119 = vpop.f32.mrb[0].mxu0
        %v6120 = vadd.f32 0.0, %v6119
        %v6121 = vpop.f32.mrb[0].mxu0
        %v6122 = vadd.f32 0.0, %v6121
        %v6123 = vpop.f32.mrb[0].mxu0
        %v6124 = vadd.f32 0.0, %v6123
        %v6125 = vpop.f32.mrb[0].mxu0
        %v6126 = vadd.f32 0.0, %v6125
        %6127 = vmatprep.mubr.bf16.mxu0 %v5732
        %6128 = vmatmul.mubr.bf16.gmra.mrb[0].mxu0 %v5731
        %v6129 = vpop.f32.mrb[0].mxu0
        %v6130 = vadd.f32 0.0, %v6129
        %v6131 = vpop.f32.mrb[0].mxu0
        %v6132 = vadd.f32 0.0, %v6131
        %v6133 = vpop.f32.mrb[0].mxu0
        %v6134 = vadd.f32 0.0, %v6133
        %v6135 = vpop.f32.mrb[0].mxu0
        %v6136 = vadd.f32 0.0, %v6135
        %6137 = vmatprep.mubr.bf16.mxu0 %v5736
        %6138 = vmatmul.mubr.bf16.gmra.mrb[0].mxu0 %v5735
        %v6139 = vpop.f32.mrb[0].mxu0
        %v6140 = vadd.f32 0.0, %v6139
        %v6141 = vpop.f32.mrb[0].mxu0
        %v6142 = vadd.f32 0.0, %v6141
        %v6143 = vpop.f32.mrb[0].mxu0
        %v6144 = vadd.f32 0.0, %v6143
        %v6145 = vpop.f32.mrb[0].mxu0
        %v6146 = vadd.f32 0.0, %v6145
        %6147 = vdwg.mxu0
        %6148 = vmatprep.subr.bf16.mxu0 %v5980
        %6149 = vmatpush1.bf16.msra.mxu0 %v5979
        %6150 = vmatprep.subr.bf16.mxu0 %v5982
        %6151 = vmatpush1.bf16.msra.mxu0 %v5981
        %6152 = vmatprep.subr.bf16.mxu0 %v5984
        %6153 = vmatpush1.bf16.msra.mxu0 %v5983
        %6154 = vmatprep.subr.bf16.mxu0 %v5986
        %6155 = vmatpush1.bf16.msra.mxu0 %v5985
        %6156 = vmatprep.subr.bf16.mxu0 %v5988
        %6157 = vmatpush1.bf16.msra.mxu0 %v5987
        %6158 = vmatprep.subr.bf16.mxu0 %v5990
        %6159 = vmatpush1.bf16.msra.mxu0 %v5989
        %6160 = vmatprep.subr.bf16.mxu0 %v5992
        %6161 = vmatpush1.bf16.msra.mxu0 %v5991
        %6162 = vmatprep.subr.bf16.mxu0 %v5994
        %6163 = vmatpush1.bf16.msra.mxu0 %v5993
        %6164 = vmatprep.subr.bf16.mxu0 %v5996
        %6165 = vmatpush1.bf16.msra.mxu0 %v5995
        %6166 = vmatprep.subr.bf16.mxu0 %v5998
        %6167 = vmatpush1.bf16.msra.mxu0 %v5997
        %6168 = vmatprep.subr.bf16.mxu0 %v6000
        %6169 = vmatpush1.bf16.msra.mxu0 %v5999
        %6170 = vmatprep.subr.bf16.mxu0 %v6002
        %6171 = vmatpush1.bf16.msra.mxu0 %v6001
        %6172 = vmatprep.subr.bf16.mxu0 %v6004
        %6173 = vmatpush1.bf16.msra.mxu0 %v6003
        %6174 = vmatprep.subr.bf16.mxu0 %v6006
        %6175 = vmatpush1.bf16.msra.mxu0 %v6005
        %6176 = vmatprep.subr.bf16.mxu0 %v6008
        %6177 = vmatpush1.bf16.msra.mxu0 %v6007
        %6178 = vmatprep.subr.bf16.mxu0 %v6010
        %6179 = vmatpush1.bf16.msra.mxu0 %v6009
        %6180 = vmatprep.mubr.bf16.mxu0 %v5726
        %6181 = vmatmul.mubr.bf16.gmra.mrb[0].mxu0 %v5725
        %v6182 = vpop.f32.mrb[0].mxu0
        %v6183 = vadd.f32 %v6110, %v6182
        %v6184 = vpop.f32.mrb[0].mxu0
        %v6185 = vadd.f32 %v6112, %v6184
        %v6186 = vpop.f32.mrb[0].mxu0
        %v6187 = vadd.f32 %v6114, %v6186
        %v6188 = vpop.f32.mrb[0].mxu0
        %v6189 = vadd.f32 %v6116, %v6188
        %6190 = vmatprep.mubr.bf16.mxu0 %v5730
        %6191 = vmatmul.mubr.bf16.gmra.mrb[0].mxu0 %v5729
        %v6192 = vpop.f32.mrb[0].mxu0
        %v6193 = vadd.f32 %v6120, %v6192
        %v6194 = vpop.f32.mrb[0].mxu0
        %v6195 = vadd.f32 %v6122, %v6194
        %v6196 = vpop.f32.mrb[0].mxu0
        %v6197 = vadd.f32 %v6124, %v6196
        %v6198 = vpop.f32.mrb[0].mxu0
        %v6199 = vadd.f32 %v6126, %v6198
        %6200 = vmatprep.mubr.bf16.mxu0 %v5734
        %6201 = vmatmul.mubr.bf16.gmra.mrb[0].mxu0 %v5733
        %v6202 = vpop.f32.mrb[0].mxu0
        %v6203 = vadd.f32 %v6130, %v6202
        %v6204 = vpop.f32.mrb[0].mxu0
        %v6205 = vadd.f32 %v6132, %v6204
        %v6206 = vpop.f32.mrb[0].mxu0
        %v6207 = vadd.f32 %v6134, %v6206
        %v6208 = vpop.f32.mrb[0].mxu0
        %v6209 = vadd.f32 %v6136, %v6208
        %6210 = vmatprep.mubr.bf16.mxu0 %v5738
        %6211 = vmatmul.mubr.bf16.gmra.mrb[0].mxu0 %v5737
        %v6212 = vpop.f32.mrb[0].mxu0
        %v6213 = vadd.f32 %v6140, %v6212
        %v6214 = vpop.f32.mrb[0].mxu0
        %v6215 = vadd.f32 %v6142, %v6214
        %v6216 = vpop.f32.mrb[0].mxu0
        %v6217 = vadd.f32 %v6144, %v6216
        %v6218 = vpop.f32.mrb[0].mxu0
        %v6219 = vadd.f32 %v6146, %v6218
        %6220 = vdwg.mxu0
        %v6221 = vadd.f32 %v5577, %v6183
        %v6222 = vadd.f32 %v5578, %v6185
        %v6223 = vadd.f32 %v5579, %v6187
        %v6224 = vadd.f32 %v5580, %v6189
        %v6225 = vadd.f32 %v5581, %v6193
        %v6226 = vadd.f32 %v5582, %v6195
        %v6227 = vadd.f32 %v5583, %v6197
        %v6228 = vadd.f32 %v5584, %v6199
        %v6229 = vadd.f32 %v5585, %v6203
        %v6230 = vadd.f32 %v5586, %v6205
        %v6231 = vadd.f32 %v5587, %v6207
        %v6232 = vadd.f32 %v5588, %v6209
        %v6233 = vadd.f32 %v5589, %v6213
        %v6234 = vadd.f32 %v5590, %v6215
        %v6235 = vadd.f32 %v5591, %v6217
        %v6236 = vadd.f32 %v5592, %v6219
        %v6237 = vld [vmem:[%s5593] sm:$0xff]
        %v6238 = vld [vmem:[%s5593 + $0x8] sm:$0xff]
        %v6239 = vld [vmem:[%s5593 + $0x10] sm:$0x11]
        %v6240 = vld [vmem:[%s5593 + $0x18] sm:$0x11]
        %v6241 = vld [vmem:[%s5593 + $0x20] sm:$0xff]
        %v6242 = vld [vmem:[%s5593 + $0x28] sm:$0xff]
        %v6243 = vld [vmem:[%s5593 + $0x30] sm:$0x11]
        %v6244 = vld [vmem:[%s5593 + $0x38] sm:$0x11]
        %v6245 = vld [vmem:[%s5593 + $0x40] sm:$0xff]
        %v6246 = vld [vmem:[%s5593 + $0x48] sm:$0xff]
        %v6247 = vld [vmem:[%s5593 + $0x50] sm:$0x11]
        %v6248 = vld [vmem:[%s5593 + $0x58] sm:$0x11]
        %v6249 = vld [vmem:[%s5593 + $0x60] sm:$0xff]
        %v6250 = vld [vmem:[%s5593 + $0x68] sm:$0xff]
        %v6251 = vld [vmem:[%s5593 + $0x70] sm:$0x11]
        %v6252 = vld [vmem:[%s5593 + $0x78] sm:$0x11]
        %v6253 = vld [vmem:[%s5593 + $0x80] sm:$0xff]
        %v6254 = vld [vmem:[%s5593 + $0x88] sm:$0xff]
        %v6255 = vld [vmem:[%s5593 + $0x90] sm:$0x11]
        %v6256 = vld [vmem:[%s5593 + $0x98] sm:$0x11]
        %v6257 = vld [vmem:[%s5593 + $0xa0] sm:$0xff]
        %v6258 = vld [vmem:[%s5593 + $0xa8] sm:$0xff]
        %v6259 = vld [vmem:[%s5593 + $0xb0] sm:$0x11]
        %v6260 = vld [vmem:[%s5593 + $0xb8] sm:$0x11]
        %v6261 = vld [vmem:[%s5593 + $0xc0] sm:$0xff]
        %v6262 = vld [vmem:[%s5593 + $0xc8] sm:$0xff]
        %v6263 = vld [vmem:[%s5593 + $0xd0] sm:$0x11]
        %v6264 = vld [vmem:[%s5593 + $0xd8] sm:$0x11]
        %v6265 = vld [vmem:[%s5593 + $0xe0] sm:$0xff]
        %v6266 = vld [vmem:[%s5593 + $0xe8] sm:$0xff]
        %v6267 = vld [vmem:[%s5593 + $0xf0] sm:$0x11]
        %v6268 = vld [vmem:[%s5593 + $0xf8] sm:$0x11]
        %v6270 = vshrl.u32 %v6237, 16
        %v6272 = vrot.slane %v6270, 4
        %v6273 = vshll.u32 %v6237, 16
        %v6275 = vrot.slane %v6273, 5
        %v6276 = vor.u32 %v6272, %v6275
        %v6277 = vrot.slane %v6276, 4
        %v6279 = vshll.u32 %v6239, 16
        %v6281 = vrot.slane %v6279, 5
        %v6282 = vsel %vm1268, %v6277, %v6281
        %v6284 = vshrl.u32 %v6238, 16
        %v6286 = vrot.slane %v6284, 4
        %v6287 = vshll.u32 %v6238, 16
        %v6289 = vrot.slane %v6287, 5
        %v6290 = vor.u32 %v6286, %v6289
        %v6291 = vrot.slane %v6290, 4
        %v6293 = vshll.u32 %v6240, 16
        %v6295 = vrot.slane %v6293, 5
        %v6296 = vsel %vm1268, %v6291, %v6295
        %v6298 = vshrl.u32 %v6241, 16
        %v6300 = vrot.slane %v6298, 4
        %v6301 = vshll.u32 %v6241, 16
        %v6303 = vrot.slane %v6301, 5
        %v6304 = vor.u32 %v6300, %v6303
        %v6305 = vrot.slane %v6304, 4
        %v6307 = vshll.u32 %v6243, 16
        %v6309 = vrot.slane %v6307, 5
        %v6310 = vsel %vm1268, %v6305, %v6309
        %v6312 = vshrl.u32 %v6242, 16
        %v6314 = vrot.slane %v6312, 4
        %v6315 = vshll.u32 %v6242, 16
        %v6317 = vrot.slane %v6315, 5
        %v6318 = vor.u32 %v6314, %v6317
        %v6319 = vrot.slane %v6318, 4
        %v6321 = vshll.u32 %v6244, 16
        %v6323 = vrot.slane %v6321, 5
        %v6324 = vsel %vm1268, %v6319, %v6323
        %v6326 = vshrl.u32 %v6245, 16
        %v6328 = vrot.slane %v6326, 4
        %v6329 = vshll.u32 %v6245, 16
        %v6331 = vrot.slane %v6329, 5
        %v6332 = vor.u32 %v6328, %v6331
        %v6333 = vrot.slane %v6332, 4
        %v6335 = vshll.u32 %v6247, 16
        %v6337 = vrot.slane %v6335, 5
        %v6338 = vsel %vm1268, %v6333, %v6337
        %v6340 = vshrl.u32 %v6246, 16
        %v6342 = vrot.slane %v6340, 4
        %v6343 = vshll.u32 %v6246, 16
        %v6345 = vrot.slane %v6343, 5
        %v6346 = vor.u32 %v6342, %v6345
        %v6347 = vrot.slane %v6346, 4
        %v6349 = vshll.u32 %v6248, 16
        %v6351 = vrot.slane %v6349, 5
        %v6352 = vsel %vm1268, %v6347, %v6351
        %v6354 = vshrl.u32 %v6249, 16
        %v6356 = vrot.slane %v6354, 4
        %v6357 = vshll.u32 %v6249, 16
        %v6359 = vrot.slane %v6357, 5
        %v6360 = vor.u32 %v6356, %v6359
        %v6361 = vrot.slane %v6360, 4
        %v6363 = vshll.u32 %v6251, 16
        %v6365 = vrot.slane %v6363, 5
        %v6366 = vsel %vm1268, %v6361, %v6365
        %v6368 = vshrl.u32 %v6250, 16
        %v6370 = vrot.slane %v6368, 4
        %v6371 = vshll.u32 %v6250, 16
        %v6373 = vrot.slane %v6371, 5
        %v6374 = vor.u32 %v6370, %v6373
        %v6375 = vrot.slane %v6374, 4
        %v6377 = vshll.u32 %v6252, 16
        %v6379 = vrot.slane %v6377, 5
        %v6380 = vsel %vm1268, %v6375, %v6379
        %v6382 = vshrl.u32 %v6253, 16
        %v6384 = vrot.slane %v6382, 4
        %v6385 = vshll.u32 %v6253, 16
        %v6387 = vrot.slane %v6385, 5
        %v6388 = vor.u32 %v6384, %v6387
        %v6389 = vrot.slane %v6388, 4
        %v6391 = vshll.u32 %v6255, 16
        %v6393 = vrot.slane %v6391, 5
        %v6394 = vsel %vm1268, %v6389, %v6393
        %v6396 = vshrl.u32 %v6254, 16
        %v6398 = vrot.slane %v6396, 4
        %v6399 = vshll.u32 %v6254, 16
        %v6401 = vrot.slane %v6399, 5
        %v6402 = vor.u32 %v6398, %v6401
        %v6403 = vrot.slane %v6402, 4
        %v6405 = vshll.u32 %v6256, 16
        %v6407 = vrot.slane %v6405, 5
        %v6408 = vsel %vm1268, %v6403, %v6407
        %v6410 = vshrl.u32 %v6257, 16
        %v6412 = vrot.slane %v6410, 4
        %v6413 = vshll.u32 %v6257, 16
        %v6415 = vrot.slane %v6413, 5
        %v6416 = vor.u32 %v6412, %v6415
        %v6417 = vrot.slane %v6416, 4
        %v6419 = vshll.u32 %v6259, 16
        %v6421 = vrot.slane %v6419, 5
        %v6422 = vsel %vm1268, %v6417, %v6421
        %v6424 = vshrl.u32 %v6258, 16
        %v6426 = vrot.slane %v6424, 4
        %v6427 = vshll.u32 %v6258, 16
        %v6429 = vrot.slane %v6427, 5
        %v6430 = vor.u32 %v6426, %v6429
        %v6431 = vrot.slane %v6430, 4
        %v6433 = vshll.u32 %v6260, 16
        %v6435 = vrot.slane %v6433, 5
        %v6436 = vsel %vm1268, %v6431, %v6435
        %v6438 = vshrl.u32 %v6261, 16
        %v6440 = vrot.slane %v6438, 4
        %v6441 = vshll.u32 %v6261, 16
        %v6443 = vrot.slane %v6441, 5
        %v6444 = vor.u32 %v6440, %v6443
        %v6445 = vrot.slane %v6444, 4
        %v6447 = vshll.u32 %v6263, 16
        %v6449 = vrot.slane %v6447, 5
        %v6450 = vsel %vm1268, %v6445, %v6449
        %v6452 = vshrl.u32 %v6262, 16
        %v6454 = vrot.slane %v6452, 4
        %v6455 = vshll.u32 %v6262, 16
        %v6457 = vrot.slane %v6455, 5
        %v6458 = vor.u32 %v6454, %v6457
        %v6459 = vrot.slane %v6458, 4
        %v6461 = vshll.u32 %v6264, 16
        %v6463 = vrot.slane %v6461, 5
        %v6464 = vsel %vm1268, %v6459, %v6463
        %v6466 = vshrl.u32 %v6265, 16
        %v6468 = vrot.slane %v6466, 4
        %v6469 = vshll.u32 %v6265, 16
        %v6471 = vrot.slane %v6469, 5
        %v6472 = vor.u32 %v6468, %v6471
        %v6473 = vrot.slane %v6472, 4
        %v6475 = vshll.u32 %v6267, 16
        %v6477 = vrot.slane %v6475, 5
        %v6478 = vsel %vm1268, %v6473, %v6477
        %v6480 = vshrl.u32 %v6266, 16
        %v6482 = vrot.slane %v6480, 4
        %v6483 = vshll.u32 %v6266, 16
        %v6485 = vrot.slane %v6483, 5
        %v6486 = vor.u32 %v6482, %v6485
        %v6487 = vrot.slane %v6486, 4
        %v6489 = vshll.u32 %v6268, 16
        %v6491 = vrot.slane %v6489, 5
        %v6492 = vsel %vm1268, %v6487, %v6491
        %s6493 = scalar_lea.vmem [#allocation10], 3584
        %v6494 = vld [vmem:[%s6493] sm:$0xff]
        %v6495 = vld [vmem:[%s6493 + $0x8] sm:$0xff]
        %v6496 = vld [vmem:[%s6493 + $0x10] sm:$0xff]
        %v6497 = vld [vmem:[%s6493 + $0x18] sm:$0xff]
        %v6498 = vld [vmem:[%s6493 + $0x20] sm:$0xff]
        %v6499 = vld [vmem:[%s6493 + $0x28] sm:$0xff]
        %v6500 = vld [vmem:[%s6493 + $0x30] sm:$0xff]
        %v6501 = vld [vmem:[%s6493 + $0x38] sm:$0xff]
        %v6502 = vld [vmem:[%s6493 + $0x40] sm:$0xff]
        %v6503 = vld [vmem:[%s6493 + $0x48] sm:$0xff]
        %v6504 = vld [vmem:[%s6493 + $0x50] sm:$0xff]
        %v6505 = vld [vmem:[%s6493 + $0x58] sm:$0xff]
        %v6506 = vld [vmem:[%s6493 + $0x60] sm:$0xff]
        %v6507 = vld [vmem:[%s6493 + $0x68] sm:$0xff]
        %v6508 = vld [vmem:[%s6493 + $0x70] sm:$0xff]
        %v6509 = vld [vmem:[%s6493 + $0x78] sm:$0xff]
        %v6510 = vld [vmem:[%s6493 + $0x80] sm:$0xff]
        %v6511 = vld [vmem:[%s6493 + $0x88] sm:$0xff]
        %v6512 = vld [vmem:[%s6493 + $0x90] sm:$0xff]
        %v6513 = vld [vmem:[%s6493 + $0x98] sm:$0xff]
        %v6514 = vld [vmem:[%s6493 + $0xa0] sm:$0xff]
        %v6515 = vld [vmem:[%s6493 + $0xa8] sm:$0xff]
        %v6516 = vld [vmem:[%s6493 + $0xb0] sm:$0xff]
        %v6517 = vld [vmem:[%s6493 + $0xb8] sm:$0xff]
        %v6518 = vld [vmem:[%s6493 + $0xc0] sm:$0xff]
        %v6519 = vld [vmem:[%s6493 + $0xc8] sm:$0xff]
        %v6520 = vld [vmem:[%s6493 + $0xd0] sm:$0xff]
        %v6521 = vld [vmem:[%s6493 + $0xd8] sm:$0xff]
        %v6522 = vld [vmem:[%s6493 + $0xe0] sm:$0xff]
        %v6523 = vld [vmem:[%s6493 + $0xe8] sm:$0xff]
        %v6524 = vld [vmem:[%s6493 + $0xf0] sm:$0xff]
        %v6525 = vld [vmem:[%s6493 + $0xf8] sm:$0xff]
        %v6526 = vld [vmem:[%s6493 + $0x100] sm:$0xff]
        %v6527 = vld [vmem:[%s6493 + $0x108] sm:$0xff]
        %v6528 = vld [vmem:[%s6493 + $0x110] sm:$0xff]
        %v6529 = vld [vmem:[%s6493 + $0x118] sm:$0xff]
        %v6530 = vld [vmem:[%s6493 + $0x120] sm:$0xff]
        %v6531 = vld [vmem:[%s6493 + $0x128] sm:$0xff]
        %v6532 = vld [vmem:[%s6493 + $0x130] sm:$0xff]
        %v6533 = vld [vmem:[%s6493 + $0x138] sm:$0xff]
        %v6534 = vld [vmem:[%s6493 + $0x140] sm:$0xff]
        %v6535 = vld [vmem:[%s6493 + $0x148] sm:$0xff]
        %v6536 = vld [vmem:[%s6493 + $0x150] sm:$0xff]
        %v6537 = vld [vmem:[%s6493 + $0x158] sm:$0xff]
        %v6538 = vld [vmem:[%s6493 + $0x160] sm:$0xff]
        %v6539 = vld [vmem:[%s6493 + $0x168] sm:$0xff]
        %v6540 = vld [vmem:[%s6493 + $0x170] sm:$0xff]
        %v6541 = vld [vmem:[%s6493 + $0x178] sm:$0xff]
        %v6542 = vld [vmem:[%s6493 + $0x180] sm:$0xff]
        %v6543 = vld [vmem:[%s6493 + $0x188] sm:$0xff]
        %v6544 = vld [vmem:[%s6493 + $0x190] sm:$0xff]
        %v6545 = vld [vmem:[%s6493 + $0x198] sm:$0xff]
        %v6546 = vld [vmem:[%s6493 + $0x1a0] sm:$0xff]
        %v6547 = vld [vmem:[%s6493 + $0x1a8] sm:$0xff]
        %v6548 = vld [vmem:[%s6493 + $0x1b0] sm:$0xff]
        %v6549 = vld [vmem:[%s6493 + $0x1b8] sm:$0xff]
        %v6550 = vld [vmem:[%s6493 + $0x1c0] sm:$0xff]
        %v6551 = vld [vmem:[%s6493 + $0x1c8] sm:$0xff]
        %v6552 = vld [vmem:[%s6493 + $0x1d0] sm:$0xff]
        %v6553 = vld [vmem:[%s6493 + $0x1d8] sm:$0xff]
        %v6554 = vld [vmem:[%s6493 + $0x1e0] sm:$0xff]
        %v6555 = vld [vmem:[%s6493 + $0x1e8] sm:$0xff]
        %v6556 = vld [vmem:[%s6493 + $0x1f0] sm:$0xff]
        %v6557 = vld [vmem:[%s6493 + $0x1f8] sm:$0xff]
        %v6558 = vunpack.c.l.b16 %v6282
        %v6559 = vunpack.c.h.b16 %v6282
        %v6560 = vunpack.c.l.b16 %v6296
        %v6561 = vunpack.c.h.b16 %v6296
        %v6562 = vunpack.c.l.b16 %v6310
        %v6563 = vunpack.c.h.b16 %v6310
        %v6564 = vunpack.c.l.b16 %v6324
        %v6565 = vunpack.c.h.b16 %v6324
        %v6566 = vunpack.c.l.b16 %v6338
        %v6567 = vunpack.c.h.b16 %v6338
        %v6568 = vunpack.c.l.b16 %v6352
        %v6569 = vunpack.c.h.b16 %v6352
        %v6570 = vunpack.c.l.b16 %v6366
        %v6571 = vunpack.c.h.b16 %v6366
        %v6572 = vunpack.c.l.b16 %v6380
        %v6573 = vunpack.c.h.b16 %v6380
        %v6574 = vunpack.c.l.b16 %v6394
        %v6575 = vunpack.c.h.b16 %v6394
        %v6576 = vunpack.c.l.b16 %v6408
        %v6577 = vunpack.c.h.b16 %v6408
        %v6578 = vunpack.c.l.b16 %v6422
        %v6579 = vunpack.c.h.b16 %v6422
        %v6580 = vunpack.c.l.b16 %v6436
        %v6581 = vunpack.c.h.b16 %v6436
        %v6582 = vunpack.c.l.b16 %v6450
        %v6583 = vunpack.c.h.b16 %v6450
        %v6584 = vunpack.c.l.b16 %v6464
        %v6585 = vunpack.c.h.b16 %v6464
        %v6586 = vunpack.c.l.b16 %v6478
        %v6587 = vunpack.c.h.b16 %v6478
        %v6588 = vunpack.c.l.b16 %v6492
        %v6589 = vunpack.c.h.b16 %v6492
        %v6590 = vpack.c.b16 %v6562, %v6558
        %v6591 = vpack.c.b16 %v6563, %v6559
        %v6592 = vpack.c.b16 %v6564, %v6560
        %v6593 = vpack.c.b16 %v6565, %v6561
        %v6594 = vpack.c.b16 %v6570, %v6566
        %v6595 = vpack.c.b16 %v6571, %v6567
        %v6596 = vpack.c.b16 %v6572, %v6568
        %v6597 = vpack.c.b16 %v6573, %v6569
        %v6598 = vpack.c.b16 %v6578, %v6574
        %v6599 = vpack.c.b16 %v6579, %v6575
        %v6600 = vpack.c.b16 %v6580, %v6576
        %v6601 = vpack.c.b16 %v6581, %v6577
        %v6602 = vpack.c.b16 %v6586, %v6582
        %v6603 = vpack.c.b16 %v6587, %v6583
        %v6604 = vpack.c.b16 %v6588, %v6584
        %v6605 = vpack.c.b16 %v6589, %v6585
        %v6686 = vunpack.c.l.b16 %v6494
        %v6687 = vunpack.c.h.b16 %v6494
        %v6688 = vunpack.c.l.b16 %v6495
        %v6689 = vunpack.c.h.b16 %v6495
        %v6690 = vunpack.c.l.b16 %v6496
        %v6691 = vunpack.c.h.b16 %v6496
        %v6692 = vunpack.c.l.b16 %v6497
        %v6693 = vunpack.c.h.b16 %v6497
        %v6694 = vunpack.c.l.b16 %v6498
        %v6695 = vunpack.c.h.b16 %v6498
        %v6696 = vunpack.c.l.b16 %v6499
        %v6697 = vunpack.c.h.b16 %v6499
        %v6698 = vunpack.c.l.b16 %v6500
        %v6699 = vunpack.c.h.b16 %v6500
        %v6700 = vunpack.c.l.b16 %v6501
        %v6701 = vunpack.c.h.b16 %v6501
        %v6702 = vunpack.c.l.b16 %v6502
        %v6703 = vunpack.c.h.b16 %v6502
        %v6704 = vunpack.c.l.b16 %v6503
        %v6705 = vunpack.c.h.b16 %v6503
        %v6706 = vunpack.c.l.b16 %v6504
        %v6707 = vunpack.c.h.b16 %v6504
        %v6708 = vunpack.c.l.b16 %v6505
        %v6709 = vunpack.c.h.b16 %v6505
        %v6710 = vunpack.c.l.b16 %v6506
        %v6711 = vunpack.c.h.b16 %v6506
        %v6712 = vunpack.c.l.b16 %v6507
        %v6713 = vunpack.c.h.b16 %v6507
        %v6714 = vunpack.c.l.b16 %v6508
        %v6715 = vunpack.c.h.b16 %v6508
        %v6716 = vunpack.c.l.b16 %v6509
        %v6717 = vunpack.c.h.b16 %v6509
        %v6718 = vunpack.c.l.b16 %v6510
        %v6719 = vunpack.c.h.b16 %v6510
        %v6720 = vunpack.c.l.b16 %v6511
        %v6721 = vunpack.c.h.b16 %v6511
        %v6722 = vunpack.c.l.b16 %v6512
        %v6723 = vunpack.c.h.b16 %v6512
        %v6724 = vunpack.c.l.b16 %v6513
        %v6725 = vunpack.c.h.b16 %v6513
        %v6726 = vunpack.c.l.b16 %v6514
        %v6727 = vunpack.c.h.b16 %v6514
        %v6728 = vunpack.c.l.b16 %v6515
        %v6729 = vunpack.c.h.b16 %v6515
        %v6730 = vunpack.c.l.b16 %v6516
        %v6731 = vunpack.c.h.b16 %v6516
        %v6732 = vunpack.c.l.b16 %v6517
        %v6733 = vunpack.c.h.b16 %v6517
        %v6734 = vunpack.c.l.b16 %v6518
        %v6735 = vunpack.c.h.b16 %v6518
        %v6736 = vunpack.c.l.b16 %v6519
        %v6737 = vunpack.c.h.b16 %v6519
        %v6738 = vunpack.c.l.b16 %v6520
        %v6739 = vunpack.c.h.b16 %v6520
        %v6740 = vunpack.c.l.b16 %v6521
        %v6741 = vunpack.c.h.b16 %v6521
        %v6742 = vunpack.c.l.b16 %v6522
        %v6743 = vunpack.c.h.b16 %v6522
        %v6744 = vunpack.c.l.b16 %v6523
        %v6745 = vunpack.c.h.b16 %v6523
        %v6746 = vunpack.c.l.b16 %v6524
        %v6747 = vunpack.c.h.b16 %v6524
        %v6748 = vunpack.c.l.b16 %v6525
        %v6749 = vunpack.c.h.b16 %v6525
        %v6750 = vunpack.c.l.b16 %v6526
        %v6751 = vunpack.c.h.b16 %v6526
        %v6752 = vunpack.c.l.b16 %v6527
        %v6753 = vunpack.c.h.b16 %v6527
        %v6754 = vunpack.c.l.b16 %v6528
        %v6755 = vunpack.c.h.b16 %v6528
        %v6756 = vunpack.c.l.b16 %v6529
        %v6757 = vunpack.c.h.b16 %v6529
        %v6758 = vunpack.c.l.b16 %v6530
        %v6759 = vunpack.c.h.b16 %v6530
        %v6760 = vunpack.c.l.b16 %v6531
        %v6761 = vunpack.c.h.b16 %v6531
        %v6762 = vunpack.c.l.b16 %v6532
        %v6763 = vunpack.c.h.b16 %v6532
        %v6764 = vunpack.c.l.b16 %v6533
        %v6765 = vunpack.c.h.b16 %v6533
        %v6766 = vunpack.c.l.b16 %v6534
        %v6767 = vunpack.c.h.b16 %v6534
        %v6768 = vunpack.c.l.b16 %v6535
        %v6769 = vunpack.c.h.b16 %v6535
        %v6770 = vunpack.c.l.b16 %v6536
        %v6771 = vunpack.c.h.b16 %v6536
        %v6772 = vunpack.c.l.b16 %v6537
        %v6773 = vunpack.c.h.b16 %v6537
        %v6774 = vunpack.c.l.b16 %v6538
        %v6775 = vunpack.c.h.b16 %v6538
        %v6776 = vunpack.c.l.b16 %v6539
        %v6777 = vunpack.c.h.b16 %v6539
        %v6778 = vunpack.c.l.b16 %v6540
        %v6779 = vunpack.c.h.b16 %v6540
        %v6780 = vunpack.c.l.b16 %v6541
        %v6781 = vunpack.c.h.b16 %v6541
        %v6782 = vunpack.c.l.b16 %v6542
        %v6783 = vunpack.c.h.b16 %v6542
        %v6784 = vunpack.c.l.b16 %v6543
        %v6785 = vunpack.c.h.b16 %v6543
        %v6786 = vunpack.c.l.b16 %v6544
        %v6787 = vunpack.c.h.b16 %v6544
        %v6788 = vunpack.c.l.b16 %v6545
        %v6789 = vunpack.c.h.b16 %v6545
        %v6790 = vunpack.c.l.b16 %v6546
        %v6791 = vunpack.c.h.b16 %v6546
        %v6792 = vunpack.c.l.b16 %v6547
        %v6793 = vunpack.c.h.b16 %v6547
        %v6794 = vunpack.c.l.b16 %v6548
        %v6795 = vunpack.c.h.b16 %v6548
        %v6796 = vunpack.c.l.b16 %v6549
        %v6797 = vunpack.c.h.b16 %v6549
        %v6798 = vunpack.c.l.b16 %v6550
        %v6799 = vunpack.c.h.b16 %v6550
        %v6800 = vunpack.c.l.b16 %v6551
        %v6801 = vunpack.c.h.b16 %v6551
        %v6802 = vunpack.c.l.b16 %v6552
        %v6803 = vunpack.c.h.b16 %v6552
        %v6804 = vunpack.c.l.b16 %v6553
        %v6805 = vunpack.c.h.b16 %v6553
        %v6806 = vunpack.c.l.b16 %v6554
        %v6807 = vunpack.c.h.b16 %v6554
        %v6808 = vunpack.c.l.b16 %v6555
        %v6809 = vunpack.c.h.b16 %v6555
        %v6810 = vunpack.c.l.b16 %v6556
        %v6811 = vunpack.c.h.b16 %v6556
        %v6812 = vunpack.c.l.b16 %v6557
        %v6813 = vunpack.c.h.b16 %v6557
        %v6814 = vpack.c.b16 %v6688, %v6686
        %v6815 = vpack.c.b16 %v6689, %v6687
        %v6816 = vpack.c.b16 %v6692, %v6690
        %v6817 = vpack.c.b16 %v6693, %v6691
        %v6818 = vpack.c.b16 %v6696, %v6694
        %v6819 = vpack.c.b16 %v6697, %v6695
        %v6820 = vpack.c.b16 %v6700, %v6698
        %v6821 = vpack.c.b16 %v6701, %v6699
        %v6822 = vpack.c.b16 %v6704, %v6702
        %v6823 = vpack.c.b16 %v6705, %v6703
        %v6824 = vpack.c.b16 %v6708, %v6706
        %v6825 = vpack.c.b16 %v6709, %v6707
        %v6826 = vpack.c.b16 %v6712, %v6710
        %v6827 = vpack.c.b16 %v6713, %v6711
        %v6828 = vpack.c.b16 %v6716, %v6714
        %v6829 = vpack.c.b16 %v6717, %v6715
        %v6830 = vpack.c.b16 %v6720, %v6718
        %v6831 = vpack.c.b16 %v6721, %v6719
        %v6832 = vpack.c.b16 %v6724, %v6722
        %v6833 = vpack.c.b16 %v6725, %v6723
        %v6834 = vpack.c.b16 %v6728, %v6726
        %v6835 = vpack.c.b16 %v6729, %v6727
        %v6836 = vpack.c.b16 %v6732, %v6730
        %v6837 = vpack.c.b16 %v6733, %v6731
        %v6838 = vpack.c.b16 %v6736, %v6734
        %v6839 = vpack.c.b16 %v6737, %v6735
        %v6840 = vpack.c.b16 %v6740, %v6738
        %v6841 = vpack.c.b16 %v6741, %v6739
        %v6842 = vpack.c.b16 %v6744, %v6742
        %v6843 = vpack.c.b16 %v6745, %v6743
        %v6844 = vpack.c.b16 %v6748, %v6746
        %v6845 = vpack.c.b16 %v6749, %v6747
        %v6846 = vpack.c.b16 %v6752, %v6750
        %v6847 = vpack.c.b16 %v6753, %v6751
        %v6848 = vpack.c.b16 %v6756, %v6754
        %v6849 = vpack.c.b16 %v6757, %v6755
        %v6850 = vpack.c.b16 %v6760, %v6758
        %v6851 = vpack.c.b16 %v6761, %v6759
        %v6852 = vpack.c.b16 %v6764, %v6762
        %v6853 = vpack.c.b16 %v6765, %v6763
        %v6854 = vpack.c.b16 %v6768, %v6766
        %v6855 = vpack.c.b16 %v6769, %v6767
        %v6856 = vpack.c.b16 %v6772, %v6770
        %v6857 = vpack.c.b16 %v6773, %v6771
        %v6858 = vpack.c.b16 %v6776, %v6774
        %v6859 = vpack.c.b16 %v6777, %v6775
        %v6860 = vpack.c.b16 %v6780, %v6778
        %v6861 = vpack.c.b16 %v6781, %v6779
        %v6862 = vpack.c.b16 %v6784, %v6782
        %v6863 = vpack.c.b16 %v6785, %v6783
        %v6864 = vpack.c.b16 %v6788, %v6786
        %v6865 = vpack.c.b16 %v6789, %v6787
        %v6866 = vpack.c.b16 %v6792, %v6790
        %v6867 = vpack.c.b16 %v6793, %v6791
        %v6868 = vpack.c.b16 %v6796, %v6794
        %v6869 = vpack.c.b16 %v6797, %v6795
        %v6870 = vpack.c.b16 %v6800, %v6798
        %v6871 = vpack.c.b16 %v6801, %v6799
        %v6872 = vpack.c.b16 %v6804, %v6802
        %v6873 = vpack.c.b16 %v6805, %v6803
        %v6874 = vpack.c.b16 %v6808, %v6806
        %v6875 = vpack.c.b16 %v6809, %v6807
        %v6876 = vpack.c.b16 %v6812, %v6810
        %v6877 = vpack.c.b16 %v6813, %v6811
        %6942 = vmatprep.subr.bf16.mxu0 %v6815
        %6943 = vmatpush1.bf16.msra.mxu0 %v6814
        %6944 = vmatprep.subr.bf16.mxu0 %v6817
        %6945 = vmatpush1.bf16.msra.mxu0 %v6816
        %6946 = vmatprep.subr.bf16.mxu0 %v6819
        %6947 = vmatpush1.bf16.msra.mxu0 %v6818
        %6948 = vmatprep.subr.bf16.mxu0 %v6821
        %6949 = vmatpush1.bf16.msra.mxu0 %v6820
        %6950 = vmatprep.subr.bf16.mxu0 %v6823
        %6951 = vmatpush1.bf16.msra.mxu0 %v6822
        %6952 = vmatprep.subr.bf16.mxu0 %v6825
        %6953 = vmatpush1.bf16.msra.mxu0 %v6824
        %6954 = vmatprep.subr.bf16.mxu0 %v6827
        %6955 = vmatpush1.bf16.msra.mxu0 %v6826
        %6956 = vmatprep.subr.bf16.mxu0 %v6829
        %6957 = vmatpush1.bf16.msra.mxu0 %v6828
        %6958 = vmatprep.subr.bf16.mxu0 %v6831
        %6959 = vmatpush1.bf16.msra.mxu0 %v6830
        %6960 = vmatprep.subr.bf16.mxu0 %v6833
        %6961 = vmatpush1.bf16.msra.mxu0 %v6832
        %6962 = vmatprep.subr.bf16.mxu0 %v6835
        %6963 = vmatpush1.bf16.msra.mxu0 %v6834
        %6964 = vmatprep.subr.bf16.mxu0 %v6837
        %6965 = vmatpush1.bf16.msra.mxu0 %v6836
        %6966 = vmatprep.subr.bf16.mxu0 %v6839
        %6967 = vmatpush1.bf16.msra.mxu0 %v6838
        %6968 = vmatprep.subr.bf16.mxu0 %v6841
        %6969 = vmatpush1.bf16.msra.mxu0 %v6840
        %6970 = vmatprep.subr.bf16.mxu0 %v6843
        %6971 = vmatpush1.bf16.msra.mxu0 %v6842
        %6972 = vmatprep.subr.bf16.mxu0 %v6845
        %6973 = vmatpush1.bf16.msra.mxu0 %v6844
        %6974 = vmatprep.mubr.bf16.mxu0 %v6591
        %6975 = vmatmul.mubr.bf16.gmra.mrb[0].mxu0 %v6590
        %v6976 = vpop.f32.mrb[0].mxu0
        %v6977 = vadd.f32 0.0, %v6976
        %v6978 = vpop.f32.mrb[0].mxu0
        %v6979 = vadd.f32 0.0, %v6978
        %v6980 = vpop.f32.mrb[0].mxu0
        %v6981 = vadd.f32 0.0, %v6980
        %v6982 = vpop.f32.mrb[0].mxu0
        %v6983 = vadd.f32 0.0, %v6982
        %6984 = vmatprep.mubr.bf16.mxu0 %v6595
        %6985 = vmatmul.mubr.bf16.gmra.mrb[0].mxu0 %v6594
        %v6986 = vpop.f32.mrb[0].mxu0
        %v6987 = vadd.f32 0.0, %v6986
        %v6988 = vpop.f32.mrb[0].mxu0
        %v6989 = vadd.f32 0.0, %v6988
        %v6990 = vpop.f32.mrb[0].mxu0
        %v6991 = vadd.f32 0.0, %v6990
        %v6992 = vpop.f32.mrb[0].mxu0
        %v6993 = vadd.f32 0.0, %v6992
        %6994 = vmatprep.mubr.bf16.mxu0 %v6599
        %6995 = vmatmul.mubr.bf16.gmra.mrb[0].mxu0 %v6598
        %v6996 = vpop.f32.mrb[0].mxu0
        %v6997 = vadd.f32 0.0, %v6996
        %v6998 = vpop.f32.mrb[0].mxu0
        %v6999 = vadd.f32 0.0, %v6998
        %v7000 = vpop.f32.mrb[0].mxu0
        %v7001 = vadd.f32 0.0, %v7000
        %v7002 = vpop.f32.mrb[0].mxu0
        %v7003 = vadd.f32 0.0, %v7002
        %7004 = vmatprep.mubr.bf16.mxu0 %v6603
        %7005 = vmatmul.mubr.bf16.gmra.mrb[0].mxu0 %v6602
        %v7006 = vpop.f32.mrb[0].mxu0
        %v7007 = vadd.f32 0.0, %v7006
        %v7008 = vpop.f32.mrb[0].mxu0
        %v7009 = vadd.f32 0.0, %v7008
        %v7010 = vpop.f32.mrb[0].mxu0
        %v7011 = vadd.f32 0.0, %v7010
        %v7012 = vpop.f32.mrb[0].mxu0
        %v7013 = vadd.f32 0.0, %v7012
        %7014 = vdwg.mxu0
        %7015 = vmatprep.subr.bf16.mxu0 %v6847
        %7016 = vmatpush1.bf16.msra.mxu0 %v6846
        %7017 = vmatprep.subr.bf16.mxu0 %v6849
        %7018 = vmatpush1.bf16.msra.mxu0 %v6848
        %7019 = vmatprep.subr.bf16.mxu0 %v6851
        %7020 = vmatpush1.bf16.msra.mxu0 %v6850
        %7021 = vmatprep.subr.bf16.mxu0 %v6853
        %7022 = vmatpush1.bf16.msra.mxu0 %v6852
        %7023 = vmatprep.subr.bf16.mxu0 %v6855
        %7024 = vmatpush1.bf16.msra.mxu0 %v6854
        %7025 = vmatprep.subr.bf16.mxu0 %v6857
        %7026 = vmatpush1.bf16.msra.mxu0 %v6856
        %7027 = vmatprep.subr.bf16.mxu0 %v6859
        %7028 = vmatpush1.bf16.msra.mxu0 %v6858
        %7029 = vmatprep.subr.bf16.mxu0 %v6861
        %7030 = vmatpush1.bf16.msra.mxu0 %v6860
        %7031 = vmatprep.subr.bf16.mxu0 %v6863
        %7032 = vmatpush1.bf16.msra.mxu0 %v6862
        %7033 = vmatprep.subr.bf16.mxu0 %v6865
        %7034 = vmatpush1.bf16.msra.mxu0 %v6864
        %7035 = vmatprep.subr.bf16.mxu0 %v6867
        %7036 = vmatpush1.bf16.msra.mxu0 %v6866
        %7037 = vmatprep.subr.bf16.mxu0 %v6869
        %7038 = vmatpush1.bf16.msra.mxu0 %v6868
        %7039 = vmatprep.subr.bf16.mxu0 %v6871
        %7040 = vmatpush1.bf16.msra.mxu0 %v6870
        %7041 = vmatprep.subr.bf16.mxu0 %v6873
        %7042 = vmatpush1.bf16.msra.mxu0 %v6872
        %7043 = vmatprep.subr.bf16.mxu0 %v6875
        %7044 = vmatpush1.bf16.msra.mxu0 %v6874
        %7045 = vmatprep.subr.bf16.mxu0 %v6877
        %7046 = vmatpush1.bf16.msra.mxu0 %v6876
        %7047 = vmatprep.mubr.bf16.mxu0 %v6593
        %7048 = vmatmul.mubr.bf16.gmra.mrb[0].mxu0 %v6592
        %v7049 = vpop.f32.mrb[0].mxu0
        %v7050 = vadd.f32 %v6977, %v7049
        %v7051 = vpop.f32.mrb[0].mxu0
        %v7052 = vadd.f32 %v6979, %v7051
        %v7053 = vpop.f32.mrb[0].mxu0
        %v7054 = vadd.f32 %v6981, %v7053
        %v7055 = vpop.f32.mrb[0].mxu0
        %v7056 = vadd.f32 %v6983, %v7055
        %7057 = vmatprep.mubr.bf16.mxu0 %v6597
        %7058 = vmatmul.mubr.bf16.gmra.mrb[0].mxu0 %v6596
        %v7059 = vpop.f32.mrb[0].mxu0
        %v7060 = vadd.f32 %v6987, %v7059
        %v7061 = vpop.f32.mrb[0].mxu0
        %v7062 = vadd.f32 %v6989, %v7061
        %v7063 = vpop.f32.mrb[0].mxu0
        %v7064 = vadd.f32 %v6991, %v7063
        %v7065 = vpop.f32.mrb[0].mxu0
        %v7066 = vadd.f32 %v6993, %v7065
        %7067 = vmatprep.mubr.bf16.mxu0 %v6601
        %7068 = vmatmul.mubr.bf16.gmra.mrb[0].mxu0 %v6600
        %v7069 = vpop.f32.mrb[0].mxu0
        %v7070 = vadd.f32 %v6997, %v7069
        %v7071 = vpop.f32.mrb[0].mxu0
        %v7072 = vadd.f32 %v6999, %v7071
        %v7073 = vpop.f32.mrb[0].mxu0
        %v7074 = vadd.f32 %v7001, %v7073
        %v7075 = vpop.f32.mrb[0].mxu0
        %v7076 = vadd.f32 %v7003, %v7075
        %7077 = vmatprep.mubr.bf16.mxu0 %v6605
        %7078 = vmatmul.mubr.bf16.gmra.mrb[0].mxu0 %v6604
        %v7079 = vpop.f32.mrb[0].mxu0
        %v7080 = vadd.f32 %v7007, %v7079
        %v7081 = vpop.f32.mrb[0].mxu0
        %v7082 = vadd.f32 %v7009, %v7081
        %v7083 = vpop.f32.mrb[0].mxu0
        %v7084 = vadd.f32 %v7011, %v7083
        %v7085 = vpop.f32.mrb[0].mxu0
        %v7086 = vadd.f32 %v7013, %v7085
        %7087 = vdwg.mxu0
        %v7088 = vadd.f32 %v6221, %v7050
        %v7089 = vadd.f32 %v6222, %v7052
        %v7090 = vadd.f32 %v6223, %v7054
        %v7091 = vadd.f32 %v6224, %v7056
        %v7092 = vadd.f32 %v6225, %v7060
        %v7093 = vadd.f32 %v6226, %v7062
        %v7094 = vadd.f32 %v6227, %v7064
        %v7095 = vadd.f32 %v6228, %v7066
        %v7096 = vadd.f32 %v6229, %v7070
        %v7097 = vadd.f32 %v6230, %v7072
        %v7098 = vadd.f32 %v6231, %v7074
        %v7099 = vadd.f32 %v6232, %v7076
        %v7100 = vadd.f32 %v6233, %v7080
        %v7101 = vadd.f32 %v6234, %v7082
        %v7102 = vadd.f32 %v6235, %v7084
        %v7103 = vadd.f32 %v6236, %v7086
        %v7104 = vld [vmem:[%s5593] sm:$0xee]
        %v7105 = vld [vmem:[%s5593 + $0x8] sm:$0xee]
        %v7106 = vld [vmem:[%s5593 + $0x20] sm:$0xee]
        %v7107 = vld [vmem:[%s5593 + $0x28] sm:$0xee]
        %v7108 = vld [vmem:[%s5593 + $0x40] sm:$0xee]
        %v7109 = vld [vmem:[%s5593 + $0x48] sm:$0xee]
        %v7110 = vld [vmem:[%s5593 + $0x60] sm:$0xee]
        %v7111 = vld [vmem:[%s5593 + $0x68] sm:$0xee]
        %v7112 = vld [vmem:[%s5593 + $0x80] sm:$0xee]
        %v7113 = vld [vmem:[%s5593 + $0x88] sm:$0xee]
        %v7114 = vld [vmem:[%s5593 + $0xa0] sm:$0xee]
        %v7115 = vld [vmem:[%s5593 + $0xa8] sm:$0xee]
        %v7116 = vld [vmem:[%s5593 + $0xc0] sm:$0xee]
        %v7117 = vld [vmem:[%s5593 + $0xc8] sm:$0xee]
        %v7118 = vld [vmem:[%s5593 + $0xe0] sm:$0xee]
        %v7119 = vld [vmem:[%s5593 + $0xe8] sm:$0xee]
        %v7152 = vrot.slane %v7104, 5
        %v7153 = vrot.slane %v7152, 4
        %v7154 = vrot.slane %v6239, 5
        %v7155 = vsel %vm2684, %v7153, %v7154
        %v7156 = vrot.slane %v7105, 5
        %v7157 = vrot.slane %v7156, 4
        %v7158 = vrot.slane %v6240, 5
        %v7159 = vsel %vm2684, %v7157, %v7158
        %v7160 = vrot.slane %v7106, 5
        %v7161 = vrot.slane %v7160, 4
        %v7162 = vrot.slane %v6243, 5
        %v7163 = vsel %vm2684, %v7161, %v7162
        %v7164 = vrot.slane %v7107, 5
        %v7165 = vrot.slane %v7164, 4
        %v7166 = vrot.slane %v6244, 5
        %v7167 = vsel %vm2684, %v7165, %v7166
        %v7168 = vrot.slane %v7108, 5
        %v7169 = vrot.slane %v7168, 4
        %v7170 = vrot.slane %v6247, 5
        %v7171 = vsel %vm2684, %v7169, %v7170
        %v7172 = vrot.slane %v7109, 5
        %v7173 = vrot.slane %v7172, 4
        %v7174 = vrot.slane %v6248, 5
        %v7175 = vsel %vm2684, %v7173, %v7174
        %v7176 = vrot.slane %v7110, 5
        %v7177 = vrot.slane %v7176, 4
        %v7178 = vrot.slane %v6251, 5
        %v7179 = vsel %vm2684, %v7177, %v7178
        %v7180 = vrot.slane %v7111, 5
        %v7181 = vrot.slane %v7180, 4
        %v7182 = vrot.slane %v6252, 5
        %v7183 = vsel %vm2684, %v7181, %v7182
        %v7184 = vrot.slane %v7112, 5
        %v7185 = vrot.slane %v7184, 4
        %v7186 = vrot.slane %v6255, 5
        %v7187 = vsel %vm2684, %v7185, %v7186
        %v7188 = vrot.slane %v7113, 5
        %v7189 = vrot.slane %v7188, 4
        %v7190 = vrot.slane %v6256, 5
        %v7191 = vsel %vm2684, %v7189, %v7190
        %v7192 = vrot.slane %v7114, 5
        %v7193 = vrot.slane %v7192, 4
        %v7194 = vrot.slane %v6259, 5
        %v7195 = vsel %vm2684, %v7193, %v7194
        %v7196 = vrot.slane %v7115, 5
        %v7197 = vrot.slane %v7196, 4
        %v7198 = vrot.slane %v6260, 5
        %v7199 = vsel %vm2684, %v7197, %v7198
        %v7200 = vrot.slane %v7116, 5
        %v7201 = vrot.slane %v7200, 4
        %v7202 = vrot.slane %v6263, 5
        %v7203 = vsel %vm2684, %v7201, %v7202
        %v7204 = vrot.slane %v7117, 5
        %v7205 = vrot.slane %v7204, 4
        %v7206 = vrot.slane %v6264, 5
        %v7207 = vsel %vm2684, %v7205, %v7206
        %v7208 = vrot.slane %v7118, 5
        %v7209 = vrot.slane %v7208, 4
        %v7210 = vrot.slane %v6267, 5
        %v7211 = vsel %vm2684, %v7209, %v7210
        %v7212 = vrot.slane %v7119, 5
        %v7213 = vrot.slane %v7212, 4
        %v7214 = vrot.slane %v6268, 5
        %v7215 = vsel %vm2684, %v7213, %v7214
        %s7216 = scalar_lea.vmem [#allocation10], 4096
        %v7217 = vld [vmem:[%s7216] sm:$0xff]
        %v7218 = vld [vmem:[%s7216 + $0x8] sm:$0xff]
        %v7219 = vld [vmem:[%s7216 + $0x10] sm:$0xff]
        %v7220 = vld [vmem:[%s7216 + $0x18] sm:$0xff]
        %v7221 = vld [vmem:[%s7216 + $0x20] sm:$0xff]
        %v7222 = vld [vmem:[%s7216 + $0x28] sm:$0xff]
        %v7223 = vld [vmem:[%s7216 + $0x30] sm:$0xff]
        %v7224 = vld [vmem:[%s7216 + $0x38] sm:$0xff]
        %v7225 = vld [vmem:[%s7216 + $0x40] sm:$0xff]
        %v7226 = vld [vmem:[%s7216 + $0x48] sm:$0xff]
        %v7227 = vld [vmem:[%s7216 + $0x50] sm:$0xff]
        %v7228 = vld [vmem:[%s7216 + $0x58] sm:$0xff]
        %v7229 = vld [vmem:[%s7216 + $0x60] sm:$0xff]
        %v7230 = vld [vmem:[%s7216 + $0x68] sm:$0xff]
        %v7231 = vld [vmem:[%s7216 + $0x70] sm:$0xff]
        %v7232 = vld [vmem:[%s7216 + $0x78] sm:$0xff]
        %v7233 = vld [vmem:[%s7216 + $0x80] sm:$0xff]
        %v7234 = vld [vmem:[%s7216 + $0x88] sm:$0xff]
        %v7235 = vld [vmem:[%s7216 + $0x90] sm:$0xff]
        %v7236 = vld [vmem:[%s7216 + $0x98] sm:$0xff]
        %v7237 = vld [vmem:[%s7216 + $0xa0] sm:$0xff]
        %v7238 = vld [vmem:[%s7216 + $0xa8] sm:$0xff]
        %v7239 = vld [vmem:[%s7216 + $0xb0] sm:$0xff]
        %v7240 = vld [vmem:[%s7216 + $0xb8] sm:$0xff]
        %v7241 = vld [vmem:[%s7216 + $0xc0] sm:$0xff]
        %v7242 = vld [vmem:[%s7216 + $0xc8] sm:$0xff]
        %v7243 = vld [vmem:[%s7216 + $0xd0] sm:$0xff]
        %v7244 = vld [vmem:[%s7216 + $0xd8] sm:$0xff]
        %v7245 = vld [vmem:[%s7216 + $0xe0] sm:$0xff]
        %v7246 = vld [vmem:[%s7216 + $0xe8] sm:$0xff]
        %v7247 = vld [vmem:[%s7216 + $0xf0] sm:$0xff]
        %v7248 = vld [vmem:[%s7216 + $0xf8] sm:$0xff]
        %v7249 = vld [vmem:[%s7216 + $0x100] sm:$0xff]
        %v7250 = vld [vmem:[%s7216 + $0x108] sm:$0xff]
        %v7251 = vld [vmem:[%s7216 + $0x110] sm:$0xff]
        %v7252 = vld [vmem:[%s7216 + $0x118] sm:$0xff]
        %v7253 = vld [vmem:[%s7216 + $0x120] sm:$0xff]
        %v7254 = vld [vmem:[%s7216 + $0x128] sm:$0xff]
        %v7255 = vld [vmem:[%s7216 + $0x130] sm:$0xff]
        %v7256 = vld [vmem:[%s7216 + $0x138] sm:$0xff]
        %v7257 = vld [vmem:[%s7216 + $0x140] sm:$0xff]
        %v7258 = vld [vmem:[%s7216 + $0x148] sm:$0xff]
        %v7259 = vld [vmem:[%s7216 + $0x150] sm:$0xff]
        %v7260 = vld [vmem:[%s7216 + $0x158] sm:$0xff]
        %v7261 = vld [vmem:[%s7216 + $0x160] sm:$0xff]
        %v7262 = vld [vmem:[%s7216 + $0x168] sm:$0xff]
        %v7263 = vld [vmem:[%s7216 + $0x170] sm:$0xff]
        %v7264 = vld [vmem:[%s7216 + $0x178] sm:$0xff]
        %v7265 = vld [vmem:[%s7216 + $0x180] sm:$0xff]
        %v7266 = vld [vmem:[%s7216 + $0x188] sm:$0xff]
        %v7267 = vld [vmem:[%s7216 + $0x190] sm:$0xff]
        %v7268 = vld [vmem:[%s7216 + $0x198] sm:$0xff]
        %v7269 = vld [vmem:[%s7216 + $0x1a0] sm:$0xff]
        %v7270 = vld [vmem:[%s7216 + $0x1a8] sm:$0xff]
        %v7271 = vld [vmem:[%s7216 + $0x1b0] sm:$0xff]
        %v7272 = vld [vmem:[%s7216 + $0x1b8] sm:$0xff]
        %v7273 = vld [vmem:[%s7216 + $0x1c0] sm:$0xff]
        %v7274 = vld [vmem:[%s7216 + $0x1c8] sm:$0xff]
        %v7275 = vld [vmem:[%s7216 + $0x1d0] sm:$0xff]
        %v7276 = vld [vmem:[%s7216 + $0x1d8] sm:$0xff]
        %v7277 = vld [vmem:[%s7216 + $0x1e0] sm:$0xff]
        %v7278 = vld [vmem:[%s7216 + $0x1e8] sm:$0xff]
        %v7279 = vld [vmem:[%s7216 + $0x1f0] sm:$0xff]
        %v7280 = vld [vmem:[%s7216 + $0x1f8] sm:$0xff]
        %v7281 = vunpack.c.l.b16 %v7155
        %v7282 = vunpack.c.h.b16 %v7155
        %v7283 = vunpack.c.l.b16 %v7159
        %v7284 = vunpack.c.h.b16 %v7159
        %v7285 = vunpack.c.l.b16 %v7163
        %v7286 = vunpack.c.h.b16 %v7163
        %v7287 = vunpack.c.l.b16 %v7167
        %v7288 = vunpack.c.h.b16 %v7167
        %v7289 = vunpack.c.l.b16 %v7171
        %v7290 = vunpack.c.h.b16 %v7171
        %v7291 = vunpack.c.l.b16 %v7175
        %v7292 = vunpack.c.h.b16 %v7175
        %v7293 = vunpack.c.l.b16 %v7179
        %v7294 = vunpack.c.h.b16 %v7179
        %v7295 = vunpack.c.l.b16 %v7183
        %v7296 = vunpack.c.h.b16 %v7183
        %v7297 = vunpack.c.l.b16 %v7187
        %v7298 = vunpack.c.h.b16 %v7187
        %v7299 = vunpack.c.l.b16 %v7191
        %v7300 = vunpack.c.h.b16 %v7191
        %v7301 = vunpack.c.l.b16 %v7195
        %v7302 = vunpack.c.h.b16 %v7195
        %v7303 = vunpack.c.l.b16 %v7199
        %v7304 = vunpack.c.h.b16 %v7199
        %v7305 = vunpack.c.l.b16 %v7203
        %v7306 = vunpack.c.h.b16 %v7203
        %v7307 = vunpack.c.l.b16 %v7207
        %v7308 = vunpack.c.h.b16 %v7207
        %v7309 = vunpack.c.l.b16 %v7211
        %v7310 = vunpack.c.h.b16 %v7211
        %v7311 = vunpack.c.l.b16 %v7215
        %v7312 = vunpack.c.h.b16 %v7215
        %v7313 = vpack.c.b16 %v7285, %v7281
        %v7314 = vpack.c.b16 %v7286, %v7282
        %v7315 = vpack.c.b16 %v7287, %v7283
        %v7316 = vpack.c.b16 %v7288, %v7284
        %v7317 = vpack.c.b16 %v7293, %v7289
        %v7318 = vpack.c.b16 %v7294, %v7290
        %v7319 = vpack.c.b16 %v7295, %v7291
        %v7320 = vpack.c.b16 %v7296, %v7292
        %v7321 = vpack.c.b16 %v7301, %v7297
        %v7322 = vpack.c.b16 %v7302, %v7298
        %v7323 = vpack.c.b16 %v7303, %v7299
        %v7324 = vpack.c.b16 %v7304, %v7300
        %v7325 = vpack.c.b16 %v7309, %v7305
        %v7326 = vpack.c.b16 %v7310, %v7306
        %v7327 = vpack.c.b16 %v7311, %v7307
        %v7328 = vpack.c.b16 %v7312, %v7308
        %v7409 = vunpack.c.l.b16 %v7217
        %v7410 = vunpack.c.h.b16 %v7217
        %v7411 = vunpack.c.l.b16 %v7218
        %v7412 = vunpack.c.h.b16 %v7218
        %v7413 = vunpack.c.l.b16 %v7219
        %v7414 = vunpack.c.h.b16 %v7219
        %v7415 = vunpack.c.l.b16 %v7220
        %v7416 = vunpack.c.h.b16 %v7220
        %v7417 = vunpack.c.l.b16 %v7221
        %v7418 = vunpack.c.h.b16 %v7221
        %v7419 = vunpack.c.l.b16 %v7222
        %v7420 = vunpack.c.h.b16 %v7222
        %v7421 = vunpack.c.l.b16 %v7223
        %v7422 = vunpack.c.h.b16 %v7223
        %v7423 = vunpack.c.l.b16 %v7224
        %v7424 = vunpack.c.h.b16 %v7224
        %v7425 = vunpack.c.l.b16 %v7225
        %v7426 = vunpack.c.h.b16 %v7225
        %v7427 = vunpack.c.l.b16 %v7226
        %v7428 = vunpack.c.h.b16 %v7226
        %v7429 = vunpack.c.l.b16 %v7227
        %v7430 = vunpack.c.h.b16 %v7227
        %v7431 = vunpack.c.l.b16 %v7228
        %v7432 = vunpack.c.h.b16 %v7228
        %v7433 = vunpack.c.l.b16 %v7229
        %v7434 = vunpack.c.h.b16 %v7229
        %v7435 = vunpack.c.l.b16 %v7230
        %v7436 = vunpack.c.h.b16 %v7230
        %v7437 = vunpack.c.l.b16 %v7231
        %v7438 = vunpack.c.h.b16 %v7231
        %v7439 = vunpack.c.l.b16 %v7232
        %v7440 = vunpack.c.h.b16 %v7232
        %v7441 = vunpack.c.l.b16 %v7233
        %v7442 = vunpack.c.h.b16 %v7233
        %v7443 = vunpack.c.l.b16 %v7234
        %v7444 = vunpack.c.h.b16 %v7234
        %v7445 = vunpack.c.l.b16 %v7235
        %v7446 = vunpack.c.h.b16 %v7235
        %v7447 = vunpack.c.l.b16 %v7236
        %v7448 = vunpack.c.h.b16 %v7236
        %v7449 = vunpack.c.l.b16 %v7237
        %v7450 = vunpack.c.h.b16 %v7237
        %v7451 = vunpack.c.l.b16 %v7238
        %v7452 = vunpack.c.h.b16 %v7238
        %v7453 = vunpack.c.l.b16 %v7239
        %v7454 = vunpack.c.h.b16 %v7239
        %v7455 = vunpack.c.l.b16 %v7240
        %v7456 = vunpack.c.h.b16 %v7240
        %v7457 = vunpack.c.l.b16 %v7241
        %v7458 = vunpack.c.h.b16 %v7241
        %v7459 = vunpack.c.l.b16 %v7242
        %v7460 = vunpack.c.h.b16 %v7242
        %v7461 = vunpack.c.l.b16 %v7243
        %v7462 = vunpack.c.h.b16 %v7243
        %v7463 = vunpack.c.l.b16 %v7244
        %v7464 = vunpack.c.h.b16 %v7244
        %v7465 = vunpack.c.l.b16 %v7245
        %v7466 = vunpack.c.h.b16 %v7245
        %v7467 = vunpack.c.l.b16 %v7246
        %v7468 = vunpack.c.h.b16 %v7246
        %v7469 = vunpack.c.l.b16 %v7247
        %v7470 = vunpack.c.h.b16 %v7247
        %v7471 = vunpack.c.l.b16 %v7248
        %v7472 = vunpack.c.h.b16 %v7248
        %v7473 = vunpack.c.l.b16 %v7249
        %v7474 = vunpack.c.h.b16 %v7249
        %v7475 = vunpack.c.l.b16 %v7250
        %v7476 = vunpack.c.h.b16 %v7250
        %v7477 = vunpack.c.l.b16 %v7251
        %v7478 = vunpack.c.h.b16 %v7251
        %v7479 = vunpack.c.l.b16 %v7252
        %v7480 = vunpack.c.h.b16 %v7252
        %v7481 = vunpack.c.l.b16 %v7253
        %v7482 = vunpack.c.h.b16 %v7253
        %v7483 = vunpack.c.l.b16 %v7254
        %v7484 = vunpack.c.h.b16 %v7254
        %v7485 = vunpack.c.l.b16 %v7255
        %v7486 = vunpack.c.h.b16 %v7255
        %v7487 = vunpack.c.l.b16 %v7256
        %v7488 = vunpack.c.h.b16 %v7256
        %v7489 = vunpack.c.l.b16 %v7257
        %v7490 = vunpack.c.h.b16 %v7257
        %v7491 = vunpack.c.l.b16 %v7258
        %v7492 = vunpack.c.h.b16 %v7258
        %v7493 = vunpack.c.l.b16 %v7259
        %v7494 = vunpack.c.h.b16 %v7259
        %v7495 = vunpack.c.l.b16 %v7260
        %v7496 = vunpack.c.h.b16 %v7260
        %v7497 = vunpack.c.l.b16 %v7261
        %v7498 = vunpack.c.h.b16 %v7261
        %v7499 = vunpack.c.l.b16 %v7262
        %v7500 = vunpack.c.h.b16 %v7262
        %v7501 = vunpack.c.l.b16 %v7263
        %v7502 = vunpack.c.h.b16 %v7263
        %v7503 = vunpack.c.l.b16 %v7264
        %v7504 = vunpack.c.h.b16 %v7264
        %v7505 = vunpack.c.l.b16 %v7265
        %v7506 = vunpack.c.h.b16 %v7265
        %v7507 = vunpack.c.l.b16 %v7266
        %v7508 = vunpack.c.h.b16 %v7266
        %v7509 = vunpack.c.l.b16 %v7267
        %v7510 = vunpack.c.h.b16 %v7267
        %v7511 = vunpack.c.l.b16 %v7268
        %v7512 = vunpack.c.h.b16 %v7268
        %v7513 = vunpack.c.l.b16 %v7269
        %v7514 = vunpack.c.h.b16 %v7269
        %v7515 = vunpack.c.l.b16 %v7270
        %v7516 = vunpack.c.h.b16 %v7270
        %v7517 = vunpack.c.l.b16 %v7271
        %v7518 = vunpack.c.h.b16 %v7271
        %v7519 = vunpack.c.l.b16 %v7272
        %v7520 = vunpack.c.h.b16 %v7272
        %v7521 = vunpack.c.l.b16 %v7273
        %v7522 = vunpack.c.h.b16 %v7273
        %v7523 = vunpack.c.l.b16 %v7274
        %v7524 = vunpack.c.h.b16 %v7274
        %v7525 = vunpack.c.l.b16 %v7275
        %v7526 = vunpack.c.h.b16 %v7275
        %v7527 = vunpack.c.l.b16 %v7276
        %v7528 = vunpack.c.h.b16 %v7276
        %v7529 = vunpack.c.l.b16 %v7277
        %v7530 = vunpack.c.h.b16 %v7277
        %v7531 = vunpack.c.l.b16 %v7278
        %v7532 = vunpack.c.h.b16 %v7278
        %v7533 = vunpack.c.l.b16 %v7279
        %v7534 = vunpack.c.h.b16 %v7279
        %v7535 = vunpack.c.l.b16 %v7280
        %v7536 = vunpack.c.h.b16 %v7280
        %v7537 = vpack.c.b16 %v7411, %v7409
        %v7538 = vpack.c.b16 %v7412, %v7410
        %v7539 = vpack.c.b16 %v7415, %v7413
        %v7540 = vpack.c.b16 %v7416, %v7414
        %v7541 = vpack.c.b16 %v7419, %v7417
        %v7542 = vpack.c.b16 %v7420, %v7418
        %v7543 = vpack.c.b16 %v7423, %v7421
        %v7544 = vpack.c.b16 %v7424, %v7422
        %v7545 = vpack.c.b16 %v7427, %v7425
        %v7546 = vpack.c.b16 %v7428, %v7426
        %v7547 = vpack.c.b16 %v7431, %v7429
        %v7548 = vpack.c.b16 %v7432, %v7430
        %v7549 = vpack.c.b16 %v7435, %v7433
        %v7550 = vpack.c.b16 %v7436, %v7434
        %v7551 = vpack.c.b16 %v7439, %v7437
        %v7552 = vpack.c.b16 %v7440, %v7438
        %v7553 = vpack.c.b16 %v7443, %v7441
        %v7554 = vpack.c.b16 %v7444, %v7442
        %v7555 = vpack.c.b16 %v7447, %v7445
        %v7556 = vpack.c.b16 %v7448, %v7446
        %v7557 = vpack.c.b16 %v7451, %v7449
        %v7558 = vpack.c.b16 %v7452, %v7450
        %v7559 = vpack.c.b16 %v7455, %v7453
        %v7560 = vpack.c.b16 %v7456, %v7454
        %v7561 = vpack.c.b16 %v7459, %v7457
        %v7562 = vpack.c.b16 %v7460, %v7458
        %v7563 = vpack.c.b16 %v7463, %v7461
        %v7564 = vpack.c.b16 %v7464, %v7462
        %v7565 = vpack.c.b16 %v7467, %v7465
        %v7566 = vpack.c.b16 %v7468, %v7466
        %v7567 = vpack.c.b16 %v7471, %v7469
        %v7568 = vpack.c.b16 %v7472, %v7470
        %v7569 = vpack.c.b16 %v7475, %v7473
        %v7570 = vpack.c.b16 %v7476, %v7474
        %v7571 = vpack.c.b16 %v7479, %v7477
        %v7572 = vpack.c.b16 %v7480, %v7478
        %v7573 = vpack.c.b16 %v7483, %v7481
        %v7574 = vpack.c.b16 %v7484, %v7482
        %v7575 = vpack.c.b16 %v7487, %v7485
        %v7576 = vpack.c.b16 %v7488, %v7486
        %v7577 = vpack.c.b16 %v7491, %v7489
        %v7578 = vpack.c.b16 %v7492, %v7490
        %v7579 = vpack.c.b16 %v7495, %v7493
        %v7580 = vpack.c.b16 %v7496, %v7494
        %v7581 = vpack.c.b16 %v7499, %v7497
        %v7582 = vpack.c.b16 %v7500, %v7498
        %v7583 = vpack.c.b16 %v7503, %v7501
        %v7584 = vpack.c.b16 %v7504, %v7502
        %v7585 = vpack.c.b16 %v7507, %v7505
        %v7586 = vpack.c.b16 %v7508, %v7506
        %v7587 = vpack.c.b16 %v7511, %v7509
        %v7588 = vpack.c.b16 %v7512, %v7510
        %v7589 = vpack.c.b16 %v7515, %v7513
        %v7590 = vpack.c.b16 %v7516, %v7514
        %v7591 = vpack.c.b16 %v7519, %v7517
        %v7592 = vpack.c.b16 %v7520, %v7518
        %v7593 = vpack.c.b16 %v7523, %v7521
        %v7594 = vpack.c.b16 %v7524, %v7522
        %v7595 = vpack.c.b16 %v7527, %v7525
        %v7596 = vpack.c.b16 %v7528, %v7526
        %v7597 = vpack.c.b16 %v7531, %v7529
        %v7598 = vpack.c.b16 %v7532, %v7530
        %v7599 = vpack.c.b16 %v7535, %v7533
        %v7600 = vpack.c.b16 %v7536, %v7534
        %7665 = vmatprep.subr.bf16.mxu0 %v7538
        %7666 = vmatpush1.bf16.msra.mxu0 %v7537
        %7667 = vmatprep.subr.bf16.mxu0 %v7540
        %7668 = vmatpush1.bf16.msra.mxu0 %v7539
        %7669 = vmatprep.subr.bf16.mxu0 %v7542
        %7670 = vmatpush1.bf16.msra.mxu0 %v7541
        %7671 = vmatprep.subr.bf16.mxu0 %v7544
        %7672 = vmatpush1.bf16.msra.mxu0 %v7543
        %7673 = vmatprep.subr.bf16.mxu0 %v7546
        %7674 = vmatpush1.bf16.msra.mxu0 %v7545
        %7675 = vmatprep.subr.bf16.mxu0 %v7548
        %7676 = vmatpush1.bf16.msra.mxu0 %v7547
        %7677 = vmatprep.subr.bf16.mxu0 %v7550
        %7678 = vmatpush1.bf16.msra.mxu0 %v7549
        %7679 = vmatprep.subr.bf16.mxu0 %v7552
        %7680 = vmatpush1.bf16.msra.mxu0 %v7551
        %7681 = vmatprep.subr.bf16.mxu0 %v7554
        %7682 = vmatpush1.bf16.msra.mxu0 %v7553
        %7683 = vmatprep.subr.bf16.mxu0 %v7556
        %7684 = vmatpush1.bf16.msra.mxu0 %v7555
        %7685 = vmatprep.subr.bf16.mxu0 %v7558
        %7686 = vmatpush1.bf16.msra.mxu0 %v7557
        %7687 = vmatprep.subr.bf16.mxu0 %v7560
        %7688 = vmatpush1.bf16.msra.mxu0 %v7559
        %7689 = vmatprep.subr.bf16.mxu0 %v7562
        %7690 = vmatpush1.bf16.msra.mxu0 %v7561
        %7691 = vmatprep.subr.bf16.mxu0 %v7564
        %7692 = vmatpush1.bf16.msra.mxu0 %v7563
        %7693 = vmatprep.subr.bf16.mxu0 %v7566
        %7694 = vmatpush1.bf16.msra.mxu0 %v7565
        %7695 = vmatprep.subr.bf16.mxu0 %v7568
        %7696 = vmatpush1.bf16.msra.mxu0 %v7567
        %7697 = vmatprep.mubr.bf16.mxu0 %v7314
        %7698 = vmatmul.mubr.bf16.gmra.mrb[0].mxu0 %v7313
        %v7699 = vpop.f32.mrb[0].mxu0
        %v7700 = vadd.f32 0.0, %v7699
        %v7701 = vpop.f32.mrb[0].mxu0
        %v7702 = vadd.f32 0.0, %v7701
        %v7703 = vpop.f32.mrb[0].mxu0
        %v7704 = vadd.f32 0.0, %v7703
        %v7705 = vpop.f32.mrb[0].mxu0
        %v7706 = vadd.f32 0.0, %v7705
        %7707 = vmatprep.mubr.bf16.mxu0 %v7318
        %7708 = vmatmul.mubr.bf16.gmra.mrb[0].mxu0 %v7317
        %v7709 = vpop.f32.mrb[0].mxu0
        %v7710 = vadd.f32 0.0, %v7709
        %v7711 = vpop.f32.mrb[0].mxu0
        %v7712 = vadd.f32 0.0, %v7711
        %v7713 = vpop.f32.mrb[0].mxu0
        %v7714 = vadd.f32 0.0, %v7713
        %v7715 = vpop.f32.mrb[0].mxu0
        %v7716 = vadd.f32 0.0, %v7715
        %7717 = vmatprep.mubr.bf16.mxu0 %v7322
        %7718 = vmatmul.mubr.bf16.gmra.mrb[0].mxu0 %v7321
        %v7719 = vpop.f32.mrb[0].mxu0
        %v7720 = vadd.f32 0.0, %v7719
        %v7721 = vpop.f32.mrb[0].mxu0
        %v7722 = vadd.f32 0.0, %v7721
        %v7723 = vpop.f32.mrb[0].mxu0
        %v7724 = vadd.f32 0.0, %v7723
        %v7725 = vpop.f32.mrb[0].mxu0
        %v7726 = vadd.f32 0.0, %v7725
        %7727 = vmatprep.mubr.bf16.mxu0 %v7326
        %7728 = vmatmul.mubr.bf16.gmra.mrb[0].mxu0 %v7325
        %v7729 = vpop.f32.mrb[0].mxu0
        %v7730 = vadd.f32 0.0, %v7729
        %v7731 = vpop.f32.mrb[0].mxu0
        %v7732 = vadd.f32 0.0, %v7731
        %v7733 = vpop.f32.mrb[0].mxu0
        %v7734 = vadd.f32 0.0, %v7733
        %v7735 = vpop.f32.mrb[0].mxu0
        %v7736 = vadd.f32 0.0, %v7735
        %7737 = vdwg.mxu0
        %7738 = vmatprep.subr.bf16.mxu0 %v7570
        %7739 = vmatpush1.bf16.msra.mxu0 %v7569
        %7740 = vmatprep.subr.bf16.mxu0 %v7572
        %7741 = vmatpush1.bf16.msra.mxu0 %v7571
        %7742 = vmatprep.subr.bf16.mxu0 %v7574
        %7743 = vmatpush1.bf16.msra.mxu0 %v7573
        %7744 = vmatprep.subr.bf16.mxu0 %v7576
        %7745 = vmatpush1.bf16.msra.mxu0 %v7575
        %7746 = vmatprep.subr.bf16.mxu0 %v7578
        %7747 = vmatpush1.bf16.msra.mxu0 %v7577
        %7748 = vmatprep.subr.bf16.mxu0 %v7580
        %7749 = vmatpush1.bf16.msra.mxu0 %v7579
        %7750 = vmatprep.subr.bf16.mxu0 %v7582
        %7751 = vmatpush1.bf16.msra.mxu0 %v7581
        %7752 = vmatprep.subr.bf16.mxu0 %v7584
        %7753 = vmatpush1.bf16.msra.mxu0 %v7583
        %7754 = vmatprep.subr.bf16.mxu0 %v7586
        %7755 = vmatpush1.bf16.msra.mxu0 %v7585
        %7756 = vmatprep.subr.bf16.mxu0 %v7588
        %7757 = vmatpush1.bf16.msra.mxu0 %v7587
        %7758 = vmatprep.subr.bf16.mxu0 %v7590
        %7759 = vmatpush1.bf16.msra.mxu0 %v7589
        %7760 = vmatprep.subr.bf16.mxu0 %v7592
        %7761 = vmatpush1.bf16.msra.mxu0 %v7591
        %7762 = vmatprep.subr.bf16.mxu0 %v7594
        %7763 = vmatpush1.bf16.msra.mxu0 %v7593
        %7764 = vmatprep.subr.bf16.mxu0 %v7596
        %7765 = vmatpush1.bf16.msra.mxu0 %v7595
        %7766 = vmatprep.subr.bf16.mxu0 %v7598
        %7767 = vmatpush1.bf16.msra.mxu0 %v7597
        %7768 = vmatprep.subr.bf16.mxu0 %v7600
        %7769 = vmatpush1.bf16.msra.mxu0 %v7599
        %7770 = vmatprep.mubr.bf16.mxu0 %v7316
        %7771 = vmatmul.mubr.bf16.gmra.mrb[0].mxu0 %v7315
        %v7772 = vpop.f32.mrb[0].mxu0
        %v7773 = vadd.f32 %v7700, %v7772
        %v7774 = vpop.f32.mrb[0].mxu0
        %v7775 = vadd.f32 %v7702, %v7774
        %v7776 = vpop.f32.mrb[0].mxu0
        %v7777 = vadd.f32 %v7704, %v7776
        %v7778 = vpop.f32.mrb[0].mxu0
        %v7779 = vadd.f32 %v7706, %v7778
        %7780 = vmatprep.mubr.bf16.mxu0 %v7320
        %7781 = vmatmul.mubr.bf16.gmra.mrb[0].mxu0 %v7319
        %v7782 = vpop.f32.mrb[0].mxu0
        %v7783 = vadd.f32 %v7710, %v7782
        %v7784 = vpop.f32.mrb[0].mxu0
        %v7785 = vadd.f32 %v7712, %v7784
        %v7786 = vpop.f32.mrb[0].mxu0
        %v7787 = vadd.f32 %v7714, %v7786
        %v7788 = vpop.f32.mrb[0].mxu0
        %v7789 = vadd.f32 %v7716, %v7788
        %7790 = vmatprep.mubr.bf16.mxu0 %v7324
        %7791 = vmatmul.mubr.bf16.gmra.mrb[0].mxu0 %v7323
        %v7792 = vpop.f32.mrb[0].mxu0
        %v7793 = vadd.f32 %v7720, %v7792
        %v7794 = vpop.f32.mrb[0].mxu0
        %v7795 = vadd.f32 %v7722, %v7794
        %v7796 = vpop.f32.mrb[0].mxu0
        %v7797 = vadd.f32 %v7724, %v7796
        %v7798 = vpop.f32.mrb[0].mxu0
        %v7799 = vadd.f32 %v7726, %v7798
        %7800 = vmatprep.mubr.bf16.mxu0 %v7328
        %7801 = vmatmul.mubr.bf16.gmra.mrb[0].mxu0 %v7327
        %v7802 = vpop.f32.mrb[0].mxu0
        %v7803 = vadd.f32 %v7730, %v7802
        %v7804 = vpop.f32.mrb[0].mxu0
        %v7805 = vadd.f32 %v7732, %v7804
        %v7806 = vpop.f32.mrb[0].mxu0
        %v7807 = vadd.f32 %v7734, %v7806
        %v7808 = vpop.f32.mrb[0].mxu0
        %v7809 = vadd.f32 %v7736, %v7808
        %7810 = vdwg.mxu0
        %v7811 = vadd.f32 %v7088, %v7773
        %v7812 = vadd.f32 %v7089, %v7775
        %v7813 = vadd.f32 %v7090, %v7777
        %v7814 = vadd.f32 %v7091, %v7779
        %v7815 = vadd.f32 %v7092, %v7783
        %v7816 = vadd.f32 %v7093, %v7785
        %v7817 = vadd.f32 %v7094, %v7787
        %v7818 = vadd.f32 %v7095, %v7789
        %v7819 = vadd.f32 %v7096, %v7793
        %v7820 = vadd.f32 %v7097, %v7795
        %v7821 = vadd.f32 %v7098, %v7797
        %v7822 = vadd.f32 %v7099, %v7799
        %v7823 = vadd.f32 %v7100, %v7803
        %v7824 = vadd.f32 %v7101, %v7805
        %v7825 = vadd.f32 %v7102, %v7807
        %v7826 = vadd.f32 %v7103, %v7809
        %v7827 = vld [vmem:[#allocation12] sm:$0x3]
        %v7829 = vlaneseq
        %v7830 = vshrl.u32 %v7829, 7
        %v7831 = vsub.s32 0, %v7830
        %v7832 = vrot.slane %v7827, %v7831
        %v7833 = vlaneseq
        %v7834 = vshrl.u32 %v7833, 7
        %v7835 = vsub.s32 1, %v7834
        %v7836 = vrot.slane %v7827, %v7835
        %v7839 = vadd.f32 %v7811, %v7832
        %v7840 = vadd.f32 %v7812, %v7836
        %v7841 = vadd.f32 %v7813, %v7832
        %v7842 = vadd.f32 %v7814, %v7836
        %v7843 = vadd.f32 %v7815, %v7832
        %v7844 = vadd.f32 %v7816, %v7836
        %v7845 = vadd.f32 %v7817, %v7832
        %v7846 = vadd.f32 %v7818, %v7836
        %v7847 = vadd.f32 %v7819, %v7832
        %v7848 = vadd.f32 %v7820, %v7836
        %v7849 = vadd.f32 %v7821, %v7832
        %v7850 = vadd.f32 %v7822, %v7836
        %v7851 = vadd.f32 %v7823, %v7832
        %v7852 = vadd.f32 %v7824, %v7836
        %v7853 = vadd.f32 %v7825, %v7832
        %v7854 = vadd.f32 %v7826, %v7836
        %v7855 = vmax.f32 %v7839, 0.0
        %v7856 = vmax.f32 %v7840, 0.0
        %v7857 = vmax.f32 %v7841, 0.0
        %v7858 = vmax.f32 %v7842, 0.0
        %v7859 = vmax.f32 %v7843, 0.0
        %v7860 = vmax.f32 %v7844, 0.0
        %v7861 = vmax.f32 %v7845, 0.0
        %v7862 = vmax.f32 %v7846, 0.0
        %v7863 = vmax.f32 %v7847, 0.0
        %v7864 = vmax.f32 %v7848, 0.0
        %v7865 = vmax.f32 %v7849, 0.0
        %v7866 = vmax.f32 %v7850, 0.0
        %v7867 = vmax.f32 %v7851, 0.0
        %v7868 = vmax.f32 %v7852, 0.0
        %v7869 = vmax.f32 %v7853, 0.0
        %v7870 = vmax.f32 %v7854, 0.0
        %v7871 = vpack.c.bf16 %v7857, %v7855
        %v7872 = vpack.c.bf16 %v7858, %v7856
        %v7873 = vpack.c.bf16 %v7861, %v7859
        %v7874 = vpack.c.bf16 %v7862, %v7860
        %v7875 = vpack.c.bf16 %v7865, %v7863
        %v7876 = vpack.c.bf16 %v7866, %v7864
        %v7877 = vpack.c.bf16 %v7869, %v7867
        %v7878 = vpack.c.bf16 %v7870, %v7868
        %v7887 = vunpack.c.l.b16 %v7871
        %v7888 = vunpack.c.l.b16 %v7872
        %v7889 = vunpack.c.h.b16 %v7871
        %v7890 = vunpack.c.h.b16 %v7872
        %v7891 = vunpack.c.l.b16 %v7873
        %v7892 = vunpack.c.l.b16 %v7874
        %v7893 = vunpack.c.h.b16 %v7873
        %v7894 = vunpack.c.h.b16 %v7874
        %v7895 = vunpack.c.l.b16 %v7875
        %v7896 = vunpack.c.l.b16 %v7876
        %v7897 = vunpack.c.h.b16 %v7875
        %v7898 = vunpack.c.h.b16 %v7876
        %v7899 = vunpack.c.l.b16 %v7877
        %v7900 = vunpack.c.l.b16 %v7878
        %v7901 = vunpack.c.h.b16 %v7877
        %v7902 = vunpack.c.h.b16 %v7878
        %v7903 = vpack.c.b16 %v7888, %v7887
        %v7904 = vpack.c.b16 %v7890, %v7889
        %v7905 = vpack.c.b16 %v7892, %v7891
        %v7906 = vpack.c.b16 %v7894, %v7893
        %v7907 = vpack.c.b16 %v7896, %v7895
        %v7908 = vpack.c.b16 %v7898, %v7897
        %v7909 = vpack.c.b16 %v7900, %v7899
        %v7910 = vpack.c.b16 %v7902, %v7901
        %v7912 = vshrl.u32 %v7903, 16
        %v7914 = vrot.slane %v7912, 7
        %v7915 = vshll.u32 %v7903, 16
        %v7917 = vor.u32 %v7914, %v7915
        %v7918 = vrot.slane %v7914, 4
        %v7920 = vshrl.u32 %v7904, 16
        %v7922 = vrot.slane %v7920, 7
        %v7923 = vshll.u32 %v7904, 16
        %v7925 = vor.u32 %v7922, %v7923
        %v7926 = vrot.slane %v7922, 4
        %v7928 = vshrl.u32 %v7905, 16
        %v7930 = vrot.slane %v7928, 7
        %v7931 = vshll.u32 %v7905, 16
        %v7933 = vor.u32 %v7930, %v7931
        %v7934 = vrot.slane %v7930, 4
        %v7936 = vshrl.u32 %v7906, 16
        %v7938 = vrot.slane %v7936, 7
        %v7939 = vshll.u32 %v7906, 16
        %v7941 = vor.u32 %v7938, %v7939
        %v7942 = vrot.slane %v7938, 4
        %v7944 = vshrl.u32 %v7907, 16
        %v7946 = vrot.slane %v7944, 7
        %v7947 = vshll.u32 %v7907, 16
        %v7949 = vor.u32 %v7946, %v7947
        %v7950 = vrot.slane %v7946, 4
        %v7952 = vshrl.u32 %v7908, 16
        %v7954 = vrot.slane %v7952, 7
        %v7955 = vshll.u32 %v7908, 16
        %v7957 = vor.u32 %v7954, %v7955
        %v7958 = vrot.slane %v7954, 4
        %v7960 = vshrl.u32 %v7909, 16
        %v7962 = vrot.slane %v7960, 7
        %v7963 = vshll.u32 %v7909, 16
        %v7965 = vor.u32 %v7962, %v7963
        %v7966 = vrot.slane %v7962, 4
        %v7968 = vshrl.u32 %v7910, 16
        %v7970 = vrot.slane %v7968, 7
        %v7971 = vshll.u32 %v7910, 16
        %v7973 = vor.u32 %v7970, %v7971
        %v7974 = vrot.slane %v7970, 4
        %s7991 = scalar_lea.vmem [#allocation3], 16
        %v7992 = vld [vmem:[%s7991] sm:$0xff]
        %v7993 = vsel %vm756, %v7917, %v7992
        %7994 = vst [vmem:[%s7991] sm:$0xff] %v7993
        %v7995 = vld [vmem:[%s7991 + $0x8] sm:$0x11]
        %v7996 = vsel %vm766, %v7918, %v7995
        %7997 = vst [vmem:[%s7991 + $0x8] sm:$0x11] %v7996
        %v7998 = vld [vmem:[%s7991 + $0x10] sm:$0xff]
        %v7999 = vsel %vm756, %v7925, %v7998
        %8000 = vst [vmem:[%s7991 + $0x10] sm:$0xff] %v7999
        %v8001 = vld [vmem:[%s7991 + $0x18] sm:$0x11]
        %v8002 = vsel %vm766, %v7926, %v8001
        %8003 = vst [vmem:[%s7991 + $0x18] sm:$0x11] %v8002
        %v8004 = vld [vmem:[%s7991 + $0x20] sm:$0xff]
        %v8005 = vsel %vm756, %v7933, %v8004
        %8006 = vst [vmem:[%s7991 + $0x20] sm:$0xff] %v8005
        %v8007 = vld [vmem:[%s7991 + $0x28] sm:$0x11]
        %v8008 = vsel %vm766, %v7934, %v8007
        %8009 = vst [vmem:[%s7991 + $0x28] sm:$0x11] %v8008
        %v8010 = vld [vmem:[%s7991 + $0x30] sm:$0xff]
        %v8011 = vsel %vm756, %v7941, %v8010
        %8012 = vst [vmem:[%s7991 + $0x30] sm:$0xff] %v8011
        %v8013 = vld [vmem:[%s7991 + $0x38] sm:$0x11]
        %v8014 = vsel %vm766, %v7942, %v8013
        %8015 = vst [vmem:[%s7991 + $0x38] sm:$0x11] %v8014
        %v8016 = vld [vmem:[%s7991 + $0x40] sm:$0xff]
        %v8017 = vsel %vm756, %v7949, %v8016
        %8018 = vst [vmem:[%s7991 + $0x40] sm:$0xff] %v8017
        %v8019 = vld [vmem:[%s7991 + $0x48] sm:$0x11]
        %v8020 = vsel %vm766, %v7950, %v8019
        %8021 = vst [vmem:[%s7991 + $0x48] sm:$0x11] %v8020
        %v8022 = vld [vmem:[%s7991 + $0x50] sm:$0xff]
        %v8023 = vsel %vm756, %v7957, %v8022
        %8024 = vst [vmem:[%s7991 + $0x50] sm:$0xff] %v8023
        %v8025 = vld [vmem:[%s7991 + $0x58] sm:$0x11]
        %v8026 = vsel %vm766, %v7958, %v8025
        %8027 = vst [vmem:[%s7991 + $0x58] sm:$0x11] %v8026
        %v8028 = vld [vmem:[%s7991 + $0x60] sm:$0xff]
        %v8029 = vsel %vm756, %v7965, %v8028
        %8030 = vst [vmem:[%s7991 + $0x60] sm:$0xff] %v8029
        %v8031 = vld [vmem:[%s7991 + $0x68] sm:$0x11]
        %v8032 = vsel %vm766, %v7966, %v8031
        %8033 = vst [vmem:[%s7991 + $0x68] sm:$0x11] %v8032
        %v8034 = vld [vmem:[%s7991 + $0x70] sm:$0xff]
        %v8035 = vsel %vm756, %v7973, %v8034
        %8036 = vst [vmem:[%s7991 + $0x70] sm:$0xff] %v8035
        %v8037 = vld [vmem:[%s7991 + $0x78] sm:$0x11]
        %v8038 = vsel %vm766, %v7974, %v8037
        %8039 = vst [vmem:[%s7991 + $0x78] sm:$0x11] %v8038
        %v8040 = vld [vmem:[#allocation3] sm:$0xff]
        %v8041 = vld [vmem:[#allocation3 + $0x10] sm:$0xff]
        %v8042 = vld [vmem:[#allocation3 + $0x20] sm:$0xff]
        %v8043 = vld [vmem:[#allocation3 + $0x30] sm:$0xff]
        %v8044 = vld [vmem:[#allocation3 + $0x40] sm:$0xff]
        %v8045 = vld [vmem:[#allocation3 + $0x50] sm:$0xff]
        %v8046 = vld [vmem:[#allocation3 + $0x60] sm:$0xff]
        %v8047 = vld [vmem:[#allocation3 + $0x70] sm:$0xff]
        %v8048 = vld [vmem:[#allocation13] sm:$0xff]
        %v8049 = vld [vmem:[#allocation13 + $0x8] sm:$0xff]
        %v8050 = vld [vmem:[#allocation13 + $0x10] sm:$0xff]
        %v8051 = vld [vmem:[#allocation13 + $0x18] sm:$0xff]
        %v8052 = vld [vmem:[#allocation13 + $0x20] sm:$0xff]
        %v8053 = vld [vmem:[#allocation13 + $0x28] sm:$0xff]
        %v8054 = vld [vmem:[#allocation13 + $0x30] sm:$0xff]
        %v8055 = vld [vmem:[#allocation13 + $0x38] sm:$0xff]
        %v8056 = vld [vmem:[#allocation13 + $0x40] sm:$0xff]
        %v8057 = vld [vmem:[#allocation13 + $0x48] sm:$0xff]
        %v8058 = vld [vmem:[#allocation13 + $0x50] sm:$0xff]
        %v8059 = vld [vmem:[#allocation13 + $0x58] sm:$0xff]
        %v8060 = vld [vmem:[#allocation13 + $0x60] sm:$0xff]
        %v8061 = vld [vmem:[#allocation13 + $0x68] sm:$0xff]
        %v8062 = vld [vmem:[#allocation13 + $0x70] sm:$0xff]
        %v8063 = vld [vmem:[#allocation13 + $0x78] sm:$0xff]
        %v8064 = vld [vmem:[#allocation13 + $0x80] sm:$0xff]
        %v8065 = vld [vmem:[#allocation13 + $0x88] sm:$0xff]
        %v8066 = vld [vmem:[#allocation13 + $0x90] sm:$0xff]
        %v8067 = vld [vmem:[#allocation13 + $0x98] sm:$0xff]
        %v8068 = vld [vmem:[#allocation13 + $0xa0] sm:$0xff]
        %v8069 = vld [vmem:[#allocation13 + $0xa8] sm:$0xff]
        %v8070 = vld [vmem:[#allocation13 + $0xb0] sm:$0xff]
        %v8071 = vld [vmem:[#allocation13 + $0xb8] sm:$0xff]
        %v8072 = vld [vmem:[#allocation13 + $0xc0] sm:$0xff]
        %v8073 = vld [vmem:[#allocation13 + $0xc8] sm:$0xff]
        %v8074 = vld [vmem:[#allocation13 + $0xd0] sm:$0xff]
        %v8075 = vld [vmem:[#allocation13 + $0xd8] sm:$0xff]
        %v8076 = vld [vmem:[#allocation13 + $0xe0] sm:$0xff]
        %v8077 = vld [vmem:[#allocation13 + $0xe8] sm:$0xff]
        %v8078 = vld [vmem:[#allocation13 + $0xf0] sm:$0xff]
        %v8079 = vld [vmem:[#allocation13 + $0xf8] sm:$0xff]
        %v8080 = vld [vmem:[#allocation3 + $0x8] sm:$0x11]
        %v8081 = vld [vmem:[#allocation3 + $0x18] sm:$0x11]
        %v8082 = vld [vmem:[#allocation3 + $0x28] sm:$0x11]
        %v8083 = vld [vmem:[#allocation3 + $0x38] sm:$0x11]
        %v8084 = vld [vmem:[#allocation3 + $0x48] sm:$0x11]
        %v8085 = vld [vmem:[#allocation3 + $0x58] sm:$0x11]
        %v8086 = vld [vmem:[#allocation3 + $0x68] sm:$0x11]
        %v8087 = vld [vmem:[#allocation3 + $0x78] sm:$0x11]
        %v8089 = vshrl.u32 %v8040, 16
        %v8091 = vrot.slane %v8089, 4
        %v8092 = vshll.u32 %v8040, 16
        %v8094 = vrot.slane %v8092, 5
        %v8095 = vor.u32 %v8091, %v8094
        %v8096 = vrot.slane %v8095, 4
        %v8098 = vshll.u32 %v8080, 16
        %v8100 = vrot.slane %v8098, 5
        %v8101 = vsel %vm1268, %v8096, %v8100
        %v8103 = vshrl.u32 %v8041, 16
        %v8105 = vrot.slane %v8103, 4
        %v8106 = vshll.u32 %v8041, 16
        %v8108 = vrot.slane %v8106, 5
        %v8109 = vor.u32 %v8105, %v8108
        %v8110 = vrot.slane %v8109, 4
        %v8112 = vshll.u32 %v8081, 16
        %v8114 = vrot.slane %v8112, 5
        %v8115 = vsel %vm1268, %v8110, %v8114
        %v8117 = vshrl.u32 %v8042, 16
        %v8119 = vrot.slane %v8117, 4
        %v8120 = vshll.u32 %v8042, 16
        %v8122 = vrot.slane %v8120, 5
        %v8123 = vor.u32 %v8119, %v8122
        %v8124 = vrot.slane %v8123, 4
        %v8126 = vshll.u32 %v8082, 16
        %v8128 = vrot.slane %v8126, 5
        %v8129 = vsel %vm1268, %v8124, %v8128
        %v8131 = vshrl.u32 %v8043, 16
        %v8133 = vrot.slane %v8131, 4
        %v8134 = vshll.u32 %v8043, 16
        %v8136 = vrot.slane %v8134, 5
        %v8137 = vor.u32 %v8133, %v8136
        %v8138 = vrot.slane %v8137, 4
        %v8140 = vshll.u32 %v8083, 16
        %v8142 = vrot.slane %v8140, 5
        %v8143 = vsel %vm1268, %v8138, %v8142
        %v8145 = vshrl.u32 %v8044, 16
        %v8147 = vrot.slane %v8145, 4
        %v8148 = vshll.u32 %v8044, 16
        %v8150 = vrot.slane %v8148, 5
        %v8151 = vor.u32 %v8147, %v8150
        %v8152 = vrot.slane %v8151, 4
        %v8154 = vshll.u32 %v8084, 16
        %v8156 = vrot.slane %v8154, 5
        %v8157 = vsel %vm1268, %v8152, %v8156
        %v8159 = vshrl.u32 %v8045, 16
        %v8161 = vrot.slane %v8159, 4
        %v8162 = vshll.u32 %v8045, 16
        %v8164 = vrot.slane %v8162, 5
        %v8165 = vor.u32 %v8161, %v8164
        %v8166 = vrot.slane %v8165, 4
        %v8168 = vshll.u32 %v8085, 16
        %v8170 = vrot.slane %v8168, 5
        %v8171 = vsel %vm1268, %v8166, %v8170
        %v8173 = vshrl.u32 %v8046, 16
        %v8175 = vrot.slane %v8173, 4
        %v8176 = vshll.u32 %v8046, 16
        %v8178 = vrot.slane %v8176, 5
        %v8179 = vor.u32 %v8175, %v8178
        %v8180 = vrot.slane %v8179, 4
        %v8182 = vshll.u32 %v8086, 16
        %v8184 = vrot.slane %v8182, 5
        %v8185 = vsel %vm1268, %v8180, %v8184
        %v8187 = vshrl.u32 %v8047, 16
        %v8189 = vrot.slane %v8187, 4
        %v8190 = vshll.u32 %v8047, 16
        %v8192 = vrot.slane %v8190, 5
        %v8193 = vor.u32 %v8189, %v8192
        %v8194 = vrot.slane %v8193, 4
        %v8196 = vshll.u32 %v8087, 16
        %v8198 = vrot.slane %v8196, 5
        %v8199 = vsel %vm1268, %v8194, %v8198
        %s8200 = scalar_lea.vmem [#allocation13], 256
        %v8201 = vld [vmem:[%s8200] sm:$0xff]
        %v8202 = vld [vmem:[%s8200 + $0x8] sm:$0xff]
        %v8203 = vld [vmem:[%s8200 + $0x10] sm:$0xff]
        %v8204 = vld [vmem:[%s8200 + $0x18] sm:$0xff]
        %v8205 = vld [vmem:[%s8200 + $0x20] sm:$0xff]
        %v8206 = vld [vmem:[%s8200 + $0x28] sm:$0xff]
        %v8207 = vld [vmem:[%s8200 + $0x30] sm:$0xff]
        %v8208 = vld [vmem:[%s8200 + $0x38] sm:$0xff]
        %v8209 = vld [vmem:[%s8200 + $0x40] sm:$0xff]
        %v8210 = vld [vmem:[%s8200 + $0x48] sm:$0xff]
        %v8211 = vld [vmem:[%s8200 + $0x50] sm:$0xff]
        %v8212 = vld [vmem:[%s8200 + $0x58] sm:$0xff]
        %v8213 = vld [vmem:[%s8200 + $0x60] sm:$0xff]
        %v8214 = vld [vmem:[%s8200 + $0x68] sm:$0xff]
        %v8215 = vld [vmem:[%s8200 + $0x70] sm:$0xff]
        %v8216 = vld [vmem:[%s8200 + $0x78] sm:$0xff]
        %v8217 = vld [vmem:[%s8200 + $0x80] sm:$0xff]
        %v8218 = vld [vmem:[%s8200 + $0x88] sm:$0xff]
        %v8219 = vld [vmem:[%s8200 + $0x90] sm:$0xff]
        %v8220 = vld [vmem:[%s8200 + $0x98] sm:$0xff]
        %v8221 = vld [vmem:[%s8200 + $0xa0] sm:$0xff]
        %v8222 = vld [vmem:[%s8200 + $0xa8] sm:$0xff]
        %v8223 = vld [vmem:[%s8200 + $0xb0] sm:$0xff]
        %v8224 = vld [vmem:[%s8200 + $0xb8] sm:$0xff]
        %v8225 = vld [vmem:[%s8200 + $0xc0] sm:$0xff]
        %v8226 = vld [vmem:[%s8200 + $0xc8] sm:$0xff]
        %v8227 = vld [vmem:[%s8200 + $0xd0] sm:$0xff]
        %v8228 = vld [vmem:[%s8200 + $0xd8] sm:$0xff]
        %v8229 = vld [vmem:[%s8200 + $0xe0] sm:$0xff]
        %v8230 = vld [vmem:[%s8200 + $0xe8] sm:$0xff]
        %v8231 = vld [vmem:[%s8200 + $0xf0] sm:$0xff]
        %v8232 = vld [vmem:[%s8200 + $0xf8] sm:$0xff]
        %v8233 = vunpack.c.l.b16 %v8101
        %v8234 = vunpack.c.h.b16 %v8101
        %v8235 = vunpack.c.l.b16 %v8115
        %v8236 = vunpack.c.h.b16 %v8115
        %v8237 = vunpack.c.l.b16 %v8129
        %v8238 = vunpack.c.h.b16 %v8129
        %v8239 = vunpack.c.l.b16 %v8143
        %v8240 = vunpack.c.h.b16 %v8143
        %v8241 = vunpack.c.l.b16 %v8157
        %v8242 = vunpack.c.h.b16 %v8157
        %v8243 = vunpack.c.l.b16 %v8171
        %v8244 = vunpack.c.h.b16 %v8171
        %v8245 = vunpack.c.l.b16 %v8185
        %v8246 = vunpack.c.h.b16 %v8185
        %v8247 = vunpack.c.l.b16 %v8199
        %v8248 = vunpack.c.h.b16 %v8199
        %v8249 = vpack.c.b16 %v8235, %v8233
        %v8250 = vpack.c.b16 %v8236, %v8234
        %v8251 = vpack.c.b16 %v8239, %v8237
        %v8252 = vpack.c.b16 %v8240, %v8238
        %v8253 = vpack.c.b16 %v8243, %v8241
        %v8254 = vpack.c.b16 %v8244, %v8242
        %v8255 = vpack.c.b16 %v8247, %v8245
        %v8256 = vpack.c.b16 %v8248, %v8246
        %v8297 = vunpack.c.l.b16 %v8201
        %v8298 = vunpack.c.h.b16 %v8201
        %v8299 = vunpack.c.l.b16 %v8202
        %v8300 = vunpack.c.h.b16 %v8202
        %v8301 = vunpack.c.l.b16 %v8203
        %v8302 = vunpack.c.h.b16 %v8203
        %v8303 = vunpack.c.l.b16 %v8204
        %v8304 = vunpack.c.h.b16 %v8204
        %v8305 = vunpack.c.l.b16 %v8205
        %v8306 = vunpack.c.h.b16 %v8205
        %v8307 = vunpack.c.l.b16 %v8206
        %v8308 = vunpack.c.h.b16 %v8206
        %v8309 = vunpack.c.l.b16 %v8207
        %v8310 = vunpack.c.h.b16 %v8207
        %v8311 = vunpack.c.l.b16 %v8208
        %v8312 = vunpack.c.h.b16 %v8208
        %v8313 = vunpack.c.l.b16 %v8209
        %v8314 = vunpack.c.h.b16 %v8209
        %v8315 = vunpack.c.l.b16 %v8210
        %v8316 = vunpack.c.h.b16 %v8210
        %v8317 = vunpack.c.l.b16 %v8211
        %v8318 = vunpack.c.h.b16 %v8211
        %v8319 = vunpack.c.l.b16 %v8212
        %v8320 = vunpack.c.h.b16 %v8212
        %v8321 = vunpack.c.l.b16 %v8213
        %v8322 = vunpack.c.h.b16 %v8213
        %v8323 = vunpack.c.l.b16 %v8214
        %v8324 = vunpack.c.h.b16 %v8214
        %v8325 = vunpack.c.l.b16 %v8215
        %v8326 = vunpack.c.h.b16 %v8215
        %v8327 = vunpack.c.l.b16 %v8216
        %v8328 = vunpack.c.h.b16 %v8216
        %v8329 = vunpack.c.l.b16 %v8217
        %v8330 = vunpack.c.h.b16 %v8217
        %v8331 = vunpack.c.l.b16 %v8218
        %v8332 = vunpack.c.h.b16 %v8218
        %v8333 = vunpack.c.l.b16 %v8219
        %v8334 = vunpack.c.h.b16 %v8219
        %v8335 = vunpack.c.l.b16 %v8220
        %v8336 = vunpack.c.h.b16 %v8220
        %v8337 = vunpack.c.l.b16 %v8221
        %v8338 = vunpack.c.h.b16 %v8221
        %v8339 = vunpack.c.l.b16 %v8222
        %v8340 = vunpack.c.h.b16 %v8222
        %v8341 = vunpack.c.l.b16 %v8223
        %v8342 = vunpack.c.h.b16 %v8223
        %v8343 = vunpack.c.l.b16 %v8224
        %v8344 = vunpack.c.h.b16 %v8224
        %v8345 = vunpack.c.l.b16 %v8225
        %v8346 = vunpack.c.h.b16 %v8225
        %v8347 = vunpack.c.l.b16 %v8226
        %v8348 = vunpack.c.h.b16 %v8226
        %v8349 = vunpack.c.l.b16 %v8227
        %v8350 = vunpack.c.h.b16 %v8227
        %v8351 = vunpack.c.l.b16 %v8228
        %v8352 = vunpack.c.h.b16 %v8228
        %v8353 = vunpack.c.l.b16 %v8229
        %v8354 = vunpack.c.h.b16 %v8229
        %v8355 = vunpack.c.l.b16 %v8230
        %v8356 = vunpack.c.h.b16 %v8230
        %v8357 = vunpack.c.l.b16 %v8231
        %v8358 = vunpack.c.h.b16 %v8231
        %v8359 = vunpack.c.l.b16 %v8232
        %v8360 = vunpack.c.h.b16 %v8232
        %v8361 = vpack.c.b16 %v8299, %v8297
        %v8362 = vpack.c.b16 %v8300, %v8298
        %v8363 = vpack.c.b16 %v8303, %v8301
        %v8364 = vpack.c.b16 %v8304, %v8302
        %v8365 = vpack.c.b16 %v8307, %v8305
        %v8366 = vpack.c.b16 %v8308, %v8306
        %v8367 = vpack.c.b16 %v8311, %v8309
        %v8368 = vpack.c.b16 %v8312, %v8310
        %v8369 = vpack.c.b16 %v8315, %v8313
        %v8370 = vpack.c.b16 %v8316, %v8314
        %v8371 = vpack.c.b16 %v8319, %v8317
        %v8372 = vpack.c.b16 %v8320, %v8318
        %v8373 = vpack.c.b16 %v8323, %v8321
        %v8374 = vpack.c.b16 %v8324, %v8322
        %v8375 = vpack.c.b16 %v8327, %v8325
        %v8376 = vpack.c.b16 %v8328, %v8326
        %v8377 = vpack.c.b16 %v8331, %v8329
        %v8378 = vpack.c.b16 %v8332, %v8330
        %v8379 = vpack.c.b16 %v8335, %v8333
        %v8380 = vpack.c.b16 %v8336, %v8334
        %v8381 = vpack.c.b16 %v8339, %v8337
        %v8382 = vpack.c.b16 %v8340, %v8338
        %v8383 = vpack.c.b16 %v8343, %v8341
        %v8384 = vpack.c.b16 %v8344, %v8342
        %v8385 = vpack.c.b16 %v8347, %v8345
        %v8386 = vpack.c.b16 %v8348, %v8346
        %v8387 = vpack.c.b16 %v8351, %v8349
        %v8388 = vpack.c.b16 %v8352, %v8350
        %v8389 = vpack.c.b16 %v8355, %v8353
        %v8390 = vpack.c.b16 %v8356, %v8354
        %v8391 = vpack.c.b16 %v8359, %v8357
        %v8392 = vpack.c.b16 %v8360, %v8358
        %8425 = vmatprep.subr.bf16.mxu0 %v8362
        %8426 = vmatpush1.bf16.msra.mxu0 %v8361
        %8427 = vmatprep.subr.bf16.mxu0 %v8364
        %8428 = vmatpush1.bf16.msra.mxu0 %v8363
        %8429 = vmatprep.subr.bf16.mxu0 %v8366
        %8430 = vmatpush1.bf16.msra.mxu0 %v8365
        %8431 = vmatprep.subr.bf16.mxu0 %v8368
        %8432 = vmatpush1.bf16.msra.mxu0 %v8367
        %8433 = vmatprep.subr.bf16.mxu0 %v8370
        %8434 = vmatpush1.bf16.msra.mxu0 %v8369
        %8435 = vmatprep.subr.bf16.mxu0 %v8372
        %8436 = vmatpush1.bf16.msra.mxu0 %v8371
        %8437 = vmatprep.subr.bf16.mxu0 %v8374
        %8438 = vmatpush1.bf16.msra.mxu0 %v8373
        %8439 = vmatprep.subr.bf16.mxu0 %v8376
        %8440 = vmatpush1.bf16.msra.mxu0 %v8375
        %8441 = vmatprep.subr.bf16.mxu0 %v8378
        %8442 = vmatpush1.bf16.msra.mxu0 %v8377
        %8443 = vmatprep.subr.bf16.mxu0 %v8380
        %8444 = vmatpush1.bf16.msra.mxu0 %v8379
        %8445 = vmatprep.subr.bf16.mxu0 %v8382
        %8446 = vmatpush1.bf16.msra.mxu0 %v8381
        %8447 = vmatprep.subr.bf16.mxu0 %v8384
        %8448 = vmatpush1.bf16.msra.mxu0 %v8383
        %8449 = vmatprep.subr.bf16.mxu0 %v8386
        %8450 = vmatpush1.bf16.msra.mxu0 %v8385
        %8451 = vmatprep.subr.bf16.mxu0 %v8388
        %8452 = vmatpush1.bf16.msra.mxu0 %v8387
        %8453 = vmatprep.subr.bf16.mxu0 %v8390
        %8454 = vmatpush1.bf16.msra.mxu0 %v8389
        %8455 = vmatprep.subr.bf16.mxu0 %v8392
        %8456 = vmatpush1.bf16.msra.mxu0 %v8391
        %8457 = vmatprep.mubr.bf16.mxu0 %v8250
        %8458 = vmatmul.mubr.bf16.gmra.mrb[0].mxu0 %v8249
        %v8459 = vpop.f32.mrb[0].mxu0
        %v8460 = vadd.f32 0.0, %v8459
        %v8461 = vpop.f32.mrb[0].mxu0
        %v8462 = vadd.f32 0.0, %v8461
        %v8463 = vpop.f32.mrb[0].mxu0
        %v8464 = vadd.f32 0.0, %v8463
        %v8465 = vpop.f32.mrb[0].mxu0
        %v8466 = vadd.f32 0.0, %v8465
        %8467 = vmatprep.mubr.bf16.mxu0 %v8252
        %8468 = vmatmul.mubr.bf16.gmra.mrb[0].mxu0 %v8251
        %v8469 = vpop.f32.mrb[0].mxu0
        %v8470 = vadd.f32 0.0, %v8469
        %v8471 = vpop.f32.mrb[0].mxu0
        %v8472 = vadd.f32 0.0, %v8471
        %v8473 = vpop.f32.mrb[0].mxu0
        %v8474 = vadd.f32 0.0, %v8473
        %v8475 = vpop.f32.mrb[0].mxu0
        %v8476 = vadd.f32 0.0, %v8475
        %8477 = vmatprep.mubr.bf16.mxu0 %v8254
        %8478 = vmatmul.mubr.bf16.gmra.mrb[0].mxu0 %v8253
        %v8479 = vpop.f32.mrb[0].mxu0
        %v8480 = vadd.f32 0.0, %v8479
        %v8481 = vpop.f32.mrb[0].mxu0
        %v8482 = vadd.f32 0.0, %v8481
        %v8483 = vpop.f32.mrb[0].mxu0
        %v8484 = vadd.f32 0.0, %v8483
        %v8485 = vpop.f32.mrb[0].mxu0
        %v8486 = vadd.f32 0.0, %v8485
        %8487 = vmatprep.mubr.bf16.mxu0 %v8256
        %8488 = vmatmul.mubr.bf16.gmra.mrb[0].mxu0 %v8255
        %v8489 = vpop.f32.mrb[0].mxu0
        %v8490 = vadd.f32 0.0, %v8489
        %v8491 = vpop.f32.mrb[0].mxu0
        %v8492 = vadd.f32 0.0, %v8491
        %v8493 = vpop.f32.mrb[0].mxu0
        %v8494 = vadd.f32 0.0, %v8493
        %v8495 = vpop.f32.mrb[0].mxu0
        %v8496 = vadd.f32 0.0, %v8495
        %8497 = vdwg.mxu0
        %v8506 = vunpack.c.l.b16 %v8040
        %v8507 = vunpack.c.h.b16 %v8040
        %v8508 = vunpack.c.l.b16 %v8041
        %v8509 = vunpack.c.h.b16 %v8041
        %v8510 = vunpack.c.l.b16 %v8042
        %v8511 = vunpack.c.h.b16 %v8042
        %v8512 = vunpack.c.l.b16 %v8043
        %v8513 = vunpack.c.h.b16 %v8043
        %v8514 = vunpack.c.l.b16 %v8044
        %v8515 = vunpack.c.h.b16 %v8044
        %v8516 = vunpack.c.l.b16 %v8045
        %v8517 = vunpack.c.h.b16 %v8045
        %v8518 = vunpack.c.l.b16 %v8046
        %v8519 = vunpack.c.h.b16 %v8046
        %v8520 = vunpack.c.l.b16 %v8047
        %v8521 = vunpack.c.h.b16 %v8047
        %v8522 = vpack.c.b16 %v8508, %v8506
        %v8523 = vpack.c.b16 %v8509, %v8507
        %v8524 = vpack.c.b16 %v8512, %v8510
        %v8525 = vpack.c.b16 %v8513, %v8511
        %v8526 = vpack.c.b16 %v8516, %v8514
        %v8527 = vpack.c.b16 %v8517, %v8515
        %v8528 = vpack.c.b16 %v8520, %v8518
        %v8529 = vpack.c.b16 %v8521, %v8519
        %v8570 = vunpack.c.l.b16 %v8048
        %v8571 = vunpack.c.h.b16 %v8048
        %v8572 = vunpack.c.l.b16 %v8049
        %v8573 = vunpack.c.h.b16 %v8049
        %v8574 = vunpack.c.l.b16 %v8050
        %v8575 = vunpack.c.h.b16 %v8050
        %v8576 = vunpack.c.l.b16 %v8051
        %v8577 = vunpack.c.h.b16 %v8051
        %v8578 = vunpack.c.l.b16 %v8052
        %v8579 = vunpack.c.h.b16 %v8052
        %v8580 = vunpack.c.l.b16 %v8053
        %v8581 = vunpack.c.h.b16 %v8053
        %v8582 = vunpack.c.l.b16 %v8054
        %v8583 = vunpack.c.h.b16 %v8054
        %v8584 = vunpack.c.l.b16 %v8055
        %v8585 = vunpack.c.h.b16 %v8055
        %v8586 = vunpack.c.l.b16 %v8056
        %v8587 = vunpack.c.h.b16 %v8056
        %v8588 = vunpack.c.l.b16 %v8057
        %v8589 = vunpack.c.h.b16 %v8057
        %v8590 = vunpack.c.l.b16 %v8058
        %v8591 = vunpack.c.h.b16 %v8058
        %v8592 = vunpack.c.l.b16 %v8059
        %v8593 = vunpack.c.h.b16 %v8059
        %v8594 = vunpack.c.l.b16 %v8060
        %v8595 = vunpack.c.h.b16 %v8060
        %v8596 = vunpack.c.l.b16 %v8061
        %v8597 = vunpack.c.h.b16 %v8061
        %v8598 = vunpack.c.l.b16 %v8062
        %v8599 = vunpack.c.h.b16 %v8062
        %v8600 = vunpack.c.l.b16 %v8063
        %v8601 = vunpack.c.h.b16 %v8063
        %v8602 = vunpack.c.l.b16 %v8064
        %v8603 = vunpack.c.h.b16 %v8064
        %v8604 = vunpack.c.l.b16 %v8065
        %v8605 = vunpack.c.h.b16 %v8065
        %v8606 = vunpack.c.l.b16 %v8066
        %v8607 = vunpack.c.h.b16 %v8066
        %v8608 = vunpack.c.l.b16 %v8067
        %v8609 = vunpack.c.h.b16 %v8067
        %v8610 = vunpack.c.l.b16 %v8068
        %v8611 = vunpack.c.h.b16 %v8068
        %v8612 = vunpack.c.l.b16 %v8069
        %v8613 = vunpack.c.h.b16 %v8069
        %v8614 = vunpack.c.l.b16 %v8070
        %v8615 = vunpack.c.h.b16 %v8070
        %v8616 = vunpack.c.l.b16 %v8071
        %v8617 = vunpack.c.h.b16 %v8071
        %v8618 = vunpack.c.l.b16 %v8072
        %v8619 = vunpack.c.h.b16 %v8072
        %v8620 = vunpack.c.l.b16 %v8073
        %v8621 = vunpack.c.h.b16 %v8073
        %v8622 = vunpack.c.l.b16 %v8074
        %v8623 = vunpack.c.h.b16 %v8074
        %v8624 = vunpack.c.l.b16 %v8075
        %v8625 = vunpack.c.h.b16 %v8075
        %v8626 = vunpack.c.l.b16 %v8076
        %v8627 = vunpack.c.h.b16 %v8076
        %v8628 = vunpack.c.l.b16 %v8077
        %v8629 = vunpack.c.h.b16 %v8077
        %v8630 = vunpack.c.l.b16 %v8078
        %v8631 = vunpack.c.h.b16 %v8078
        %v8632 = vunpack.c.l.b16 %v8079
        %v8633 = vunpack.c.h.b16 %v8079
        %v8634 = vpack.c.b16 %v8572, %v8570
        %v8635 = vpack.c.b16 %v8573, %v8571
        %v8636 = vpack.c.b16 %v8576, %v8574
        %v8637 = vpack.c.b16 %v8577, %v8575
        %v8638 = vpack.c.b16 %v8580, %v8578
        %v8639 = vpack.c.b16 %v8581, %v8579
        %v8640 = vpack.c.b16 %v8584, %v8582
        %v8641 = vpack.c.b16 %v8585, %v8583
        %v8642 = vpack.c.b16 %v8588, %v8586
        %v8643 = vpack.c.b16 %v8589, %v8587
        %v8644 = vpack.c.b16 %v8592, %v8590
        %v8645 = vpack.c.b16 %v8593, %v8591
        %v8646 = vpack.c.b16 %v8596, %v8594
        %v8647 = vpack.c.b16 %v8597, %v8595
        %v8648 = vpack.c.b16 %v8600, %v8598
        %v8649 = vpack.c.b16 %v8601, %v8599
        %v8650 = vpack.c.b16 %v8604, %v8602
        %v8651 = vpack.c.b16 %v8605, %v8603
        %v8652 = vpack.c.b16 %v8608, %v8606
        %v8653 = vpack.c.b16 %v8609, %v8607
        %v8654 = vpack.c.b16 %v8612, %v8610
        %v8655 = vpack.c.b16 %v8613, %v8611
        %v8656 = vpack.c.b16 %v8616, %v8614
        %v8657 = vpack.c.b16 %v8617, %v8615
        %v8658 = vpack.c.b16 %v8620, %v8618
        %v8659 = vpack.c.b16 %v8621, %v8619
        %v8660 = vpack.c.b16 %v8624, %v8622
        %v8661 = vpack.c.b16 %v8625, %v8623
        %v8662 = vpack.c.b16 %v8628, %v8626
        %v8663 = vpack.c.b16 %v8629, %v8627
        %v8664 = vpack.c.b16 %v8632, %v8630
        %v8665 = vpack.c.b16 %v8633, %v8631
        %8698 = vmatprep.subr.bf16.mxu0 %v8635
        %8699 = vmatpush1.bf16.msra.mxu0 %v8634
        %8700 = vmatprep.subr.bf16.mxu0 %v8637
        %8701 = vmatpush1.bf16.msra.mxu0 %v8636
        %8702 = vmatprep.subr.bf16.mxu0 %v8639
        %8703 = vmatpush1.bf16.msra.mxu0 %v8638
        %8704 = vmatprep.subr.bf16.mxu0 %v8641
        %8705 = vmatpush1.bf16.msra.mxu0 %v8640
        %8706 = vmatprep.subr.bf16.mxu0 %v8643
        %8707 = vmatpush1.bf16.msra.mxu0 %v8642
        %8708 = vmatprep.subr.bf16.mxu0 %v8645
        %8709 = vmatpush1.bf16.msra.mxu0 %v8644
        %8710 = vmatprep.subr.bf16.mxu0 %v8647
        %8711 = vmatpush1.bf16.msra.mxu0 %v8646
        %8712 = vmatprep.subr.bf16.mxu0 %v8649
        %8713 = vmatpush1.bf16.msra.mxu0 %v8648
        %8714 = vmatprep.subr.bf16.mxu0 %v8651
        %8715 = vmatpush1.bf16.msra.mxu0 %v8650
        %8716 = vmatprep.subr.bf16.mxu0 %v8653
        %8717 = vmatpush1.bf16.msra.mxu0 %v8652
        %8718 = vmatprep.subr.bf16.mxu0 %v8655
        %8719 = vmatpush1.bf16.msra.mxu0 %v8654
        %8720 = vmatprep.subr.bf16.mxu0 %v8657
        %8721 = vmatpush1.bf16.msra.mxu0 %v8656
        %8722 = vmatprep.subr.bf16.mxu0 %v8659
        %8723 = vmatpush1.bf16.msra.mxu0 %v8658
        %8724 = vmatprep.subr.bf16.mxu0 %v8661
        %8725 = vmatpush1.bf16.msra.mxu0 %v8660
        %8726 = vmatprep.subr.bf16.mxu0 %v8663
        %8727 = vmatpush1.bf16.msra.mxu0 %v8662
        %8728 = vmatprep.subr.bf16.mxu0 %v8665
        %8729 = vmatpush1.bf16.msra.mxu0 %v8664
        %8730 = vmatprep.mubr.bf16.mxu0 %v8523
        %8731 = vmatmul.mubr.bf16.gmra.mrb[0].mxu0 %v8522
        %v8732 = vpop.f32.mrb[0].mxu0
        %v8733 = vadd.f32 %v8460, %v8732
        %v8734 = vpop.f32.mrb[0].mxu0
        %v8735 = vadd.f32 %v8462, %v8734
        %v8736 = vpop.f32.mrb[0].mxu0
        %v8737 = vadd.f32 %v8464, %v8736
        %v8738 = vpop.f32.mrb[0].mxu0
        %v8739 = vadd.f32 %v8466, %v8738
        %8740 = vmatprep.mubr.bf16.mxu0 %v8525
        %8741 = vmatmul.mubr.bf16.gmra.mrb[0].mxu0 %v8524
        %v8742 = vpop.f32.mrb[0].mxu0
        %v8743 = vadd.f32 %v8470, %v8742
        %v8744 = vpop.f32.mrb[0].mxu0
        %v8745 = vadd.f32 %v8472, %v8744
        %v8746 = vpop.f32.mrb[0].mxu0
        %v8747 = vadd.f32 %v8474, %v8746
        %v8748 = vpop.f32.mrb[0].mxu0
        %v8749 = vadd.f32 %v8476, %v8748
        %8750 = vmatprep.mubr.bf16.mxu0 %v8527
        %8751 = vmatmul.mubr.bf16.gmra.mrb[0].mxu0 %v8526
        %v8752 = vpop.f32.mrb[0].mxu0
        %v8753 = vadd.f32 %v8480, %v8752
        %v8754 = vpop.f32.mrb[0].mxu0
        %v8755 = vadd.f32 %v8482, %v8754
        %v8756 = vpop.f32.mrb[0].mxu0
        %v8757 = vadd.f32 %v8484, %v8756
        %v8758 = vpop.f32.mrb[0].mxu0
        %v8759 = vadd.f32 %v8486, %v8758
        %8760 = vmatprep.mubr.bf16.mxu0 %v8529
        %8761 = vmatmul.mubr.bf16.gmra.mrb[0].mxu0 %v8528
        %v8762 = vpop.f32.mrb[0].mxu0
        %v8763 = vadd.f32 %v8490, %v8762
        %v8764 = vpop.f32.mrb[0].mxu0
        %v8765 = vadd.f32 %v8492, %v8764
        %v8766 = vpop.f32.mrb[0].mxu0
        %v8767 = vadd.f32 %v8494, %v8766
        %v8768 = vpop.f32.mrb[0].mxu0
        %v8769 = vadd.f32 %v8496, %v8768
        %8770 = vdwg.mxu0
        %v8771 = vld [vmem:[#allocation3] sm:$0xee]
        %v8772 = vld [vmem:[#allocation3 + $0x10] sm:$0xee]
        %v8773 = vld [vmem:[#allocation3 + $0x20] sm:$0xee]
        %v8774 = vld [vmem:[#allocation3 + $0x30] sm:$0xee]
        %v8775 = vld [vmem:[#allocation3 + $0x40] sm:$0xee]
        %v8776 = vld [vmem:[#allocation3 + $0x50] sm:$0xee]
        %v8777 = vld [vmem:[#allocation3 + $0x60] sm:$0xee]
        %v8778 = vld [vmem:[#allocation3 + $0x70] sm:$0xee]
        %v8795 = vrot.slane %v8771, 5
        %v8796 = vrot.slane %v8795, 4
        %v8797 = vrot.slane %v8080, 5
        %v8798 = vsel %vm2684, %v8796, %v8797
        %v8799 = vrot.slane %v8772, 5
        %v8800 = vrot.slane %v8799, 4
        %v8801 = vrot.slane %v8081, 5
        %v8802 = vsel %vm2684, %v8800, %v8801
        %v8803 = vrot.slane %v8773, 5
        %v8804 = vrot.slane %v8803, 4
        %v8805 = vrot.slane %v8082, 5
        %v8806 = vsel %vm2684, %v8804, %v8805
        %v8807 = vrot.slane %v8774, 5
        %v8808 = vrot.slane %v8807, 4
        %v8809 = vrot.slane %v8083, 5
        %v8810 = vsel %vm2684, %v8808, %v8809
        %v8811 = vrot.slane %v8775, 5
        %v8812 = vrot.slane %v8811, 4
        %v8813 = vrot.slane %v8084, 5
        %v8814 = vsel %vm2684, %v8812, %v8813
        %v8815 = vrot.slane %v8776, 5
        %v8816 = vrot.slane %v8815, 4
        %v8817 = vrot.slane %v8085, 5
        %v8818 = vsel %vm2684, %v8816, %v8817
        %v8819 = vrot.slane %v8777, 5
        %v8820 = vrot.slane %v8819, 4
        %v8821 = vrot.slane %v8086, 5
        %v8822 = vsel %vm2684, %v8820, %v8821
        %v8823 = vrot.slane %v8778, 5
        %v8824 = vrot.slane %v8823, 4
        %v8825 = vrot.slane %v8087, 5
        %v8826 = vsel %vm2684, %v8824, %v8825
        %s8827 = scalar_lea.vmem [#allocation13], 512
        %v8828 = vld [vmem:[%s8827] sm:$0xff]
        %v8829 = vld [vmem:[%s8827 + $0x8] sm:$0xff]
        %v8830 = vld [vmem:[%s8827 + $0x10] sm:$0xff]
        %v8831 = vld [vmem:[%s8827 + $0x18] sm:$0xff]
        %v8832 = vld [vmem:[%s8827 + $0x20] sm:$0xff]
        %v8833 = vld [vmem:[%s8827 + $0x28] sm:$0xff]
        %v8834 = vld [vmem:[%s8827 + $0x30] sm:$0xff]
        %v8835 = vld [vmem:[%s8827 + $0x38] sm:$0xff]
        %v8836 = vld [vmem:[%s8827 + $0x40] sm:$0xff]
        %v8837 = vld [vmem:[%s8827 + $0x48] sm:$0xff]
        %v8838 = vld [vmem:[%s8827 + $0x50] sm:$0xff]
        %v8839 = vld [vmem:[%s8827 + $0x58] sm:$0xff]
        %v8840 = vld [vmem:[%s8827 + $0x60] sm:$0xff]
        %v8841 = vld [vmem:[%s8827 + $0x68] sm:$0xff]
        %v8842 = vld [vmem:[%s8827 + $0x70] sm:$0xff]
        %v8843 = vld [vmem:[%s8827 + $0x78] sm:$0xff]
        %v8844 = vld [vmem:[%s8827 + $0x80] sm:$0xff]
        %v8845 = vld [vmem:[%s8827 + $0x88] sm:$0xff]
        %v8846 = vld [vmem:[%s8827 + $0x90] sm:$0xff]
        %v8847 = vld [vmem:[%s8827 + $0x98] sm:$0xff]
        %v8848 = vld [vmem:[%s8827 + $0xa0] sm:$0xff]
        %v8849 = vld [vmem:[%s8827 + $0xa8] sm:$0xff]
        %v8850 = vld [vmem:[%s8827 + $0xb0] sm:$0xff]
        %v8851 = vld [vmem:[%s8827 + $0xb8] sm:$0xff]
        %v8852 = vld [vmem:[%s8827 + $0xc0] sm:$0xff]
        %v8853 = vld [vmem:[%s8827 + $0xc8] sm:$0xff]
        %v8854 = vld [vmem:[%s8827 + $0xd0] sm:$0xff]
        %v8855 = vld [vmem:[%s8827 + $0xd8] sm:$0xff]
        %v8856 = vld [vmem:[%s8827 + $0xe0] sm:$0xff]
        %v8857 = vld [vmem:[%s8827 + $0xe8] sm:$0xff]
        %v8858 = vld [vmem:[%s8827 + $0xf0] sm:$0xff]
        %v8859 = vld [vmem:[%s8827 + $0xf8] sm:$0xff]
        %v8860 = vunpack.c.l.b16 %v8798
        %v8861 = vunpack.c.h.b16 %v8798
        %v8862 = vunpack.c.l.b16 %v8802
        %v8863 = vunpack.c.h.b16 %v8802
        %v8864 = vunpack.c.l.b16 %v8806
        %v8865 = vunpack.c.h.b16 %v8806
        %v8866 = vunpack.c.l.b16 %v8810
        %v8867 = vunpack.c.h.b16 %v8810
        %v8868 = vunpack.c.l.b16 %v8814
        %v8869 = vunpack.c.h.b16 %v8814
        %v8870 = vunpack.c.l.b16 %v8818
        %v8871 = vunpack.c.h.b16 %v8818
        %v8872 = vunpack.c.l.b16 %v8822
        %v8873 = vunpack.c.h.b16 %v8822
        %v8874 = vunpack.c.l.b16 %v8826
        %v8875 = vunpack.c.h.b16 %v8826
        %v8876 = vpack.c.b16 %v8862, %v8860
        %v8877 = vpack.c.b16 %v8863, %v8861
        %v8878 = vpack.c.b16 %v8866, %v8864
        %v8879 = vpack.c.b16 %v8867, %v8865
        %v8880 = vpack.c.b16 %v8870, %v8868
        %v8881 = vpack.c.b16 %v8871, %v8869
        %v8882 = vpack.c.b16 %v8874, %v8872
        %v8883 = vpack.c.b16 %v8875, %v8873
        %v8924 = vunpack.c.l.b16 %v8828
        %v8925 = vunpack.c.h.b16 %v8828
        %v8926 = vunpack.c.l.b16 %v8829
        %v8927 = vunpack.c.h.b16 %v8829
        %v8928 = vunpack.c.l.b16 %v8830
        %v8929 = vunpack.c.h.b16 %v8830
        %v8930 = vunpack.c.l.b16 %v8831
        %v8931 = vunpack.c.h.b16 %v8831
        %v8932 = vunpack.c.l.b16 %v8832
        %v8933 = vunpack.c.h.b16 %v8832
        %v8934 = vunpack.c.l.b16 %v8833
        %v8935 = vunpack.c.h.b16 %v8833
        %v8936 = vunpack.c.l.b16 %v8834
        %v8937 = vunpack.c.h.b16 %v8834
        %v8938 = vunpack.c.l.b16 %v8835
        %v8939 = vunpack.c.h.b16 %v8835
        %v8940 = vunpack.c.l.b16 %v8836
        %v8941 = vunpack.c.h.b16 %v8836
        %v8942 = vunpack.c.l.b16 %v8837
        %v8943 = vunpack.c.h.b16 %v8837
        %v8944 = vunpack.c.l.b16 %v8838
        %v8945 = vunpack.c.h.b16 %v8838
        %v8946 = vunpack.c.l.b16 %v8839
        %v8947 = vunpack.c.h.b16 %v8839
        %v8948 = vunpack.c.l.b16 %v8840
        %v8949 = vunpack.c.h.b16 %v8840
        %v8950 = vunpack.c.l.b16 %v8841
        %v8951 = vunpack.c.h.b16 %v8841
        %v8952 = vunpack.c.l.b16 %v8842
        %v8953 = vunpack.c.h.b16 %v8842
        %v8954 = vunpack.c.l.b16 %v8843
        %v8955 = vunpack.c.h.b16 %v8843
        %v8956 = vunpack.c.l.b16 %v8844
        %v8957 = vunpack.c.h.b16 %v8844
        %v8958 = vunpack.c.l.b16 %v8845
        %v8959 = vunpack.c.h.b16 %v8845
        %v8960 = vunpack.c.l.b16 %v8846
        %v8961 = vunpack.c.h.b16 %v8846
        %v8962 = vunpack.c.l.b16 %v8847
        %v8963 = vunpack.c.h.b16 %v8847
        %v8964 = vunpack.c.l.b16 %v8848
        %v8965 = vunpack.c.h.b16 %v8848
        %v8966 = vunpack.c.l.b16 %v8849
        %v8967 = vunpack.c.h.b16 %v8849
        %v8968 = vunpack.c.l.b16 %v8850
        %v8969 = vunpack.c.h.b16 %v8850
        %v8970 = vunpack.c.l.b16 %v8851
        %v8971 = vunpack.c.h.b16 %v8851
        %v8972 = vunpack.c.l.b16 %v8852
        %v8973 = vunpack.c.h.b16 %v8852
        %v8974 = vunpack.c.l.b16 %v8853
        %v8975 = vunpack.c.h.b16 %v8853
        %v8976 = vunpack.c.l.b16 %v8854
        %v8977 = vunpack.c.h.b16 %v8854
        %v8978 = vunpack.c.l.b16 %v8855
        %v8979 = vunpack.c.h.b16 %v8855
        %v8980 = vunpack.c.l.b16 %v8856
        %v8981 = vunpack.c.h.b16 %v8856
        %v8982 = vunpack.c.l.b16 %v8857
        %v8983 = vunpack.c.h.b16 %v8857
        %v8984 = vunpack.c.l.b16 %v8858
        %v8985 = vunpack.c.h.b16 %v8858
        %v8986 = vunpack.c.l.b16 %v8859
        %v8987 = vunpack.c.h.b16 %v8859
        %v8988 = vpack.c.b16 %v8926, %v8924
        %v8989 = vpack.c.b16 %v8927, %v8925
        %v8990 = vpack.c.b16 %v8930, %v8928
        %v8991 = vpack.c.b16 %v8931, %v8929
        %v8992 = vpack.c.b16 %v8934, %v8932
        %v8993 = vpack.c.b16 %v8935, %v8933
        %v8994 = vpack.c.b16 %v8938, %v8936
        %v8995 = vpack.c.b16 %v8939, %v8937
        %v8996 = vpack.c.b16 %v8942, %v8940
        %v8997 = vpack.c.b16 %v8943, %v8941
        %v8998 = vpack.c.b16 %v8946, %v8944
        %v8999 = vpack.c.b16 %v8947, %v8945
        %v9000 = vpack.c.b16 %v8950, %v8948
        %v9001 = vpack.c.b16 %v8951, %v8949
        %v9002 = vpack.c.b16 %v8954, %v8952
        %v9003 = vpack.c.b16 %v8955, %v8953
        %v9004 = vpack.c.b16 %v8958, %v8956
        %v9005 = vpack.c.b16 %v8959, %v8957
        %v9006 = vpack.c.b16 %v8962, %v8960
        %v9007 = vpack.c.b16 %v8963, %v8961
        %v9008 = vpack.c.b16 %v8966, %v8964
        %v9009 = vpack.c.b16 %v8967, %v8965
        %v9010 = vpack.c.b16 %v8970, %v8968
        %v9011 = vpack.c.b16 %v8971, %v8969
        %v9012 = vpack.c.b16 %v8974, %v8972
        %v9013 = vpack.c.b16 %v8975, %v8973
        %v9014 = vpack.c.b16 %v8978, %v8976
        %v9015 = vpack.c.b16 %v8979, %v8977
        %v9016 = vpack.c.b16 %v8982, %v8980
        %v9017 = vpack.c.b16 %v8983, %v8981
        %v9018 = vpack.c.b16 %v8986, %v8984
        %v9019 = vpack.c.b16 %v8987, %v8985
        %9052 = vmatprep.subr.bf16.mxu0 %v8989
        %9053 = vmatpush1.bf16.msra.mxu0 %v8988
        %9054 = vmatprep.subr.bf16.mxu0 %v8991
        %9055 = vmatpush1.bf16.msra.mxu0 %v8990
        %9056 = vmatprep.subr.bf16.mxu0 %v8993
        %9057 = vmatpush1.bf16.msra.mxu0 %v8992
        %9058 = vmatprep.subr.bf16.mxu0 %v8995
        %9059 = vmatpush1.bf16.msra.mxu0 %v8994
        %9060 = vmatprep.subr.bf16.mxu0 %v8997
        %9061 = vmatpush1.bf16.msra.mxu0 %v8996
        %9062 = vmatprep.subr.bf16.mxu0 %v8999
        %9063 = vmatpush1.bf16.msra.mxu0 %v8998
        %9064 = vmatprep.subr.bf16.mxu0 %v9001
        %9065 = vmatpush1.bf16.msra.mxu0 %v9000
        %9066 = vmatprep.subr.bf16.mxu0 %v9003
        %9067 = vmatpush1.bf16.msra.mxu0 %v9002
        %9068 = vmatprep.subr.bf16.mxu0 %v9005
        %9069 = vmatpush1.bf16.msra.mxu0 %v9004
        %9070 = vmatprep.subr.bf16.mxu0 %v9007
        %9071 = vmatpush1.bf16.msra.mxu0 %v9006
        %9072 = vmatprep.subr.bf16.mxu0 %v9009
        %9073 = vmatpush1.bf16.msra.mxu0 %v9008
        %9074 = vmatprep.subr.bf16.mxu0 %v9011
        %9075 = vmatpush1.bf16.msra.mxu0 %v9010
        %9076 = vmatprep.subr.bf16.mxu0 %v9013
        %9077 = vmatpush1.bf16.msra.mxu0 %v9012
        %9078 = vmatprep.subr.bf16.mxu0 %v9015
        %9079 = vmatpush1.bf16.msra.mxu0 %v9014
        %9080 = vmatprep.subr.bf16.mxu0 %v9017
        %9081 = vmatpush1.bf16.msra.mxu0 %v9016
        %9082 = vmatprep.subr.bf16.mxu0 %v9019
        %9083 = vmatpush1.bf16.msra.mxu0 %v9018
        %9084 = vmatprep.mubr.bf16.mxu0 %v8877
        %9085 = vmatmul.mubr.bf16.gmra.mrb[0].mxu0 %v8876
        %v9086 = vpop.f32.mrb[0].mxu0
        %v9087 = vadd.f32 0.0, %v9086
        %v9088 = vpop.f32.mrb[0].mxu0
        %v9089 = vadd.f32 0.0, %v9088
        %v9090 = vpop.f32.mrb[0].mxu0
        %v9091 = vadd.f32 0.0, %v9090
        %v9092 = vpop.f32.mrb[0].mxu0
        %v9093 = vadd.f32 0.0, %v9092
        %9094 = vmatprep.mubr.bf16.mxu0 %v8879
        %9095 = vmatmul.mubr.bf16.gmra.mrb[0].mxu0 %v8878
        %v9096 = vpop.f32.mrb[0].mxu0
        %v9097 = vadd.f32 0.0, %v9096
        %v9098 = vpop.f32.mrb[0].mxu0
        %v9099 = vadd.f32 0.0, %v9098
        %v9100 = vpop.f32.mrb[0].mxu0
        %v9101 = vadd.f32 0.0, %v9100
        %v9102 = vpop.f32.mrb[0].mxu0
        %v9103 = vadd.f32 0.0, %v9102
        %9104 = vmatprep.mubr.bf16.mxu0 %v8881
        %9105 = vmatmul.mubr.bf16.gmra.mrb[0].mxu0 %v8880
        %v9106 = vpop.f32.mrb[0].mxu0
        %v9107 = vadd.f32 0.0, %v9106
        %v9108 = vpop.f32.mrb[0].mxu0
        %v9109 = vadd.f32 0.0, %v9108
        %v9110 = vpop.f32.mrb[0].mxu0
        %v9111 = vadd.f32 0.0, %v9110
        %v9112 = vpop.f32.mrb[0].mxu0
        %v9113 = vadd.f32 0.0, %v9112
        %9114 = vmatprep.mubr.bf16.mxu0 %v8883
        %9115 = vmatmul.mubr.bf16.gmra.mrb[0].mxu0 %v8882
        %v9116 = vpop.f32.mrb[0].mxu0
        %v9117 = vadd.f32 0.0, %v9116
        %v9118 = vpop.f32.mrb[0].mxu0
        %v9119 = vadd.f32 0.0, %v9118
        %v9120 = vpop.f32.mrb[0].mxu0
        %v9121 = vadd.f32 0.0, %v9120
        %v9122 = vpop.f32.mrb[0].mxu0
        %v9123 = vadd.f32 0.0, %v9122
        %9124 = vdwg.mxu0
        %v9125 = vadd.f32 %v8733, %v9087
        %v9126 = vadd.f32 %v8735, %v9089
        %v9127 = vadd.f32 %v8737, %v9091
        %v9128 = vadd.f32 %v8739, %v9093
        %v9129 = vadd.f32 %v8743, %v9097
        %v9130 = vadd.f32 %v8745, %v9099
        %v9131 = vadd.f32 %v8747, %v9101
        %v9132 = vadd.f32 %v8749, %v9103
        %v9133 = vadd.f32 %v8753, %v9107
        %v9134 = vadd.f32 %v8755, %v9109
        %v9135 = vadd.f32 %v8757, %v9111
        %v9136 = vadd.f32 %v8759, %v9113
        %v9137 = vadd.f32 %v8763, %v9117
        %v9138 = vadd.f32 %v8765, %v9119
        %v9139 = vadd.f32 %v8767, %v9121
        %v9140 = vadd.f32 %v8769, %v9123
        %v9141 = vld [vmem:[%s7991] sm:$0xff]
        %v9142 = vld [vmem:[%s7991 + $0x10] sm:$0xff]
        %v9143 = vld [vmem:[%s7991 + $0x20] sm:$0xff]
        %v9144 = vld [vmem:[%s7991 + $0x30] sm:$0xff]
        %v9145 = vld [vmem:[%s7991 + $0x40] sm:$0xff]
        %v9146 = vld [vmem:[%s7991 + $0x50] sm:$0xff]
        %v9147 = vld [vmem:[%s7991 + $0x60] sm:$0xff]
        %v9148 = vld [vmem:[%s7991 + $0x70] sm:$0xff]
        %s9149 = scalar_lea.vmem [#allocation13], 768
        %v9150 = vld [vmem:[%s9149] sm:$0xff]
        %v9151 = vld [vmem:[%s9149 + $0x8] sm:$0xff]
        %v9152 = vld [vmem:[%s9149 + $0x10] sm:$0xff]
        %v9153 = vld [vmem:[%s9149 + $0x18] sm:$0xff]
        %v9154 = vld [vmem:[%s9149 + $0x20] sm:$0xff]
        %v9155 = vld [vmem:[%s9149 + $0x28] sm:$0xff]
        %v9156 = vld [vmem:[%s9149 + $0x30] sm:$0xff]
        %v9157 = vld [vmem:[%s9149 + $0x38] sm:$0xff]
        %v9158 = vld [vmem:[%s9149 + $0x40] sm:$0xff]
        %v9159 = vld [vmem:[%s9149 + $0x48] sm:$0xff]
        %v9160 = vld [vmem:[%s9149 + $0x50] sm:$0xff]
        %v9161 = vld [vmem:[%s9149 + $0x58] sm:$0xff]
        %v9162 = vld [vmem:[%s9149 + $0x60] sm:$0xff]
        %v9163 = vld [vmem:[%s9149 + $0x68] sm:$0xff]
        %v9164 = vld [vmem:[%s9149 + $0x70] sm:$0xff]
        %v9165 = vld [vmem:[%s9149 + $0x78] sm:$0xff]
        %v9166 = vld [vmem:[%s9149 + $0x80] sm:$0xff]
        %v9167 = vld [vmem:[%s9149 + $0x88] sm:$0xff]
        %v9168 = vld [vmem:[%s9149 + $0x90] sm:$0xff]
        %v9169 = vld [vmem:[%s9149 + $0x98] sm:$0xff]
        %v9170 = vld [vmem:[%s9149 + $0xa0] sm:$0xff]
        %v9171 = vld [vmem:[%s9149 + $0xa8] sm:$0xff]
        %v9172 = vld [vmem:[%s9149 + $0xb0] sm:$0xff]
        %v9173 = vld [vmem:[%s9149 + $0xb8] sm:$0xff]
        %v9174 = vld [vmem:[%s9149 + $0xc0] sm:$0xff]
        %v9175 = vld [vmem:[%s9149 + $0xc8] sm:$0xff]
        %v9176 = vld [vmem:[%s9149 + $0xd0] sm:$0xff]
        %v9177 = vld [vmem:[%s9149 + $0xd8] sm:$0xff]
        %v9178 = vld [vmem:[%s9149 + $0xe0] sm:$0xff]
        %v9179 = vld [vmem:[%s9149 + $0xe8] sm:$0xff]
        %v9180 = vld [vmem:[%s9149 + $0xf0] sm:$0xff]
        %v9181 = vld [vmem:[%s9149 + $0xf8] sm:$0xff]
        %v9190 = vunpack.c.l.b16 %v9141
        %v9191 = vunpack.c.h.b16 %v9141
        %v9192 = vunpack.c.l.b16 %v9142
        %v9193 = vunpack.c.h.b16 %v9142
        %v9194 = vunpack.c.l.b16 %v9143
        %v9195 = vunpack.c.h.b16 %v9143
        %v9196 = vunpack.c.l.b16 %v9144
        %v9197 = vunpack.c.h.b16 %v9144
        %v9198 = vunpack.c.l.b16 %v9145
        %v9199 = vunpack.c.h.b16 %v9145
        %v9200 = vunpack.c.l.b16 %v9146
        %v9201 = vunpack.c.h.b16 %v9146
        %v9202 = vunpack.c.l.b16 %v9147
        %v9203 = vunpack.c.h.b16 %v9147
        %v9204 = vunpack.c.l.b16 %v9148
        %v9205 = vunpack.c.h.b16 %v9148
        %v9206 = vpack.c.b16 %v9192, %v9190
        %v9207 = vpack.c.b16 %v9193, %v9191
        %v9208 = vpack.c.b16 %v9196, %v9194
        %v9209 = vpack.c.b16 %v9197, %v9195
        %v9210 = vpack.c.b16 %v9200, %v9198
        %v9211 = vpack.c.b16 %v9201, %v9199
        %v9212 = vpack.c.b16 %v9204, %v9202
        %v9213 = vpack.c.b16 %v9205, %v9203
        %v9254 = vunpack.c.l.b16 %v9150
        %v9255 = vunpack.c.h.b16 %v9150
        %v9256 = vunpack.c.l.b16 %v9151
        %v9257 = vunpack.c.h.b16 %v9151
        %v9258 = vunpack.c.l.b16 %v9152
        %v9259 = vunpack.c.h.b16 %v9152
        %v9260 = vunpack.c.l.b16 %v9153
        %v9261 = vunpack.c.h.b16 %v9153
        %v9262 = vunpack.c.l.b16 %v9154
        %v9263 = vunpack.c.h.b16 %v9154
        %v9264 = vunpack.c.l.b16 %v9155
        %v9265 = vunpack.c.h.b16 %v9155
        %v9266 = vunpack.c.l.b16 %v9156
        %v9267 = vunpack.c.h.b16 %v9156
        %v9268 = vunpack.c.l.b16 %v9157
        %v9269 = vunpack.c.h.b16 %v9157
        %v9270 = vunpack.c.l.b16 %v9158
        %v9271 = vunpack.c.h.b16 %v9158
        %v9272 = vunpack.c.l.b16 %v9159
        %v9273 = vunpack.c.h.b16 %v9159
        %v9274 = vunpack.c.l.b16 %v9160
        %v9275 = vunpack.c.h.b16 %v9160
        %v9276 = vunpack.c.l.b16 %v9161
        %v9277 = vunpack.c.h.b16 %v9161
        %v9278 = vunpack.c.l.b16 %v9162
        %v9279 = vunpack.c.h.b16 %v9162
        %v9280 = vunpack.c.l.b16 %v9163
        %v9281 = vunpack.c.h.b16 %v9163
        %v9282 = vunpack.c.l.b16 %v9164
        %v9283 = vunpack.c.h.b16 %v9164
        %v9284 = vunpack.c.l.b16 %v9165
        %v9285 = vunpack.c.h.b16 %v9165
        %v9286 = vunpack.c.l.b16 %v9166
        %v9287 = vunpack.c.h.b16 %v9166
        %v9288 = vunpack.c.l.b16 %v9167
        %v9289 = vunpack.c.h.b16 %v9167
        %v9290 = vunpack.c.l.b16 %v9168
        %v9291 = vunpack.c.h.b16 %v9168
        %v9292 = vunpack.c.l.b16 %v9169
        %v9293 = vunpack.c.h.b16 %v9169
        %v9294 = vunpack.c.l.b16 %v9170
        %v9295 = vunpack.c.h.b16 %v9170
        %v9296 = vunpack.c.l.b16 %v9171
        %v9297 = vunpack.c.h.b16 %v9171
        %v9298 = vunpack.c.l.b16 %v9172
        %v9299 = vunpack.c.h.b16 %v9172
        %v9300 = vunpack.c.l.b16 %v9173
        %v9301 = vunpack.c.h.b16 %v9173
        %v9302 = vunpack.c.l.b16 %v9174
        %v9303 = vunpack.c.h.b16 %v9174
        %v9304 = vunpack.c.l.b16 %v9175
        %v9305 = vunpack.c.h.b16 %v9175
        %v9306 = vunpack.c.l.b16 %v9176
        %v9307 = vunpack.c.h.b16 %v9176
        %v9308 = vunpack.c.l.b16 %v9177
        %v9309 = vunpack.c.h.b16 %v9177
        %v9310 = vunpack.c.l.b16 %v9178
        %v9311 = vunpack.c.h.b16 %v9178
        %v9312 = vunpack.c.l.b16 %v9179
        %v9313 = vunpack.c.h.b16 %v9179
        %v9314 = vunpack.c.l.b16 %v9180
        %v9315 = vunpack.c.h.b16 %v9180
        %v9316 = vunpack.c.l.b16 %v9181
        %v9317 = vunpack.c.h.b16 %v9181
        %v9318 = vpack.c.b16 %v9256, %v9254
        %v9319 = vpack.c.b16 %v9257, %v9255
        %v9320 = vpack.c.b16 %v9260, %v9258
        %v9321 = vpack.c.b16 %v9261, %v9259
        %v9322 = vpack.c.b16 %v9264, %v9262
        %v9323 = vpack.c.b16 %v9265, %v9263
        %v9324 = vpack.c.b16 %v9268, %v9266
        %v9325 = vpack.c.b16 %v9269, %v9267
        %v9326 = vpack.c.b16 %v9272, %v9270
        %v9327 = vpack.c.b16 %v9273, %v9271
        %v9328 = vpack.c.b16 %v9276, %v9274
        %v9329 = vpack.c.b16 %v9277, %v9275
        %v9330 = vpack.c.b16 %v9280, %v9278
        %v9331 = vpack.c.b16 %v9281, %v9279
        %v9332 = vpack.c.b16 %v9284, %v9282
        %v9333 = vpack.c.b16 %v9285, %v9283
        %v9334 = vpack.c.b16 %v9288, %v9286
        %v9335 = vpack.c.b16 %v9289, %v9287
        %v9336 = vpack.c.b16 %v9292, %v9290
        %v9337 = vpack.c.b16 %v9293, %v9291
        %v9338 = vpack.c.b16 %v9296, %v9294
        %v9339 = vpack.c.b16 %v9297, %v9295
        %v9340 = vpack.c.b16 %v9300, %v9298
        %v9341 = vpack.c.b16 %v9301, %v9299
        %v9342 = vpack.c.b16 %v9304, %v9302
        %v9343 = vpack.c.b16 %v9305, %v9303
        %v9344 = vpack.c.b16 %v9308, %v9306
        %v9345 = vpack.c.b16 %v9309, %v9307
        %v9346 = vpack.c.b16 %v9312, %v9310
        %v9347 = vpack.c.b16 %v9313, %v9311
        %v9348 = vpack.c.b16 %v9316, %v9314
        %v9349 = vpack.c.b16 %v9317, %v9315
        %9382 = vmatprep.subr.bf16.mxu0 %v9319
        %9383 = vmatpush1.bf16.msra.mxu0 %v9318
        %9384 = vmatprep.subr.bf16.mxu0 %v9321
        %9385 = vmatpush1.bf16.msra.mxu0 %v9320
        %9386 = vmatprep.subr.bf16.mxu0 %v9323
        %9387 = vmatpush1.bf16.msra.mxu0 %v9322
        %9388 = vmatprep.subr.bf16.mxu0 %v9325
        %9389 = vmatpush1.bf16.msra.mxu0 %v9324
        %9390 = vmatprep.subr.bf16.mxu0 %v9327
        %9391 = vmatpush1.bf16.msra.mxu0 %v9326
        %9392 = vmatprep.subr.bf16.mxu0 %v9329
        %9393 = vmatpush1.bf16.msra.mxu0 %v9328
        %9394 = vmatprep.subr.bf16.mxu0 %v9331
        %9395 = vmatpush1.bf16.msra.mxu0 %v9330
        %9396 = vmatprep.subr.bf16.mxu0 %v9333
        %9397 = vmatpush1.bf16.msra.mxu0 %v9332
        %9398 = vmatprep.subr.bf16.mxu0 %v9335
        %9399 = vmatpush1.bf16.msra.mxu0 %v9334
        %9400 = vmatprep.subr.bf16.mxu0 %v9337
        %9401 = vmatpush1.bf16.msra.mxu0 %v9336
        %9402 = vmatprep.subr.bf16.mxu0 %v9339
        %9403 = vmatpush1.bf16.msra.mxu0 %v9338
        %9404 = vmatprep.subr.bf16.mxu0 %v9341
        %9405 = vmatpush1.bf16.msra.mxu0 %v9340
        %9406 = vmatprep.subr.bf16.mxu0 %v9343
        %9407 = vmatpush1.bf16.msra.mxu0 %v9342
        %9408 = vmatprep.subr.bf16.mxu0 %v9345
        %9409 = vmatpush1.bf16.msra.mxu0 %v9344
        %9410 = vmatprep.subr.bf16.mxu0 %v9347
        %9411 = vmatpush1.bf16.msra.mxu0 %v9346
        %9412 = vmatprep.subr.bf16.mxu0 %v9349
        %9413 = vmatpush1.bf16.msra.mxu0 %v9348
        %9414 = vmatprep.mubr.bf16.mxu0 %v9207
        %9415 = vmatmul.mubr.bf16.gmra.mrb[0].mxu0 %v9206
        %v9416 = vpop.f32.mrb[0].mxu0
        %v9417 = vadd.f32 0.0, %v9416
        %v9418 = vpop.f32.mrb[0].mxu0
        %v9419 = vadd.f32 0.0, %v9418
        %v9420 = vpop.f32.mrb[0].mxu0
        %v9421 = vadd.f32 0.0, %v9420
        %v9422 = vpop.f32.mrb[0].mxu0
        %v9423 = vadd.f32 0.0, %v9422
        %9424 = vmatprep.mubr.bf16.mxu0 %v9209
        %9425 = vmatmul.mubr.bf16.gmra.mrb[0].mxu0 %v9208
        %v9426 = vpop.f32.mrb[0].mxu0
        %v9427 = vadd.f32 0.0, %v9426
        %v9428 = vpop.f32.mrb[0].mxu0
        %v9429 = vadd.f32 0.0, %v9428
        %v9430 = vpop.f32.mrb[0].mxu0
        %v9431 = vadd.f32 0.0, %v9430
        %v9432 = vpop.f32.mrb[0].mxu0
        %v9433 = vadd.f32 0.0, %v9432
        %9434 = vmatprep.mubr.bf16.mxu0 %v9211
        %9435 = vmatmul.mubr.bf16.gmra.mrb[0].mxu0 %v9210
        %v9436 = vpop.f32.mrb[0].mxu0
        %v9437 = vadd.f32 0.0, %v9436
        %v9438 = vpop.f32.mrb[0].mxu0
        %v9439 = vadd.f32 0.0, %v9438
        %v9440 = vpop.f32.mrb[0].mxu0
        %v9441 = vadd.f32 0.0, %v9440
        %v9442 = vpop.f32.mrb[0].mxu0
        %v9443 = vadd.f32 0.0, %v9442
        %9444 = vmatprep.mubr.bf16.mxu0 %v9213
        %9445 = vmatmul.mubr.bf16.gmra.mrb[0].mxu0 %v9212
        %v9446 = vpop.f32.mrb[0].mxu0
        %v9447 = vadd.f32 0.0, %v9446
        %v9448 = vpop.f32.mrb[0].mxu0
        %v9449 = vadd.f32 0.0, %v9448
        %v9450 = vpop.f32.mrb[0].mxu0
        %v9451 = vadd.f32 0.0, %v9450
        %v9452 = vpop.f32.mrb[0].mxu0
        %v9453 = vadd.f32 0.0, %v9452
        %9454 = vdwg.mxu0
        %v9455 = vadd.f32 %v9125, %v9417
        %v9456 = vadd.f32 %v9126, %v9419
        %v9457 = vadd.f32 %v9127, %v9421
        %v9458 = vadd.f32 %v9128, %v9423
        %v9459 = vadd.f32 %v9129, %v9427
        %v9460 = vadd.f32 %v9130, %v9429
        %v9461 = vadd.f32 %v9131, %v9431
        %v9462 = vadd.f32 %v9132, %v9433
        %v9463 = vadd.f32 %v9133, %v9437
        %v9464 = vadd.f32 %v9134, %v9439
        %v9465 = vadd.f32 %v9135, %v9441
        %v9466 = vadd.f32 %v9136, %v9443
        %v9467 = vadd.f32 %v9137, %v9447
        %v9468 = vadd.f32 %v9138, %v9449
        %v9469 = vadd.f32 %v9139, %v9451
        %v9470 = vadd.f32 %v9140, %v9453
        %v9471 = vld [vmem:[%s7991] sm:$0xff]
        %v9472 = vld [vmem:[%s7991 + $0x8] sm:$0x11]
        %v9473 = vld [vmem:[%s7991 + $0x10] sm:$0xff]
        %v9474 = vld [vmem:[%s7991 + $0x18] sm:$0x11]
        %v9475 = vld [vmem:[%s7991 + $0x20] sm:$0xff]
        %v9476 = vld [vmem:[%s7991 + $0x28] sm:$0x11]
        %v9477 = vld [vmem:[%s7991 + $0x30] sm:$0xff]
        %v9478 = vld [vmem:[%s7991 + $0x38] sm:$0x11]
        %v9479 = vld [vmem:[%s7991 + $0x40] sm:$0xff]
        %v9480 = vld [vmem:[%s7991 + $0x48] sm:$0x11]
        %v9481 = vld [vmem:[%s7991 + $0x50] sm:$0xff]
        %v9482 = vld [vmem:[%s7991 + $0x58] sm:$0x11]
        %v9483 = vld [vmem:[%s7991 + $0x60] sm:$0xff]
        %v9484 = vld [vmem:[%s7991 + $0x68] sm:$0x11]
        %v9485 = vld [vmem:[%s7991 + $0x70] sm:$0xff]
        %v9486 = vld [vmem:[%s7991 + $0x78] sm:$0x11]
        %v9488 = vshrl.u32 %v9471, 16
        %v9490 = vrot.slane %v9488, 4
        %v9491 = vshll.u32 %v9471, 16
        %v9493 = vrot.slane %v9491, 5
        %v9494 = vor.u32 %v9490, %v9493
        %v9495 = vrot.slane %v9494, 4
        %v9497 = vshll.u32 %v9472, 16
        %v9499 = vrot.slane %v9497, 5
        %v9500 = vsel %vm1268, %v9495, %v9499
        %v9502 = vshrl.u32 %v9473, 16
        %v9504 = vrot.slane %v9502, 4
        %v9505 = vshll.u32 %v9473, 16
        %v9507 = vrot.slane %v9505, 5
        %v9508 = vor.u32 %v9504, %v9507
        %v9509 = vrot.slane %v9508, 4
        %v9511 = vshll.u32 %v9474, 16
        %v9513 = vrot.slane %v9511, 5
        %v9514 = vsel %vm1268, %v9509, %v9513
        %v9516 = vshrl.u32 %v9475, 16
        %v9518 = vrot.slane %v9516, 4
        %v9519 = vshll.u32 %v9475, 16
        %v9521 = vrot.slane %v9519, 5
        %v9522 = vor.u32 %v9518, %v9521
        %v9523 = vrot.slane %v9522, 4
        %v9525 = vshll.u32 %v9476, 16
        %v9527 = vrot.slane %v9525, 5
        %v9528 = vsel %vm1268, %v9523, %v9527
        %v9530 = vshrl.u32 %v9477, 16
        %v9532 = vrot.slane %v9530, 4
        %v9533 = vshll.u32 %v9477, 16
        %v9535 = vrot.slane %v9533, 5
        %v9536 = vor.u32 %v9532, %v9535
        %v9537 = vrot.slane %v9536, 4
        %v9539 = vshll.u32 %v9478, 16
        %v9541 = vrot.slane %v9539, 5
        %v9542 = vsel %vm1268, %v9537, %v9541
        %v9544 = vshrl.u32 %v9479, 16
        %v9546 = vrot.slane %v9544, 4
        %v9547 = vshll.u32 %v9479, 16
        %v9549 = vrot.slane %v9547, 5
        %v9550 = vor.u32 %v9546, %v9549
        %v9551 = vrot.slane %v9550, 4
        %v9553 = vshll.u32 %v9480, 16
        %v9555 = vrot.slane %v9553, 5
        %v9556 = vsel %vm1268, %v9551, %v9555
        %v9558 = vshrl.u32 %v9481, 16
        %v9560 = vrot.slane %v9558, 4
        %v9561 = vshll.u32 %v9481, 16
        %v9563 = vrot.slane %v9561, 5
        %v9564 = vor.u32 %v9560, %v9563
        %v9565 = vrot.slane %v9564, 4
        %v9567 = vshll.u32 %v9482, 16
        %v9569 = vrot.slane %v9567, 5
        %v9570 = vsel %vm1268, %v9565, %v9569
        %v9572 = vshrl.u32 %v9483, 16
        %v9574 = vrot.slane %v9572, 4
        %v9575 = vshll.u32 %v9483, 16
        %v9577 = vrot.slane %v9575, 5
        %v9578 = vor.u32 %v9574, %v9577
        %v9579 = vrot.slane %v9578, 4
        %v9581 = vshll.u32 %v9484, 16
        %v9583 = vrot.slane %v9581, 5
        %v9584 = vsel %vm1268, %v9579, %v9583
        %v9586 = vshrl.u32 %v9485, 16
        %v9588 = vrot.slane %v9586, 4
        %v9589 = vshll.u32 %v9485, 16
        %v9591 = vrot.slane %v9589, 5
        %v9592 = vor.u32 %v9588, %v9591
        %v9593 = vrot.slane %v9592, 4
        %v9595 = vshll.u32 %v9486, 16
        %v9597 = vrot.slane %v9595, 5
        %v9598 = vsel %vm1268, %v9593, %v9597
        %s9599 = scalar_lea.vmem [#allocation13], 1024
        %v9600 = vld [vmem:[%s9599] sm:$0xff]
        %v9601 = vld [vmem:[%s9599 + $0x8] sm:$0xff]
        %v9602 = vld [vmem:[%s9599 + $0x10] sm:$0xff]
        %v9603 = vld [vmem:[%s9599 + $0x18] sm:$0xff]
        %v9604 = vld [vmem:[%s9599 + $0x20] sm:$0xff]
        %v9605 = vld [vmem:[%s9599 + $0x28] sm:$0xff]
        %v9606 = vld [vmem:[%s9599 + $0x30] sm:$0xff]
        %v9607 = vld [vmem:[%s9599 + $0x38] sm:$0xff]
        %v9608 = vld [vmem:[%s9599 + $0x40] sm:$0xff]
        %v9609 = vld [vmem:[%s9599 + $0x48] sm:$0xff]
        %v9610 = vld [vmem:[%s9599 + $0x50] sm:$0xff]
        %v9611 = vld [vmem:[%s9599 + $0x58] sm:$0xff]
        %v9612 = vld [vmem:[%s9599 + $0x60] sm:$0xff]
        %v9613 = vld [vmem:[%s9599 + $0x68] sm:$0xff]
        %v9614 = vld [vmem:[%s9599 + $0x70] sm:$0xff]
        %v9615 = vld [vmem:[%s9599 + $0x78] sm:$0xff]
        %v9616 = vld [vmem:[%s9599 + $0x80] sm:$0xff]
        %v9617 = vld [vmem:[%s9599 + $0x88] sm:$0xff]
        %v9618 = vld [vmem:[%s9599 + $0x90] sm:$0xff]
        %v9619 = vld [vmem:[%s9599 + $0x98] sm:$0xff]
        %v9620 = vld [vmem:[%s9599 + $0xa0] sm:$0xff]
        %v9621 = vld [vmem:[%s9599 + $0xa8] sm:$0xff]
        %v9622 = vld [vmem:[%s9599 + $0xb0] sm:$0xff]
        %v9623 = vld [vmem:[%s9599 + $0xb8] sm:$0xff]
        %v9624 = vld [vmem:[%s9599 + $0xc0] sm:$0xff]
        %v9625 = vld [vmem:[%s9599 + $0xc8] sm:$0xff]
        %v9626 = vld [vmem:[%s9599 + $0xd0] sm:$0xff]
        %v9627 = vld [vmem:[%s9599 + $0xd8] sm:$0xff]
        %v9628 = vld [vmem:[%s9599 + $0xe0] sm:$0xff]
        %v9629 = vld [vmem:[%s9599 + $0xe8] sm:$0xff]
        %v9630 = vld [vmem:[%s9599 + $0xf0] sm:$0xff]
        %v9631 = vld [vmem:[%s9599 + $0xf8] sm:$0xff]
        %v9632 = vunpack.c.l.b16 %v9500
        %v9633 = vunpack.c.h.b16 %v9500
        %v9634 = vunpack.c.l.b16 %v9514
        %v9635 = vunpack.c.h.b16 %v9514
        %v9636 = vunpack.c.l.b16 %v9528
        %v9637 = vunpack.c.h.b16 %v9528
        %v9638 = vunpack.c.l.b16 %v9542
        %v9639 = vunpack.c.h.b16 %v9542
        %v9640 = vunpack.c.l.b16 %v9556
        %v9641 = vunpack.c.h.b16 %v9556
        %v9642 = vunpack.c.l.b16 %v9570
        %v9643 = vunpack.c.h.b16 %v9570
        %v9644 = vunpack.c.l.b16 %v9584
        %v9645 = vunpack.c.h.b16 %v9584
        %v9646 = vunpack.c.l.b16 %v9598
        %v9647 = vunpack.c.h.b16 %v9598
        %v9648 = vpack.c.b16 %v9634, %v9632
        %v9649 = vpack.c.b16 %v9635, %v9633
        %v9650 = vpack.c.b16 %v9638, %v9636
        %v9651 = vpack.c.b16 %v9639, %v9637
        %v9652 = vpack.c.b16 %v9642, %v9640
        %v9653 = vpack.c.b16 %v9643, %v9641
        %v9654 = vpack.c.b16 %v9646, %v9644
        %v9655 = vpack.c.b16 %v9647, %v9645
        %v9696 = vunpack.c.l.b16 %v9600
        %v9697 = vunpack.c.h.b16 %v9600
        %v9698 = vunpack.c.l.b16 %v9601
        %v9699 = vunpack.c.h.b16 %v9601
        %v9700 = vunpack.c.l.b16 %v9602
        %v9701 = vunpack.c.h.b16 %v9602
        %v9702 = vunpack.c.l.b16 %v9603
        %v9703 = vunpack.c.h.b16 %v9603
        %v9704 = vunpack.c.l.b16 %v9604
        %v9705 = vunpack.c.h.b16 %v9604
        %v9706 = vunpack.c.l.b16 %v9605
        %v9707 = vunpack.c.h.b16 %v9605
        %v9708 = vunpack.c.l.b16 %v9606
        %v9709 = vunpack.c.h.b16 %v9606
        %v9710 = vunpack.c.l.b16 %v9607
        %v9711 = vunpack.c.h.b16 %v9607
        %v9712 = vunpack.c.l.b16 %v9608
        %v9713 = vunpack.c.h.b16 %v9608
        %v9714 = vunpack.c.l.b16 %v9609
        %v9715 = vunpack.c.h.b16 %v9609
        %v9716 = vunpack.c.l.b16 %v9610
        %v9717 = vunpack.c.h.b16 %v9610
        %v9718 = vunpack.c.l.b16 %v9611
        %v9719 = vunpack.c.h.b16 %v9611
        %v9720 = vunpack.c.l.b16 %v9612
        %v9721 = vunpack.c.h.b16 %v9612
        %v9722 = vunpack.c.l.b16 %v9613
        %v9723 = vunpack.c.h.b16 %v9613
        %v9724 = vunpack.c.l.b16 %v9614
        %v9725 = vunpack.c.h.b16 %v9614
        %v9726 = vunpack.c.l.b16 %v9615
        %v9727 = vunpack.c.h.b16 %v9615
        %v9728 = vunpack.c.l.b16 %v9616
        %v9729 = vunpack.c.h.b16 %v9616
        %v9730 = vunpack.c.l.b16 %v9617
        %v9731 = vunpack.c.h.b16 %v9617
        %v9732 = vunpack.c.l.b16 %v9618
        %v9733 = vunpack.c.h.b16 %v9618
        %v9734 = vunpack.c.l.b16 %v9619
        %v9735 = vunpack.c.h.b16 %v9619
        %v9736 = vunpack.c.l.b16 %v9620
        %v9737 = vunpack.c.h.b16 %v9620
        %v9738 = vunpack.c.l.b16 %v9621
        %v9739 = vunpack.c.h.b16 %v9621
        %v9740 = vunpack.c.l.b16 %v9622
        %v9741 = vunpack.c.h.b16 %v9622
        %v9742 = vunpack.c.l.b16 %v9623
        %v9743 = vunpack.c.h.b16 %v9623
        %v9744 = vunpack.c.l.b16 %v9624
        %v9745 = vunpack.c.h.b16 %v9624
        %v9746 = vunpack.c.l.b16 %v9625
        %v9747 = vunpack.c.h.b16 %v9625
        %v9748 = vunpack.c.l.b16 %v9626
        %v9749 = vunpack.c.h.b16 %v9626
        %v9750 = vunpack.c.l.b16 %v9627
        %v9751 = vunpack.c.h.b16 %v9627
        %v9752 = vunpack.c.l.b16 %v9628
        %v9753 = vunpack.c.h.b16 %v9628
        %v9754 = vunpack.c.l.b16 %v9629
        %v9755 = vunpack.c.h.b16 %v9629
        %v9756 = vunpack.c.l.b16 %v9630
        %v9757 = vunpack.c.h.b16 %v9630
        %v9758 = vunpack.c.l.b16 %v9631
        %v9759 = vunpack.c.h.b16 %v9631
        %v9760 = vpack.c.b16 %v9698, %v9696
        %v9761 = vpack.c.b16 %v9699, %v9697
        %v9762 = vpack.c.b16 %v9702, %v9700
        %v9763 = vpack.c.b16 %v9703, %v9701
        %v9764 = vpack.c.b16 %v9706, %v9704
        %v9765 = vpack.c.b16 %v9707, %v9705
        %v9766 = vpack.c.b16 %v9710, %v9708
        %v9767 = vpack.c.b16 %v9711, %v9709
        %v9768 = vpack.c.b16 %v9714, %v9712
        %v9769 = vpack.c.b16 %v9715, %v9713
        %v9770 = vpack.c.b16 %v9718, %v9716
        %v9771 = vpack.c.b16 %v9719, %v9717
        %v9772 = vpack.c.b16 %v9722, %v9720
        %v9773 = vpack.c.b16 %v9723, %v9721
        %v9774 = vpack.c.b16 %v9726, %v9724
        %v9775 = vpack.c.b16 %v9727, %v9725
        %v9776 = vpack.c.b16 %v9730, %v9728
        %v9777 = vpack.c.b16 %v9731, %v9729
        %v9778 = vpack.c.b16 %v9734, %v9732
        %v9779 = vpack.c.b16 %v9735, %v9733
        %v9780 = vpack.c.b16 %v9738, %v9736
        %v9781 = vpack.c.b16 %v9739, %v9737
        %v9782 = vpack.c.b16 %v9742, %v9740
        %v9783 = vpack.c.b16 %v9743, %v9741
        %v9784 = vpack.c.b16 %v9746, %v9744
        %v9785 = vpack.c.b16 %v9747, %v9745
        %v9786 = vpack.c.b16 %v9750, %v9748
        %v9787 = vpack.c.b16 %v9751, %v9749
        %v9788 = vpack.c.b16 %v9754, %v9752
        %v9789 = vpack.c.b16 %v9755, %v9753
        %v9790 = vpack.c.b16 %v9758, %v9756
        %v9791 = vpack.c.b16 %v9759, %v9757
        %9824 = vmatprep.subr.bf16.mxu0 %v9761
        %9825 = vmatpush1.bf16.msra.mxu0 %v9760
        %9826 = vmatprep.subr.bf16.mxu0 %v9763
        %9827 = vmatpush1.bf16.msra.mxu0 %v9762
        %9828 = vmatprep.subr.bf16.mxu0 %v9765
        %9829 = vmatpush1.bf16.msra.mxu0 %v9764
        %9830 = vmatprep.subr.bf16.mxu0 %v9767
        %9831 = vmatpush1.bf16.msra.mxu0 %v9766
        %9832 = vmatprep.subr.bf16.mxu0 %v9769
        %9833 = vmatpush1.bf16.msra.mxu0 %v9768
        %9834 = vmatprep.subr.bf16.mxu0 %v9771
        %9835 = vmatpush1.bf16.msra.mxu0 %v9770
        %9836 = vmatprep.subr.bf16.mxu0 %v9773
        %9837 = vmatpush1.bf16.msra.mxu0 %v9772
        %9838 = vmatprep.subr.bf16.mxu0 %v9775
        %9839 = vmatpush1.bf16.msra.mxu0 %v9774
        %9840 = vmatprep.subr.bf16.mxu0 %v9777
        %9841 = vmatpush1.bf16.msra.mxu0 %v9776
        %9842 = vmatprep.subr.bf16.mxu0 %v9779
        %9843 = vmatpush1.bf16.msra.mxu0 %v9778
        %9844 = vmatprep.subr.bf16.mxu0 %v9781
        %9845 = vmatpush1.bf16.msra.mxu0 %v9780
        %9846 = vmatprep.subr.bf16.mxu0 %v9783
        %9847 = vmatpush1.bf16.msra.mxu0 %v9782
        %9848 = vmatprep.subr.bf16.mxu0 %v9785
        %9849 = vmatpush1.bf16.msra.mxu0 %v9784
        %9850 = vmatprep.subr.bf16.mxu0 %v9787
        %9851 = vmatpush1.bf16.msra.mxu0 %v9786
        %9852 = vmatprep.subr.bf16.mxu0 %v9789
        %9853 = vmatpush1.bf16.msra.mxu0 %v9788
        %9854 = vmatprep.subr.bf16.mxu0 %v9791
        %9855 = vmatpush1.bf16.msra.mxu0 %v9790
        %9856 = vmatprep.mubr.bf16.mxu0 %v9649
        %9857 = vmatmul.mubr.bf16.gmra.mrb[0].mxu0 %v9648
        %v9858 = vpop.f32.mrb[0].mxu0
        %v9859 = vadd.f32 0.0, %v9858
        %v9860 = vpop.f32.mrb[0].mxu0
        %v9861 = vadd.f32 0.0, %v9860
        %v9862 = vpop.f32.mrb[0].mxu0
        %v9863 = vadd.f32 0.0, %v9862
        %v9864 = vpop.f32.mrb[0].mxu0
        %v9865 = vadd.f32 0.0, %v9864
        %9866 = vmatprep.mubr.bf16.mxu0 %v9651
        %9867 = vmatmul.mubr.bf16.gmra.mrb[0].mxu0 %v9650
        %v9868 = vpop.f32.mrb[0].mxu0
        %v9869 = vadd.f32 0.0, %v9868
        %v9870 = vpop.f32.mrb[0].mxu0
        %v9871 = vadd.f32 0.0, %v9870
        %v9872 = vpop.f32.mrb[0].mxu0
        %v9873 = vadd.f32 0.0, %v9872
        %v9874 = vpop.f32.mrb[0].mxu0
        %v9875 = vadd.f32 0.0, %v9874
        %9876 = vmatprep.mubr.bf16.mxu0 %v9653
        %9877 = vmatmul.mubr.bf16.gmra.mrb[0].mxu0 %v9652
        %v9878 = vpop.f32.mrb[0].mxu0
        %v9879 = vadd.f32 0.0, %v9878
        %v9880 = vpop.f32.mrb[0].mxu0
        %v9881 = vadd.f32 0.0, %v9880
        %v9882 = vpop.f32.mrb[0].mxu0
        %v9883 = vadd.f32 0.0, %v9882
        %v9884 = vpop.f32.mrb[0].mxu0
        %v9885 = vadd.f32 0.0, %v9884
        %9886 = vmatprep.mubr.bf16.mxu0 %v9655
        %9887 = vmatmul.mubr.bf16.gmra.mrb[0].mxu0 %v9654
        %v9888 = vpop.f32.mrb[0].mxu0
        %v9889 = vadd.f32 0.0, %v9888
        %v9890 = vpop.f32.mrb[0].mxu0
        %v9891 = vadd.f32 0.0, %v9890
        %v9892 = vpop.f32.mrb[0].mxu0
        %v9893 = vadd.f32 0.0, %v9892
        %v9894 = vpop.f32.mrb[0].mxu0
        %v9895 = vadd.f32 0.0, %v9894
        %9896 = vdwg.mxu0
        %v9897 = vadd.f32 %v9455, %v9859
        %v9898 = vadd.f32 %v9456, %v9861
        %v9899 = vadd.f32 %v9457, %v9863
        %v9900 = vadd.f32 %v9458, %v9865
        %v9901 = vadd.f32 %v9459, %v9869
        %v9902 = vadd.f32 %v9460, %v9871
        %v9903 = vadd.f32 %v9461, %v9873
        %v9904 = vadd.f32 %v9462, %v9875
        %v9905 = vadd.f32 %v9463, %v9879
        %v9906 = vadd.f32 %v9464, %v9881
        %v9907 = vadd.f32 %v9465, %v9883
        %v9908 = vadd.f32 %v9466, %v9885
        %v9909 = vadd.f32 %v9467, %v9889
        %v9910 = vadd.f32 %v9468, %v9891
        %v9911 = vadd.f32 %v9469, %v9893
        %v9912 = vadd.f32 %v9470, %v9895
        %v9913 = vld [vmem:[%s7991] sm:$0xee]
        %v9914 = vld [vmem:[%s7991 + $0x10] sm:$0xee]
        %v9915 = vld [vmem:[%s7991 + $0x20] sm:$0xee]
        %v9916 = vld [vmem:[%s7991 + $0x30] sm:$0xee]
        %v9917 = vld [vmem:[%s7991 + $0x40] sm:$0xee]
        %v9918 = vld [vmem:[%s7991 + $0x50] sm:$0xee]
        %v9919 = vld [vmem:[%s7991 + $0x60] sm:$0xee]
        %v9920 = vld [vmem:[%s7991 + $0x70] sm:$0xee]
        %v9937 = vrot.slane %v9913, 5
        %v9938 = vrot.slane %v9937, 4
        %v9939 = vrot.slane %v9472, 5
        %v9940 = vsel %vm2684, %v9938, %v9939
        %v9941 = vrot.slane %v9914, 5
        %v9942 = vrot.slane %v9941, 4
        %v9943 = vrot.slane %v9474, 5
        %v9944 = vsel %vm2684, %v9942, %v9943
        %v9945 = vrot.slane %v9915, 5
        %v9946 = vrot.slane %v9945, 4
        %v9947 = vrot.slane %v9476, 5
        %v9948 = vsel %vm2684, %v9946, %v9947
        %v9949 = vrot.slane %v9916, 5
        %v9950 = vrot.slane %v9949, 4
        %v9951 = vrot.slane %v9478, 5
        %v9952 = vsel %vm2684, %v9950, %v9951
        %v9953 = vrot.slane %v9917, 5
        %v9954 = vrot.slane %v9953, 4
        %v9955 = vrot.slane %v9480, 5
        %v9956 = vsel %vm2684, %v9954, %v9955
        %v9957 = vrot.slane %v9918, 5
        %v9958 = vrot.slane %v9957, 4
        %v9959 = vrot.slane %v9482, 5
        %v9960 = vsel %vm2684, %v9958, %v9959
        %v9961 = vrot.slane %v9919, 5
        %v9962 = vrot.slane %v9961, 4
        %v9963 = vrot.slane %v9484, 5
        %v9964 = vsel %vm2684, %v9962, %v9963
        %v9965 = vrot.slane %v9920, 5
        %v9966 = vrot.slane %v9965, 4
        %v9967 = vrot.slane %v9486, 5
        %v9968 = vsel %vm2684, %v9966, %v9967
        %s9969 = scalar_lea.vmem [#allocation13], 1280
        %v9970 = vld [vmem:[%s9969] sm:$0xff]
        %v9971 = vld [vmem:[%s9969 + $0x8] sm:$0xff]
        %v9972 = vld [vmem:[%s9969 + $0x10] sm:$0xff]
        %v9973 = vld [vmem:[%s9969 + $0x18] sm:$0xff]
        %v9974 = vld [vmem:[%s9969 + $0x20] sm:$0xff]
        %v9975 = vld [vmem:[%s9969 + $0x28] sm:$0xff]
        %v9976 = vld [vmem:[%s9969 + $0x30] sm:$0xff]
        %v9977 = vld [vmem:[%s9969 + $0x38] sm:$0xff]
        %v9978 = vld [vmem:[%s9969 + $0x40] sm:$0xff]
        %v9979 = vld [vmem:[%s9969 + $0x48] sm:$0xff]
        %v9980 = vld [vmem:[%s9969 + $0x50] sm:$0xff]
        %v9981 = vld [vmem:[%s9969 + $0x58] sm:$0xff]
        %v9982 = vld [vmem:[%s9969 + $0x60] sm:$0xff]
        %v9983 = vld [vmem:[%s9969 + $0x68] sm:$0xff]
        %v9984 = vld [vmem:[%s9969 + $0x70] sm:$0xff]
        %v9985 = vld [vmem:[%s9969 + $0x78] sm:$0xff]
        %v9986 = vld [vmem:[%s9969 + $0x80] sm:$0xff]
        %v9987 = vld [vmem:[%s9969 + $0x88] sm:$0xff]
        %v9988 = vld [vmem:[%s9969 + $0x90] sm:$0xff]
        %v9989 = vld [vmem:[%s9969 + $0x98] sm:$0xff]
        %v9990 = vld [vmem:[%s9969 + $0xa0] sm:$0xff]
        %v9991 = vld [vmem:[%s9969 + $0xa8] sm:$0xff]
        %v9992 = vld [vmem:[%s9969 + $0xb0] sm:$0xff]
        %v9993 = vld [vmem:[%s9969 + $0xb8] sm:$0xff]
        %v9994 = vld [vmem:[%s9969 + $0xc0] sm:$0xff]
        %v9995 = vld [vmem:[%s9969 + $0xc8] sm:$0xff]
        %v9996 = vld [vmem:[%s9969 + $0xd0] sm:$0xff]
        %v9997 = vld [vmem:[%s9969 + $0xd8] sm:$0xff]
        %v9998 = vld [vmem:[%s9969 + $0xe0] sm:$0xff]
        %v9999 = vld [vmem:[%s9969 + $0xe8] sm:$0xff]
        %v10000 = vld [vmem:[%s9969 + $0xf0] sm:$0xff]
        %v10001 = vld [vmem:[%s9969 + $0xf8] sm:$0xff]
        %v10002 = vunpack.c.l.b16 %v9940
        %v10003 = vunpack.c.h.b16 %v9940
        %v10004 = vunpack.c.l.b16 %v9944
        %v10005 = vunpack.c.h.b16 %v9944
        %v10006 = vunpack.c.l.b16 %v9948
        %v10007 = vunpack.c.h.b16 %v9948
        %v10008 = vunpack.c.l.b16 %v9952
        %v10009 = vunpack.c.h.b16 %v9952
        %v10010 = vunpack.c.l.b16 %v9956
        %v10011 = vunpack.c.h.b16 %v9956
        %v10012 = vunpack.c.l.b16 %v9960
        %v10013 = vunpack.c.h.b16 %v9960
        %v10014 = vunpack.c.l.b16 %v9964
        %v10015 = vunpack.c.h.b16 %v9964
        %v10016 = vunpack.c.l.b16 %v9968
        %v10017 = vunpack.c.h.b16 %v9968
        %v10018 = vpack.c.b16 %v10004, %v10002
        %v10019 = vpack.c.b16 %v10005, %v10003
        %v10020 = vpack.c.b16 %v10008, %v10006
        %v10021 = vpack.c.b16 %v10009, %v10007
        %v10022 = vpack.c.b16 %v10012, %v10010
        %v10023 = vpack.c.b16 %v10013, %v10011
        %v10024 = vpack.c.b16 %v10016, %v10014
        %v10025 = vpack.c.b16 %v10017, %v10015
        %v10066 = vunpack.c.l.b16 %v9970
        %v10067 = vunpack.c.h.b16 %v9970
        %v10068 = vunpack.c.l.b16 %v9971
        %v10069 = vunpack.c.h.b16 %v9971
        %v10070 = vunpack.c.l.b16 %v9972
        %v10071 = vunpack.c.h.b16 %v9972
        %v10072 = vunpack.c.l.b16 %v9973
        %v10073 = vunpack.c.h.b16 %v9973
        %v10074 = vunpack.c.l.b16 %v9974
        %v10075 = vunpack.c.h.b16 %v9974
        %v10076 = vunpack.c.l.b16 %v9975
        %v10077 = vunpack.c.h.b16 %v9975
        %v10078 = vunpack.c.l.b16 %v9976
        %v10079 = vunpack.c.h.b16 %v9976
        %v10080 = vunpack.c.l.b16 %v9977
        %v10081 = vunpack.c.h.b16 %v9977
        %v10082 = vunpack.c.l.b16 %v9978
        %v10083 = vunpack.c.h.b16 %v9978
        %v10084 = vunpack.c.l.b16 %v9979
        %v10085 = vunpack.c.h.b16 %v9979
        %v10086 = vunpack.c.l.b16 %v9980
        %v10087 = vunpack.c.h.b16 %v9980
        %v10088 = vunpack.c.l.b16 %v9981
        %v10089 = vunpack.c.h.b16 %v9981
        %v10090 = vunpack.c.l.b16 %v9982
        %v10091 = vunpack.c.h.b16 %v9982
        %v10092 = vunpack.c.l.b16 %v9983
        %v10093 = vunpack.c.h.b16 %v9983
        %v10094 = vunpack.c.l.b16 %v9984
        %v10095 = vunpack.c.h.b16 %v9984
        %v10096 = vunpack.c.l.b16 %v9985
        %v10097 = vunpack.c.h.b16 %v9985
        %v10098 = vunpack.c.l.b16 %v9986
        %v10099 = vunpack.c.h.b16 %v9986
        %v10100 = vunpack.c.l.b16 %v9987
        %v10101 = vunpack.c.h.b16 %v9987
        %v10102 = vunpack.c.l.b16 %v9988
        %v10103 = vunpack.c.h.b16 %v9988
        %v10104 = vunpack.c.l.b16 %v9989
        %v10105 = vunpack.c.h.b16 %v9989
        %v10106 = vunpack.c.l.b16 %v9990
        %v10107 = vunpack.c.h.b16 %v9990
        %v10108 = vunpack.c.l.b16 %v9991
        %v10109 = vunpack.c.h.b16 %v9991
        %v10110 = vunpack.c.l.b16 %v9992
        %v10111 = vunpack.c.h.b16 %v9992
        %v10112 = vunpack.c.l.b16 %v9993
        %v10113 = vunpack.c.h.b16 %v9993
        %v10114 = vunpack.c.l.b16 %v9994
        %v10115 = vunpack.c.h.b16 %v9994
        %v10116 = vunpack.c.l.b16 %v9995
        %v10117 = vunpack.c.h.b16 %v9995
        %v10118 = vunpack.c.l.b16 %v9996
        %v10119 = vunpack.c.h.b16 %v9996
        %v10120 = vunpack.c.l.b16 %v9997
        %v10121 = vunpack.c.h.b16 %v9997
        %v10122 = vunpack.c.l.b16 %v9998
        %v10123 = vunpack.c.h.b16 %v9998
        %v10124 = vunpack.c.l.b16 %v9999
        %v10125 = vunpack.c.h.b16 %v9999
        %v10126 = vunpack.c.l.b16 %v10000
        %v10127 = vunpack.c.h.b16 %v10000
        %v10128 = vunpack.c.l.b16 %v10001
        %v10129 = vunpack.c.h.b16 %v10001
        %v10130 = vpack.c.b16 %v10068, %v10066
        %v10131 = vpack.c.b16 %v10069, %v10067
        %v10132 = vpack.c.b16 %v10072, %v10070
        %v10133 = vpack.c.b16 %v10073, %v10071
        %v10134 = vpack.c.b16 %v10076, %v10074
        %v10135 = vpack.c.b16 %v10077, %v10075
        %v10136 = vpack.c.b16 %v10080, %v10078
        %v10137 = vpack.c.b16 %v10081, %v10079
        %v10138 = vpack.c.b16 %v10084, %v10082
        %v10139 = vpack.c.b16 %v10085, %v10083
        %v10140 = vpack.c.b16 %v10088, %v10086
        %v10141 = vpack.c.b16 %v10089, %v10087
        %v10142 = vpack.c.b16 %v10092, %v10090
        %v10143 = vpack.c.b16 %v10093, %v10091
        %v10144 = vpack.c.b16 %v10096, %v10094
        %v10145 = vpack.c.b16 %v10097, %v10095
        %v10146 = vpack.c.b16 %v10100, %v10098
        %v10147 = vpack.c.b16 %v10101, %v10099
        %v10148 = vpack.c.b16 %v10104, %v10102
        %v10149 = vpack.c.b16 %v10105, %v10103
        %v10150 = vpack.c.b16 %v10108, %v10106
        %v10151 = vpack.c.b16 %v10109, %v10107
        %v10152 = vpack.c.b16 %v10112, %v10110
        %v10153 = vpack.c.b16 %v10113, %v10111
        %v10154 = vpack.c.b16 %v10116, %v10114
        %v10155 = vpack.c.b16 %v10117, %v10115
        %v10156 = vpack.c.b16 %v10120, %v10118
        %v10157 = vpack.c.b16 %v10121, %v10119
        %v10158 = vpack.c.b16 %v10124, %v10122
        %v10159 = vpack.c.b16 %v10125, %v10123
        %v10160 = vpack.c.b16 %v10128, %v10126
        %v10161 = vpack.c.b16 %v10129, %v10127
        %10194 = vmatprep.subr.bf16.mxu0 %v10131
        %10195 = vmatpush1.bf16.msra.mxu0 %v10130
        %10196 = vmatprep.subr.bf16.mxu0 %v10133
        %10197 = vmatpush1.bf16.msra.mxu0 %v10132
        %10198 = vmatprep.subr.bf16.mxu0 %v10135
        %10199 = vmatpush1.bf16.msra.mxu0 %v10134
        %10200 = vmatprep.subr.bf16.mxu0 %v10137
        %10201 = vmatpush1.bf16.msra.mxu0 %v10136
        %10202 = vmatprep.subr.bf16.mxu0 %v10139
        %10203 = vmatpush1.bf16.msra.mxu0 %v10138
        %10204 = vmatprep.subr.bf16.mxu0 %v10141
        %10205 = vmatpush1.bf16.msra.mxu0 %v10140
        %10206 = vmatprep.subr.bf16.mxu0 %v10143
        %10207 = vmatpush1.bf16.msra.mxu0 %v10142
        %10208 = vmatprep.subr.bf16.mxu0 %v10145
        %10209 = vmatpush1.bf16.msra.mxu0 %v10144
        %10210 = vmatprep.subr.bf16.mxu0 %v10147
        %10211 = vmatpush1.bf16.msra.mxu0 %v10146
        %10212 = vmatprep.subr.bf16.mxu0 %v10149
        %10213 = vmatpush1.bf16.msra.mxu0 %v10148
        %10214 = vmatprep.subr.bf16.mxu0 %v10151
        %10215 = vmatpush1.bf16.msra.mxu0 %v10150
        %10216 = vmatprep.subr.bf16.mxu0 %v10153
        %10217 = vmatpush1.bf16.msra.mxu0 %v10152
        %10218 = vmatprep.subr.bf16.mxu0 %v10155
        %10219 = vmatpush1.bf16.msra.mxu0 %v10154
        %10220 = vmatprep.subr.bf16.mxu0 %v10157
        %10221 = vmatpush1.bf16.msra.mxu0 %v10156
        %10222 = vmatprep.subr.bf16.mxu0 %v10159
        %10223 = vmatpush1.bf16.msra.mxu0 %v10158
        %10224 = vmatprep.subr.bf16.mxu0 %v10161
        %10225 = vmatpush1.bf16.msra.mxu0 %v10160
        %10226 = vmatprep.mubr.bf16.mxu0 %v10019
        %10227 = vmatmul.mubr.bf16.gmra.mrb[0].mxu0 %v10018
        %v10228 = vpop.f32.mrb[0].mxu0
        %v10229 = vadd.f32 0.0, %v10228
        %v10230 = vpop.f32.mrb[0].mxu0
        %v10231 = vadd.f32 0.0, %v10230
        %v10232 = vpop.f32.mrb[0].mxu0
        %v10233 = vadd.f32 0.0, %v10232
        %v10234 = vpop.f32.mrb[0].mxu0
        %v10235 = vadd.f32 0.0, %v10234
        %10236 = vmatprep.mubr.bf16.mxu0 %v10021
        %10237 = vmatmul.mubr.bf16.gmra.mrb[0].mxu0 %v10020
        %v10238 = vpop.f32.mrb[0].mxu0
        %v10239 = vadd.f32 0.0, %v10238
        %v10240 = vpop.f32.mrb[0].mxu0
        %v10241 = vadd.f32 0.0, %v10240
        %v10242 = vpop.f32.mrb[0].mxu0
        %v10243 = vadd.f32 0.0, %v10242
        %v10244 = vpop.f32.mrb[0].mxu0
        %v10245 = vadd.f32 0.0, %v10244
        %10246 = vmatprep.mubr.bf16.mxu0 %v10023
        %10247 = vmatmul.mubr.bf16.gmra.mrb[0].mxu0 %v10022
        %v10248 = vpop.f32.mrb[0].mxu0
        %v10249 = vadd.f32 0.0, %v10248
        %v10250 = vpop.f32.mrb[0].mxu0
        %v10251 = vadd.f32 0.0, %v10250
        %v10252 = vpop.f32.mrb[0].mxu0
        %v10253 = vadd.f32 0.0, %v10252
        %v10254 = vpop.f32.mrb[0].mxu0
        %v10255 = vadd.f32 0.0, %v10254
        %10256 = vmatprep.mubr.bf16.mxu0 %v10025
        %10257 = vmatmul.mubr.bf16.gmra.mrb[0].mxu0 %v10024
        %v10258 = vpop.f32.mrb[0].mxu0
        %v10259 = vadd.f32 0.0, %v10258
        %v10260 = vpop.f32.mrb[0].mxu0
        %v10261 = vadd.f32 0.0, %v10260
        %v10262 = vpop.f32.mrb[0].mxu0
        %v10263 = vadd.f32 0.0, %v10262
        %v10264 = vpop.f32.mrb[0].mxu0
        %v10265 = vadd.f32 0.0, %v10264
        %10266 = vdwg.mxu0
        %v10267 = vadd.f32 %v9897, %v10229
        %v10268 = vadd.f32 %v9898, %v10231
        %v10269 = vadd.f32 %v9899, %v10233
        %v10270 = vadd.f32 %v9900, %v10235
        %v10271 = vadd.f32 %v9901, %v10239
        %v10272 = vadd.f32 %v9902, %v10241
        %v10273 = vadd.f32 %v9903, %v10243
        %v10274 = vadd.f32 %v9904, %v10245
        %v10275 = vadd.f32 %v9905, %v10249
        %v10276 = vadd.f32 %v9906, %v10251
        %v10277 = vadd.f32 %v9907, %v10253
        %v10278 = vadd.f32 %v9908, %v10255
        %v10279 = vadd.f32 %v9909, %v10259
        %v10280 = vadd.f32 %v9910, %v10261
        %v10281 = vadd.f32 %v9911, %v10263
        %v10282 = vadd.f32 %v9912, %v10265
        %s10283 = scalar_lea.vmem [#allocation3], 32
        %v10284 = vld [vmem:[%s10283] sm:$0xff]
        %v10285 = vld [vmem:[%s10283 + $0x10] sm:$0xff]
        %v10286 = vld [vmem:[%s10283 + $0x20] sm:$0xff]
        %v10287 = vld [vmem:[%s10283 + $0x30] sm:$0xff]
        %v10288 = vld [vmem:[%s10283 + $0x40] sm:$0xff]
        %v10289 = vld [vmem:[%s10283 + $0x50] sm:$0xff]
        %v10290 = vld [vmem:[%s10283 + $0x60] sm:$0xff]
        %v10291 = vld [vmem:[%s10283 + $0x70] sm:$0xff]
        %s10292 = scalar_lea.vmem [#allocation13], 1536
        %v10293 = vld [vmem:[%s10292] sm:$0xff]
        %v10294 = vld [vmem:[%s10292 + $0x8] sm:$0xff]
        %v10295 = vld [vmem:[%s10292 + $0x10] sm:$0xff]
        %v10296 = vld [vmem:[%s10292 + $0x18] sm:$0xff]
        %v10297 = vld [vmem:[%s10292 + $0x20] sm:$0xff]
        %v10298 = vld [vmem:[%s10292 + $0x28] sm:$0xff]
        %v10299 = vld [vmem:[%s10292 + $0x30] sm:$0xff]
        %v10300 = vld [vmem:[%s10292 + $0x38] sm:$0xff]
        %v10301 = vld [vmem:[%s10292 + $0x40] sm:$0xff]
        %v10302 = vld [vmem:[%s10292 + $0x48] sm:$0xff]
        %v10303 = vld [vmem:[%s10292 + $0x50] sm:$0xff]
        %v10304 = vld [vmem:[%s10292 + $0x58] sm:$0xff]
        %v10305 = vld [vmem:[%s10292 + $0x60] sm:$0xff]
        %v10306 = vld [vmem:[%s10292 + $0x68] sm:$0xff]
        %v10307 = vld [vmem:[%s10292 + $0x70] sm:$0xff]
        %v10308 = vld [vmem:[%s10292 + $0x78] sm:$0xff]
        %v10309 = vld [vmem:[%s10292 + $0x80] sm:$0xff]
        %v10310 = vld [vmem:[%s10292 + $0x88] sm:$0xff]
        %v10311 = vld [vmem:[%s10292 + $0x90] sm:$0xff]
        %v10312 = vld [vmem:[%s10292 + $0x98] sm:$0xff]
        %v10313 = vld [vmem:[%s10292 + $0xa0] sm:$0xff]
        %v10314 = vld [vmem:[%s10292 + $0xa8] sm:$0xff]
        %v10315 = vld [vmem:[%s10292 + $0xb0] sm:$0xff]
        %v10316 = vld [vmem:[%s10292 + $0xb8] sm:$0xff]
        %v10317 = vld [vmem:[%s10292 + $0xc0] sm:$0xff]
        %v10318 = vld [vmem:[%s10292 + $0xc8] sm:$0xff]
        %v10319 = vld [vmem:[%s10292 + $0xd0] sm:$0xff]
        %v10320 = vld [vmem:[%s10292 + $0xd8] sm:$0xff]
        %v10321 = vld [vmem:[%s10292 + $0xe0] sm:$0xff]
        %v10322 = vld [vmem:[%s10292 + $0xe8] sm:$0xff]
        %v10323 = vld [vmem:[%s10292 + $0xf0] sm:$0xff]
        %v10324 = vld [vmem:[%s10292 + $0xf8] sm:$0xff]
        %v10333 = vunpack.c.l.b16 %v10284
        %v10334 = vunpack.c.h.b16 %v10284
        %v10335 = vunpack.c.l.b16 %v10285
        %v10336 = vunpack.c.h.b16 %v10285
        %v10337 = vunpack.c.l.b16 %v10286
        %v10338 = vunpack.c.h.b16 %v10286
        %v10339 = vunpack.c.l.b16 %v10287
        %v10340 = vunpack.c.h.b16 %v10287
        %v10341 = vunpack.c.l.b16 %v10288
        %v10342 = vunpack.c.h.b16 %v10288
        %v10343 = vunpack.c.l.b16 %v10289
        %v10344 = vunpack.c.h.b16 %v10289
        %v10345 = vunpack.c.l.b16 %v10290
        %v10346 = vunpack.c.h.b16 %v10290
        %v10347 = vunpack.c.l.b16 %v10291
        %v10348 = vunpack.c.h.b16 %v10291
        %v10349 = vpack.c.b16 %v10335, %v10333
        %v10350 = vpack.c.b16 %v10336, %v10334
        %v10351 = vpack.c.b16 %v10339, %v10337
        %v10352 = vpack.c.b16 %v10340, %v10338
        %v10353 = vpack.c.b16 %v10343, %v10341
        %v10354 = vpack.c.b16 %v10344, %v10342
        %v10355 = vpack.c.b16 %v10347, %v10345
        %v10356 = vpack.c.b16 %v10348, %v10346
        %v10397 = vunpack.c.l.b16 %v10293
        %v10398 = vunpack.c.h.b16 %v10293
        %v10399 = vunpack.c.l.b16 %v10294
        %v10400 = vunpack.c.h.b16 %v10294
        %v10401 = vunpack.c.l.b16 %v10295
        %v10402 = vunpack.c.h.b16 %v10295
        %v10403 = vunpack.c.l.b16 %v10296
        %v10404 = vunpack.c.h.b16 %v10296
        %v10405 = vunpack.c.l.b16 %v10297
        %v10406 = vunpack.c.h.b16 %v10297
        %v10407 = vunpack.c.l.b16 %v10298
        %v10408 = vunpack.c.h.b16 %v10298
        %v10409 = vunpack.c.l.b16 %v10299
        %v10410 = vunpack.c.h.b16 %v10299
        %v10411 = vunpack.c.l.b16 %v10300
        %v10412 = vunpack.c.h.b16 %v10300
        %v10413 = vunpack.c.l.b16 %v10301
        %v10414 = vunpack.c.h.b16 %v10301
        %v10415 = vunpack.c.l.b16 %v10302
        %v10416 = vunpack.c.h.b16 %v10302
        %v10417 = vunpack.c.l.b16 %v10303
        %v10418 = vunpack.c.h.b16 %v10303
        %v10419 = vunpack.c.l.b16 %v10304
        %v10420 = vunpack.c.h.b16 %v10304
        %v10421 = vunpack.c.l.b16 %v10305
        %v10422 = vunpack.c.h.b16 %v10305
        %v10423 = vunpack.c.l.b16 %v10306
        %v10424 = vunpack.c.h.b16 %v10306
        %v10425 = vunpack.c.l.b16 %v10307
        %v10426 = vunpack.c.h.b16 %v10307
        %v10427 = vunpack.c.l.b16 %v10308
        %v10428 = vunpack.c.h.b16 %v10308
        %v10429 = vunpack.c.l.b16 %v10309
        %v10430 = vunpack.c.h.b16 %v10309
        %v10431 = vunpack.c.l.b16 %v10310
        %v10432 = vunpack.c.h.b16 %v10310
        %v10433 = vunpack.c.l.b16 %v10311
        %v10434 = vunpack.c.h.b16 %v10311
        %v10435 = vunpack.c.l.b16 %v10312
        %v10436 = vunpack.c.h.b16 %v10312
        %v10437 = vunpack.c.l.b16 %v10313
        %v10438 = vunpack.c.h.b16 %v10313
        %v10439 = vunpack.c.l.b16 %v10314
        %v10440 = vunpack.c.h.b16 %v10314
        %v10441 = vunpack.c.l.b16 %v10315
        %v10442 = vunpack.c.h.b16 %v10315
        %v10443 = vunpack.c.l.b16 %v10316
        %v10444 = vunpack.c.h.b16 %v10316
        %v10445 = vunpack.c.l.b16 %v10317
        %v10446 = vunpack.c.h.b16 %v10317
        %v10447 = vunpack.c.l.b16 %v10318
        %v10448 = vunpack.c.h.b16 %v10318
        %v10449 = vunpack.c.l.b16 %v10319
        %v10450 = vunpack.c.h.b16 %v10319
        %v10451 = vunpack.c.l.b16 %v10320
        %v10452 = vunpack.c.h.b16 %v10320
        %v10453 = vunpack.c.l.b16 %v10321
        %v10454 = vunpack.c.h.b16 %v10321
        %v10455 = vunpack.c.l.b16 %v10322
        %v10456 = vunpack.c.h.b16 %v10322
        %v10457 = vunpack.c.l.b16 %v10323
        %v10458 = vunpack.c.h.b16 %v10323
        %v10459 = vunpack.c.l.b16 %v10324
        %v10460 = vunpack.c.h.b16 %v10324
        %v10461 = vpack.c.b16 %v10399, %v10397
        %v10462 = vpack.c.b16 %v10400, %v10398
        %v10463 = vpack.c.b16 %v10403, %v10401
        %v10464 = vpack.c.b16 %v10404, %v10402
        %v10465 = vpack.c.b16 %v10407, %v10405
        %v10466 = vpack.c.b16 %v10408, %v10406
        %v10467 = vpack.c.b16 %v10411, %v10409
        %v10468 = vpack.c.b16 %v10412, %v10410
        %v10469 = vpack.c.b16 %v10415, %v10413
        %v10470 = vpack.c.b16 %v10416, %v10414
        %v10471 = vpack.c.b16 %v10419, %v10417
        %v10472 = vpack.c.b16 %v10420, %v10418
        %v10473 = vpack.c.b16 %v10423, %v10421
        %v10474 = vpack.c.b16 %v10424, %v10422
        %v10475 = vpack.c.b16 %v10427, %v10425
        %v10476 = vpack.c.b16 %v10428, %v10426
        %v10477 = vpack.c.b16 %v10431, %v10429
        %v10478 = vpack.c.b16 %v10432, %v10430
        %v10479 = vpack.c.b16 %v10435, %v10433
        %v10480 = vpack.c.b16 %v10436, %v10434
        %v10481 = vpack.c.b16 %v10439, %v10437
        %v10482 = vpack.c.b16 %v10440, %v10438
        %v10483 = vpack.c.b16 %v10443, %v10441
        %v10484 = vpack.c.b16 %v10444, %v10442
        %v10485 = vpack.c.b16 %v10447, %v10445
        %v10486 = vpack.c.b16 %v10448, %v10446
        %v10487 = vpack.c.b16 %v10451, %v10449
        %v10488 = vpack.c.b16 %v10452, %v10450
        %v10489 = vpack.c.b16 %v10455, %v10453
        %v10490 = vpack.c.b16 %v10456, %v10454
        %v10491 = vpack.c.b16 %v10459, %v10457
        %v10492 = vpack.c.b16 %v10460, %v10458
        %10525 = vmatprep.subr.bf16.mxu0 %v10462
        %10526 = vmatpush1.bf16.msra.mxu0 %v10461
        %10527 = vmatprep.subr.bf16.mxu0 %v10464
        %10528 = vmatpush1.bf16.msra.mxu0 %v10463
        %10529 = vmatprep.subr.bf16.mxu0 %v10466
        %10530 = vmatpush1.bf16.msra.mxu0 %v10465
        %10531 = vmatprep.subr.bf16.mxu0 %v10468
        %10532 = vmatpush1.bf16.msra.mxu0 %v10467
        %10533 = vmatprep.subr.bf16.mxu0 %v10470
        %10534 = vmatpush1.bf16.msra.mxu0 %v10469
        %10535 = vmatprep.subr.bf16.mxu0 %v10472
        %10536 = vmatpush1.bf16.msra.mxu0 %v10471
        %10537 = vmatprep.subr.bf16.mxu0 %v10474
        %10538 = vmatpush1.bf16.msra.mxu0 %v10473
        %10539 = vmatprep.subr.bf16.mxu0 %v10476
        %10540 = vmatpush1.bf16.msra.mxu0 %v10475
        %10541 = vmatprep.subr.bf16.mxu0 %v10478
        %10542 = vmatpush1.bf16.msra.mxu0 %v10477
        %10543 = vmatprep.subr.bf16.mxu0 %v10480
        %10544 = vmatpush1.bf16.msra.mxu0 %v10479
        %10545 = vmatprep.subr.bf16.mxu0 %v10482
        %10546 = vmatpush1.bf16.msra.mxu0 %v10481
        %10547 = vmatprep.subr.bf16.mxu0 %v10484
        %10548 = vmatpush1.bf16.msra.mxu0 %v10483
        %10549 = vmatprep.subr.bf16.mxu0 %v10486
        %10550 = vmatpush1.bf16.msra.mxu0 %v10485
        %10551 = vmatprep.subr.bf16.mxu0 %v10488
        %10552 = vmatpush1.bf16.msra.mxu0 %v10487
        %10553 = vmatprep.subr.bf16.mxu0 %v10490
        %10554 = vmatpush1.bf16.msra.mxu0 %v10489
        %10555 = vmatprep.subr.bf16.mxu0 %v10492
        %10556 = vmatpush1.bf16.msra.mxu0 %v10491
        %10557 = vmatprep.mubr.bf16.mxu0 %v10350
        %10558 = vmatmul.mubr.bf16.gmra.mrb[0].mxu0 %v10349
        %v10559 = vpop.f32.mrb[0].mxu0
        %v10560 = vadd.f32 0.0, %v10559
        %v10561 = vpop.f32.mrb[0].mxu0
        %v10562 = vadd.f32 0.0, %v10561
        %v10563 = vpop.f32.mrb[0].mxu0
        %v10564 = vadd.f32 0.0, %v10563
        %v10565 = vpop.f32.mrb[0].mxu0
        %v10566 = vadd.f32 0.0, %v10565
        %10567 = vmatprep.mubr.bf16.mxu0 %v10352
        %10568 = vmatmul.mubr.bf16.gmra.mrb[0].mxu0 %v10351
        %v10569 = vpop.f32.mrb[0].mxu0
        %v10570 = vadd.f32 0.0, %v10569
        %v10571 = vpop.f32.mrb[0].mxu0
        %v10572 = vadd.f32 0.0, %v10571
        %v10573 = vpop.f32.mrb[0].mxu0
        %v10574 = vadd.f32 0.0, %v10573
        %v10575 = vpop.f32.mrb[0].mxu0
        %v10576 = vadd.f32 0.0, %v10575
        %10577 = vmatprep.mubr.bf16.mxu0 %v10354
        %10578 = vmatmul.mubr.bf16.gmra.mrb[0].mxu0 %v10353
        %v10579 = vpop.f32.mrb[0].mxu0
        %v10580 = vadd.f32 0.0, %v10579
        %v10581 = vpop.f32.mrb[0].mxu0
        %v10582 = vadd.f32 0.0, %v10581
        %v10583 = vpop.f32.mrb[0].mxu0
        %v10584 = vadd.f32 0.0, %v10583
        %v10585 = vpop.f32.mrb[0].mxu0
        %v10586 = vadd.f32 0.0, %v10585
        %10587 = vmatprep.mubr.bf16.mxu0 %v10356
        %10588 = vmatmul.mubr.bf16.gmra.mrb[0].mxu0 %v10355
        %v10589 = vpop.f32.mrb[0].mxu0
        %v10590 = vadd.f32 0.0, %v10589
        %v10591 = vpop.f32.mrb[0].mxu0
        %v10592 = vadd.f32 0.0, %v10591
        %v10593 = vpop.f32.mrb[0].mxu0
        %v10594 = vadd.f32 0.0, %v10593
        %v10595 = vpop.f32.mrb[0].mxu0
        %v10596 = vadd.f32 0.0, %v10595
        %10597 = vdwg.mxu0
        %v10598 = vadd.f32 %v10267, %v10560
        %v10599 = vadd.f32 %v10268, %v10562
        %v10600 = vadd.f32 %v10269, %v10564
        %v10601 = vadd.f32 %v10270, %v10566
        %v10602 = vadd.f32 %v10271, %v10570
        %v10603 = vadd.f32 %v10272, %v10572
        %v10604 = vadd.f32 %v10273, %v10574
        %v10605 = vadd.f32 %v10274, %v10576
        %v10606 = vadd.f32 %v10275, %v10580
        %v10607 = vadd.f32 %v10276, %v10582
        %v10608 = vadd.f32 %v10277, %v10584
        %v10609 = vadd.f32 %v10278, %v10586
        %v10610 = vadd.f32 %v10279, %v10590
        %v10611 = vadd.f32 %v10280, %v10592
        %v10612 = vadd.f32 %v10281, %v10594
        %v10613 = vadd.f32 %v10282, %v10596
        %v10614 = vld [vmem:[%s10283] sm:$0xff]
        %v10615 = vld [vmem:[%s10283 + $0x8] sm:$0x11]
        %v10616 = vld [vmem:[%s10283 + $0x10] sm:$0xff]
        %v10617 = vld [vmem:[%s10283 + $0x18] sm:$0x11]
        %v10618 = vld [vmem:[%s10283 + $0x20] sm:$0xff]
        %v10619 = vld [vmem:[%s10283 + $0x28] sm:$0x11]
        %v10620 = vld [vmem:[%s10283 + $0x30] sm:$0xff]
        %v10621 = vld [vmem:[%s10283 + $0x38] sm:$0x11]
        %v10622 = vld [vmem:[%s10283 + $0x40] sm:$0xff]
        %v10623 = vld [vmem:[%s10283 + $0x48] sm:$0x11]
        %v10624 = vld [vmem:[%s10283 + $0x50] sm:$0xff]
        %v10625 = vld [vmem:[%s10283 + $0x58] sm:$0x11]
        %v10626 = vld [vmem:[%s10283 + $0x60] sm:$0xff]
        %v10627 = vld [vmem:[%s10283 + $0x68] sm:$0x11]
        %v10628 = vld [vmem:[%s10283 + $0x70] sm:$0xff]
        %v10629 = vld [vmem:[%s10283 + $0x78] sm:$0x11]
        %v10631 = vshrl.u32 %v10614, 16
        %v10633 = vrot.slane %v10631, 4
        %v10634 = vshll.u32 %v10614, 16
        %v10636 = vrot.slane %v10634, 5
        %v10637 = vor.u32 %v10633, %v10636
        %v10638 = vrot.slane %v10637, 4
        %v10640 = vshll.u32 %v10615, 16
        %v10642 = vrot.slane %v10640, 5
        %v10643 = vsel %vm1268, %v10638, %v10642
        %v10645 = vshrl.u32 %v10616, 16
        %v10647 = vrot.slane %v10645, 4
        %v10648 = vshll.u32 %v10616, 16
        %v10650 = vrot.slane %v10648, 5
        %v10651 = vor.u32 %v10647, %v10650
        %v10652 = vrot.slane %v10651, 4
        %v10654 = vshll.u32 %v10617, 16
        %v10656 = vrot.slane %v10654, 5
        %v10657 = vsel %vm1268, %v10652, %v10656
        %v10659 = vshrl.u32 %v10618, 16
        %v10661 = vrot.slane %v10659, 4
        %v10662 = vshll.u32 %v10618, 16
        %v10664 = vrot.slane %v10662, 5
        %v10665 = vor.u32 %v10661, %v10664
        %v10666 = vrot.slane %v10665, 4
        %v10668 = vshll.u32 %v10619, 16
        %v10670 = vrot.slane %v10668, 5
        %v10671 = vsel %vm1268, %v10666, %v10670
        %v10673 = vshrl.u32 %v10620, 16
        %v10675 = vrot.slane %v10673, 4
        %v10676 = vshll.u32 %v10620, 16
        %v10678 = vrot.slane %v10676, 5
        %v10679 = vor.u32 %v10675, %v10678
        %v10680 = vrot.slane %v10679, 4
        %v10682 = vshll.u32 %v10621, 16
        %v10684 = vrot.slane %v10682, 5
        %v10685 = vsel %vm1268, %v10680, %v10684
        %v10687 = vshrl.u32 %v10622, 16
        %v10689 = vrot.slane %v10687, 4
        %v10690 = vshll.u32 %v10622, 16
        %v10692 = vrot.slane %v10690, 5
        %v10693 = vor.u32 %v10689, %v10692
        %v10694 = vrot.slane %v10693, 4
        %v10696 = vshll.u32 %v10623, 16
        %v10698 = vrot.slane %v10696, 5
        %v10699 = vsel %vm1268, %v10694, %v10698
        %v10701 = vshrl.u32 %v10624, 16
        %v10703 = vrot.slane %v10701, 4
        %v10704 = vshll.u32 %v10624, 16
        %v10706 = vrot.slane %v10704, 5
        %v10707 = vor.u32 %v10703, %v10706
        %v10708 = vrot.slane %v10707, 4
        %v10710 = vshll.u32 %v10625, 16
        %v10712 = vrot.slane %v10710, 5
        %v10713 = vsel %vm1268, %v10708, %v10712
        %v10715 = vshrl.u32 %v10626, 16
        %v10717 = vrot.slane %v10715, 4
        %v10718 = vshll.u32 %v10626, 16
        %v10720 = vrot.slane %v10718, 5
        %v10721 = vor.u32 %v10717, %v10720
        %v10722 = vrot.slane %v10721, 4
        %v10724 = vshll.u32 %v10627, 16
        %v10726 = vrot.slane %v10724, 5
        %v10727 = vsel %vm1268, %v10722, %v10726
        %v10729 = vshrl.u32 %v10628, 16
        %v10731 = vrot.slane %v10729, 4
        %v10732 = vshll.u32 %v10628, 16
        %v10734 = vrot.slane %v10732, 5
        %v10735 = vor.u32 %v10731, %v10734
        %v10736 = vrot.slane %v10735, 4
        %v10738 = vshll.u32 %v10629, 16
        %v10740 = vrot.slane %v10738, 5
        %v10741 = vsel %vm1268, %v10736, %v10740
        %s10742 = scalar_lea.vmem [#allocation13], 1792
        %v10743 = vld [vmem:[%s10742] sm:$0xff]
        %v10744 = vld [vmem:[%s10742 + $0x8] sm:$0xff]
        %v10745 = vld [vmem:[%s10742 + $0x10] sm:$0xff]
        %v10746 = vld [vmem:[%s10742 + $0x18] sm:$0xff]
        %v10747 = vld [vmem:[%s10742 + $0x20] sm:$0xff]
        %v10748 = vld [vmem:[%s10742 + $0x28] sm:$0xff]
        %v10749 = vld [vmem:[%s10742 + $0x30] sm:$0xff]
        %v10750 = vld [vmem:[%s10742 + $0x38] sm:$0xff]
        %v10751 = vld [vmem:[%s10742 + $0x40] sm:$0xff]
        %v10752 = vld [vmem:[%s10742 + $0x48] sm:$0xff]
        %v10753 = vld [vmem:[%s10742 + $0x50] sm:$0xff]
        %v10754 = vld [vmem:[%s10742 + $0x58] sm:$0xff]
        %v10755 = vld [vmem:[%s10742 + $0x60] sm:$0xff]
        %v10756 = vld [vmem:[%s10742 + $0x68] sm:$0xff]
        %v10757 = vld [vmem:[%s10742 + $0x70] sm:$0xff]
        %v10758 = vld [vmem:[%s10742 + $0x78] sm:$0xff]
        %v10759 = vld [vmem:[%s10742 + $0x80] sm:$0xff]
        %v10760 = vld [vmem:[%s10742 + $0x88] sm:$0xff]
        %v10761 = vld [vmem:[%s10742 + $0x90] sm:$0xff]
        %v10762 = vld [vmem:[%s10742 + $0x98] sm:$0xff]
        %v10763 = vld [vmem:[%s10742 + $0xa0] sm:$0xff]
        %v10764 = vld [vmem:[%s10742 + $0xa8] sm:$0xff]
        %v10765 = vld [vmem:[%s10742 + $0xb0] sm:$0xff]
        %v10766 = vld [vmem:[%s10742 + $0xb8] sm:$0xff]
        %v10767 = vld [vmem:[%s10742 + $0xc0] sm:$0xff]
        %v10768 = vld [vmem:[%s10742 + $0xc8] sm:$0xff]
        %v10769 = vld [vmem:[%s10742 + $0xd0] sm:$0xff]
        %v10770 = vld [vmem:[%s10742 + $0xd8] sm:$0xff]
        %v10771 = vld [vmem:[%s10742 + $0xe0] sm:$0xff]
        %v10772 = vld [vmem:[%s10742 + $0xe8] sm:$0xff]
        %v10773 = vld [vmem:[%s10742 + $0xf0] sm:$0xff]
        %v10774 = vld [vmem:[%s10742 + $0xf8] sm:$0xff]
        %v10775 = vunpack.c.l.b16 %v10643
        %v10776 = vunpack.c.h.b16 %v10643
        %v10777 = vunpack.c.l.b16 %v10657
        %v10778 = vunpack.c.h.b16 %v10657
        %v10779 = vunpack.c.l.b16 %v10671
        %v10780 = vunpack.c.h.b16 %v10671
        %v10781 = vunpack.c.l.b16 %v10685
        %v10782 = vunpack.c.h.b16 %v10685
        %v10783 = vunpack.c.l.b16 %v10699
        %v10784 = vunpack.c.h.b16 %v10699
        %v10785 = vunpack.c.l.b16 %v10713
        %v10786 = vunpack.c.h.b16 %v10713
        %v10787 = vunpack.c.l.b16 %v10727
        %v10788 = vunpack.c.h.b16 %v10727
        %v10789 = vunpack.c.l.b16 %v10741
        %v10790 = vunpack.c.h.b16 %v10741
        %v10791 = vpack.c.b16 %v10777, %v10775
        %v10792 = vpack.c.b16 %v10778, %v10776
        %v10793 = vpack.c.b16 %v10781, %v10779
        %v10794 = vpack.c.b16 %v10782, %v10780
        %v10795 = vpack.c.b16 %v10785, %v10783
        %v10796 = vpack.c.b16 %v10786, %v10784
        %v10797 = vpack.c.b16 %v10789, %v10787
        %v10798 = vpack.c.b16 %v10790, %v10788
        %v10839 = vunpack.c.l.b16 %v10743
        %v10840 = vunpack.c.h.b16 %v10743
        %v10841 = vunpack.c.l.b16 %v10744
        %v10842 = vunpack.c.h.b16 %v10744
        %v10843 = vunpack.c.l.b16 %v10745
        %v10844 = vunpack.c.h.b16 %v10745
        %v10845 = vunpack.c.l.b16 %v10746
        %v10846 = vunpack.c.h.b16 %v10746
        %v10847 = vunpack.c.l.b16 %v10747
        %v10848 = vunpack.c.h.b16 %v10747
        %v10849 = vunpack.c.l.b16 %v10748
        %v10850 = vunpack.c.h.b16 %v10748
        %v10851 = vunpack.c.l.b16 %v10749
        %v10852 = vunpack.c.h.b16 %v10749
        %v10853 = vunpack.c.l.b16 %v10750
        %v10854 = vunpack.c.h.b16 %v10750
        %v10855 = vunpack.c.l.b16 %v10751
        %v10856 = vunpack.c.h.b16 %v10751
        %v10857 = vunpack.c.l.b16 %v10752
        %v10858 = vunpack.c.h.b16 %v10752
        %v10859 = vunpack.c.l.b16 %v10753
        %v10860 = vunpack.c.h.b16 %v10753
        %v10861 = vunpack.c.l.b16 %v10754
        %v10862 = vunpack.c.h.b16 %v10754
        %v10863 = vunpack.c.l.b16 %v10755
        %v10864 = vunpack.c.h.b16 %v10755
        %v10865 = vunpack.c.l.b16 %v10756
        %v10866 = vunpack.c.h.b16 %v10756
        %v10867 = vunpack.c.l.b16 %v10757
        %v10868 = vunpack.c.h.b16 %v10757
        %v10869 = vunpack.c.l.b16 %v10758
        %v10870 = vunpack.c.h.b16 %v10758
        %v10871 = vunpack.c.l.b16 %v10759
        %v10872 = vunpack.c.h.b16 %v10759
        %v10873 = vunpack.c.l.b16 %v10760
        %v10874 = vunpack.c.h.b16 %v10760
        %v10875 = vunpack.c.l.b16 %v10761
        %v10876 = vunpack.c.h.b16 %v10761
        %v10877 = vunpack.c.l.b16 %v10762
        %v10878 = vunpack.c.h.b16 %v10762
        %v10879 = vunpack.c.l.b16 %v10763
        %v10880 = vunpack.c.h.b16 %v10763
        %v10881 = vunpack.c.l.b16 %v10764
        %v10882 = vunpack.c.h.b16 %v10764
        %v10883 = vunpack.c.l.b16 %v10765
        %v10884 = vunpack.c.h.b16 %v10765
        %v10885 = vunpack.c.l.b16 %v10766
        %v10886 = vunpack.c.h.b16 %v10766
        %v10887 = vunpack.c.l.b16 %v10767
        %v10888 = vunpack.c.h.b16 %v10767
        %v10889 = vunpack.c.l.b16 %v10768
        %v10890 = vunpack.c.h.b16 %v10768
        %v10891 = vunpack.c.l.b16 %v10769
        %v10892 = vunpack.c.h.b16 %v10769
        %v10893 = vunpack.c.l.b16 %v10770
        %v10894 = vunpack.c.h.b16 %v10770
        %v10895 = vunpack.c.l.b16 %v10771
        %v10896 = vunpack.c.h.b16 %v10771
        %v10897 = vunpack.c.l.b16 %v10772
        %v10898 = vunpack.c.h.b16 %v10772
        %v10899 = vunpack.c.l.b16 %v10773
        %v10900 = vunpack.c.h.b16 %v10773
        %v10901 = vunpack.c.l.b16 %v10774
        %v10902 = vunpack.c.h.b16 %v10774
        %v10903 = vpack.c.b16 %v10841, %v10839
        %v10904 = vpack.c.b16 %v10842, %v10840
        %v10905 = vpack.c.b16 %v10845, %v10843
        %v10906 = vpack.c.b16 %v10846, %v10844
        %v10907 = vpack.c.b16 %v10849, %v10847
        %v10908 = vpack.c.b16 %v10850, %v10848
        %v10909 = vpack.c.b16 %v10853, %v10851
        %v10910 = vpack.c.b16 %v10854, %v10852
        %v10911 = vpack.c.b16 %v10857, %v10855
        %v10912 = vpack.c.b16 %v10858, %v10856
        %v10913 = vpack.c.b16 %v10861, %v10859
        %v10914 = vpack.c.b16 %v10862, %v10860
        %v10915 = vpack.c.b16 %v10865, %v10863
        %v10916 = vpack.c.b16 %v10866, %v10864
        %v10917 = vpack.c.b16 %v10869, %v10867
        %v10918 = vpack.c.b16 %v10870, %v10868
        %v10919 = vpack.c.b16 %v10873, %v10871
        %v10920 = vpack.c.b16 %v10874, %v10872
        %v10921 = vpack.c.b16 %v10877, %v10875
        %v10922 = vpack.c.b16 %v10878, %v10876
        %v10923 = vpack.c.b16 %v10881, %v10879
        %v10924 = vpack.c.b16 %v10882, %v10880
        %v10925 = vpack.c.b16 %v10885, %v10883
        %v10926 = vpack.c.b16 %v10886, %v10884
        %v10927 = vpack.c.b16 %v10889, %v10887
        %v10928 = vpack.c.b16 %v10890, %v10888
        %v10929 = vpack.c.b16 %v10893, %v10891
        %v10930 = vpack.c.b16 %v10894, %v10892
        %v10931 = vpack.c.b16 %v10897, %v10895
        %v10932 = vpack.c.b16 %v10898, %v10896
        %v10933 = vpack.c.b16 %v10901, %v10899
        %v10934 = vpack.c.b16 %v10902, %v10900
        %10967 = vmatprep.subr.bf16.mxu0 %v10904
        %10968 = vmatpush1.bf16.msra.mxu0 %v10903
        %10969 = vmatprep.subr.bf16.mxu0 %v10906
        %10970 = vmatpush1.bf16.msra.mxu0 %v10905
        %10971 = vmatprep.subr.bf16.mxu0 %v10908
        %10972 = vmatpush1.bf16.msra.mxu0 %v10907
        %10973 = vmatprep.subr.bf16.mxu0 %v10910
        %10974 = vmatpush1.bf16.msra.mxu0 %v10909
        %10975 = vmatprep.subr.bf16.mxu0 %v10912
        %10976 = vmatpush1.bf16.msra.mxu0 %v10911
        %10977 = vmatprep.subr.bf16.mxu0 %v10914
        %10978 = vmatpush1.bf16.msra.mxu0 %v10913
        %10979 = vmatprep.subr.bf16.mxu0 %v10916
        %10980 = vmatpush1.bf16.msra.mxu0 %v10915
        %10981 = vmatprep.subr.bf16.mxu0 %v10918
        %10982 = vmatpush1.bf16.msra.mxu0 %v10917
        %10983 = vmatprep.subr.bf16.mxu0 %v10920
        %10984 = vmatpush1.bf16.msra.mxu0 %v10919
        %10985 = vmatprep.subr.bf16.mxu0 %v10922
        %10986 = vmatpush1.bf16.msra.mxu0 %v10921
        %10987 = vmatprep.subr.bf16.mxu0 %v10924
        %10988 = vmatpush1.bf16.msra.mxu0 %v10923
        %10989 = vmatprep.subr.bf16.mxu0 %v10926
        %10990 = vmatpush1.bf16.msra.mxu0 %v10925
        %10991 = vmatprep.subr.bf16.mxu0 %v10928
        %10992 = vmatpush1.bf16.msra.mxu0 %v10927
        %10993 = vmatprep.subr.bf16.mxu0 %v10930
        %10994 = vmatpush1.bf16.msra.mxu0 %v10929
        %10995 = vmatprep.subr.bf16.mxu0 %v10932
        %10996 = vmatpush1.bf16.msra.mxu0 %v10931
        %10997 = vmatprep.subr.bf16.mxu0 %v10934
        %10998 = vmatpush1.bf16.msra.mxu0 %v10933
        %10999 = vmatprep.mubr.bf16.mxu0 %v10792
        %11000 = vmatmul.mubr.bf16.gmra.mrb[0].mxu0 %v10791
        %v11001 = vpop.f32.mrb[0].mxu0
        %v11002 = vadd.f32 0.0, %v11001
        %v11003 = vpop.f32.mrb[0].mxu0
        %v11004 = vadd.f32 0.0, %v11003
        %v11005 = vpop.f32.mrb[0].mxu0
        %v11006 = vadd.f32 0.0, %v11005
        %v11007 = vpop.f32.mrb[0].mxu0
        %v11008 = vadd.f32 0.0, %v11007
        %11009 = vmatprep.mubr.bf16.mxu0 %v10794
        %11010 = vmatmul.mubr.bf16.gmra.mrb[0].mxu0 %v10793
        %v11011 = vpop.f32.mrb[0].mxu0
        %v11012 = vadd.f32 0.0, %v11011
        %v11013 = vpop.f32.mrb[0].mxu0
        %v11014 = vadd.f32 0.0, %v11013
        %v11015 = vpop.f32.mrb[0].mxu0
        %v11016 = vadd.f32 0.0, %v11015
        %v11017 = vpop.f32.mrb[0].mxu0
        %v11018 = vadd.f32 0.0, %v11017
        %11019 = vmatprep.mubr.bf16.mxu0 %v10796
        %11020 = vmatmul.mubr.bf16.gmra.mrb[0].mxu0 %v10795
        %v11021 = vpop.f32.mrb[0].mxu0
        %v11022 = vadd.f32 0.0, %v11021
        %v11023 = vpop.f32.mrb[0].mxu0
        %v11024 = vadd.f32 0.0, %v11023
        %v11025 = vpop.f32.mrb[0].mxu0
        %v11026 = vadd.f32 0.0, %v11025
        %v11027 = vpop.f32.mrb[0].mxu0
        %v11028 = vadd.f32 0.0, %v11027
        %11029 = vmatprep.mubr.bf16.mxu0 %v10798
        %11030 = vmatmul.mubr.bf16.gmra.mrb[0].mxu0 %v10797
        %v11031 = vpop.f32.mrb[0].mxu0
        %v11032 = vadd.f32 0.0, %v11031
        %v11033 = vpop.f32.mrb[0].mxu0
        %v11034 = vadd.f32 0.0, %v11033
        %v11035 = vpop.f32.mrb[0].mxu0
        %v11036 = vadd.f32 0.0, %v11035
        %v11037 = vpop.f32.mrb[0].mxu0
        %v11038 = vadd.f32 0.0, %v11037
        %11039 = vdwg.mxu0
        %v11040 = vadd.f32 %v10598, %v11002
        %v11041 = vadd.f32 %v10599, %v11004
        %v11042 = vadd.f32 %v10600, %v11006
        %v11043 = vadd.f32 %v10601, %v11008
        %v11044 = vadd.f32 %v10602, %v11012
        %v11045 = vadd.f32 %v10603, %v11014
        %v11046 = vadd.f32 %v10604, %v11016
        %v11047 = vadd.f32 %v10605, %v11018
        %v11048 = vadd.f32 %v10606, %v11022
        %v11049 = vadd.f32 %v10607, %v11024
        %v11050 = vadd.f32 %v10608, %v11026
        %v11051 = vadd.f32 %v10609, %v11028
        %v11052 = vadd.f32 %v10610, %v11032
        %v11053 = vadd.f32 %v10611, %v11034
        %v11054 = vadd.f32 %v10612, %v11036
        %v11055 = vadd.f32 %v10613, %v11038
        %v11056 = vld [vmem:[%s10283] sm:$0xee]
        %v11057 = vld [vmem:[%s10283 + $0x10] sm:$0xee]
        %v11058 = vld [vmem:[%s10283 + $0x20] sm:$0xee]
        %v11059 = vld [vmem:[%s10283 + $0x30] sm:$0xee]
        %v11060 = vld [vmem:[%s10283 + $0x40] sm:$0xee]
        %v11061 = vld [vmem:[%s10283 + $0x50] sm:$0xee]
        %v11062 = vld [vmem:[%s10283 + $0x60] sm:$0xee]
        %v11063 = vld [vmem:[%s10283 + $0x70] sm:$0xee]
        %v11080 = vrot.slane %v11056, 5
        %v11081 = vrot.slane %v11080, 4
        %v11082 = vrot.slane %v10615, 5
        %v11083 = vsel %vm2684, %v11081, %v11082
        %v11084 = vrot.slane %v11057, 5
        %v11085 = vrot.slane %v11084, 4
        %v11086 = vrot.slane %v10617, 5
        %v11087 = vsel %vm2684, %v11085, %v11086
        %v11088 = vrot.slane %v11058, 5
        %v11089 = vrot.slane %v11088, 4
        %v11090 = vrot.slane %v10619, 5
        %v11091 = vsel %vm2684, %v11089, %v11090
        %v11092 = vrot.slane %v11059, 5
        %v11093 = vrot.slane %v11092, 4
        %v11094 = vrot.slane %v10621, 5
        %v11095 = vsel %vm2684, %v11093, %v11094
        %v11096 = vrot.slane %v11060, 5
        %v11097 = vrot.slane %v11096, 4
        %v11098 = vrot.slane %v10623, 5
        %v11099 = vsel %vm2684, %v11097, %v11098
        %v11100 = vrot.slane %v11061, 5
        %v11101 = vrot.slane %v11100, 4
        %v11102 = vrot.slane %v10625, 5
        %v11103 = vsel %vm2684, %v11101, %v11102
        %v11104 = vrot.slane %v11062, 5
        %v11105 = vrot.slane %v11104, 4
        %v11106 = vrot.slane %v10627, 5
        %v11107 = vsel %vm2684, %v11105, %v11106
        %v11108 = vrot.slane %v11063, 5
        %v11109 = vrot.slane %v11108, 4
        %v11110 = vrot.slane %v10629, 5
        %v11111 = vsel %vm2684, %v11109, %v11110
        %s11112 = scalar_lea.vmem [#allocation13], 2048
        %v11113 = vld [vmem:[%s11112] sm:$0xff]
        %v11114 = vld [vmem:[%s11112 + $0x8] sm:$0xff]
        %v11115 = vld [vmem:[%s11112 + $0x10] sm:$0xff]
        %v11116 = vld [vmem:[%s11112 + $0x18] sm:$0xff]
        %v11117 = vld [vmem:[%s11112 + $0x20] sm:$0xff]
        %v11118 = vld [vmem:[%s11112 + $0x28] sm:$0xff]
        %v11119 = vld [vmem:[%s11112 + $0x30] sm:$0xff]
        %v11120 = vld [vmem:[%s11112 + $0x38] sm:$0xff]
        %v11121 = vld [vmem:[%s11112 + $0x40] sm:$0xff]
        %v11122 = vld [vmem:[%s11112 + $0x48] sm:$0xff]
        %v11123 = vld [vmem:[%s11112 + $0x50] sm:$0xff]
        %v11124 = vld [vmem:[%s11112 + $0x58] sm:$0xff]
        %v11125 = vld [vmem:[%s11112 + $0x60] sm:$0xff]
        %v11126 = vld [vmem:[%s11112 + $0x68] sm:$0xff]
        %v11127 = vld [vmem:[%s11112 + $0x70] sm:$0xff]
        %v11128 = vld [vmem:[%s11112 + $0x78] sm:$0xff]
        %v11129 = vld [vmem:[%s11112 + $0x80] sm:$0xff]
        %v11130 = vld [vmem:[%s11112 + $0x88] sm:$0xff]
        %v11131 = vld [vmem:[%s11112 + $0x90] sm:$0xff]
        %v11132 = vld [vmem:[%s11112 + $0x98] sm:$0xff]
        %v11133 = vld [vmem:[%s11112 + $0xa0] sm:$0xff]
        %v11134 = vld [vmem:[%s11112 + $0xa8] sm:$0xff]
        %v11135 = vld [vmem:[%s11112 + $0xb0] sm:$0xff]
        %v11136 = vld [vmem:[%s11112 + $0xb8] sm:$0xff]
        %v11137 = vld [vmem:[%s11112 + $0xc0] sm:$0xff]
        %v11138 = vld [vmem:[%s11112 + $0xc8] sm:$0xff]
        %v11139 = vld [vmem:[%s11112 + $0xd0] sm:$0xff]
        %v11140 = vld [vmem:[%s11112 + $0xd8] sm:$0xff]
        %v11141 = vld [vmem:[%s11112 + $0xe0] sm:$0xff]
        %v11142 = vld [vmem:[%s11112 + $0xe8] sm:$0xff]
        %v11143 = vld [vmem:[%s11112 + $0xf0] sm:$0xff]
        %v11144 = vld [vmem:[%s11112 + $0xf8] sm:$0xff]
        %v11145 = vunpack.c.l.b16 %v11083
        %v11146 = vunpack.c.h.b16 %v11083
        %v11147 = vunpack.c.l.b16 %v11087
        %v11148 = vunpack.c.h.b16 %v11087
        %v11149 = vunpack.c.l.b16 %v11091
        %v11150 = vunpack.c.h.b16 %v11091
        %v11151 = vunpack.c.l.b16 %v11095
        %v11152 = vunpack.c.h.b16 %v11095
        %v11153 = vunpack.c.l.b16 %v11099
        %v11154 = vunpack.c.h.b16 %v11099
        %v11155 = vunpack.c.l.b16 %v11103
        %v11156 = vunpack.c.h.b16 %v11103
        %v11157 = vunpack.c.l.b16 %v11107
        %v11158 = vunpack.c.h.b16 %v11107
        %v11159 = vunpack.c.l.b16 %v11111
        %v11160 = vunpack.c.h.b16 %v11111
        %v11161 = vpack.c.b16 %v11147, %v11145
        %v11162 = vpack.c.b16 %v11148, %v11146
        %v11163 = vpack.c.b16 %v11151, %v11149
        %v11164 = vpack.c.b16 %v11152, %v11150
        %v11165 = vpack.c.b16 %v11155, %v11153
        %v11166 = vpack.c.b16 %v11156, %v11154
        %v11167 = vpack.c.b16 %v11159, %v11157
        %v11168 = vpack.c.b16 %v11160, %v11158
        %v11209 = vunpack.c.l.b16 %v11113
        %v11210 = vunpack.c.h.b16 %v11113
        %v11211 = vunpack.c.l.b16 %v11114
        %v11212 = vunpack.c.h.b16 %v11114
        %v11213 = vunpack.c.l.b16 %v11115
        %v11214 = vunpack.c.h.b16 %v11115
        %v11215 = vunpack.c.l.b16 %v11116
        %v11216 = vunpack.c.h.b16 %v11116
        %v11217 = vunpack.c.l.b16 %v11117
        %v11218 = vunpack.c.h.b16 %v11117
        %v11219 = vunpack.c.l.b16 %v11118
        %v11220 = vunpack.c.h.b16 %v11118
        %v11221 = vunpack.c.l.b16 %v11119
        %v11222 = vunpack.c.h.b16 %v11119
        %v11223 = vunpack.c.l.b16 %v11120
        %v11224 = vunpack.c.h.b16 %v11120
        %v11225 = vunpack.c.l.b16 %v11121
        %v11226 = vunpack.c.h.b16 %v11121
        %v11227 = vunpack.c.l.b16 %v11122
        %v11228 = vunpack.c.h.b16 %v11122
        %v11229 = vunpack.c.l.b16 %v11123
        %v11230 = vunpack.c.h.b16 %v11123
        %v11231 = vunpack.c.l.b16 %v11124
        %v11232 = vunpack.c.h.b16 %v11124
        %v11233 = vunpack.c.l.b16 %v11125
        %v11234 = vunpack.c.h.b16 %v11125
        %v11235 = vunpack.c.l.b16 %v11126
        %v11236 = vunpack.c.h.b16 %v11126
        %v11237 = vunpack.c.l.b16 %v11127
        %v11238 = vunpack.c.h.b16 %v11127
        %v11239 = vunpack.c.l.b16 %v11128
        %v11240 = vunpack.c.h.b16 %v11128
        %v11241 = vunpack.c.l.b16 %v11129
        %v11242 = vunpack.c.h.b16 %v11129
        %v11243 = vunpack.c.l.b16 %v11130
        %v11244 = vunpack.c.h.b16 %v11130
        %v11245 = vunpack.c.l.b16 %v11131
        %v11246 = vunpack.c.h.b16 %v11131
        %v11247 = vunpack.c.l.b16 %v11132
        %v11248 = vunpack.c.h.b16 %v11132
        %v11249 = vunpack.c.l.b16 %v11133
        %v11250 = vunpack.c.h.b16 %v11133
        %v11251 = vunpack.c.l.b16 %v11134
        %v11252 = vunpack.c.h.b16 %v11134
        %v11253 = vunpack.c.l.b16 %v11135
        %v11254 = vunpack.c.h.b16 %v11135
        %v11255 = vunpack.c.l.b16 %v11136
        %v11256 = vunpack.c.h.b16 %v11136
        %v11257 = vunpack.c.l.b16 %v11137
        %v11258 = vunpack.c.h.b16 %v11137
        %v11259 = vunpack.c.l.b16 %v11138
        %v11260 = vunpack.c.h.b16 %v11138
        %v11261 = vunpack.c.l.b16 %v11139
        %v11262 = vunpack.c.h.b16 %v11139
        %v11263 = vunpack.c.l.b16 %v11140
        %v11264 = vunpack.c.h.b16 %v11140
        %v11265 = vunpack.c.l.b16 %v11141
        %v11266 = vunpack.c.h.b16 %v11141
        %v11267 = vunpack.c.l.b16 %v11142
        %v11268 = vunpack.c.h.b16 %v11142
        %v11269 = vunpack.c.l.b16 %v11143
        %v11270 = vunpack.c.h.b16 %v11143
        %v11271 = vunpack.c.l.b16 %v11144
        %v11272 = vunpack.c.h.b16 %v11144
        %v11273 = vpack.c.b16 %v11211, %v11209
        %v11274 = vpack.c.b16 %v11212, %v11210
        %v11275 = vpack.c.b16 %v11215, %v11213
        %v11276 = vpack.c.b16 %v11216, %v11214
        %v11277 = vpack.c.b16 %v11219, %v11217
        %v11278 = vpack.c.b16 %v11220, %v11218
        %v11279 = vpack.c.b16 %v11223, %v11221
        %v11280 = vpack.c.b16 %v11224, %v11222
        %v11281 = vpack.c.b16 %v11227, %v11225
        %v11282 = vpack.c.b16 %v11228, %v11226
        %v11283 = vpack.c.b16 %v11231, %v11229
        %v11284 = vpack.c.b16 %v11232, %v11230
        %v11285 = vpack.c.b16 %v11235, %v11233
        %v11286 = vpack.c.b16 %v11236, %v11234
        %v11287 = vpack.c.b16 %v11239, %v11237
        %v11288 = vpack.c.b16 %v11240, %v11238
        %v11289 = vpack.c.b16 %v11243, %v11241
        %v11290 = vpack.c.b16 %v11244, %v11242
        %v11291 = vpack.c.b16 %v11247, %v11245
        %v11292 = vpack.c.b16 %v11248, %v11246
        %v11293 = vpack.c.b16 %v11251, %v11249
        %v11294 = vpack.c.b16 %v11252, %v11250
        %v11295 = vpack.c.b16 %v11255, %v11253
        %v11296 = vpack.c.b16 %v11256, %v11254
        %v11297 = vpack.c.b16 %v11259, %v11257
        %v11298 = vpack.c.b16 %v11260, %v11258
        %v11299 = vpack.c.b16 %v11263, %v11261
        %v11300 = vpack.c.b16 %v11264, %v11262
        %v11301 = vpack.c.b16 %v11267, %v11265
        %v11302 = vpack.c.b16 %v11268, %v11266
        %v11303 = vpack.c.b16 %v11271, %v11269
        %v11304 = vpack.c.b16 %v11272, %v11270
        %11337 = vmatprep.subr.bf16.mxu0 %v11274
        %11338 = vmatpush1.bf16.msra.mxu0 %v11273
        %11339 = vmatprep.subr.bf16.mxu0 %v11276
        %11340 = vmatpush1.bf16.msra.mxu0 %v11275
        %11341 = vmatprep.subr.bf16.mxu0 %v11278
        %11342 = vmatpush1.bf16.msra.mxu0 %v11277
        %11343 = vmatprep.subr.bf16.mxu0 %v11280
        %11344 = vmatpush1.bf16.msra.mxu0 %v11279
        %11345 = vmatprep.subr.bf16.mxu0 %v11282
        %11346 = vmatpush1.bf16.msra.mxu0 %v11281
        %11347 = vmatprep.subr.bf16.mxu0 %v11284
        %11348 = vmatpush1.bf16.msra.mxu0 %v11283
        %11349 = vmatprep.subr.bf16.mxu0 %v11286
        %11350 = vmatpush1.bf16.msra.mxu0 %v11285
        %11351 = vmatprep.subr.bf16.mxu0 %v11288
        %11352 = vmatpush1.bf16.msra.mxu0 %v11287
        %11353 = vmatprep.subr.bf16.mxu0 %v11290
        %11354 = vmatpush1.bf16.msra.mxu0 %v11289
        %11355 = vmatprep.subr.bf16.mxu0 %v11292
        %11356 = vmatpush1.bf16.msra.mxu0 %v11291
        %11357 = vmatprep.subr.bf16.mxu0 %v11294
        %11358 = vmatpush1.bf16.msra.mxu0 %v11293
        %11359 = vmatprep.subr.bf16.mxu0 %v11296
        %11360 = vmatpush1.bf16.msra.mxu0 %v11295
        %11361 = vmatprep.subr.bf16.mxu0 %v11298
        %11362 = vmatpush1.bf16.msra.mxu0 %v11297
        %11363 = vmatprep.subr.bf16.mxu0 %v11300
        %11364 = vmatpush1.bf16.msra.mxu0 %v11299
        %11365 = vmatprep.subr.bf16.mxu0 %v11302
        %11366 = vmatpush1.bf16.msra.mxu0 %v11301
        %11367 = vmatprep.subr.bf16.mxu0 %v11304
        %11368 = vmatpush1.bf16.msra.mxu0 %v11303
        %11369 = vmatprep.mubr.bf16.mxu0 %v11162
        %11370 = vmatmul.mubr.bf16.gmra.mrb[0].mxu0 %v11161
        %v11371 = vpop.f32.mrb[0].mxu0
        %v11372 = vadd.f32 0.0, %v11371
        %v11373 = vpop.f32.mrb[0].mxu0
        %v11374 = vadd.f32 0.0, %v11373
        %v11375 = vpop.f32.mrb[0].mxu0
        %v11376 = vadd.f32 0.0, %v11375
        %v11377 = vpop.f32.mrb[0].mxu0
        %v11378 = vadd.f32 0.0, %v11377
        %11379 = vmatprep.mubr.bf16.mxu0 %v11164
        %11380 = vmatmul.mubr.bf16.gmra.mrb[0].mxu0 %v11163
        %v11381 = vpop.f32.mrb[0].mxu0
        %v11382 = vadd.f32 0.0, %v11381
        %v11383 = vpop.f32.mrb[0].mxu0
        %v11384 = vadd.f32 0.0, %v11383
        %v11385 = vpop.f32.mrb[0].mxu0
        %v11386 = vadd.f32 0.0, %v11385
        %v11387 = vpop.f32.mrb[0].mxu0
        %v11388 = vadd.f32 0.0, %v11387
        %11389 = vmatprep.mubr.bf16.mxu0 %v11166
        %11390 = vmatmul.mubr.bf16.gmra.mrb[0].mxu0 %v11165
        %v11391 = vpop.f32.mrb[0].mxu0
        %v11392 = vadd.f32 0.0, %v11391
        %v11393 = vpop.f32.mrb[0].mxu0
        %v11394 = vadd.f32 0.0, %v11393
        %v11395 = vpop.f32.mrb[0].mxu0
        %v11396 = vadd.f32 0.0, %v11395
        %v11397 = vpop.f32.mrb[0].mxu0
        %v11398 = vadd.f32 0.0, %v11397
        %11399 = vmatprep.mubr.bf16.mxu0 %v11168
        %11400 = vmatmul.mubr.bf16.gmra.mrb[0].mxu0 %v11167
        %v11401 = vpop.f32.mrb[0].mxu0
        %v11402 = vadd.f32 0.0, %v11401
        %v11403 = vpop.f32.mrb[0].mxu0
        %v11404 = vadd.f32 0.0, %v11403
        %v11405 = vpop.f32.mrb[0].mxu0
        %v11406 = vadd.f32 0.0, %v11405
        %v11407 = vpop.f32.mrb[0].mxu0
        %v11408 = vadd.f32 0.0, %v11407
        %11409 = vdwg.mxu0
        %v11410 = vadd.f32 %v11040, %v11372
        %v11411 = vadd.f32 %v11041, %v11374
        %v11412 = vadd.f32 %v11042, %v11376
        %v11413 = vadd.f32 %v11043, %v11378
        %v11414 = vadd.f32 %v11044, %v11382
        %v11415 = vadd.f32 %v11045, %v11384
        %v11416 = vadd.f32 %v11046, %v11386
        %v11417 = vadd.f32 %v11047, %v11388
        %v11418 = vadd.f32 %v11048, %v11392
        %v11419 = vadd.f32 %v11049, %v11394
        %v11420 = vadd.f32 %v11050, %v11396
        %v11421 = vadd.f32 %v11051, %v11398
        %v11422 = vadd.f32 %v11052, %v11402
        %v11423 = vadd.f32 %v11053, %v11404
        %v11424 = vadd.f32 %v11054, %v11406
        %v11425 = vadd.f32 %v11055, %v11408
        %v11426 = vld [vmem:[#allocation15] sm:$0x3]
        %v11428 = vlaneseq
        %v11429 = vshrl.u32 %v11428, 7
        %v11430 = vsub.s32 0, %v11429
        %v11431 = vrot.slane %v11426, %v11430
        %v11432 = vlaneseq
        %v11433 = vshrl.u32 %v11432, 7
        %v11434 = vsub.s32 1, %v11433
        %v11435 = vrot.slane %v11426, %v11434
        %v11438 = vadd.f32 %v11410, %v11431
        %v11439 = vadd.f32 %v11411, %v11435
        %v11440 = vadd.f32 %v11412, %v11431
        %v11441 = vadd.f32 %v11413, %v11435
        %v11442 = vadd.f32 %v11414, %v11431
        %v11443 = vadd.f32 %v11415, %v11435
        %v11444 = vadd.f32 %v11416, %v11431
        %v11445 = vadd.f32 %v11417, %v11435
        %v11446 = vadd.f32 %v11418, %v11431
        %v11447 = vadd.f32 %v11419, %v11435
        %v11448 = vadd.f32 %v11420, %v11431
        %v11449 = vadd.f32 %v11421, %v11435
        %v11450 = vadd.f32 %v11422, %v11431
        %v11451 = vadd.f32 %v11423, %v11435
        %v11452 = vadd.f32 %v11424, %v11431
        %v11453 = vadd.f32 %v11425, %v11435
        %v11454 = vmax.f32 %v11438, 0.0
        %v11455 = vmax.f32 %v11439, 0.0
        %v11456 = vmax.f32 %v11440, 0.0
        %v11457 = vmax.f32 %v11441, 0.0
        %v11458 = vmax.f32 %v11442, 0.0
        %v11459 = vmax.f32 %v11443, 0.0
        %v11460 = vmax.f32 %v11444, 0.0
        %v11461 = vmax.f32 %v11445, 0.0
        %v11462 = vmax.f32 %v11446, 0.0
        %v11463 = vmax.f32 %v11447, 0.0
        %v11464 = vmax.f32 %v11448, 0.0
        %v11465 = vmax.f32 %v11449, 0.0
        %v11466 = vmax.f32 %v11450, 0.0
        %v11467 = vmax.f32 %v11451, 0.0
        %v11468 = vmax.f32 %v11452, 0.0
        %v11469 = vmax.f32 %v11453, 0.0
        %v11470 = vadd.f32 %v11454, %v11456
        %v11471 = vadd.f32 %v11470, %v11458
        %v11472 = vadd.f32 %v11471, %v11460
        %v11473 = vadd.f32 %v11472, %v11462
        %v11474 = vadd.f32 %v11473, %v11464
        %v11475 = vadd.f32 %v11474, %v11466
        %v11476 = vadd.f32 %v11475, %v11468
        %v11477 = vrot.slane %v11476, 4
        %v11478 = vadd.f32 %v11476, %v11477
        %v11479 = vrot.slane %v11478, 2
        %v11480 = vadd.f32 %v11478, %v11479
        %v11481 = vrot.slane %v11480, 1
        %v11482 = vadd.f32 %v11480, %v11481
        %v11483 = vadd.f32 %v11455, %v11457
        %v11484 = vadd.f32 %v11483, %v11459
        %v11485 = vadd.f32 %v11484, %v11461
        %v11486 = vadd.f32 %v11485, %v11463
        %v11487 = vadd.f32 %v11486, %v11465
        %v11488 = vadd.f32 %v11487, %v11467
        %v11489 = vadd.f32 %v11488, %v11469
        %v11490 = vrot.slane %v11489, 4
        %v11491 = vadd.f32 %v11489, %v11490
        %v11492 = vrot.slane %v11491, 2
        %v11493 = vadd.f32 %v11491, %v11492
        %v11494 = vrot.slane %v11493, 1
        %v11495 = vadd.f32 %v11493, %v11494
        %v11496 = vmul.f32 %v11482, 0.015625
        %v11497 = vmul.f32 %v11495, 0.015625
        %11498 = vst [vmem:[%s377] sm:$0xff] %v11496
        %11499 = vst [vmem:[%s377 + $0x8] sm:$0xff] %v11497
        %s11500 = sand.u32 %s187, 1
        %s11501 = scalar_lea.sflag [#allocation6], %s11500
        %s11502 = sand.u32 %s187, 1
        %s11503 = smul.addr %s11502, 16
        %s11504 = scalar_lea.vmem [#allocation16], %s11503
        // Predicated region
        $region77: #{tpu_custom_call.1} parent=47 // pred_check
          %p11505 = pneg %p197
        $region78: #{tpu_custom_call.1} parent=47 // pred_check_branch
          %11507 = sbr.rel (%p11505) target = $region80
        $region79: #{tpu_custom_call.1} parent=47 // pred_region
          %s11509 = ssub.s32 256, 256
          %11510 = vsyncadd %s11501, %s11509
          %s11511 = smul.addr %s27, 2
          %s11512 = smul.addr %s11511, 128
          %s11513 = scalar_lea.hbm %s7, %s11512
          %s11515 = sshll.u32 %s11504, 4
          %s11516 = int_to_ptr.vmem [resolvable:$true] %s11515
          %11518 = dma.vmem_to_hbm [thread:$0]  %s11516, 256, %s11513, %s11501
        $region80: #{tpu_custom_call.1} parent=47 // pred_fallthru
          _
      $region48: #{tpu_custom_call.1} parent=5 // pred_fallthru
        _
      %p11519 = scmp.le.s32.totalorder 2, %s22
      // Predicated region
      $region81: #{tpu_custom_call.1} parent=5 // pred_check
        %p11520 = pneg %p11519
      $region82: #{tpu_custom_call.1} parent=5 // pred_check_branch
        %11522 = sbr.rel (%p11520) target = $region84
      $region83: #{tpu_custom_call.1} parent=5 // pred_region
        %s11523 = ssub.s32 %s22, 2
        // Predicated region
        $region85: #{tpu_custom_call.1} parent=83 // pred_check
          %p11524 = pneg %p203
        $region86: #{tpu_custom_call.1} parent=83 // pred_check_branch
          %11526 = sbr.rel (%p11524) target = $region88
        $region87: #{tpu_custom_call.1} parent=83 // pred_region
          %s11527 = sand.u32 %s188, 1
          %s11528 = scalar_lea.sflag [#allocation6], %s11527
          %s11529 = sand.u32 %s188, 1
          %s11530 = smul.addr %s11529, 16
          %s11531 = scalar_lea.vmem [#allocation16], %s11530
          %11532 = dma.done %s11528, 256
        $region88: #{tpu_custom_call.1} parent=83 // pred_fallthru
          _
      $region84: #{tpu_custom_call.1} parent=5 // pred_fallthru
        _
    $region6: #{tpu_custom_call.1} parent=1 // loop_footer
      %s26 = sadd.s32 1, %s22
    $region7: #{tpu_custom_call.1} parent=1 // loop_footer_branch
      %21 = sbr.rel target = $region3
    $region8: #{tpu_custom_call.1} parent=1 // loop_exit
      _
    %11533 = vsyncpa [#allocation5], 1
    %s11534 = scalar_lea.sflag [#allocation5], 1
    %11535 = vsyncpa %s11534, 1
    %11536 = vsyncpa [#allocation8], 1
    %11537 = vsyncpa [#allocation11], 1
    %11538 = vsyncpa [#allocation14], 1
    %11539 = vsyncpa [#allocation6], 1
    %s11540 = scalar_lea.sflag [#allocation6], 1
    %11541 = vsyncpa %s11540, 1

</llo_original>
